<compile_context>
chip_gen: v7x
topology: tpu7x:2x2x1
jax: 0.10.0
libtpu: 0.0.40
codegen_flags: <defaults>
</compile_context>

<pallas_src>
import numpy as np

import jax
import jax.numpy as jnp
from jax.experimental import pallas as pl
from jax.experimental.pallas import tpu as pltpu

# ---------------- configuration (consistent with the module) ----------------
DIM = 32              # in_channel
NUM_HEADS = 4
HEAD_DIM = DIM // NUM_HEADS
NSAMPLE = 8           # k[0]
MLP_RATIO = 4
HIDDEN = MLP_RATIO * DIM     # 128
CPAD = 128                   # lane-padded width for the fused posi / qkv outputs
DOWNSCALE = 8
LN_EPS = 1e-5
BN_EPS = 1e-5
TM_DEFAULT = 512             # sampled points per grid step
VMEM_LIMIT_BYTES = 48 * 1024 * 1024


def _round_up(v, m):
    return (v + m - 1) // m * m


# ------------------------------- Pallas kernel -------------------------------------
def triple_attention_local_kernel(
    x_ref, xyzf_ref, xyz_ref,
    vecs_ref, pw1a_ref,
    wA_ref, wV_ref, wP_ref,
    wproj_ref, wfc1_ref, wfc2_ref,
    gsum_ref, gexp_ref, gden_ref,
    out_ref,
):
    K, C, H, D = NSAMPLE, DIM, NUM_HEADS, HEAD_DIM
    tm = out_ref.shape[0]          # sampled points in this tile
    rows = tm * K                  # grouped (point, neighbour) rows in this tile
    bf16 = jnp.bfloat16
    f32 = jnp.float32

    # small packed vectors (one (16,128) constant instead of ~12 tiny inputs)
    vecs = vecs_ref[...]
    ln1g, ln1b = vecs[0:1, 0:C], vecs[0:1, C:2 * C]
    ln2g, ln2b = vecs[0:1, 2 * C:3 * C], vecs[0:1, 3 * C:4 * C]
    bproj, bfc2 = vecs[1:2, 0:C], vecs[1:2, C:2 * C]
    bfc1 = vecs[2:3, :]
    pb1 = vecs[3:4, :]
    bns = vecs[4:5, :]
    bnh = vecs[5:6, :]
    bP = vecs[6:7, :]
    pw1s = vecs[7:10, :]           # (3, 128): sum_j W1[3j+c, :]

    def layernorm(t, g, b):
        mu = jnp.mean(t, axis=-1, keepdims=True)
        var = jnp.mean(jnp.square(t - mu), axis=-1, keepdims=True)
        return (t - mu) * jax.lax.rsqrt(var + LN_EPS) * g + b

    xg = x_ref[...]                               # (rows, C) f32 residual (l_feat)
    xn = layernorm(xg, ln1g, ln1b)                # l_norm1

    # ---- positional MLP stage 1: Linear(3K->3C) -> BN(eval) -> ReLU.
    # pos[m,i,3j+c] = xyz[m,j,c] - xyz[m,i,c], so pos @ W1 decomposes exactly as
    # broadcast(xyz_flat @ W1) - xyz @ (sum_j W1[3j+c,:]); the (M,K,3K) tensor is
    # never materialised.  The 3-wide contraction runs as 3 VPU broadcast-FMAs.
    hA = jnp.dot(xyzf_ref[...], pw1a_ref[...], preferred_element_type=f32)    # (tm, 128)
    xyz = xyz_ref[...]                                                        # (rows, 3)
    hB = (xyz[:, 0:1] * pw1s[0:1, :]
          + xyz[:, 1:2] * pw1s[1:2, :]
          + xyz[:, 2:3] * pw1s[2:3, :])                                       # (rows, 128)
    h1 = (hA[:, None, :] - hB.reshape(tm, K, CPAD)).reshape(rows, CPAD) + pb1
    h1 = jnp.maximum(h1 * bns + bnh, 0.0)                                     # BN fold + ReLU

    # ---- fused linears whose output columns are already in attention layout:
    #   A[:,  0: 64] = per head: [q_h | k_h]              (LHS of the score dot)
    #   A[:, 64:128] = per head: [k_h | 0]                (qkv part of RHS)
    #   P[:,  0: 32] = pos_v (h,d)      P[:, 64:128] = per head: [pq_h | pk_h]
    #   V[:,  0: 32] = v (h,d)
    P = jnp.dot(h1.astype(bf16), wP_ref[...], preferred_element_type=f32) + bP
    xnb = xn.astype(bf16)
    A = jnp.dot(xnb, wA_ref[...], preferred_element_type=f32)
    V = jnp.dot(xnb, wV_ref[...], preferred_element_type=f32)

    L3 = A[:, 0:2 * C].reshape(tm, K, 2 * C)                          # [q|k]
    R3 = (A[:, 2 * C:4 * C] + P[:, 2 * C:4 * C]).reshape(tm, K, 2 * C)  # [k+pq|pk]
    W3 = (V + P[:, 0:C]).reshape(tm, K, C)                            # v + pos_v

    gsum = gsum_ref[...]          # (K, 2C, H*K)  per-head e-sum + scale + (h,j) placement
    gexp = gexp_ref[...]          # (K, H*K, C)   (h,j) -> (h,d) broadcast
    gden = gden_ref[...]          # (H*K, C)      softmax denominator, pre-broadcast over d

    # ---- scores for all heads in one (rows, H*K) slab (lane = (head, j))
    S = jnp.zeros((rows, H * K), f32)
    for j in range(K):
        prod = (L3 * R3[:, j:j + 1, :]).reshape(rows, 2 * C)          # (rows, 64)
        S = S + jnp.dot(prod, gsum[j], preferred_element_type=f32)

    # ---- softmax over j: one max, one exp, one matmul-sum, one approx reciprocal.
    # The per-(m,i) row max is a valid stabiliser (constant across j within each head).
    m_row = jnp.max(S, axis=-1, keepdims=True)
    E = jnp.exp(S - m_row)                                            # (rows, H*K)
    denom = jnp.dot(E, gden, preferred_element_type=f32)              # (rows, C) lane=(h,d)
    inv = pl.reciprocal(denom, approx=True)

    # ---- attention-weighted sum over neighbours: attn @ (v + pos_v)
    acc = jnp.zeros((tm, K, C), f32)
    for j in range(K):
        aj = jnp.dot(E, gexp[j], preferred_element_type=f32)          # (rows, C) lane=(h,d)
        acc = acc + aj.reshape(tm, K, C) * W3[:, j:j + 1, :]
    attn_out = acc.reshape(rows, C) * inv

    proj = jnp.dot(attn_out.astype(bf16), wproj_ref[...],
                   preferred_element_type=f32) + bproj
    x1 = xg + proj                                   # residual (drop_path = identity)

    # l_mlp on l_norm2(x1)
    xn2 = layernorm(x1, ln2g, ln2b)
    hm = jnp.dot(xn2.astype(bf16), wfc1_ref[...], preferred_element_type=f32) + bfc1
    hm = jax.nn.gelu(hm, approximate=True)           # tanh GELU -> EUP slot
    mlp = jnp.dot(hm.astype(bf16), wfc2_ref[...], preferred_element_type=f32) + bfc2
    x2 = x1 + mlp                                    # (rows, C)

    out_ref[...] = jnp.max(x2.reshape(tm, K, C), axis=1)   # feats_aggre 'max' over K


def run_triple_attention_local(x_group, knn_xyz, params, tm=TM_DEFAULT):
    """x_group: (M, K, C) grouped feats, knn_xyz: (M, K, 3) neighbour coords -> (M, C)."""
    M, K, C = x_group.shape
    tm = max(8, min(_round_up(tm, 8), _round_up(M, 8)))
    # v7x megacore: make sure the (parallel) grid has >= 2 steps whenever possible.
    if _round_up(M, tm) // tm < 2 and M > 8:
        tm = max(8, _round_up(pl.cdiv(M, 2), 8))
    Mp = _round_up(M, tm)
    if Mp != M:                      # padded rows stay finite and are sliced off
        x_group = jnp.pad(x_group, ((0, Mp - M), (0, 0), (0, 0)))
        knn_xyz = jnp.pad(knn_xyz, ((0, Mp - M), (0, 0), (0, 0)))

    # Centre neighbour coords per sampled point: pairwise differences (the actual
    # positional-encoding input) are unchanged and the in-kernel pos@W1
    # decomposition stays numerically exact for large scene coords.
    knn_c = knn_xyz - knn_xyz[:, :1, :]
    x_flat = x_group.reshape(Mp * K, C).astype(jnp.float32)     # f32 residual stream
    xyz_rows = knn_c.reshape(Mp, K * 3).astype(jnp.float32)
    xyz_flat = knn_c.reshape(Mp * K, 3).astype(jnp.float32)

    p = params
    consts = [p["vecs"], p["pw1a"], p["wA"], p["wV"], p["wP"],
              p["wproj"], p["wfc1"], p["wfc2"], p["gsum"], p["gexp"], p["gden"]]

    def const_spec(a):               # full-block, constant index map -> stays resident
        nd = a.ndim
        return pl.BlockSpec(a.shape, lambda i, _nd=nd: (0,) * _nd)

    in_specs = [
        pl.BlockSpec((tm * K, C), lambda i: (i, 0)),
        pl.BlockSpec((tm, 3 * K), lambda i: (i, 0)),
        pl.BlockSpec((tm * K, 3), lambda i: (i, 0)),
    ] + [const_spec(a) for a in consts]

    out = pl.pallas_call(
        triple_attention_local_kernel,
        out_shape=jax.ShapeDtypeStruct((Mp, C), jnp.float32),
        grid_spec=pltpu.PrefetchScalarGridSpec(
            num_scalar_prefetch=0,
            grid=(Mp // tm,),
            in_specs=in_specs,
            out_specs=pl.BlockSpec((tm, C), lambda i: (i, 0)),
        ),
        compiler_params=pltpu.CompilerParams(
            dimension_semantics=("parallel",),
            vmem_limit_bytes=VMEM_LIMIT_BYTES,
        ),
    )(x_flat, xyz_rows, xyz_flat, *consts)
    return out[:M]


# ------------------------------- plain-JAX glue -------------------------------------
def sampling(p, o, downscale=DOWNSCALE):
    """Furthest point sampling (pointops.furthestsampling), single batch, start at 0.
    NOTE: output count depends on concrete offsets (as in the reference), so `o` must be
    concrete; the FPS loop itself is a jittable lax.fori_loop."""
    n = p.shape[0]
    m = int(o[0]) // downscale + 1

    def body(i, carry):
        dist, cur, idxs = carry
        d = jnp.sum(jnp.square(p - p[cur]), axis=-1)
        dist = jnp.minimum(dist, d)
        nxt = jnp.argmax(dist).astype(jnp.int32)
        return dist, nxt, idxs.at[i].set(nxt)

    dist0 = jnp.full((n,), jnp.inf, jnp.float32)
    idxs0 = jnp.zeros((m,), jnp.int32)
    _, _, idx = jax.lax.fori_loop(1, m, body, (dist0, jnp.int32(0), idxs0))
    n_p = p[idx]
    n_o = jnp.array([m], dtype=jnp.int32)
    return idx, n_p, n_o


def knnquery(nsample, xyz, new_xyz):
    """Brute-force KNN (pointops.knnquery), single batch."""
    d2 = jnp.sum(jnp.square(new_xyz[:, None, :] - xyz[None, :, :]), axis=-1)  # (m, n)
    _, idx = jax.lax.top_k(-d2, nsample)
    return idx.astype(jnp.int32)


def query_group(xyz, feats, idx):
    """QueryGroup(..., local=True) gathers; the pairwise relative-coordinate tensor is
    computed inside the Pallas kernel instead of being materialised here."""
    knn_xyz = xyz[idx]          # (m, K, 3)
    grouped_feat = feats[idx]   # (m, K, C)
    return knn_xyz, grouped_feat


# ------------------------------- parameters -----------------------------------------
def init_raw_params(key):
    """Random params mirroring the nn.Module layout (math (in, out) layout)."""
    C, K3, HID = DIM, 3 * NSAMPLE, HIDDEN
    keys = iter(jax.random.split(key, 24))

    def lin(fan_in, shape):
        bound = 1.0 / (fan_in ** 0.5)
        return jax.random.uniform(next(keys), shape, jnp.float32, -bound, bound)

    return {
        "ln1_g": jnp.ones((C,), jnp.float32), "ln1_b": jnp.zeros((C,), jnp.float32),
        "pos_w1": jnp.stack([lin(K3, (K3, C)) for _ in range(3)]),   # posi_{q,k,v} Linear1 W
        "pos_b1": jnp.stack([lin(K3, (C,)) for _ in range(3)]),
        "bn_g": jnp.ones((3, C), jnp.float32), "bn_b": jnp.zeros((3, C), jnp.float32),
        "bn_rm": jnp.zeros((3, C), jnp.float32), "bn_rv": jnp.ones((3, C), jnp.float32),
        "pos_w2": jnp.stack([lin(C, (C, C)) for _ in range(3)]),     # posi_{q,k,v} Linear2 W
        "pos_b2": jnp.stack([lin(C, (C,)) for _ in range(3)]),
        "w_qkv": lin(C, (C, 3 * C)),                                 # qkv, bias=False
        "w_proj": lin(C, (C, C)), "b_proj": lin(C, (C,)),
        "ln2_g": jnp.ones((C,), jnp.float32), "ln2_b": jnp.zeros((C,), jnp.float32),
        "w_fc1": lin(C, (C, HID)), "b_fc1": lin(C, (HID,)),
        "w_fc2": lin(HID, (HID, C)), "b_fc2": lin(HID, (C,)),
    }


def pack_params(raw):
    """Fuse posi_{q,k,v}, fold BN eval stats, reorder fused-weight columns into the
    attention layout, pack the tiny row vectors, and build the constant lane-plumbing
    matrices used by the in-kernel attention."""
    C, K, H, D, HID, CP = DIM, NSAMPLE, NUM_HEADS, HEAD_DIM, HIDDEN, CPAD
    f32, bf16 = jnp.float32, jnp.bfloat16

    # fused posi Linear1: (3K, 3C) padded to (3K, 128); column blocks [q | k | v | 0]
    pw1 = jnp.concatenate([raw["pos_w1"][i] for i in range(3)], axis=1)       # (24, 96)
    pw1a = jnp.pad(pw1, ((0, 0), (0, CP - 3 * C))).astype(f32)                # (24, 128)
    pw1s = pw1a.reshape(K, 3, CP).sum(axis=0)                                 # (3, 128)
    pb1 = jnp.pad(jnp.concatenate([raw["pos_b1"][i] for i in range(3)]), (0, CP - 3 * C))

    # BatchNorm1d (eval) fold: y = x * s + h
    s = raw["bn_g"] / jnp.sqrt(raw["bn_rv"] + BN_EPS)
    hsh = raw["bn_b"] - raw["bn_rm"] * s
    bns = jnp.pad(s.reshape(-1), (0, CP - 3 * C))
    bnh = jnp.pad(hsh.reshape(-1), (0, CP - 3 * C))

    # fused posi Linear2 (W_P): input = h1 blocks [q|k|v|pad], output columns:
    #   [0:32]  pos_v (h,d);   [32:64] zeros;   [64:128] per head [pq_h | pk_h]
    wP = jnp.zeros((CP, CP), f32)
    bP = jnp.zeros((CP,), f32)
    for hh in range(H):
        src = slice(hh * D, (hh + 1) * D)
        dst_q = 2 * C + hh * 2 * D
        dst_k = 2 * C + hh * 2 * D + D
        dst_v = hh * D
        wP = wP.at[0:C, dst_q:dst_q + D].set(raw["pos_w2"][0][:, src])
        wP = wP.at[C:2 * C, dst_k:dst_k + D].set(raw["pos_w2"][1][:, src])
        wP = wP.at[2 * C:3 * C, dst_v:dst_v + D].set(raw["pos_w2"][2][:, src])
        bP = bP.at[dst_q:dst_q + D].set(raw["pos_b2"][0][src])
        bP = bP.at[dst_k:dst_k + D].set(raw["pos_b2"][1][src])
        bP = bP.at[dst_v:dst_v + D].set(raw["pos_b2"][2][src])

    # fused qkv (bias-free) in attention layout:
    #   wA cols [0:64]   = per head [q_h | k_h]      (LHS)
    #   wA cols [64:128] = per head [k_h | 0]        (qkv part of RHS)
    #   wV cols [0:32]   = v (h,d)
    wq = raw["w_qkv"][:, 0:C]
    wk = raw["w_qkv"][:, C:2 * C]
    wv = raw["w_qkv"][:, 2 * C:3 * C]
    wA = jnp.zeros((C, CP), f32)
    for hh in range(H):
        src = slice(hh * D, (hh + 1) * D)
        wA = wA.at[:, hh * 2 * D: hh * 2 * D + D].set(wq[:, src])
        wA = wA.at[:, hh * 2 * D + D: (hh + 1) * 2 * D].set(wk[:, src])
        wA = wA.at[:, 2 * C + hh * 2 * D: 2 * C + hh * 2 * D + D].set(wk[:, src])
    wV = wv

    # attention lane-plumbing constants (score scale folded into gsum)
    scale = float(D) ** -0.5
    gsum = np.zeros((K, 2 * C, H * K), np.float32)     # (h,e)->(h,j) per-head e-sum
    gexp = np.zeros((K, H * K, C), np.float32)         # (h,j)->(h,d) broadcast over d
    for j in range(K):
        for hh in range(H):
            gsum[j, hh * 2 * D:(hh + 1) * 2 * D, hh * K + j] = scale
            gexp[j, hh * K + j, hh * D:(hh + 1) * D] = 1.0
    gden = gexp.sum(axis=0)                            # (H*K, C) softmax denominator map

    # pack the small row vectors into one (16, 128) constant
    vecs = jnp.zeros((16, CP), f32)
    vecs = vecs.at[0, 0:C].set(raw["ln1_g"])
    vecs = vecs.at[0, C:2 * C].set(raw["ln1_b"])
    vecs = vecs.at[0, 2 * C:3 * C].set(raw["ln2_g"])
    vecs = vecs.at[0, 3 * C:4 * C].set(raw["ln2_b"])
    vecs = vecs.at[1, 0:C].set(raw["b_proj"])
    vecs = vecs.at[1, C:2 * C].set(raw["b_fc2"])
    vecs = vecs.at[2, 0:HID].set(raw["b_fc1"])
    vecs = vecs.at[3, :].set(pb1)
    vecs = vecs.at[4, :].set(bns)
    vecs = vecs.at[5, :].set(bnh)
    vecs = vecs.at[6, :].set(bP)
    vecs = vecs.at[7:10, :].set(pw1s)

    return {
        "vecs": vecs,
        "pw1a": pw1a,
        "wA": wA.astype(bf16),
        "wV": wV.astype(bf16),
        "wP": wP.astype(bf16),
        "wproj": raw["w_proj"].astype(bf16),
        "wfc1": raw["w_fc1"].astype(bf16),
        "wfc2": raw["w_fc2"].astype(bf16),
        "gsum": jnp.asarray(gsum),
        "gexp": jnp.asarray(gexp),
        "gden": jnp.asarray(gden),
    }


# ------------------------------- BasicBlock forward ----------------------------------
def basic_block_forward(pxo, params, downscale=DOWNSCALE, nsample=NSAMPLE):
    p, x, o = pxo
    # Sampling(p, o, downscale) + pointops.knnquery(nsample, p, n_p, o, n_o)
    _, n_p, n_o = sampling(p, o, downscale)
    knn_idx = knnquery(nsample, p, n_p)

    # depth = 1 TripleAttention block, local (LGA) branch + 'max' aggregation.
    knn_xyz, x_group = query_group(p, x, knn_idx)
    x_out = run_triple_attention_local(x_group, knn_xyz, params)

    # downsample=None in this configuration
    return x_out, p, o, None, None, None


# --------------------------------------- main ----------------------------------------
if __name__ == "__main__":
    key = jax.random.PRNGKey(0)
    kp, kx, kw = jax.random.split(key, 3)
    N = 200                                   # -> M = N//8 + 1 = 26 sampled points
    p = jax.random.normal(kp, (N, 3), jnp.float32)
    x = jax.random.normal(kx, (N, DIM), jnp.float32)
    o = jnp.array([N], dtype=jnp.int32)

    params = pack_params(init_raw_params(kw))
    feats, xyz, offset, fd, xd, od = basic_block_forward((p, x, o), params)
    feats = jax.block_until_ready(feats)
    M = N // DOWNSCALE + 1
    assert feats.shape == (M, DIM)
    assert bool(jnp.all(jnp.isfinite(feats)))
    print("KERNEL_OK")
</pallas_src>

<mosaic_0001>
module attributes {stable_mosaic.version = 11 : i64} {
  func.func @triple_attention_local_kernel(%arg0: i32, %arg1: memref<128x32xf32, #tpu.memory_space<vmem>>, %arg2: memref<16x24xf32, #tpu.memory_space<vmem>>, %arg3: memref<128x3xf32, #tpu.memory_space<vmem>>, %arg4: memref<16x128xf32, #tpu.memory_space<vmem>>, %arg5: memref<24x128xf32, #tpu.memory_space<vmem>>, %arg6: memref<32x128xbf16, #tpu.memory_space<vmem>>, %arg7: memref<32x32xbf16, #tpu.memory_space<vmem>>, %arg8: memref<128x128xbf16, #tpu.memory_space<vmem>>, %arg9: memref<32x32xbf16, #tpu.memory_space<vmem>>, %arg10: memref<32x128xbf16, #tpu.memory_space<vmem>>, %arg11: memref<128x32xbf16, #tpu.memory_space<vmem>>, %arg12: memref<8x64x32xf32, #tpu.memory_space<vmem>>, %arg13: memref<8x32x32xf32, #tpu.memory_space<vmem>>, %arg14: memref<32x32xf32, #tpu.memory_space<vmem>>, %arg15: memref<16x32xf32, #tpu.memory_space<vmem>>) attributes {dimension_semantics = [#tpu.dimension_semantics<parallel>], iteration_bounds = array<i64: 2>, scalar_prefetch = 0 : i64, scratch_operands = 0 : i64, tpu.core_type = #tpu.core_type<tc>, window_params = [{transform_indices = @transform_0, window_bounds = array<i64: 128, 32>}, {transform_indices = @transform_1, window_bounds = array<i64: 16, 24>}, {transform_indices = @transform_2, window_bounds = array<i64: 128, 3>}, {pipeline_mode = #tpu.pipeline_mode<synchronous>, transform_indices = @transform_3, window_bounds = array<i64: 16, 128>}, {pipeline_mode = #tpu.pipeline_mode<synchronous>, transform_indices = @transform_4, window_bounds = array<i64: 24, 128>}, {pipeline_mode = #tpu.pipeline_mode<synchronous>, transform_indices = @transform_5, window_bounds = array<i64: 32, 128>}, {pipeline_mode = #tpu.pipeline_mode<synchronous>, transform_indices = @transform_6, window_bounds = array<i64: 32, 32>}, {pipeline_mode = #tpu.pipeline_mode<synchronous>, transform_indices = @transform_7, window_bounds = array<i64: 128, 128>}, {pipeline_mode = #tpu.pipeline_mode<synchronous>, transform_indices = @transform_8, window_bounds = array<i64: 32, 32>}, {pipeline_mode = #tpu.pipeline_mode<synchronous>, transform_indices = @transform_9, window_bounds = array<i64: 32, 128>}, {pipeline_mode = #tpu.pipeline_mode<synchronous>, transform_indices = @transform_10, window_bounds = array<i64: 128, 32>}, {pipeline_mode = #tpu.pipeline_mode<synchronous>, transform_indices = @transform_11, window_bounds = array<i64: 8, 64, 32>}, {pipeline_mode = #tpu.pipeline_mode<synchronous>, transform_indices = @transform_12, window_bounds = array<i64: 8, 32, 32>}, {pipeline_mode = #tpu.pipeline_mode<synchronous>, transform_indices = @transform_13, window_bounds = array<i64: 32, 32>}, {transform_indices = @transform_14, window_bounds = array<i64: 16, 32>}]} {
    %c0 = arith.constant 0 : index
    %c0_0 = arith.constant 0 : index
    %0 = vector.load %arg4[%c0, %c0_0] : memref<16x128xf32, #tpu.memory_space<vmem>>, vector<16x128xf32>
    %1 = vector.extract_strided_slice %0 {offsets = [0, 0], sizes = [1, 32], strides = [1, 1]} : vector<16x128xf32> to vector<1x32xf32>
    %2 = vector.extract_strided_slice %0 {offsets = [0, 32], sizes = [1, 32], strides = [1, 1]} : vector<16x128xf32> to vector<1x32xf32>
    %3 = vector.extract_strided_slice %0 {offsets = [0, 64], sizes = [1, 32], strides = [1, 1]} : vector<16x128xf32> to vector<1x32xf32>
    %4 = vector.extract_strided_slice %0 {offsets = [0, 96], sizes = [1, 32], strides = [1, 1]} : vector<16x128xf32> to vector<1x32xf32>
    %5 = vector.extract_strided_slice %0 {offsets = [1, 0], sizes = [1, 32], strides = [1, 1]} : vector<16x128xf32> to vector<1x32xf32>
    %6 = vector.extract_strided_slice %0 {offsets = [1, 32], sizes = [1, 32], strides = [1, 1]} : vector<16x128xf32> to vector<1x32xf32>
    %7 = vector.extract_strided_slice %0 {offsets = [2, 0], sizes = [1, 128], strides = [1, 1]} : vector<16x128xf32> to vector<1x128xf32>
    %8 = vector.extract_strided_slice %0 {offsets = [3, 0], sizes = [1, 128], strides = [1, 1]} : vector<16x128xf32> to vector<1x128xf32>
    %9 = vector.extract_strided_slice %0 {offsets = [4, 0], sizes = [1, 128], strides = [1, 1]} : vector<16x128xf32> to vector<1x128xf32>
    %10 = vector.extract_strided_slice %0 {offsets = [5, 0], sizes = [1, 128], strides = [1, 1]} : vector<16x128xf32> to vector<1x128xf32>
    %11 = vector.extract_strided_slice %0 {offsets = [6, 0], sizes = [1, 128], strides = [1, 1]} : vector<16x128xf32> to vector<1x128xf32>
    %12 = vector.extract_strided_slice %0 {offsets = [7, 0], sizes = [3, 128], strides = [1, 1]} : vector<16x128xf32> to vector<3x128xf32>
    %c0_1 = arith.constant 0 : index
    %c0_2 = arith.constant 0 : index
    %13 = vector.load %arg1[%c0_1, %c0_2] : memref<128x32xf32, #tpu.memory_space<vmem>>, vector<128x32xf32>
    %cst = arith.constant dense<0.000000e+00> : vector<128xf32>
    %14 = vector.multi_reduction <add>, %13, %cst [1] : vector<128x32xf32> to vector<128xf32>
    %15 = vector.shape_cast %14 : vector<128xf32> to vector<128x1xf32>
    %cst_3 = arith.constant 3.200000e+01 : f32
    %16 = vector.broadcast %cst_3 : f32 to vector<128x1xf32>
    %17 = arith.divf %15, %16 : vector<128x1xf32>
    %18 = vector.broadcast %17 : vector<128x1xf32> to vector<128x32xf32>
    %19 = arith.subf %13, %18 : vector<128x32xf32>
    %20 = arith.mulf %19, %19 : vector<128x32xf32>
    %cst_4 = arith.constant dense<0.000000e+00> : vector<128xf32>
    %21 = vector.multi_reduction <add>, %20, %cst_4 [1] : vector<128x32xf32> to vector<128xf32>
    %22 = vector.shape_cast %21 : vector<128xf32> to vector<128x1xf32>
    %cst_5 = arith.constant 3.200000e+01 : f32
    %23 = vector.broadcast %cst_5 : f32 to vector<128x1xf32>
    %24 = arith.divf %22, %23 : vector<128x1xf32>
    %25 = vector.broadcast %17 : vector<128x1xf32> to vector<128x32xf32>
    %26 = arith.subf %13, %25 : vector<128x32xf32>
    %cst_6 = arith.constant 9.99999974E-6 : f32
    %27 = vector.broadcast %cst_6 : f32 to vector<128x1xf32>
    %28 = arith.addf %24, %27 : vector<128x1xf32>
    %29 = math.rsqrt %28 : vector<128x1xf32>
    %30 = vector.broadcast %29 : vector<128x1xf32> to vector<128x32xf32>
    %31 = arith.mulf %26, %30 : vector<128x32xf32>
    %32 = vector.broadcast %1 : vector<1x32xf32> to vector<128x32xf32>
    %33 = arith.mulf %31, %32 : vector<128x32xf32>
    %34 = vector.broadcast %2 : vector<1x32xf32> to vector<128x32xf32>
    %35 = arith.addf %33, %34 : vector<128x32xf32>
    %c0_7 = arith.constant 0 : index
    %c0_8 = arith.constant 0 : index
    %36 = vector.load %arg2[%c0_7, %c0_8] : memref<16x24xf32, #tpu.memory_space<vmem>>, vector<16x24xf32>
    %c0_9 = arith.constant 0 : index
    %c0_10 = arith.constant 0 : index
    %37 = vector.load %arg5[%c0_9, %c0_10] : memref<24x128xf32, #tpu.memory_space<vmem>>, vector<24x128xf32>
    %cst_11 = arith.constant dense<0.000000e+00> : vector<16x128xf32>
    %38 = tpu.matmul %36, %37, %cst_11 {dimension_numbers = #tpu.dot_dimension_numbers<[1], [0], [0], [1], [0, 0, 1, 1], [], []>} : vector<16x24xf32>, vector<24x128xf32>, vector<16x128xf32> -> vector<16x128xf32>
    %c0_12 = arith.constant 0 : index
    %c0_13 = arith.constant 0 : index
    %39 = vector.load %arg3[%c0_12, %c0_13] : memref<128x3xf32, #tpu.memory_space<vmem>>, vector<128x3xf32>
    %40 = vector.extract_strided_slice %39 {offsets = [0, 0], sizes = [128, 1], strides = [1, 1]} : vector<128x3xf32> to vector<128x1xf32>
    %41 = vector.extract_strided_slice %12 {offsets = [0, 0], sizes = [1, 128], strides = [1, 1]} : vector<3x128xf32> to vector<1x128xf32>
    %42 = vector.broadcast %40 : vector<128x1xf32> to vector<128x128xf32>
    %43 = vector.broadcast %41 : vector<1x128xf32> to vector<128x128xf32>
    %44 = arith.mulf %42, %43 : vector<128x128xf32>
    %45 = vector.extract_strided_slice %39 {offsets = [0, 1], sizes = [128, 1], strides = [1, 1]} : vector<128x3xf32> to vector<128x1xf32>
    %46 = vector.extract_strided_slice %12 {offsets = [1, 0], sizes = [1, 128], strides = [1, 1]} : vector<3x128xf32> to vector<1x128xf32>
    %47 = vector.broadcast %45 : vector<128x1xf32> to vector<128x128xf32>
    %48 = vector.broadcast %46 : vector<1x128xf32> to vector<128x128xf32>
    %49 = arith.mulf %47, %48 : vector<128x128xf32>
    %50 = arith.addf %44, %49 : vector<128x128xf32>
    %51 = vector.extract_strided_slice %39 {offsets = [0, 2], sizes = [128, 1], strides = [1, 1]} : vector<128x3xf32> to vector<128x1xf32>
    %52 = vector.extract_strided_slice %12 {offsets = [2, 0], sizes = [1, 128], strides = [1, 1]} : vector<3x128xf32> to vector<1x128xf32>
    %53 = vector.broadcast %51 : vector<128x1xf32> to vector<128x128xf32>
    %54 = vector.broadcast %52 : vector<1x128xf32> to vector<128x128xf32>
    %55 = arith.mulf %53, %54 : vector<128x128xf32>
    %56 = arith.addf %50, %55 : vector<128x128xf32>
    %57 = vector.shape_cast %38 : vector<16x128xf32> to vector<16x1x128xf32>
    %58 = vector.shape_cast %56 : vector<128x128xf32> to vector<16x8x128xf32>
    %59 = vector.broadcast %57 : vector<16x1x128xf32> to vector<16x8x128xf32>
    %60 = arith.subf %59, %58 : vector<16x8x128xf32>
    %61 = vector.shape_cast %60 : vector<16x8x128xf32> to vector<128x128xf32>
    %62 = vector.broadcast %8 : vector<1x128xf32> to vector<128x128xf32>
    %63 = arith.addf %61, %62 : vector<128x128xf32>
    %64 = vector.broadcast %9 : vector<1x128xf32> to vector<128x128xf32>
    %65 = arith.mulf %63, %64 : vector<128x128xf32>
    %66 = vector.broadcast %10 : vector<1x128xf32> to vector<128x128xf32>
    %67 = arith.addf %65, %66 : vector<128x128xf32>
    %cst_14 = arith.constant 0.000000e+00 : f32
    %68 = vector.broadcast %cst_14 : f32 to vector<128x128xf32>
    %69 = arith.maximumf %67, %68 : vector<128x128xf32>
    %70 = arith.truncf %69 : vector<128x128xf32> to vector<128x128xbf16>
    %c0_15 = arith.constant 0 : index
    %c0_16 = arith.constant 0 : index
    %71 = vector.load %arg8[%c0_15, %c0_16] : memref<128x128xbf16, #tpu.memory_space<vmem>>, vector<128x128xbf16>
    %cst_17 = arith.constant dense<0.000000e+00> : vector<128x128xf32>
    %72 = tpu.matmul %70, %71, %cst_17 {dimension_numbers = #tpu.dot_dimension_numbers<[1], [0], [0], [1], [0, 0, 1, 1], [], []>} : vector<128x128xbf16>, vector<128x128xbf16>, vector<128x128xf32> -> vector<128x128xf32>
    %73 = vector.broadcast %11 : vector<1x128xf32> to vector<128x128xf32>
    %74 = arith.addf %72, %73 : vector<128x128xf32>
    %75 = arith.truncf %35 : vector<128x32xf32> to vector<128x32xbf16>
    %c0_18 = arith.constant 0 : index
    %c0_19 = arith.constant 0 : index
    %76 = vector.load %arg6[%c0_18, %c0_19] : memref<32x128xbf16, #tpu.memory_space<vmem>>, vector<32x128xbf16>
    %cst_20 = arith.constant dense<0.000000e+00> : vector<128x128xf32>
    %77 = tpu.matmul %75, %76, %cst_20 {dimension_numbers = #tpu.dot_dimension_numbers<[1], [0], [0], [1], [0, 0, 1, 1], [], []>} : vector<128x32xbf16>, vector<32x128xbf16>, vector<128x128xf32> -> vector<128x128xf32>
    %c0_21 = arith.constant 0 : index
    %c0_22 = arith.constant 0 : index
    %78 = vector.load %arg7[%c0_21, %c0_22] : memref<32x32xbf16, #tpu.memory_space<vmem>>, vector<32x32xbf16>
    %cst_23 = arith.constant dense<0.000000e+00> : vector<128x32xf32>
    %79 = tpu.matmul %75, %78, %cst_23 {dimension_numbers = #tpu.dot_dimension_numbers<[1], [0], [0], [1], [0, 0, 1, 1], [], []>} : vector<128x32xbf16>, vector<32x32xbf16>, vector<128x32xf32> -> vector<128x32xf32>
    %80 = vector.extract_strided_slice %77 {offsets = [0, 0], sizes = [128, 64], strides = [1, 1]} : vector<128x128xf32> to vector<128x64xf32>
    %81 = vector.shape_cast %80 : vector<128x64xf32> to vector<16x8x64xf32>
    %82 = vector.extract_strided_slice %77 {offsets = [0, 64], sizes = [128, 64], strides = [1, 1]} : vector<128x128xf32> to vector<128x64xf32>
    %83 = vector.extract_strided_slice %74 {offsets = [0, 64], sizes = [128, 64], strides = [1, 1]} : vector<128x128xf32> to vector<128x64xf32>
    %84 = arith.addf %82, %83 : vector<128x64xf32>
    %85 = vector.shape_cast %84 : vector<128x64xf32> to vector<16x8x64xf32>
    %86 = vector.extract_strided_slice %74 {offsets = [0, 0], sizes = [128, 32], strides = [1, 1]} : vector<128x128xf32> to vector<128x32xf32>
    %87 = arith.addf %79, %86 : vector<128x32xf32>
    %88 = vector.shape_cast %87 : vector<128x32xf32> to vector<16x8x32xf32>
    %c0_24 = arith.constant 0 : index
    %c0_25 = arith.constant 0 : index
    %c0_26 = arith.constant 0 : index
    %89 = vector.load %arg12[%c0_24, %c0_25, %c0_26] : memref<8x64x32xf32, #tpu.memory_space<vmem>>, vector<8x64x32xf32>
    %c0_27 = arith.constant 0 : index
    %c0_28 = arith.constant 0 : index
    %c0_29 = arith.constant 0 : index
    %90 = vector.load %arg13[%c0_27, %c0_28, %c0_29] : memref<8x32x32xf32, #tpu.memory_space<vmem>>, vector<8x32x32xf32>
    %c0_30 = arith.constant 0 : index
    %c0_31 = arith.constant 0 : index
    %91 = vector.load %arg14[%c0_30, %c0_31] : memref<32x32xf32, #tpu.memory_space<vmem>>, vector<32x32xf32>
    %cst_32 = arith.constant 0.000000e+00 : f32
    %92 = vector.broadcast %cst_32 : f32 to vector<128x32xf32>
    %93 = vector.extract_strided_slice %85 {offsets = [0, 0, 0], sizes = [16, 1, 64], strides = [1, 1, 1]} : vector<16x8x64xf32> to vector<16x1x64xf32>
    %94 = vector.broadcast %93 : vector<16x1x64xf32> to vector<16x8x64xf32>
    %95 = arith.mulf %81, %94 : vector<16x8x64xf32>
    %96 = vector.shape_cast %95 : vector<16x8x64xf32> to vector<128x64xf32>
    %97 = vector.extract_strided_slice %89 {offsets = [0, 0, 0], sizes = [1, 64, 32], strides = [1, 1, 1]} : vector<8x64x32xf32> to vector<1x64x32xf32>
    %98 = vector.shape_cast %97 : vector<1x64x32xf32> to vector<64x32xf32>
    %cst_33 = arith.constant dense<0.000000e+00> : vector<128x32xf32>
    %99 = tpu.matmul %96, %98, %cst_33 {dimension_numbers = #tpu.dot_dimension_numbers<[1], [0], [0], [1], [0, 0, 1, 1], [], []>} : vector<128x64xf32>, vector<64x32xf32>, vector<128x32xf32> -> vector<128x32xf32>
    %100 = arith.addf %92, %99 : vector<128x32xf32>
    %101 = vector.extract_strided_slice %85 {offsets = [0, 1, 0], sizes = [16, 1, 64], strides = [1, 1, 1]} : vector<16x8x64xf32> to vector<16x1x64xf32>
    %102 = vector.broadcast %101 : vector<16x1x64xf32> to vector<16x8x64xf32>
    %103 = arith.mulf %81, %102 : vector<16x8x64xf32>
    %104 = vector.shape_cast %103 : vector<16x8x64xf32> to vector<128x64xf32>
    %105 = vector.extract_strided_slice %89 {offsets = [1, 0, 0], sizes = [1, 64, 32], strides = [1, 1, 1]} : vector<8x64x32xf32> to vector<1x64x32xf32>
    %106 = vector.shape_cast %105 : vector<1x64x32xf32> to vector<64x32xf32>
    %cst_34 = arith.constant dense<0.000000e+00> : vector<128x32xf32>
    %107 = tpu.matmul %104, %106, %cst_34 {dimension_numbers = #tpu.dot_dimension_numbers<[1], [0], [0], [1], [0, 0, 1, 1], [], []>} : vector<128x64xf32>, vector<64x32xf32>, vector<128x32xf32> -> vector<128x32xf32>
    %108 = arith.addf %100, %107 : vector<128x32xf32>
    %109 = vector.extract_strided_slice %85 {offsets = [0, 2, 0], sizes = [16, 1, 64], strides = [1, 1, 1]} : vector<16x8x64xf32> to vector<16x1x64xf32>
    %110 = vector.broadcast %109 : vector<16x1x64xf32> to vector<16x8x64xf32>
    %111 = arith.mulf %81, %110 : vector<16x8x64xf32>
    %112 = vector.shape_cast %111 : vector<16x8x64xf32> to vector<128x64xf32>
    %113 = vector.extract_strided_slice %89 {offsets = [2, 0, 0], sizes = [1, 64, 32], strides = [1, 1, 1]} : vector<8x64x32xf32> to vector<1x64x32xf32>
    %114 = vector.shape_cast %113 : vector<1x64x32xf32> to vector<64x32xf32>
    %cst_35 = arith.constant dense<0.000000e+00> : vector<128x32xf32>
    %115 = tpu.matmul %112, %114, %cst_35 {dimension_numbers = #tpu.dot_dimension_numbers<[1], [0], [0], [1], [0, 0, 1, 1], [], []>} : vector<128x64xf32>, vector<64x32xf32>, vector<128x32xf32> -> vector<128x32xf32>
    %116 = arith.addf %108, %115 : vector<128x32xf32>
    %117 = vector.extract_strided_slice %85 {offsets = [0, 3, 0], sizes = [16, 1, 64], strides = [1, 1, 1]} : vector<16x8x64xf32> to vector<16x1x64xf32>
    %118 = vector.broadcast %117 : vector<16x1x64xf32> to vector<16x8x64xf32>
    %119 = arith.mulf %81, %118 : vector<16x8x64xf32>
    %120 = vector.shape_cast %119 : vector<16x8x64xf32> to vector<128x64xf32>
    %121 = vector.extract_strided_slice %89 {offsets = [3, 0, 0], sizes = [1, 64, 32], strides = [1, 1, 1]} : vector<8x64x32xf32> to vector<1x64x32xf32>
    %122 = vector.shape_cast %121 : vector<1x64x32xf32> to vector<64x32xf32>
    %cst_36 = arith.constant dense<0.000000e+00> : vector<128x32xf32>
    %123 = tpu.matmul %120, %122, %cst_36 {dimension_numbers = #tpu.dot_dimension_numbers<[1], [0], [0], [1], [0, 0, 1, 1], [], []>} : vector<128x64xf32>, vector<64x32xf32>, vector<128x32xf32> -> vector<128x32xf32>
    %124 = arith.addf %116, %123 : vector<128x32xf32>
    %125 = vector.extract_strided_slice %85 {offsets = [0, 4, 0], sizes = [16, 1, 64], strides = [1, 1, 1]} : vector<16x8x64xf32> to vector<16x1x64xf32>
    %126 = vector.broadcast %125 : vector<16x1x64xf32> to vector<16x8x64xf32>
    %127 = arith.mulf %81, %126 : vector<16x8x64xf32>
    %128 = vector.shape_cast %127 : vector<16x8x64xf32> to vector<128x64xf32>
    %129 = vector.extract_strided_slice %89 {offsets = [4, 0, 0], sizes = [1, 64, 32], strides = [1, 1, 1]} : vector<8x64x32xf32> to vector<1x64x32xf32>
    %130 = vector.shape_cast %129 : vector<1x64x32xf32> to vector<64x32xf32>
    %cst_37 = arith.constant dense<0.000000e+00> : vector<128x32xf32>
    %131 = tpu.matmul %128, %130, %cst_37 {dimension_numbers = #tpu.dot_dimension_numbers<[1], [0], [0], [1], [0, 0, 1, 1], [], []>} : vector<128x64xf32>, vector<64x32xf32>, vector<128x32xf32> -> vector<128x32xf32>
    %132 = arith.addf %124, %131 : vector<128x32xf32>
    %133 = vector.extract_strided_slice %85 {offsets = [0, 5, 0], sizes = [16, 1, 64], strides = [1, 1, 1]} : vector<16x8x64xf32> to vector<16x1x64xf32>
    %134 = vector.broadcast %133 : vector<16x1x64xf32> to vector<16x8x64xf32>
    %135 = arith.mulf %81, %134 : vector<16x8x64xf32>
    %136 = vector.shape_cast %135 : vector<16x8x64xf32> to vector<128x64xf32>
    %137 = vector.extract_strided_slice %89 {offsets = [5, 0, 0], sizes = [1, 64, 32], strides = [1, 1, 1]} : vector<8x64x32xf32> to vector<1x64x32xf32>
    %138 = vector.shape_cast %137 : vector<1x64x32xf32> to vector<64x32xf32>
    %cst_38 = arith.constant dense<0.000000e+00> : vector<128x32xf32>
    %139 = tpu.matmul %136, %138, %cst_38 {dimension_numbers = #tpu.dot_dimension_numbers<[1], [0], [0], [1], [0, 0, 1, 1], [], []>} : vector<128x64xf32>, vector<64x32xf32>, vector<128x32xf32> -> vector<128x32xf32>
    %140 = arith.addf %132, %139 : vector<128x32xf32>
    %141 = vector.extract_strided_slice %85 {offsets = [0, 6, 0], sizes = [16, 1, 64], strides = [1, 1, 1]} : vector<16x8x64xf32> to vector<16x1x64xf32>
    %142 = vector.broadcast %141 : vector<16x1x64xf32> to vector<16x8x64xf32>
    %143 = arith.mulf %81, %142 : vector<16x8x64xf32>
    %144 = vector.shape_cast %143 : vector<16x8x64xf32> to vector<128x64xf32>
    %145 = vector.extract_strided_slice %89 {offsets = [6, 0, 0], sizes = [1, 64, 32], strides = [1, 1, 1]} : vector<8x64x32xf32> to vector<1x64x32xf32>
    %146 = vector.shape_cast %145 : vector<1x64x32xf32> to vector<64x32xf32>
    %cst_39 = arith.constant dense<0.000000e+00> : vector<128x32xf32>
    %147 = tpu.matmul %144, %146, %cst_39 {dimension_numbers = #tpu.dot_dimension_numbers<[1], [0], [0], [1], [0, 0, 1, 1], [], []>} : vector<128x64xf32>, vector<64x32xf32>, vector<128x32xf32> -> vector<128x32xf32>
    %148 = arith.addf %140, %147 : vector<128x32xf32>
    %149 = vector.extract_strided_slice %85 {offsets = [0, 7, 0], sizes = [16, 1, 64], strides = [1, 1, 1]} : vector<16x8x64xf32> to vector<16x1x64xf32>
    %150 = vector.broadcast %149 : vector<16x1x64xf32> to vector<16x8x64xf32>
    %151 = arith.mulf %81, %150 : vector<16x8x64xf32>
    %152 = vector.shape_cast %151 : vector<16x8x64xf32> to vector<128x64xf32>
    %153 = vector.extract_strided_slice %89 {offsets = [7, 0, 0], sizes = [1, 64, 32], strides = [1, 1, 1]} : vector<8x64x32xf32> to vector<1x64x32xf32>
    %154 = vector.shape_cast %153 : vector<1x64x32xf32> to vector<64x32xf32>
    %cst_40 = arith.constant dense<0.000000e+00> : vector<128x32xf32>
    %155 = tpu.matmul %152, %154, %cst_40 {dimension_numbers = #tpu.dot_dimension_numbers<[1], [0], [0], [1], [0, 0, 1, 1], [], []>} : vector<128x64xf32>, vector<64x32xf32>, vector<128x32xf32> -> vector<128x32xf32>
    %156 = arith.addf %148, %155 : vector<128x32xf32>
    %cst_41 = arith.constant dense<0xFF800000> : vector<128xf32>
    %157 = vector.multi_reduction <maximumf>, %156, %cst_41 [1] : vector<128x32xf32> to vector<128xf32>
    %158 = vector.shape_cast %157 : vector<128xf32> to vector<128x1xf32>
    %159 = vector.broadcast %158 : vector<128x1xf32> to vector<128x32xf32>
    %160 = arith.subf %156, %159 : vector<128x32xf32>
    %161 = math.exp %160 : vector<128x32xf32>
    %cst_42 = arith.constant dense<0.000000e+00> : vector<128x32xf32>
    %162 = tpu.matmul %161, %91, %cst_42 {dimension_numbers = #tpu.dot_dimension_numbers<[1], [0], [0], [1], [0, 0, 1, 1], [], []>} : vector<128x32xf32>, vector<32x32xf32>, vector<128x32xf32> -> vector<128x32xf32>
    %163 = tpu.reciprocal %162 {approx = true} : vector<128x32xf32> -> vector<128x32xf32>
    %cst_43 = arith.constant 0.000000e+00 : f32
    %164 = vector.broadcast %cst_43 : f32 to vector<16x8x32xf32>
    %165 = vector.extract_strided_slice %90 {offsets = [0, 0, 0], sizes = [1, 32, 32], strides = [1, 1, 1]} : vector<8x32x32xf32> to vector<1x32x32xf32>
    %166 = vector.shape_cast %165 : vector<1x32x32xf32> to vector<32x32xf32>
    %cst_44 = arith.constant dense<0.000000e+00> : vector<128x32xf32>
    %167 = tpu.matmul %161, %166, %cst_44 {dimension_numbers = #tpu.dot_dimension_numbers<[1], [0], [0], [1], [0, 0, 1, 1], [], []>} : vector<128x32xf32>, vector<32x32xf32>, vector<128x32xf32> -> vector<128x32xf32>
    %168 = vector.shape_cast %167 : vector<128x32xf32> to vector<16x8x32xf32>
    %169 = vector.extract_strided_slice %88 {offsets = [0, 0, 0], sizes = [16, 1, 32], strides = [1, 1, 1]} : vector<16x8x32xf32> to vector<16x1x32xf32>
    %170 = vector.broadcast %169 : vector<16x1x32xf32> to vector<16x8x32xf32>
    %171 = arith.mulf %168, %170 : vector<16x8x32xf32>
    %172 = arith.addf %164, %171 : vector<16x8x32xf32>
    %173 = vector.extract_strided_slice %90 {offsets = [1, 0, 0], sizes = [1, 32, 32], strides = [1, 1, 1]} : vector<8x32x32xf32> to vector<1x32x32xf32>
    %174 = vector.shape_cast %173 : vector<1x32x32xf32> to vector<32x32xf32>
    %cst_45 = arith.constant dense<0.000000e+00> : vector<128x32xf32>
    %175 = tpu.matmul %161, %174, %cst_45 {dimension_numbers = #tpu.dot_dimension_numbers<[1], [0], [0], [1], [0, 0, 1, 1], [], []>} : vector<128x32xf32>, vector<32x32xf32>, vector<128x32xf32> -> vector<128x32xf32>
    %176 = vector.shape_cast %175 : vector<128x32xf32> to vector<16x8x32xf32>
    %177 = vector.extract_strided_slice %88 {offsets = [0, 1, 0], sizes = [16, 1, 32], strides = [1, 1, 1]} : vector<16x8x32xf32> to vector<16x1x32xf32>
    %178 = vector.broadcast %177 : vector<16x1x32xf32> to vector<16x8x32xf32>
    %179 = arith.mulf %176, %178 : vector<16x8x32xf32>
    %180 = arith.addf %172, %179 : vector<16x8x32xf32>
    %181 = vector.extract_strided_slice %90 {offsets = [2, 0, 0], sizes = [1, 32, 32], strides = [1, 1, 1]} : vector<8x32x32xf32> to vector<1x32x32xf32>
    %182 = vector.shape_cast %181 : vector<1x32x32xf32> to vector<32x32xf32>
    %cst_46 = arith.constant dense<0.000000e+00> : vector<128x32xf32>
    %183 = tpu.matmul %161, %182, %cst_46 {dimension_numbers = #tpu.dot_dimension_numbers<[1], [0], [0], [1], [0, 0, 1, 1], [], []>} : vector<128x32xf32>, vector<32x32xf32>, vector<128x32xf32> -> vector<128x32xf32>
    %184 = vector.shape_cast %183 : vector<128x32xf32> to vector<16x8x32xf32>
    %185 = vector.extract_strided_slice %88 {offsets = [0, 2, 0], sizes = [16, 1, 32], strides = [1, 1, 1]} : vector<16x8x32xf32> to vector<16x1x32xf32>
    %186 = vector.broadcast %185 : vector<16x1x32xf32> to vector<16x8x32xf32>
    %187 = arith.mulf %184, %186 : vector<16x8x32xf32>
    %188 = arith.addf %180, %187 : vector<16x8x32xf32>
    %189 = vector.extract_strided_slice %90 {offsets = [3, 0, 0], sizes = [1, 32, 32], strides = [1, 1, 1]} : vector<8x32x32xf32> to vector<1x32x32xf32>
    %190 = vector.shape_cast %189 : vector<1x32x32xf32> to vector<32x32xf32>
    %cst_47 = arith.constant dense<0.000000e+00> : vector<128x32xf32>
    %191 = tpu.matmul %161, %190, %cst_47 {dimension_numbers = #tpu.dot_dimension_numbers<[1], [0], [0], [1], [0, 0, 1, 1], [], []>} : vector<128x32xf32>, vector<32x32xf32>, vector<128x32xf32> -> vector<128x32xf32>
    %192 = vector.shape_cast %191 : vector<128x32xf32> to vector<16x8x32xf32>
    %193 = vector.extract_strided_slice %88 {offsets = [0, 3, 0], sizes = [16, 1, 32], strides = [1, 1, 1]} : vector<16x8x32xf32> to vector<16x1x32xf32>
    %194 = vector.broadcast %193 : vector<16x1x32xf32> to vector<16x8x32xf32>
    %195 = arith.mulf %192, %194 : vector<16x8x32xf32>
    %196 = arith.addf %188, %195 : vector<16x8x32xf32>
    %197 = vector.extract_strided_slice %90 {offsets = [4, 0, 0], sizes = [1, 32, 32], strides = [1, 1, 1]} : vector<8x32x32xf32> to vector<1x32x32xf32>
    %198 = vector.shape_cast %197 : vector<1x32x32xf32> to vector<32x32xf32>
    %cst_48 = arith.constant dense<0.000000e+00> : vector<128x32xf32>
    %199 = tpu.matmul %161, %198, %cst_48 {dimension_numbers = #tpu.dot_dimension_numbers<[1], [0], [0], [1], [0, 0, 1, 1], [], []>} : vector<128x32xf32>, vector<32x32xf32>, vector<128x32xf32> -> vector<128x32xf32>
    %200 = vector.shape_cast %199 : vector<128x32xf32> to vector<16x8x32xf32>
    %201 = vector.extract_strided_slice %88 {offsets = [0, 4, 0], sizes = [16, 1, 32], strides = [1, 1, 1]} : vector<16x8x32xf32> to vector<16x1x32xf32>
    %202 = vector.broadcast %201 : vector<16x1x32xf32> to vector<16x8x32xf32>
    %203 = arith.mulf %200, %202 : vector<16x8x32xf32>
    %204 = arith.addf %196, %203 : vector<16x8x32xf32>
    %205 = vector.extract_strided_slice %90 {offsets = [5, 0, 0], sizes = [1, 32, 32], strides = [1, 1, 1]} : vector<8x32x32xf32> to vector<1x32x32xf32>
    %206 = vector.shape_cast %205 : vector<1x32x32xf32> to vector<32x32xf32>
    %cst_49 = arith.constant dense<0.000000e+00> : vector<128x32xf32>
    %207 = tpu.matmul %161, %206, %cst_49 {dimension_numbers = #tpu.dot_dimension_numbers<[1], [0], [0], [1], [0, 0, 1, 1], [], []>} : vector<128x32xf32>, vector<32x32xf32>, vector<128x32xf32> -> vector<128x32xf32>
    %208 = vector.shape_cast %207 : vector<128x32xf32> to vector<16x8x32xf32>
    %209 = vector.extract_strided_slice %88 {offsets = [0, 5, 0], sizes = [16, 1, 32], strides = [1, 1, 1]} : vector<16x8x32xf32> to vector<16x1x32xf32>
    %210 = vector.broadcast %209 : vector<16x1x32xf32> to vector<16x8x32xf32>
    %211 = arith.mulf %208, %210 : vector<16x8x32xf32>
    %212 = arith.addf %204, %211 : vector<16x8x32xf32>
    %213 = vector.extract_strided_slice %90 {offsets = [6, 0, 0], sizes = [1, 32, 32], strides = [1, 1, 1]} : vector<8x32x32xf32> to vector<1x32x32xf32>
    %214 = vector.shape_cast %213 : vector<1x32x32xf32> to vector<32x32xf32>
    %cst_50 = arith.constant dense<0.000000e+00> : vector<128x32xf32>
    %215 = tpu.matmul %161, %214, %cst_50 {dimension_numbers = #tpu.dot_dimension_numbers<[1], [0], [0], [1], [0, 0, 1, 1], [], []>} : vector<128x32xf32>, vector<32x32xf32>, vector<128x32xf32> -> vector<128x32xf32>
    %216 = vector.shape_cast %215 : vector<128x32xf32> to vector<16x8x32xf32>
    %217 = vector.extract_strided_slice %88 {offsets = [0, 6, 0], sizes = [16, 1, 32], strides = [1, 1, 1]} : vector<16x8x32xf32> to vector<16x1x32xf32>
    %218 = vector.broadcast %217 : vector<16x1x32xf32> to vector<16x8x32xf32>
    %219 = arith.mulf %216, %218 : vector<16x8x32xf32>
    %220 = arith.addf %212, %219 : vector<16x8x32xf32>
    %221 = vector.extract_strided_slice %90 {offsets = [7, 0, 0], sizes = [1, 32, 32], strides = [1, 1, 1]} : vector<8x32x32xf32> to vector<1x32x32xf32>
    %222 = vector.shape_cast %221 : vector<1x32x32xf32> to vector<32x32xf32>
    %cst_51 = arith.constant dense<0.000000e+00> : vector<128x32xf32>
    %223 = tpu.matmul %161, %222, %cst_51 {dimension_numbers = #tpu.dot_dimension_numbers<[1], [0], [0], [1], [0, 0, 1, 1], [], []>} : vector<128x32xf32>, vector<32x32xf32>, vector<128x32xf32> -> vector<128x32xf32>
    %224 = vector.shape_cast %223 : vector<128x32xf32> to vector<16x8x32xf32>
    %225 = vector.extract_strided_slice %88 {offsets = [0, 7, 0], sizes = [16, 1, 32], strides = [1, 1, 1]} : vector<16x8x32xf32> to vector<16x1x32xf32>
    %226 = vector.broadcast %225 : vector<16x1x32xf32> to vector<16x8x32xf32>
    %227 = arith.mulf %224, %226 : vector<16x8x32xf32>
    %228 = arith.addf %220, %227 : vector<16x8x32xf32>
    %229 = vector.shape_cast %228 : vector<16x8x32xf32> to vector<128x32xf32>
    %230 = arith.mulf %229, %163 : vector<128x32xf32>
    %231 = arith.truncf %230 : vector<128x32xf32> to vector<128x32xbf16>
    %c0_52 = arith.constant 0 : index
    %c0_53 = arith.constant 0 : index
    %232 = vector.load %arg9[%c0_52, %c0_53] : memref<32x32xbf16, #tpu.memory_space<vmem>>, vector<32x32xbf16>
    %cst_54 = arith.constant dense<0.000000e+00> : vector<128x32xf32>
    %233 = tpu.matmul %231, %232, %cst_54 {dimension_numbers = #tpu.dot_dimension_numbers<[1], [0], [0], [1], [0, 0, 1, 1], [], []>} : vector<128x32xbf16>, vector<32x32xbf16>, vector<128x32xf32> -> vector<128x32xf32>
    %234 = vector.broadcast %5 : vector<1x32xf32> to vector<128x32xf32>
    %235 = arith.addf %233, %234 : vector<128x32xf32>
    %236 = arith.addf %13, %235 : vector<128x32xf32>
    %cst_55 = arith.constant dense<0.000000e+00> : vector<128xf32>
    %237 = vector.multi_reduction <add>, %236, %cst_55 [1] : vector<128x32xf32> to vector<128xf32>
    %238 = vector.shape_cast %237 : vector<128xf32> to vector<128x1xf32>
    %cst_56 = arith.constant 3.200000e+01 : f32
    %239 = vector.broadcast %cst_56 : f32 to vector<128x1xf32>
    %240 = arith.divf %238, %239 : vector<128x1xf32>
    %241 = vector.broadcast %240 : vector<128x1xf32> to vector<128x32xf32>
    %242 = arith.subf %236, %241 : vector<128x32xf32>
    %243 = arith.mulf %242, %242 : vector<128x32xf32>
    %cst_57 = arith.constant dense<0.000000e+00> : vector<128xf32>
    %244 = vector.multi_reduction <add>, %243, %cst_57 [1] : vector<128x32xf32> to vector<128xf32>
    %245 = vector.shape_cast %244 : vector<128xf32> to vector<128x1xf32>
    %cst_58 = arith.constant 3.200000e+01 : f32
    %246 = vector.broadcast %cst_58 : f32 to vector<128x1xf32>
    %247 = arith.divf %245, %246 : vector<128x1xf32>
    %248 = vector.broadcast %240 : vector<128x1xf32> to vector<128x32xf32>
    %249 = arith.subf %236, %248 : vector<128x32xf32>
    %cst_59 = arith.constant 9.99999974E-6 : f32
    %250 = vector.broadcast %cst_59 : f32 to vector<128x1xf32>
    %251 = arith.addf %247, %250 : vector<128x1xf32>
    %252 = math.rsqrt %251 : vector<128x1xf32>
    %253 = vector.broadcast %252 : vector<128x1xf32> to vector<128x32xf32>
    %254 = arith.mulf %249, %253 : vector<128x32xf32>
    %255 = vector.broadcast %3 : vector<1x32xf32> to vector<128x32xf32>
    %256 = arith.mulf %254, %255 : vector<128x32xf32>
    %257 = vector.broadcast %4 : vector<1x32xf32> to vector<128x32xf32>
    %258 = arith.addf %256, %257 : vector<128x32xf32>
    %259 = arith.truncf %258 : vector<128x32xf32> to vector<128x32xbf16>
    %c0_60 = arith.constant 0 : index
    %c0_61 = arith.constant 0 : index
    %260 = vector.load %arg10[%c0_60, %c0_61] : memref<32x128xbf16, #tpu.memory_space<vmem>>, vector<32x128xbf16>
    %cst_62 = arith.constant dense<0.000000e+00> : vector<128x128xf32>
    %261 = tpu.matmul %259, %260, %cst_62 {dimension_numbers = #tpu.dot_dimension_numbers<[1], [0], [0], [1], [0, 0, 1, 1], [], []>} : vector<128x32xbf16>, vector<32x128xbf16>, vector<128x128xf32> -> vector<128x128xf32>
    %262 = vector.broadcast %7 : vector<1x128xf32> to vector<128x128xf32>
    %263 = arith.addf %261, %262 : vector<128x128xf32>
    %264 = arith.mulf %263, %263 : vector<128x128xf32>
    %265 = arith.mulf %263, %264 : vector<128x128xf32>
    %cst_63 = arith.constant 4.471500e-02 : f32
    %266 = vector.broadcast %cst_63 : f32 to vector<128x128xf32>
    %267 = arith.mulf %266, %265 : vector<128x128xf32>
    %268 = arith.addf %263, %267 : vector<128x128xf32>
    %cst_64 = arith.constant 0.797884583 : f32
    %269 = vector.broadcast %cst_64 : f32 to vector<128x128xf32>
    %270 = arith.mulf %269, %268 : vector<128x128xf32>
    %271 = math.tanh %270 : vector<128x128xf32>
    %cst_65 = arith.constant 1.000000e+00 : f32
    %272 = vector.broadcast %cst_65 : f32 to vector<128x128xf32>
    %273 = arith.addf %272, %271 : vector<128x128xf32>
    %cst_66 = arith.constant 5.000000e-01 : f32
    %274 = vector.broadcast %cst_66 : f32 to vector<128x128xf32>
    %275 = arith.mulf %274, %273 : vector<128x128xf32>
    %276 = arith.mulf %263, %275 : vector<128x128xf32>
    %277 = arith.truncf %276 : vector<128x128xf32> to vector<128x128xbf16>
    %c0_67 = arith.constant 0 : index
    %c0_68 = arith.constant 0 : index
    %278 = vector.load %arg11[%c0_67, %c0_68] : memref<128x32xbf16, #tpu.memory_space<vmem>>, vector<128x32xbf16>
    %cst_69 = arith.constant dense<0.000000e+00> : vector<128x32xf32>
    %279 = tpu.matmul %277, %278, %cst_69 {dimension_numbers = #tpu.dot_dimension_numbers<[1], [0], [0], [1], [0, 0, 1, 1], [], []>} : vector<128x128xbf16>, vector<128x32xbf16>, vector<128x32xf32> -> vector<128x32xf32>
    %280 = vector.broadcast %6 : vector<1x32xf32> to vector<128x32xf32>
    %281 = arith.addf %279, %280 : vector<128x32xf32>
    %282 = arith.addf %236, %281 : vector<128x32xf32>
    %283 = vector.shape_cast %282 : vector<128x32xf32> to vector<16x8x32xf32>
    %cst_70 = arith.constant dense<0xFF800000> : vector<16x32xf32>
    %284 = vector.multi_reduction <maximumf>, %283, %cst_70 [1] : vector<16x8x32xf32> to vector<16x32xf32>
    %c0_71 = arith.constant 0 : index
    %c0_72 = arith.constant 0 : index
    %285 = vector.load %arg15[%c0_71, %c0_72] : memref<16x32xf32, #tpu.memory_space<vmem>>, vector<16x32xf32>
    tpu.vector_store %arg15[%c0_71, %c0_72], %284 {strides = array<i32>} : memref<16x32xf32, #tpu.memory_space<vmem>>, vector<16x32xf32>,
    return
  }
  func.func @transform_0(%arg0: i32) -> (i32, i32) {
    %c0_i32 = arith.constant 0 : i32
    %c0_i32_0 = arith.constant 0 : i32
    return %arg0, %c0_i32 : i32, i32
  }
  func.func @transform_1(%arg0: i32) -> (i32, i32) {
    %c0_i32 = arith.constant 0 : i32
    %c0_i32_0 = arith.constant 0 : i32
    return %arg0, %c0_i32 : i32, i32
  }
  func.func @transform_2(%arg0: i32) -> (i32, i32) {
    %c0_i32 = arith.constant 0 : i32
    %c0_i32_0 = arith.constant 0 : i32
    return %arg0, %c0_i32 : i32, i32
  }
  func.func @transform_3(%arg0: i32) -> (i32, i32) {
    %c0_i32 = arith.constant 0 : i32
    %c0_i32_0 = arith.constant 0 : i32
    %c0_i32_1 = arith.constant 0 : i32
    return %c0_i32, %c0_i32_0 : i32, i32
  }
  func.func @transform_4(%arg0: i32) -> (i32, i32) {
    %c0_i32 = arith.constant 0 : i32
    %c0_i32_0 = arith.constant 0 : i32
    %c0_i32_1 = arith.constant 0 : i32
    return %c0_i32, %c0_i32_0 : i32, i32
  }
  func.func @transform_5(%arg0: i32) -> (i32, i32) {
    %c0_i32 = arith.constant 0 : i32
    %c0_i32_0 = arith.constant 0 : i32
    %c0_i32_1 = arith.constant 0 : i32
    return %c0_i32, %c0_i32_0 : i32, i32
  }
  func.func @transform_6(%arg0: i32) -> (i32, i32) {
    %c0_i32 = arith.constant 0 : i32
    %c0_i32_0 = arith.constant 0 : i32
    %c0_i32_1 = arith.constant 0 : i32
    return %c0_i32, %c0_i32_0 : i32, i32
  }
  func.func @transform_7(%arg0: i32) -> (i32, i32) {
    %c0_i32 = arith.constant 0 : i32
    %c0_i32_0 = arith.constant 0 : i32
    %c0_i32_1 = arith.constant 0 : i32
    return %c0_i32, %c0_i32_0 : i32, i32
  }
  func.func @transform_8(%arg0: i32) -> (i32, i32) {
    %c0_i32 = arith.constant 0 : i32
    %c0_i32_0 = arith.constant 0 : i32
    %c0_i32_1 = arith.constant 0 : i32
    return %c0_i32, %c0_i32_0 : i32, i32
  }
  func.func @transform_9(%arg0: i32) -> (i32, i32) {
    %c0_i32 = arith.constant 0 : i32
    %c0_i32_0 = arith.constant 0 : i32
    %c0_i32_1 = arith.constant 0 : i32
    return %c0_i32, %c0_i32_0 : i32, i32
  }
  func.func @transform_10(%arg0: i32) -> (i32, i32) {
    %c0_i32 = arith.constant 0 : i32
    %c0_i32_0 = arith.constant 0 : i32
    %c0_i32_1 = arith.constant 0 : i32
    return %c0_i32, %c0_i32_0 : i32, i32
  }
  func.func @transform_11(%arg0: i32) -> (i32, i32, i32) {
    %c0_i32 = arith.constant 0 : i32
    %c0_i32_0 = arith.constant 0 : i32
    %c0_i32_1 = arith.constant 0 : i32
    %c0_i32_2 = arith.constant 0 : i32
    return %c0_i32, %c0_i32_0, %c0_i32_1 : i32, i32, i32
  }
  func.func @transform_12(%arg0: i32) -> (i32, i32, i32) {
    %c0_i32 = arith.constant 0 : i32
    %c0_i32_0 = arith.constant 0 : i32
    %c0_i32_1 = arith.constant 0 : i32
    %c0_i32_2 = arith.constant 0 : i32
    return %c0_i32, %c0_i32_0, %c0_i32_1 : i32, i32, i32
  }
  func.func @transform_13(%arg0: i32) -> (i32, i32) {
    %c0_i32 = arith.constant 0 : i32
    %c0_i32_0 = arith.constant 0 : i32
    %c0_i32_1 = arith.constant 0 : i32
    return %c0_i32, %c0_i32_0 : i32, i32
  }
  func.func @transform_14(%arg0: i32) -> (i32, i32) {
    %c0_i32 = arith.constant 0 : i32
    %c0_i32_0 = arith.constant 0 : i32
    return %arg0, %c0_i32 : i32, i32
  }
}

</mosaic_0001>

<llo_original>
// kernel: tpu_custom_call.1
$region0: #{tpu_custom_call.1}
  #allocation0 [shape = 'u32[]', space=smem, size = 0x4, offset = 0x4, fixed_abs, tag = 'smem constant byte address 0x4 - core index']
  #allocation1 [shape = 'u32[144,128]{1,0:T(1,128)}', space=vmem, size = 0x12000, scoped, tag = 'internal scratch']
  %s0 = inlined_call_operand.vmem [shape: f32[256,32], index: 0, kind: input, shape index: {}]
  %s1 = inlined_call_operand.vmem [shape: f32[32,24], index: 1, kind: input, shape index: {}]
  %s2 = inlined_call_operand.vmem [shape: f32[256,3], index: 2, kind: input, shape index: {}]
  %s3 = inlined_call_operand.vmem [shape: f32[16,128], index: 3, kind: input, shape index: {}]
  %s4 = inlined_call_operand.vmem [shape: f32[24,128], index: 4, kind: input, shape index: {}]
  %s5 = inlined_call_operand.vmem [shape: bf16[32,128], index: 5, kind: input, shape index: {}]
  %s6 = inlined_call_operand.vmem [shape: bf16[32,32], index: 6, kind: input, shape index: {}]
  %s7 = inlined_call_operand.vmem [shape: bf16[128,128], index: 7, kind: input, shape index: {}]
  %s8 = inlined_call_operand.vmem [shape: bf16[32,32], index: 8, kind: input, shape index: {}]
  %s9 = inlined_call_operand.vmem [shape: bf16[32,128], index: 9, kind: input, shape index: {}]
  %s10 = inlined_call_operand.vmem [shape: bf16[128,32], index: 10, kind: input, shape index: {}]
  %s11 = inlined_call_operand.vmem [shape: f32[8,64,32], index: 11, kind: input, shape index: {}]
  %s12 = inlined_call_operand.vmem [shape: f32[8,32,32], index: 12, kind: input, shape index: {}]
  %s13 = inlined_call_operand.vmem [shape: f32[32,32], index: 13, kind: input, shape index: {}]
  %s14 = inlined_call_operand.hbm [shape: f32[32,32], index: 14, kind: output, shape index: {}]
  %s15 = sld [smem:[#allocation0]]
  $region89: #{tpu_custom_call.1} parent=0
    _
  %s17 = ssub.s32 1, %s15
  %s18 = scalar_select 0, %s17, %s15
  $region1: #{tpu_custom_call.1} parent=0
    #allocation2 [shape = 'u8[16384]{0}', space=vmem, size = 0x4000, scoped, tag = 'output window, operand 0']
    #allocation3 [shape = 's32[2]{0}', space=sflag, size = 0x8, scoped, tag = 'scoped memory for tpu_custom_call.1']
    %19 = vsyncpa [#allocation3], 0
    %s20 = scalar_lea.sflag [#allocation3], 1
    %21 = vsyncpa %s20, 0
    loop: start=0, step=1, limit=4
    $region2: #{tpu_custom_call.1} parent=1 // loop_pre_header
      _
    $region3: #{tpu_custom_call.1} parent=1 // loop_header
      %s23 = sphi 0, %s27
      %p24 = scmp.ge.s32.totalorder %s23, 4
      %s33 = sphi 0, %s35
      %s36 = sphi 0, %s33
      %s37 = sphi 0, %s36
      %s53 = sphi 0, %s37
      %s59 = sphi 0, %s61
      %s62 = sphi 0, %s59
      %s63 = sphi 0, %s62
      %s79 = sphi 0, %s63
      %s85 = sphi 0, %s87
      %s88 = sphi 0, %s85
      %s89 = sphi 0, %s88
      %s105 = sphi 0, %s89
      %s109 = sphi 0, %s109
      %s111 = sphi 0, %s109
      %s112 = sphi 0, %s111
      %s126 = sphi 0, %s112
      %s130 = sphi 0, %s130
      %s132 = sphi 0, %s130
      %s133 = sphi 0, %s132
      %s147 = sphi 0, %s133
      %s151 = sphi 0, %s151
      %s153 = sphi 0, %s151
      %s154 = sphi 0, %s153
      %s168 = sphi 0, %s154
      %s172 = sphi 0, %s172
      %s174 = sphi 0, %s172
      %s175 = sphi 0, %s174
      %s189 = sphi 0, %s175
      %s193 = sphi 0, %s193
      %s195 = sphi 0, %s193
      %s196 = sphi 0, %s195
      %s210 = sphi 0, %s196
      %s214 = sphi 0, %s214
      %s216 = sphi 0, %s214
      %s217 = sphi 0, %s216
      %s231 = sphi 0, %s217
      %s235 = sphi 0, %s235
      %s237 = sphi 0, %s235
      %s238 = sphi 0, %s237
      %s252 = sphi 0, %s238
      %s256 = sphi 0, %s256
      %s258 = sphi 0, %s256
      %s259 = sphi 0, %s258
      %s273 = sphi 0, %s259
      %s277 = sphi 0, %s277
      %s279 = sphi 0, %s277
      %s280 = sphi 0, %s279
      %s294 = sphi 0, %s280
      %s298 = sphi 0, %s298
      %s300 = sphi 0, %s298
      %s301 = sphi 0, %s300
      %s315 = sphi 0, %s301
      %s319 = sphi 0, %s319
      %s321 = sphi 0, %s319
      %s322 = sphi 0, %s321
      %s336 = sphi 0, %s322
      %s342 = sphi 0, %s344
      %s345 = sphi 0, %s342
      %s346 = sphi 0, %s345
      %s362 = sphi 0, %s346
    $region4: #{tpu_custom_call.1} parent=1 // loop_header_branch
      %26 = sbr.rel (%p24) target = $region8
    $region5: #{tpu_custom_call.1} parent=1 // loop_body
      %s28 = ssub.s32 %s23, 1
      %s29 = ssub.s32 %s23, 2
      %s30 = sadd.s32 %s23, 1
      %s31 = ssub.s32 %s23, %s30
      %p32 = scmp.eq.s32.totalorder %s31, 0
      %s34 = sadd.s32 %s33, 1
      %s35 = scalar_select %p32, %s33, %s34
      %p38 = pneg %p32
      %p39 = scmp.eq.s32.totalorder %s23, 1
      %p40 = por %p38, %p39
      %p41 = scmp.ne.s32.totalorder %s33, %s36
      %p42 = scmp.eq.s32.totalorder %s23, 0
      %p43 = por %p41, %p42
      %p44 = scmp.ne.s32.totalorder %s33, %s36
      %p45 = scmp.eq.s32.totalorder %s28, 1
      %p46 = por %p44, %p45
      %p47 = scmp.ne.s32.totalorder %s36, %s37
      %p48 = scmp.eq.s32.totalorder %s28, 0
      %p49 = por %p47, %p48
      %p50 = scmp.ne.s32.totalorder %s36, %s37
      %p51 = scmp.eq.s32.totalorder %s29, 1
      %p52 = por %p50, %p51
      %p54 = scmp.ne.s32.totalorder %s37, %s53
      %p55 = scmp.eq.s32.totalorder %s29, 0
      %p56 = por %p54, %p55
      %s57 = ssub.s32 %s23, %s30
      %p58 = scmp.eq.s32.totalorder %s57, 0
      %s60 = sadd.s32 %s59, 1
      %s61 = scalar_select %p58, %s59, %s60
      %p64 = pneg %p58
      %p65 = scmp.eq.s32.totalorder %s23, 1
      %p66 = por %p64, %p65
      %p67 = scmp.ne.s32.totalorder %s59, %s62
      %p68 = scmp.eq.s32.totalorder %s23, 0
      %p69 = por %p67, %p68
      %p70 = scmp.ne.s32.totalorder %s59, %s62
      %p71 = scmp.eq.s32.totalorder %s28, 1
      %p72 = por %p70, %p71
      %p73 = scmp.ne.s32.totalorder %s62, %s63
      %p74 = scmp.eq.s32.totalorder %s28, 0
      %p75 = por %p73, %p74
      %p76 = scmp.ne.s32.totalorder %s62, %s63
      %p77 = scmp.eq.s32.totalorder %s29, 1
      %p78 = por %p76, %p77
      %p80 = scmp.ne.s32.totalorder %s63, %s79
      %p81 = scmp.eq.s32.totalorder %s29, 0
      %p82 = por %p80, %p81
      %s83 = ssub.s32 %s23, %s30
      %p84 = scmp.eq.s32.totalorder %s83, 0
      %s86 = sadd.s32 %s85, 1
      %s87 = scalar_select %p84, %s85, %s86
      %p90 = pneg %p84
      %p91 = scmp.eq.s32.totalorder %s23, 1
      %p92 = por %p90, %p91
      %p93 = scmp.ne.s32.totalorder %s85, %s88
      %p94 = scmp.eq.s32.totalorder %s23, 0
      %p95 = por %p93, %p94
      %p96 = scmp.ne.s32.totalorder %s85, %s88
      %p97 = scmp.eq.s32.totalorder %s28, 1
      %p98 = por %p96, %p97
      %p99 = scmp.ne.s32.totalorder %s88, %s89
      %p100 = scmp.eq.s32.totalorder %s28, 0
      %p101 = por %p99, %p100
      %p102 = scmp.ne.s32.totalorder %s88, %s89
      %p103 = scmp.eq.s32.totalorder %s29, 1
      %p104 = por %p102, %p103
      %p106 = scmp.ne.s32.totalorder %s89, %s105
      %p107 = scmp.eq.s32.totalorder %s29, 0
      %p108 = por %p106, %p107
      %s110 = sadd.s32 %s109, 1
      %p113 = scmp.eq.s32.totalorder %s23, 1
      %p114 = scmp.ne.s32.totalorder %s109, %s111
      %p115 = scmp.eq.s32.totalorder %s23, 0
      %p116 = por %p114, %p115
      %p117 = scmp.ne.s32.totalorder %s109, %s111
      %p118 = scmp.eq.s32.totalorder %s28, 1
      %p119 = por %p117, %p118
      %p120 = scmp.ne.s32.totalorder %s111, %s112
      %p121 = scmp.eq.s32.totalorder %s28, 0
      %p122 = por %p120, %p121
      %p123 = scmp.ne.s32.totalorder %s111, %s112
      %p124 = scmp.eq.s32.totalorder %s29, 1
      %p125 = por %p123, %p124
      %p127 = scmp.ne.s32.totalorder %s112, %s126
      %p128 = scmp.eq.s32.totalorder %s29, 0
      %p129 = por %p127, %p128
      %s131 = sadd.s32 %s130, 1
      %p134 = scmp.eq.s32.totalorder %s23, 1
      %p135 = scmp.ne.s32.totalorder %s130, %s132
      %p136 = scmp.eq.s32.totalorder %s23, 0
      %p137 = por %p135, %p136
      %p138 = scmp.ne.s32.totalorder %s130, %s132
      %p139 = scmp.eq.s32.totalorder %s28, 1
      %p140 = por %p138, %p139
      %p141 = scmp.ne.s32.totalorder %s132, %s133
      %p142 = scmp.eq.s32.totalorder %s28, 0
      %p143 = por %p141, %p142
      %p144 = scmp.ne.s32.totalorder %s132, %s133
      %p145 = scmp.eq.s32.totalorder %s29, 1
      %p146 = por %p144, %p145
      %p148 = scmp.ne.s32.totalorder %s133, %s147
      %p149 = scmp.eq.s32.totalorder %s29, 0
      %p150 = por %p148, %p149
      %s152 = sadd.s32 %s151, 1
      %p155 = scmp.eq.s32.totalorder %s23, 1
      %p156 = scmp.ne.s32.totalorder %s151, %s153
      %p157 = scmp.eq.s32.totalorder %s23, 0
      %p158 = por %p156, %p157
      %p159 = scmp.ne.s32.totalorder %s151, %s153
      %p160 = scmp.eq.s32.totalorder %s28, 1
      %p161 = por %p159, %p160
      %p162 = scmp.ne.s32.totalorder %s153, %s154
      %p163 = scmp.eq.s32.totalorder %s28, 0
      %p164 = por %p162, %p163
      %p165 = scmp.ne.s32.totalorder %s153, %s154
      %p166 = scmp.eq.s32.totalorder %s29, 1
      %p167 = por %p165, %p166
      %p169 = scmp.ne.s32.totalorder %s154, %s168
      %p170 = scmp.eq.s32.totalorder %s29, 0
      %p171 = por %p169, %p170
      %s173 = sadd.s32 %s172, 1
      %p176 = scmp.eq.s32.totalorder %s23, 1
      %p177 = scmp.ne.s32.totalorder %s172, %s174
      %p178 = scmp.eq.s32.totalorder %s23, 0
      %p179 = por %p177, %p178
      %p180 = scmp.ne.s32.totalorder %s172, %s174
      %p181 = scmp.eq.s32.totalorder %s28, 1
      %p182 = por %p180, %p181
      %p183 = scmp.ne.s32.totalorder %s174, %s175
      %p184 = scmp.eq.s32.totalorder %s28, 0
      %p185 = por %p183, %p184
      %p186 = scmp.ne.s32.totalorder %s174, %s175
      %p187 = scmp.eq.s32.totalorder %s29, 1
      %p188 = por %p186, %p187
      %p190 = scmp.ne.s32.totalorder %s175, %s189
      %p191 = scmp.eq.s32.totalorder %s29, 0
      %p192 = por %p190, %p191
      %s194 = sadd.s32 %s193, 1
      %p197 = scmp.eq.s32.totalorder %s23, 1
      %p198 = scmp.ne.s32.totalorder %s193, %s195
      %p199 = scmp.eq.s32.totalorder %s23, 0
      %p200 = por %p198, %p199
      %p201 = scmp.ne.s32.totalorder %s193, %s195
      %p202 = scmp.eq.s32.totalorder %s28, 1
      %p203 = por %p201, %p202
      %p204 = scmp.ne.s32.totalorder %s195, %s196
      %p205 = scmp.eq.s32.totalorder %s28, 0
      %p206 = por %p204, %p205
      %p207 = scmp.ne.s32.totalorder %s195, %s196
      %p208 = scmp.eq.s32.totalorder %s29, 1
      %p209 = por %p207, %p208
      %p211 = scmp.ne.s32.totalorder %s196, %s210
      %p212 = scmp.eq.s32.totalorder %s29, 0
      %p213 = por %p211, %p212
      %s215 = sadd.s32 %s214, 1
      %p218 = scmp.eq.s32.totalorder %s23, 1
      %p219 = scmp.ne.s32.totalorder %s214, %s216
      %p220 = scmp.eq.s32.totalorder %s23, 0
      %p221 = por %p219, %p220
      %p222 = scmp.ne.s32.totalorder %s214, %s216
      %p223 = scmp.eq.s32.totalorder %s28, 1
      %p224 = por %p222, %p223
      %p225 = scmp.ne.s32.totalorder %s216, %s217
      %p226 = scmp.eq.s32.totalorder %s28, 0
      %p227 = por %p225, %p226
      %p228 = scmp.ne.s32.totalorder %s216, %s217
      %p229 = scmp.eq.s32.totalorder %s29, 1
      %p230 = por %p228, %p229
      %p232 = scmp.ne.s32.totalorder %s217, %s231
      %p233 = scmp.eq.s32.totalorder %s29, 0
      %p234 = por %p232, %p233
      %s236 = sadd.s32 %s235, 1
      %p239 = scmp.eq.s32.totalorder %s23, 1
      %p240 = scmp.ne.s32.totalorder %s235, %s237
      %p241 = scmp.eq.s32.totalorder %s23, 0
      %p242 = por %p240, %p241
      %p243 = scmp.ne.s32.totalorder %s235, %s237
      %p244 = scmp.eq.s32.totalorder %s28, 1
      %p245 = por %p243, %p244
      %p246 = scmp.ne.s32.totalorder %s237, %s238
      %p247 = scmp.eq.s32.totalorder %s28, 0
      %p248 = por %p246, %p247
      %p249 = scmp.ne.s32.totalorder %s237, %s238
      %p250 = scmp.eq.s32.totalorder %s29, 1
      %p251 = por %p249, %p250
      %p253 = scmp.ne.s32.totalorder %s238, %s252
      %p254 = scmp.eq.s32.totalorder %s29, 0
      %p255 = por %p253, %p254
      %s257 = sadd.s32 %s256, 1
      %p260 = scmp.eq.s32.totalorder %s23, 1
      %p261 = scmp.ne.s32.totalorder %s256, %s258
      %p262 = scmp.eq.s32.totalorder %s23, 0
      %p263 = por %p261, %p262
      %p264 = scmp.ne.s32.totalorder %s256, %s258
      %p265 = scmp.eq.s32.totalorder %s28, 1
      %p266 = por %p264, %p265
      %p267 = scmp.ne.s32.totalorder %s258, %s259
      %p268 = scmp.eq.s32.totalorder %s28, 0
      %p269 = por %p267, %p268
      %p270 = scmp.ne.s32.totalorder %s258, %s259
      %p271 = scmp.eq.s32.totalorder %s29, 1
      %p272 = por %p270, %p271
      %p274 = scmp.ne.s32.totalorder %s259, %s273
      %p275 = scmp.eq.s32.totalorder %s29, 0
      %p276 = por %p274, %p275
      %s278 = sadd.s32 %s277, 1
      %p281 = scmp.eq.s32.totalorder %s23, 1
      %p282 = scmp.ne.s32.totalorder %s277, %s279
      %p283 = scmp.eq.s32.totalorder %s23, 0
      %p284 = por %p282, %p283
      %p285 = scmp.ne.s32.totalorder %s277, %s279
      %p286 = scmp.eq.s32.totalorder %s28, 1
      %p287 = por %p285, %p286
      %p288 = scmp.ne.s32.totalorder %s279, %s280
      %p289 = scmp.eq.s32.totalorder %s28, 0
      %p290 = por %p288, %p289
      %p291 = scmp.ne.s32.totalorder %s279, %s280
      %p292 = scmp.eq.s32.totalorder %s29, 1
      %p293 = por %p291, %p292
      %p295 = scmp.ne.s32.totalorder %s280, %s294
      %p296 = scmp.eq.s32.totalorder %s29, 0
      %p297 = por %p295, %p296
      %s299 = sadd.s32 %s298, 1
      %p302 = scmp.eq.s32.totalorder %s23, 1
      %p303 = scmp.ne.s32.totalorder %s298, %s300
      %p304 = scmp.eq.s32.totalorder %s23, 0
      %p305 = por %p303, %p304
      %p306 = scmp.ne.s32.totalorder %s298, %s300
      %p307 = scmp.eq.s32.totalorder %s28, 1
      %p308 = por %p306, %p307
      %p309 = scmp.ne.s32.totalorder %s300, %s301
      %p310 = scmp.eq.s32.totalorder %s28, 0
      %p311 = por %p309, %p310
      %p312 = scmp.ne.s32.totalorder %s300, %s301
      %p313 = scmp.eq.s32.totalorder %s29, 1
      %p314 = por %p312, %p313
      %p316 = scmp.ne.s32.totalorder %s301, %s315
      %p317 = scmp.eq.s32.totalorder %s29, 0
      %p318 = por %p316, %p317
      %s320 = sadd.s32 %s319, 1
      %p323 = scmp.eq.s32.totalorder %s23, 1
      %p324 = scmp.ne.s32.totalorder %s319, %s321
      %p325 = scmp.eq.s32.totalorder %s23, 0
      %p326 = por %p324, %p325
      %p327 = scmp.ne.s32.totalorder %s319, %s321
      %p328 = scmp.eq.s32.totalorder %s28, 1
      %p329 = por %p327, %p328
      %p330 = scmp.ne.s32.totalorder %s321, %s322
      %p331 = scmp.eq.s32.totalorder %s28, 0
      %p332 = por %p330, %p331
      %p333 = scmp.ne.s32.totalorder %s321, %s322
      %p334 = scmp.eq.s32.totalorder %s29, 1
      %p335 = por %p333, %p334
      %p337 = scmp.ne.s32.totalorder %s322, %s336
      %p338 = scmp.eq.s32.totalorder %s29, 0
      %p339 = por %p337, %p338
      %s340 = ssub.s32 %s23, %s30
      %p341 = scmp.eq.s32.totalorder %s340, 0
      %s343 = sadd.s32 %s342, 1
      %s344 = scalar_select %p341, %s342, %s343
      %p347 = pneg %p341
      %p348 = scmp.eq.s32.totalorder %s23, 1
      %p349 = por %p347, %p348
      %p350 = scmp.ne.s32.totalorder %s342, %s345
      %p351 = scmp.eq.s32.totalorder %s23, 0
      %p352 = por %p350, %p351
      %p353 = scmp.ne.s32.totalorder %s342, %s345
      %p354 = scmp.eq.s32.totalorder %s28, 1
      %p355 = por %p353, %p354
      %p356 = scmp.ne.s32.totalorder %s345, %s346
      %p357 = scmp.eq.s32.totalorder %s28, 0
      %p358 = por %p356, %p357
      %p359 = scmp.ne.s32.totalorder %s345, %s346
      %p360 = scmp.eq.s32.totalorder %s29, 1
      %p361 = por %p359, %p360
      %p363 = scmp.ne.s32.totalorder %s346, %s362
      %p364 = scmp.eq.s32.totalorder %s29, 0
      %p365 = por %p363, %p364
      %p366 = scmp.le.s32.totalorder 1, %s23
      %p367 = scmp.lt.s32.totalorder %s23, 3
      %p368 = pnand %p366, %p367
      %p369 = pneg %p368
      // Predicated region
      $region9: #{tpu_custom_call.1} parent=5 // pred_check
        _
      $region10: #{tpu_custom_call.1} parent=5 // pred_check_branch
        %371 = sbr.rel (%p368) target = $region12
      $region11: #{tpu_custom_call.1} parent=5 // pred_region
        %s372 = ssub.s32 %s23, 1
        // Predicated region
        $region13: #{tpu_custom_call.1} parent=11 // pred_check
          %p373 = pneg %p122
        $region14: #{tpu_custom_call.1} parent=11 // pred_check_branch
          %375 = sbr.rel (%p373) target = $region16
        $region15: #{tpu_custom_call.1} parent=11 // pred_region
          _
        $region16: #{tpu_custom_call.1} parent=11 // pred_fallthru
          _
        // Predicated region
        $region17: #{tpu_custom_call.1} parent=11 // pred_check
          %p376 = pneg %p143
        $region18: #{tpu_custom_call.1} parent=11 // pred_check_branch
          %378 = sbr.rel (%p376) target = $region20
        $region19: #{tpu_custom_call.1} parent=11 // pred_region
          _
        $region20: #{tpu_custom_call.1} parent=11 // pred_fallthru
          _
        // Predicated region
        $region21: #{tpu_custom_call.1} parent=11 // pred_check
          %p379 = pneg %p164
        $region22: #{tpu_custom_call.1} parent=11 // pred_check_branch
          %381 = sbr.rel (%p379) target = $region24
        $region23: #{tpu_custom_call.1} parent=11 // pred_region
          _
        $region24: #{tpu_custom_call.1} parent=11 // pred_fallthru
          _
        // Predicated region
        $region25: #{tpu_custom_call.1} parent=11 // pred_check
          %p382 = pneg %p185
        $region26: #{tpu_custom_call.1} parent=11 // pred_check_branch
          %384 = sbr.rel (%p382) target = $region28
        $region27: #{tpu_custom_call.1} parent=11 // pred_region
          _
        $region28: #{tpu_custom_call.1} parent=11 // pred_fallthru
          _
        // Predicated region
        $region29: #{tpu_custom_call.1} parent=11 // pred_check
          %p385 = pneg %p206
        $region30: #{tpu_custom_call.1} parent=11 // pred_check_branch
          %387 = sbr.rel (%p385) target = $region32
        $region31: #{tpu_custom_call.1} parent=11 // pred_region
          _
        $region32: #{tpu_custom_call.1} parent=11 // pred_fallthru
          _
        // Predicated region
        $region33: #{tpu_custom_call.1} parent=11 // pred_check
          %p388 = pneg %p227
        $region34: #{tpu_custom_call.1} parent=11 // pred_check_branch
          %390 = sbr.rel (%p388) target = $region36
        $region35: #{tpu_custom_call.1} parent=11 // pred_region
          _
        $region36: #{tpu_custom_call.1} parent=11 // pred_fallthru
          _
        // Predicated region
        $region37: #{tpu_custom_call.1} parent=11 // pred_check
          %p391 = pneg %p248
        $region38: #{tpu_custom_call.1} parent=11 // pred_check_branch
          %393 = sbr.rel (%p391) target = $region40
        $region39: #{tpu_custom_call.1} parent=11 // pred_region
          _
        $region40: #{tpu_custom_call.1} parent=11 // pred_fallthru
          _
        // Predicated region
        $region41: #{tpu_custom_call.1} parent=11 // pred_check
          %p394 = pneg %p269
        $region42: #{tpu_custom_call.1} parent=11 // pred_check_branch
          %396 = sbr.rel (%p394) target = $region44
        $region43: #{tpu_custom_call.1} parent=11 // pred_region
          _
        $region44: #{tpu_custom_call.1} parent=11 // pred_fallthru
          _
        // Predicated region
        $region45: #{tpu_custom_call.1} parent=11 // pred_check
          %p397 = pneg %p290
        $region46: #{tpu_custom_call.1} parent=11 // pred_check_branch
          %399 = sbr.rel (%p397) target = $region48
        $region47: #{tpu_custom_call.1} parent=11 // pred_region
          _
        $region48: #{tpu_custom_call.1} parent=11 // pred_fallthru
          _
        // Predicated region
        $region49: #{tpu_custom_call.1} parent=11 // pred_check
          %p400 = pneg %p311
        $region50: #{tpu_custom_call.1} parent=11 // pred_check_branch
          %402 = sbr.rel (%p400) target = $region52
        $region51: #{tpu_custom_call.1} parent=11 // pred_region
          _
        $region52: #{tpu_custom_call.1} parent=11 // pred_fallthru
          _
        // Predicated region
        $region53: #{tpu_custom_call.1} parent=11 // pred_check
          %p403 = pneg %p332
        $region54: #{tpu_custom_call.1} parent=11 // pred_check_branch
          %405 = sbr.rel (%p403) target = $region56
        $region55: #{tpu_custom_call.1} parent=11 // pred_region
          _
        $region56: #{tpu_custom_call.1} parent=11 // pred_fallthru
          _
      $region12: #{tpu_custom_call.1} parent=5 // pred_fallthru
        _
      %p406 = scmp.lt.s32.totalorder %s23, 2
      // Predicated region
      $region57: #{tpu_custom_call.1} parent=5 // pred_check
        %p407 = pneg %p406
      $region58: #{tpu_custom_call.1} parent=5 // pred_check_branch
        %409 = sbr.rel (%p407) target = $region60
      $region59: #{tpu_custom_call.1} parent=5 // pred_region
        // Predicated region
        $region61: #{tpu_custom_call.1} parent=59 // pred_check
          %p410 = pneg %p43
        $region62: #{tpu_custom_call.1} parent=59 // pred_check_branch
          %412 = sbr.rel (%p410) target = $region64
        $region63: #{tpu_custom_call.1} parent=59 // pred_region
          %s413 = smul.u32 16, %s23
          %p414 = scmp.lt.s32.totalorder %s413, 31
          %s415 = scalar_select %p414, %s413, 31
          %s416 = smul.addr %s415, 8
          %s417 = scalar_lea.vmem %s0, %s416
          %s418 = smul.u32 16, %s23
        $region64: #{tpu_custom_call.1} parent=59 // pred_fallthru
          _
        // Predicated region
        $region65: #{tpu_custom_call.1} parent=59 // pred_check
          %p419 = pneg %p69
        $region66: #{tpu_custom_call.1} parent=59 // pred_check_branch
          %421 = sbr.rel (%p419) target = $region68
        $region67: #{tpu_custom_call.1} parent=59 // pred_region
          %s422 = smul.u32 2, %s23
          %p423 = scmp.lt.s32.totalorder %s422, 3
          %s424 = scalar_select %p423, %s422, 3
          %s425 = smul.addr %s424, 8
          %s426 = scalar_lea.vmem %s1, %s425
          %s427 = smul.u32 2, %s23
        $region68: #{tpu_custom_call.1} parent=59 // pred_fallthru
          _
        // Predicated region
        $region69: #{tpu_custom_call.1} parent=59 // pred_check
          %p428 = pneg %p95
        $region70: #{tpu_custom_call.1} parent=59 // pred_check_branch
          %430 = sbr.rel (%p428) target = $region72
        $region71: #{tpu_custom_call.1} parent=59 // pred_region
          %s431 = smul.u32 16, %s23
          %p432 = scmp.lt.s32.totalorder %s431, 31
          %s433 = scalar_select %p432, %s431, 31
          %s434 = smul.addr %s433, 8
          %s435 = scalar_lea.vmem %s2, %s434
          %s436 = smul.u32 16, %s23
        $region72: #{tpu_custom_call.1} parent=59 // pred_fallthru
          _
      $region60: #{tpu_custom_call.1} parent=5 // pred_fallthru
        _
      %p437 = scmp.le.s32.totalorder 1, %s23
      %p438 = scmp.lt.s32.totalorder %s23, 3
      %p439 = pnand %p437, %p438
      %p440 = pneg %p439
      // Predicated region
      $region73: #{tpu_custom_call.1} parent=5 // pred_check
        _
      $region74: #{tpu_custom_call.1} parent=5 // pred_check_branch
        %442 = sbr.rel (%p439) target = $region76
      $region75: #{tpu_custom_call.1} parent=5 // pred_region
        %s443 = ssub.s32 %s23, 1
        %s444 = smul.u32 16, %s28
        %p445 = scmp.lt.s32.totalorder %s444, 31
        %s446 = scalar_select %p445, %s444, 31
        %s447 = smul.addr %s446, 8
        %s448 = scalar_lea.vmem %s0, %s447
        %p449 = pneg %p49
        %p450 = pneg %p46
        %s451 = smul.u32 2, %s28
        %p452 = scmp.lt.s32.totalorder %s451, 3
        %s453 = scalar_select %p452, %s451, 3
        %s454 = smul.addr %s453, 8
        %s455 = scalar_lea.vmem %s1, %s454
        %p456 = pneg %p75
        %p457 = pneg %p72
        %s458 = smul.u32 16, %s28
        %p459 = scmp.lt.s32.totalorder %s458, 31
        %s460 = scalar_select %p459, %s458, 31
        %s461 = smul.addr %s460, 8
        %s462 = scalar_lea.vmem %s2, %s461
        %p463 = pneg %p101
        %p464 = pneg %p98
        %p465 = pneg %p122
        %p466 = pneg %p119
        %p467 = pneg %p143
        %p468 = pneg %p140
        %p469 = pneg %p164
        %p470 = pneg %p161
        %p471 = pneg %p185
        %p472 = pneg %p182
        %p473 = pneg %p206
        %p474 = pneg %p203
        %p475 = pneg %p227
        %p476 = pneg %p224
        %p477 = pneg %p248
        %p478 = pneg %p245
        %p479 = pneg %p269
        %p480 = pneg %p266
        %p481 = pneg %p290
        %p482 = pneg %p287
        %p483 = pneg %p311
        %p484 = pneg %p308
        %p485 = pneg %p332
        %p486 = pneg %p329
        %p487 = pneg %p358
        %p488 = pneg %p355
        %s489 = sand.u32 %s345, 1
        %s490 = scalar_lea.sflag [#allocation3], %s489
        %s491 = sand.u32 %s345, 1
        %s492 = smul.addr %s491, 16
        %s493 = scalar_lea.vmem [#allocation2], %s492
        %s494 = smul.u32 16, %s28
        %p495 = scmp.lt.s32.totalorder %s494, 31
        %s496 = scalar_select %p495, %s494, 31
        %s497 = smul.addr %s496, 8
        %s498 = scalar_lea.vmem %s0, %s497
        %s499 = smul.u32 16, %s28
        %s500 = smul.u32 2, %s28
        %p501 = scmp.lt.s32.totalorder %s500, 3
        %s502 = scalar_select %p501, %s500, 3
        %s503 = smul.addr %s502, 8
        %s504 = scalar_lea.vmem %s1, %s503
        %s505 = smul.u32 2, %s28
        %s506 = smul.u32 16, %s28
        %p507 = scmp.lt.s32.totalorder %s506, 31
        %s508 = scalar_select %p507, %s506, 31
        %s509 = smul.addr %s508, 8
        %s510 = scalar_lea.vmem %s2, %s509
        %s511 = smul.u32 16, %s28
        %s512 = smul.u32 2, %s28
        %v514 = vld [vmem:[%s3] sm:$0xff]
        %v515 = vld [vmem:[%s3 + $0x8] sm:$0xff]
        %v516 = vld [vmem:[%s498] sm:$0xff]
        %v517 = vld [vmem:[%s498 + $0x8] sm:$0xff]
        %v518 = vld [vmem:[%s498 + $0x10] sm:$0xff]
        %v519 = vld [vmem:[%s498 + $0x18] sm:$0xff]
        %v520 = vld [vmem:[%s498 + $0x20] sm:$0xff]
        %v521 = vld [vmem:[%s498 + $0x28] sm:$0xff]
        %v522 = vld [vmem:[%s498 + $0x30] sm:$0xff]
        %v523 = vld [vmem:[%s498 + $0x38] sm:$0xff]
        %v524 = vld [vmem:[%s498 + $0x40] sm:$0xff]
        %v525 = vld [vmem:[%s498 + $0x48] sm:$0xff]
        %v526 = vld [vmem:[%s498 + $0x50] sm:$0xff]
        %v527 = vld [vmem:[%s498 + $0x58] sm:$0xff]
        %v528 = vld [vmem:[%s498 + $0x60] sm:$0xff]
        %v529 = vld [vmem:[%s498 + $0x68] sm:$0xff]
        %v530 = vld [vmem:[%s498 + $0x70] sm:$0xff]
        %v531 = vld [vmem:[%s498 + $0x78] sm:$0xff]
        %vm532 = vcmask 261120
        %v533 = vsel %vm532, %v516, 0.0
        %534 = vadd.xlane.f32.xlu0 %v533
        %v535 = vpop.xlane.xlu0 %534
        %v536 = vsel %vm532, %v517, 0.0
        %537 = vadd.xlane.f32.xlu0 %v536
        %v538 = vpop.xlane.xlu0 %537
        %v539 = vsel %vm532, %v518, 0.0
        %540 = vadd.xlane.f32.xlu0 %v539
        %v541 = vpop.xlane.xlu0 %540
        %v542 = vsel %vm532, %v519, 0.0
        %543 = vadd.xlane.f32.xlu0 %v542
        %v544 = vpop.xlane.xlu0 %543
        %v545 = vsel %vm532, %v520, 0.0
        %546 = vadd.xlane.f32.xlu0 %v545
        %v547 = vpop.xlane.xlu0 %546
        %v548 = vsel %vm532, %v521, 0.0
        %549 = vadd.xlane.f32.xlu0 %v548
        %v550 = vpop.xlane.xlu0 %549
        %v551 = vsel %vm532, %v522, 0.0
        %552 = vadd.xlane.f32.xlu0 %v551
        %v553 = vpop.xlane.xlu0 %552
        %v554 = vsel %vm532, %v523, 0.0
        %555 = vadd.xlane.f32.xlu0 %v554
        %v556 = vpop.xlane.xlu0 %555
        %v557 = vsel %vm532, %v524, 0.0
        %558 = vadd.xlane.f32.xlu0 %v557
        %v559 = vpop.xlane.xlu0 %558
        %v560 = vsel %vm532, %v525, 0.0
        %561 = vadd.xlane.f32.xlu0 %v560
        %v562 = vpop.xlane.xlu0 %561
        %v563 = vsel %vm532, %v526, 0.0
        %564 = vadd.xlane.f32.xlu0 %v563
        %v565 = vpop.xlane.xlu0 %564
        %v566 = vsel %vm532, %v527, 0.0
        %567 = vadd.xlane.f32.xlu0 %v566
        %v568 = vpop.xlane.xlu0 %567
        %v569 = vsel %vm532, %v528, 0.0
        %570 = vadd.xlane.f32.xlu0 %v569
        %v571 = vpop.xlane.xlu0 %570
        %v572 = vsel %vm532, %v529, 0.0
        %573 = vadd.xlane.f32.xlu0 %v572
        %v574 = vpop.xlane.xlu0 %573
        %v575 = vsel %vm532, %v530, 0.0
        %576 = vadd.xlane.f32.xlu0 %v575
        %v577 = vpop.xlane.xlu0 %576
        %v578 = vsel %vm532, %v531, 0.0
        %579 = vadd.xlane.f32.xlu0 %v578
        %v580 = vpop.xlane.xlu0 %579
        %v581 = vrcp.pop 32.0
        %v582 = vmul.f32 %v535, %v581
        %v583 = vmul.f32 %v538, %v581
        %v584 = vmul.f32 %v541, %v581
        %v585 = vmul.f32 %v544, %v581
        %v586 = vmul.f32 %v547, %v581
        %v587 = vmul.f32 %v550, %v581
        %v588 = vmul.f32 %v553, %v581
        %v589 = vmul.f32 %v556, %v581
        %v590 = vmul.f32 %v559, %v581
        %v591 = vmul.f32 %v562, %v581
        %v592 = vmul.f32 %v565, %v581
        %v593 = vmul.f32 %v568, %v581
        %v594 = vmul.f32 %v571, %v581
        %v595 = vmul.f32 %v574, %v581
        %v596 = vmul.f32 %v577, %v581
        %v597 = vmul.f32 %v580, %v581
        %v598 = vsub.f32 %v516, %v582
        %v599 = vsub.f32 %v517, %v583
        %v600 = vsub.f32 %v518, %v584
        %v601 = vsub.f32 %v519, %v585
        %v602 = vsub.f32 %v520, %v586
        %v603 = vsub.f32 %v521, %v587
        %v604 = vsub.f32 %v522, %v588
        %v605 = vsub.f32 %v523, %v589
        %v606 = vsub.f32 %v524, %v590
        %v607 = vsub.f32 %v525, %v591
        %v608 = vsub.f32 %v526, %v592
        %v609 = vsub.f32 %v527, %v593
        %v610 = vsub.f32 %v528, %v594
        %v611 = vsub.f32 %v529, %v595
        %v612 = vsub.f32 %v530, %v596
        %v613 = vsub.f32 %v531, %v597
        %v614 = vmul.f32 %v598, %v598
        %v615 = vmul.f32 %v599, %v599
        %v616 = vmul.f32 %v600, %v600
        %v617 = vmul.f32 %v601, %v601
        %v618 = vmul.f32 %v602, %v602
        %v619 = vmul.f32 %v603, %v603
        %v620 = vmul.f32 %v604, %v604
        %v621 = vmul.f32 %v605, %v605
        %v622 = vmul.f32 %v606, %v606
        %v623 = vmul.f32 %v607, %v607
        %v624 = vmul.f32 %v608, %v608
        %v625 = vmul.f32 %v609, %v609
        %v626 = vmul.f32 %v610, %v610
        %v627 = vmul.f32 %v611, %v611
        %v628 = vmul.f32 %v612, %v612
        %v629 = vmul.f32 %v613, %v613
        %v630 = vsel %vm532, %v614, 0.0
        %631 = vadd.xlane.f32.xlu0 %v630
        %v632 = vpop.xlane.xlu0 %631
        %v633 = vsel %vm532, %v615, 0.0
        %634 = vadd.xlane.f32.xlu0 %v633
        %v635 = vpop.xlane.xlu0 %634
        %v636 = vsel %vm532, %v616, 0.0
        %637 = vadd.xlane.f32.xlu0 %v636
        %v638 = vpop.xlane.xlu0 %637
        %v639 = vsel %vm532, %v617, 0.0
        %640 = vadd.xlane.f32.xlu0 %v639
        %v641 = vpop.xlane.xlu0 %640
        %v642 = vsel %vm532, %v618, 0.0
        %643 = vadd.xlane.f32.xlu0 %v642
        %v644 = vpop.xlane.xlu0 %643
        %v645 = vsel %vm532, %v619, 0.0
        %646 = vadd.xlane.f32.xlu0 %v645
        %v647 = vpop.xlane.xlu0 %646
        %v648 = vsel %vm532, %v620, 0.0
        %649 = vadd.xlane.f32.xlu0 %v648
        %v650 = vpop.xlane.xlu0 %649
        %v651 = vsel %vm532, %v621, 0.0
        %652 = vadd.xlane.f32.xlu0 %v651
        %v653 = vpop.xlane.xlu0 %652
        %v654 = vsel %vm532, %v622, 0.0
        %655 = vadd.xlane.f32.xlu0 %v654
        %v656 = vpop.xlane.xlu0 %655
        %v657 = vsel %vm532, %v623, 0.0
        %658 = vadd.xlane.f32.xlu0 %v657
        %v659 = vpop.xlane.xlu0 %658
        %v660 = vsel %vm532, %v624, 0.0
        %661 = vadd.xlane.f32.xlu0 %v660
        %v662 = vpop.xlane.xlu0 %661
        %v663 = vsel %vm532, %v625, 0.0
        %664 = vadd.xlane.f32.xlu0 %v663
        %v665 = vpop.xlane.xlu0 %664
        %v666 = vsel %vm532, %v626, 0.0
        %667 = vadd.xlane.f32.xlu0 %v666
        %v668 = vpop.xlane.xlu0 %667
        %v669 = vsel %vm532, %v627, 0.0
        %670 = vadd.xlane.f32.xlu0 %v669
        %v671 = vpop.xlane.xlu0 %670
        %v672 = vsel %vm532, %v628, 0.0
        %673 = vadd.xlane.f32.xlu0 %v672
        %v674 = vpop.xlane.xlu0 %673
        %v675 = vsel %vm532, %v629, 0.0
        %676 = vadd.xlane.f32.xlu0 %v675
        %v677 = vpop.xlane.xlu0 %676
        %v678 = vmul.f32 %v632, %v581
        %v679 = vmul.f32 %v635, %v581
        %v680 = vmul.f32 %v638, %v581
        %v681 = vmul.f32 %v641, %v581
        %v682 = vmul.f32 %v644, %v581
        %v683 = vmul.f32 %v647, %v581
        %v684 = vmul.f32 %v650, %v581
        %v685 = vmul.f32 %v653, %v581
        %v686 = vmul.f32 %v656, %v581
        %v687 = vmul.f32 %v659, %v581
        %v688 = vmul.f32 %v662, %v581
        %v689 = vmul.f32 %v665, %v581
        %v690 = vmul.f32 %v668, %v581
        %v691 = vmul.f32 %v671, %v581
        %v692 = vmul.f32 %v674, %v581
        %v693 = vmul.f32 %v677, %v581
        %v694 = vadd.f32 %v678, 1e-05
        %v695 = vadd.f32 %v679, 1e-05
        %v696 = vadd.f32 %v680, 1e-05
        %v697 = vadd.f32 %v681, 1e-05
        %v698 = vadd.f32 %v682, 1e-05
        %v699 = vadd.f32 %v683, 1e-05
        %v700 = vadd.f32 %v684, 1e-05
        %v701 = vadd.f32 %v685, 1e-05
        %v702 = vadd.f32 %v686, 1e-05
        %v703 = vadd.f32 %v687, 1e-05
        %v704 = vadd.f32 %v688, 1e-05
        %v705 = vadd.f32 %v689, 1e-05
        %v706 = vadd.f32 %v690, 1e-05
        %v707 = vadd.f32 %v691, 1e-05
        %v708 = vadd.f32 %v692, 1e-05
        %v709 = vadd.f32 %v693, 1e-05
        %v710 = vrsqrt.pop %v694
        %v711 = vrsqrt.pop %v695
        %v712 = vrsqrt.pop %v696
        %v713 = vrsqrt.pop %v697
        %v714 = vrsqrt.pop %v698
        %v715 = vrsqrt.pop %v699
        %v716 = vrsqrt.pop %v700
        %v717 = vrsqrt.pop %v701
        %v718 = vrsqrt.pop %v702
        %v719 = vrsqrt.pop %v703
        %v720 = vrsqrt.pop %v704
        %v721 = vrsqrt.pop %v705
        %v722 = vrsqrt.pop %v706
        %v723 = vrsqrt.pop %v707
        %v724 = vrsqrt.pop %v708
        %v725 = vrsqrt.pop %v709
        %v726 = vmul.f32 %v598, %v710
        %v727 = vmul.f32 %v599, %v711
        %v728 = vmul.f32 %v600, %v712
        %v729 = vmul.f32 %v601, %v713
        %v730 = vmul.f32 %v602, %v714
        %v731 = vmul.f32 %v603, %v715
        %v732 = vmul.f32 %v604, %v716
        %v733 = vmul.f32 %v605, %v717
        %v734 = vmul.f32 %v606, %v718
        %v735 = vmul.f32 %v607, %v719
        %v736 = vmul.f32 %v608, %v720
        %v737 = vmul.f32 %v609, %v721
        %v738 = vmul.f32 %v610, %v722
        %v739 = vmul.f32 %v611, %v723
        %v740 = vmul.f32 %v612, %v724
        %v741 = vmul.f32 %v613, %v725
        %v742 = vlaneseq
        %v743 = vshrl.u32 %v742, 7
        %v744 = vsub.s32 0, %v743
        %v745 = vrot.slane %v514, %v744
        %v746 = vmul.f32 %v726, %v745
        %v747 = vmul.f32 %v727, %v745
        %v748 = vmul.f32 %v728, %v745
        %v749 = vmul.f32 %v729, %v745
        %v750 = vmul.f32 %v730, %v745
        %v751 = vmul.f32 %v731, %v745
        %v752 = vmul.f32 %v732, %v745
        %v753 = vmul.f32 %v733, %v745
        %v754 = vmul.f32 %v734, %v745
        %v755 = vmul.f32 %v735, %v745
        %v756 = vmul.f32 %v736, %v745
        %v757 = vmul.f32 %v737, %v745
        %v758 = vmul.f32 %v738, %v745
        %v759 = vmul.f32 %v739, %v745
        %v760 = vmul.f32 %v740, %v745
        %v761 = vmul.f32 %v741, %v745
        %763 = vrot.lane.b32.xlu0 %v745, 96
        %v764 = vpop.permute.xlu0 %763
        %v766 = vadd.f32 %v746, %v764
        %v767 = vadd.f32 %v747, %v764
        %v768 = vadd.f32 %v748, %v764
        %v769 = vadd.f32 %v749, %v764
        %v770 = vadd.f32 %v750, %v764
        %v771 = vadd.f32 %v751, %v764
        %v772 = vadd.f32 %v752, %v764
        %v773 = vadd.f32 %v753, %v764
        %v774 = vadd.f32 %v754, %v764
        %v775 = vadd.f32 %v755, %v764
        %v776 = vadd.f32 %v756, %v764
        %v777 = vadd.f32 %v757, %v764
        %v778 = vadd.f32 %v758, %v764
        %v779 = vadd.f32 %v759, %v764
        %v780 = vadd.f32 %v760, %v764
        %v781 = vadd.f32 %v761, %v764
        %v782 = vld [vmem:[%s504] sm:$0xff]
        %v783 = vld [vmem:[%s504 + $0x8] sm:$0xff]
        %v784 = vld [vmem:[%s4] sm:$0xff]
        %v785 = vld [vmem:[%s4 + $0x8] sm:$0xff]
        %v786 = vld [vmem:[%s4 + $0x10] sm:$0xff]
        %vm787 = vcmask 195584
        %v789 = vsel %vm787, %v782, 0
        %v792 = vsel %vm787, %v783, 0
        %794 = vmatprep.subr.mxu0 0.0
        %795 = vmatpush1.msra.mxu0 %v784
        %796 = vmatprep.subr.mxu0 0.0
        %797 = vmatpush1.msra.mxu0 %v785
        %798 = vmatprep.subr.mxu0 0.0
        %799 = vmatpush1.msra.mxu0 %v786
        %800 = vmatprep.subr.mxu0 0.0
        %801 = vmatpush1.msra.mxu0 0.0
        %802 = vmatprep.subr.mxu0 0.0
        %803 = vmatpush1.msra.mxu0 0.0
        %804 = vmatprep.subr.mxu0 0.0
        %805 = vmatpush1.msra.mxu0 0.0
        %806 = vmatprep.subr.mxu0 0.0
        %807 = vmatpush1.msra.mxu0 0.0
        %808 = vmatprep.subr.mxu0 0.0
        %809 = vmatpush1.msra.mxu0 0.0
        %810 = vmatprep.subr.mxu0 0.0
        %811 = vmatpush1.msra.mxu0 0.0
        %812 = vmatprep.subr.mxu0 0.0
        %813 = vmatpush1.msra.mxu0 0.0
        %814 = vmatprep.subr.mxu0 0.0
        %815 = vmatpush1.msra.mxu0 0.0
        %816 = vmatprep.subr.mxu0 0.0
        %817 = vmatpush1.msra.mxu0 0.0
        %818 = vmatprep.subr.mxu0 0.0
        %819 = vmatpush1.msra.mxu0 0.0
        %820 = vmatprep.subr.mxu0 0.0
        %821 = vmatpush1.msra.mxu0 0.0
        %822 = vmatprep.subr.mxu0 0.0
        %823 = vmatpush1.msra.mxu0 0.0
        %824 = vmatprep.subr.mxu0 0.0
        %825 = vmatpush1.msra.mxu0 0.0
        %826 = vmatprep.subr.mxu0 0.0
        %827 = vmatpush1.msra.mxu0 0.0
        %828 = vmatprep.subr.mxu0 0.0
        %829 = vmatpush1.msra.mxu0 0.0
        %830 = vmatprep.subr.mxu0 0.0
        %831 = vmatpush1.msra.mxu0 0.0
        %832 = vmatprep.subr.mxu0 0.0
        %833 = vmatpush1.msra.mxu0 0.0
        %834 = vmatprep.subr.mxu0 0.0
        %835 = vmatpush1.msra.mxu0 0.0
        %836 = vmatprep.subr.mxu0 0.0
        %837 = vmatpush1.msra.mxu0 0.0
        %838 = vmatprep.subr.mxu0 0.0
        %839 = vmatpush1.msra.mxu0 0.0
        %840 = vmatprep.subr.mxu0 0.0
        %841 = vmatpush1.msra.mxu0 0.0
        %842 = vmatprep.subr.mxu0 0.0
        %843 = vmatpush1.msra.mxu0 0.0
        %844 = vmatprep.subr.mxu0 0.0
        %845 = vmatpush1.msra.mxu0 0.0
        %846 = vmatprep.subr.mxu0 0.0
        %847 = vmatpush1.msra.mxu0 0.0
        %848 = vmatprep.subr.mxu0 0.0
        %849 = vmatpush1.msra.mxu0 0.0
        %850 = vmatprep.subr.mxu0 0.0
        %851 = vmatpush1.msra.mxu0 0.0
        %852 = vmatprep.subr.mxu0 0.0
        %853 = vmatpush1.msra.mxu0 0.0
        %854 = vmatprep.subr.mxu0 0.0
        %855 = vmatpush1.msra.mxu0 0.0
        %856 = vmatprep.subr.mxu0 0.0
        %857 = vmatpush1.msra.mxu0 0.0
        %858 = vmatprep.mubr.f32.mxu0 0.0
        %859 = vmatmul.mubr.f32.gmra.mrb[0].mxu0 %v789
        %v860 = vpop.f32.mrb[0].mxu0
        %v861 = vadd.f32 0.0, %v860
        %v862 = vpop.f32.mrb[0].mxu0
        %863 = vmatprep.mubr.f32.mxu0 0.0
        %864 = vmatmul.mubr.f32.gmra.mrb[0].mxu0 %v792
        %v865 = vpop.f32.mrb[0].mxu0
        %v866 = vadd.f32 0.0, %v865
        %v867 = vpop.f32.mrb[0].mxu0
        %868 = vdwg.mxu0
        %v869 = vld [vmem:[%s510] sm:$0xff]
        %v870 = vld [vmem:[%s510 + $0x8] sm:$0xff]
        %v871 = vld [vmem:[%s510 + $0x10] sm:$0xff]
        %v872 = vld [vmem:[%s510 + $0x18] sm:$0xff]
        %v873 = vld [vmem:[%s510 + $0x20] sm:$0xff]
        %v874 = vld [vmem:[%s510 + $0x28] sm:$0xff]
        %v875 = vld [vmem:[%s510 + $0x30] sm:$0xff]
        %v876 = vld [vmem:[%s510 + $0x38] sm:$0xff]
        %v877 = vld [vmem:[%s510 + $0x40] sm:$0xff]
        %v878 = vld [vmem:[%s510 + $0x48] sm:$0xff]
        %v879 = vld [vmem:[%s510 + $0x50] sm:$0xff]
        %v880 = vld [vmem:[%s510 + $0x58] sm:$0xff]
        %v881 = vld [vmem:[%s510 + $0x60] sm:$0xff]
        %v882 = vld [vmem:[%s510 + $0x68] sm:$0xff]
        %v883 = vld [vmem:[%s510 + $0x70] sm:$0xff]
        %v884 = vld [vmem:[%s510 + $0x78] sm:$0xff]
        %886 = vset.pattern.permute.xlu0 0
        %887 = vperm.xlu0 %886, %v869
        %v888 = vpop.permute.xlu0 %887
        %891 = vset.pattern.permute.xlu0 0
        %892 = vperm.xlu0 %891, %v870
        %v893 = vpop.permute.xlu0 %892
        %896 = vset.pattern.permute.xlu0 0
        %897 = vperm.xlu0 %896, %v871
        %v898 = vpop.permute.xlu0 %897
        %901 = vset.pattern.permute.xlu0 0
        %902 = vperm.xlu0 %901, %v872
        %v903 = vpop.permute.xlu0 %902
        %906 = vset.pattern.permute.xlu0 0
        %907 = vperm.xlu0 %906, %v873
        %v908 = vpop.permute.xlu0 %907
        %911 = vset.pattern.permute.xlu0 0
        %912 = vperm.xlu0 %911, %v874
        %v913 = vpop.permute.xlu0 %912
        %916 = vset.pattern.permute.xlu0 0
        %917 = vperm.xlu0 %916, %v875
        %v918 = vpop.permute.xlu0 %917
        %921 = vset.pattern.permute.xlu0 0
        %922 = vperm.xlu0 %921, %v876
        %v923 = vpop.permute.xlu0 %922
        %926 = vset.pattern.permute.xlu0 0
        %927 = vperm.xlu0 %926, %v877
        %v928 = vpop.permute.xlu0 %927
        %931 = vset.pattern.permute.xlu0 0
        %932 = vperm.xlu0 %931, %v878
        %v933 = vpop.permute.xlu0 %932
        %936 = vset.pattern.permute.xlu0 0
        %937 = vperm.xlu0 %936, %v879
        %v938 = vpop.permute.xlu0 %937
        %941 = vset.pattern.permute.xlu0 0
        %942 = vperm.xlu0 %941, %v880
        %v943 = vpop.permute.xlu0 %942
        %946 = vset.pattern.permute.xlu0 0
        %947 = vperm.xlu0 %946, %v881
        %v948 = vpop.permute.xlu0 %947
        %951 = vset.pattern.permute.xlu0 0
        %952 = vperm.xlu0 %951, %v882
        %v953 = vpop.permute.xlu0 %952
        %956 = vset.pattern.permute.xlu0 0
        %957 = vperm.xlu0 %956, %v883
        %v958 = vpop.permute.xlu0 %957
        %961 = vset.pattern.permute.xlu0 0
        %962 = vperm.xlu0 %961, %v884
        %v963 = vpop.permute.xlu0 %962
        %v965 = vlaneseq
        %v966 = vshrl.u32 %v965, 7
        %v967 = vsub.s32 7, %v966
        %v968 = vrot.slane %v514, %v967
        %v969 = vmul.f32 %v888, %v968
        %v970 = vmul.f32 %v893, %v968
        %v971 = vmul.f32 %v898, %v968
        %v972 = vmul.f32 %v903, %v968
        %v973 = vmul.f32 %v908, %v968
        %v974 = vmul.f32 %v913, %v968
        %v975 = vmul.f32 %v918, %v968
        %v976 = vmul.f32 %v923, %v968
        %v977 = vmul.f32 %v928, %v968
        %v978 = vmul.f32 %v933, %v968
        %v979 = vmul.f32 %v938, %v968
        %v980 = vmul.f32 %v943, %v968
        %v981 = vmul.f32 %v948, %v968
        %v982 = vmul.f32 %v953, %v968
        %v983 = vmul.f32 %v958, %v968
        %v984 = vmul.f32 %v963, %v968
        %985 = vset.pattern.permute.xlu0 1
        %986 = vperm.xlu0 %985, %v869
        %v987 = vpop.permute.xlu0 %986
        %989 = vset.pattern.permute.xlu0 1
        %990 = vperm.xlu0 %989, %v870
        %v991 = vpop.permute.xlu0 %990
        %993 = vset.pattern.permute.xlu0 1
        %994 = vperm.xlu0 %993, %v871
        %v995 = vpop.permute.xlu0 %994
        %997 = vset.pattern.permute.xlu0 1
        %998 = vperm.xlu0 %997, %v872
        %v999 = vpop.permute.xlu0 %998
        %1001 = vset.pattern.permute.xlu0 1
        %1002 = vperm.xlu0 %1001, %v873
        %v1003 = vpop.permute.xlu0 %1002
        %1005 = vset.pattern.permute.xlu0 1
        %1006 = vperm.xlu0 %1005, %v874
        %v1007 = vpop.permute.xlu0 %1006
        %1009 = vset.pattern.permute.xlu0 1
        %1010 = vperm.xlu0 %1009, %v875
        %v1011 = vpop.permute.xlu0 %1010
        %1013 = vset.pattern.permute.xlu0 1
        %1014 = vperm.xlu0 %1013, %v876
        %v1015 = vpop.permute.xlu0 %1014
        %1017 = vset.pattern.permute.xlu0 1
        %1018 = vperm.xlu0 %1017, %v877
        %v1019 = vpop.permute.xlu0 %1018
        %1021 = vset.pattern.permute.xlu0 1
        %1022 = vperm.xlu0 %1021, %v878
        %v1023 = vpop.permute.xlu0 %1022
        %1025 = vset.pattern.permute.xlu0 1
        %1026 = vperm.xlu0 %1025, %v879
        %v1027 = vpop.permute.xlu0 %1026
        %1029 = vset.pattern.permute.xlu0 1
        %1030 = vperm.xlu0 %1029, %v880
        %v1031 = vpop.permute.xlu0 %1030
        %1033 = vset.pattern.permute.xlu0 1
        %1034 = vperm.xlu0 %1033, %v881
        %v1035 = vpop.permute.xlu0 %1034
        %1037 = vset.pattern.permute.xlu0 1
        %1038 = vperm.xlu0 %1037, %v882
        %v1039 = vpop.permute.xlu0 %1038
        %1041 = vset.pattern.permute.xlu0 1
        %1042 = vperm.xlu0 %1041, %v883
        %v1043 = vpop.permute.xlu0 %1042
        %1045 = vset.pattern.permute.xlu0 1
        %1046 = vperm.xlu0 %1045, %v884
        %v1047 = vpop.permute.xlu0 %1046
        %v1049 = vlaneseq
        %v1050 = vshrl.u32 %v1049, 7
        %v1051 = vsub.s32 0, %v1050
        %v1052 = vrot.slane %v515, %v1051
        %v1053 = vmul.f32 %v987, %v1052
        %v1054 = vmul.f32 %v991, %v1052
        %v1055 = vmul.f32 %v995, %v1052
        %v1056 = vmul.f32 %v999, %v1052
        %v1057 = vmul.f32 %v1003, %v1052
        %v1058 = vmul.f32 %v1007, %v1052
        %v1059 = vmul.f32 %v1011, %v1052
        %v1060 = vmul.f32 %v1015, %v1052
        %v1061 = vmul.f32 %v1019, %v1052
        %v1062 = vmul.f32 %v1023, %v1052
        %v1063 = vmul.f32 %v1027, %v1052
        %v1064 = vmul.f32 %v1031, %v1052
        %v1065 = vmul.f32 %v1035, %v1052
        %v1066 = vmul.f32 %v1039, %v1052
        %v1067 = vmul.f32 %v1043, %v1052
        %v1068 = vmul.f32 %v1047, %v1052
        %v1069 = vadd.f32 %v969, %v1053
        %v1070 = vadd.f32 %v970, %v1054
        %v1071 = vadd.f32 %v971, %v1055
        %v1072 = vadd.f32 %v972, %v1056
        %v1073 = vadd.f32 %v973, %v1057
        %v1074 = vadd.f32 %v974, %v1058
        %v1075 = vadd.f32 %v975, %v1059
        %v1076 = vadd.f32 %v976, %v1060
        %v1077 = vadd.f32 %v977, %v1061
        %v1078 = vadd.f32 %v978, %v1062
        %v1079 = vadd.f32 %v979, %v1063
        %v1080 = vadd.f32 %v980, %v1064
        %v1081 = vadd.f32 %v981, %v1065
        %v1082 = vadd.f32 %v982, %v1066
        %v1083 = vadd.f32 %v983, %v1067
        %v1084 = vadd.f32 %v984, %v1068
        %1085 = vset.pattern.permute.xlu0 2
        %1086 = vperm.xlu0 %1085, %v869
        %v1087 = vpop.permute.xlu0 %1086
        %1089 = vset.pattern.permute.xlu0 2
        %1090 = vperm.xlu0 %1089, %v870
        %v1091 = vpop.permute.xlu0 %1090
        %1093 = vset.pattern.permute.xlu0 2
        %1094 = vperm.xlu0 %1093, %v871
        %v1095 = vpop.permute.xlu0 %1094
        %1097 = vset.pattern.permute.xlu0 2
        %1098 = vperm.xlu0 %1097, %v872
        %v1099 = vpop.permute.xlu0 %1098
        %1101 = vset.pattern.permute.xlu0 2
        %1102 = vperm.xlu0 %1101, %v873
        %v1103 = vpop.permute.xlu0 %1102
        %1105 = vset.pattern.permute.xlu0 2
        %1106 = vperm.xlu0 %1105, %v874
        %v1107 = vpop.permute.xlu0 %1106
        %1109 = vset.pattern.permute.xlu0 2
        %1110 = vperm.xlu0 %1109, %v875
        %v1111 = vpop.permute.xlu0 %1110
        %1113 = vset.pattern.permute.xlu0 2
        %1114 = vperm.xlu0 %1113, %v876
        %v1115 = vpop.permute.xlu0 %1114
        %1117 = vset.pattern.permute.xlu0 2
        %1118 = vperm.xlu0 %1117, %v877
        %v1119 = vpop.permute.xlu0 %1118
        %1121 = vset.pattern.permute.xlu0 2
        %1122 = vperm.xlu0 %1121, %v878
        %v1123 = vpop.permute.xlu0 %1122
        %1125 = vset.pattern.permute.xlu0 2
        %1126 = vperm.xlu0 %1125, %v879
        %v1127 = vpop.permute.xlu0 %1126
        %1129 = vset.pattern.permute.xlu0 2
        %1130 = vperm.xlu0 %1129, %v880
        %v1131 = vpop.permute.xlu0 %1130
        %1133 = vset.pattern.permute.xlu0 2
        %1134 = vperm.xlu0 %1133, %v881
        %v1135 = vpop.permute.xlu0 %1134
        %1137 = vset.pattern.permute.xlu0 2
        %1138 = vperm.xlu0 %1137, %v882
        %v1139 = vpop.permute.xlu0 %1138
        %1141 = vset.pattern.permute.xlu0 2
        %1142 = vperm.xlu0 %1141, %v883
        %v1143 = vpop.permute.xlu0 %1142
        %1145 = vset.pattern.permute.xlu0 2
        %1146 = vperm.xlu0 %1145, %v884
        %v1147 = vpop.permute.xlu0 %1146
        %v1149 = vlaneseq
        %v1150 = vshrl.u32 %v1149, 7
        %v1151 = vsub.s32 1, %v1150
        %v1152 = vrot.slane %v515, %v1151
        %v1153 = vmul.f32 %v1087, %v1152
        %v1154 = vmul.f32 %v1091, %v1152
        %v1155 = vmul.f32 %v1095, %v1152
        %v1156 = vmul.f32 %v1099, %v1152
        %v1157 = vmul.f32 %v1103, %v1152
        %v1158 = vmul.f32 %v1107, %v1152
        %v1159 = vmul.f32 %v1111, %v1152
        %v1160 = vmul.f32 %v1115, %v1152
        %v1161 = vmul.f32 %v1119, %v1152
        %v1162 = vmul.f32 %v1123, %v1152
        %v1163 = vmul.f32 %v1127, %v1152
        %v1164 = vmul.f32 %v1131, %v1152
        %v1165 = vmul.f32 %v1135, %v1152
        %v1166 = vmul.f32 %v1139, %v1152
        %v1167 = vmul.f32 %v1143, %v1152
        %v1168 = vmul.f32 %v1147, %v1152
        %v1169 = vadd.f32 %v1069, %v1153
        %v1170 = vadd.f32 %v1070, %v1154
        %v1171 = vadd.f32 %v1071, %v1155
        %v1172 = vadd.f32 %v1072, %v1156
        %v1173 = vadd.f32 %v1073, %v1157
        %v1174 = vadd.f32 %v1074, %v1158
        %v1175 = vadd.f32 %v1075, %v1159
        %v1176 = vadd.f32 %v1076, %v1160
        %v1177 = vadd.f32 %v1077, %v1161
        %v1178 = vadd.f32 %v1078, %v1162
        %v1179 = vadd.f32 %v1079, %v1163
        %v1180 = vadd.f32 %v1080, %v1164
        %v1181 = vadd.f32 %v1081, %v1165
        %v1182 = vadd.f32 %v1082, %v1166
        %v1183 = vadd.f32 %v1083, %v1167
        %v1184 = vadd.f32 %v1084, %v1168
        %v1187 = vcombine.high %v861, %v861
        %v1189 = vunpack.c.l.s4 1966171168
        %v1190 = vunpack.c.0.s8 %v1189
        %v1191 = vlaneseq
        %v1192 = vshrl.u32 %v1191, 7
        %v1193 = vsub.s32 %v1190, %v1192
        %v1194 = vrot.slane %v861, %v1193
        %v1196 = vunpack.c.l.s4 1966171168
        %v1197 = vunpack.c.0.s8 %v1196
        %v1198 = vlaneseq
        %v1199 = vshrl.u32 %v1198, 7
        %v1200 = vsub.s32 %v1197, %v1199
        %v1201 = vrot.slane %v1187, %v1200
        %v1202 = vcombine.high %v1194, %v1194
        %v1203 = vcombine.high %v1201, %v1201
        %v1205 = vunpack.c.l.s4 1966171168
        %v1206 = vunpack.c.0.s8 %v1205
        %v1207 = vlaneseq
        %v1208 = vshrl.u32 %v1207, 7
        %v1209 = vsub.s32 %v1206, %v1208
        %v1210 = vrot.slane %v1194, %v1209
        %v1212 = vunpack.c.l.s4 1966171168
        %v1213 = vunpack.c.0.s8 %v1212
        %v1214 = vlaneseq
        %v1215 = vshrl.u32 %v1214, 7
        %v1216 = vsub.s32 %v1213, %v1215
        %v1217 = vrot.slane %v1201, %v1216
        %v1219 = vunpack.c.l.s4 1966171168
        %v1220 = vunpack.c.0.s8 %v1219
        %v1221 = vlaneseq
        %v1222 = vshrl.u32 %v1221, 7
        %v1223 = vsub.s32 %v1220, %v1222
        %v1224 = vrot.slane %v1202, %v1223
        %v1226 = vunpack.c.l.s4 1966171168
        %v1227 = vunpack.c.0.s8 %v1226
        %v1228 = vlaneseq
        %v1229 = vshrl.u32 %v1228, 7
        %v1230 = vsub.s32 %v1227, %v1229
        %v1231 = vrot.slane %v1203, %v1230
        %v1232 = vcombine.high %v1210, %v1210
        %v1233 = vcombine.high %v1217, %v1217
        %v1234 = vcombine.high %v1224, %v1224
        %v1235 = vcombine.high %v1231, %v1231
        %v1236 = vcombine.high %v866, %v866
        %v1238 = vunpack.c.l.s4 1966171168
        %v1239 = vunpack.c.0.s8 %v1238
        %v1240 = vlaneseq
        %v1241 = vshrl.u32 %v1240, 7
        %v1242 = vsub.s32 %v1239, %v1241
        %v1243 = vrot.slane %v866, %v1242
        %v1245 = vunpack.c.l.s4 1966171168
        %v1246 = vunpack.c.0.s8 %v1245
        %v1247 = vlaneseq
        %v1248 = vshrl.u32 %v1247, 7
        %v1249 = vsub.s32 %v1246, %v1248
        %v1250 = vrot.slane %v1236, %v1249
        %v1251 = vcombine.high %v1243, %v1243
        %v1252 = vcombine.high %v1250, %v1250
        %v1254 = vunpack.c.l.s4 1966171168
        %v1255 = vunpack.c.0.s8 %v1254
        %v1256 = vlaneseq
        %v1257 = vshrl.u32 %v1256, 7
        %v1258 = vsub.s32 %v1255, %v1257
        %v1259 = vrot.slane %v1243, %v1258
        %v1261 = vunpack.c.l.s4 1966171168
        %v1262 = vunpack.c.0.s8 %v1261
        %v1263 = vlaneseq
        %v1264 = vshrl.u32 %v1263, 7
        %v1265 = vsub.s32 %v1262, %v1264
        %v1266 = vrot.slane %v1250, %v1265
        %v1268 = vunpack.c.l.s4 1966171168
        %v1269 = vunpack.c.0.s8 %v1268
        %v1270 = vlaneseq
        %v1271 = vshrl.u32 %v1270, 7
        %v1272 = vsub.s32 %v1269, %v1271
        %v1273 = vrot.slane %v1251, %v1272
        %v1275 = vunpack.c.l.s4 1966171168
        %v1276 = vunpack.c.0.s8 %v1275
        %v1277 = vlaneseq
        %v1278 = vshrl.u32 %v1277, 7
        %v1279 = vsub.s32 %v1276, %v1278
        %v1280 = vrot.slane %v1252, %v1279
        %v1281 = vcombine.high %v1259, %v1259
        %v1282 = vcombine.high %v1266, %v1266
        %v1283 = vcombine.high %v1273, %v1273
        %v1284 = vcombine.high %v1280, %v1280
        %v1285 = vlaneseq
        %v1286 = vshrl.u32 %v1285, 7
        %v1287 = vsub.s32 0, %v1286
        %v1288 = vrot.slane %v1210, %v1287
        %v1289 = vlaneseq
        %v1290 = vshrl.u32 %v1289, 7
        %v1291 = vsub.s32 0, %v1290
        %v1292 = vrot.slane %v1224, %v1291
        %v1293 = vlaneseq
        %v1294 = vshrl.u32 %v1293, 7
        %v1295 = vsub.s32 0, %v1294
        %v1296 = vrot.slane %v1232, %v1295
        %v1297 = vlaneseq
        %v1298 = vshrl.u32 %v1297, 7
        %v1299 = vsub.s32 0, %v1298
        %v1300 = vrot.slane %v1234, %v1299
        %v1301 = vlaneseq
        %v1302 = vshrl.u32 %v1301, 7
        %v1303 = vsub.s32 0, %v1302
        %v1304 = vrot.slane %v1217, %v1303
        %v1305 = vlaneseq
        %v1306 = vshrl.u32 %v1305, 7
        %v1307 = vsub.s32 0, %v1306
        %v1308 = vrot.slane %v1231, %v1307
        %v1309 = vlaneseq
        %v1310 = vshrl.u32 %v1309, 7
        %v1311 = vsub.s32 0, %v1310
        %v1312 = vrot.slane %v1233, %v1311
        %v1313 = vlaneseq
        %v1314 = vshrl.u32 %v1313, 7
        %v1315 = vsub.s32 0, %v1314
        %v1316 = vrot.slane %v1235, %v1315
        %v1317 = vlaneseq
        %v1318 = vshrl.u32 %v1317, 7
        %v1319 = vsub.s32 0, %v1318
        %v1320 = vrot.slane %v1259, %v1319
        %v1321 = vlaneseq
        %v1322 = vshrl.u32 %v1321, 7
        %v1323 = vsub.s32 0, %v1322
        %v1324 = vrot.slane %v1273, %v1323
        %v1325 = vlaneseq
        %v1326 = vshrl.u32 %v1325, 7
        %v1327 = vsub.s32 0, %v1326
        %v1328 = vrot.slane %v1281, %v1327
        %v1329 = vlaneseq
        %v1330 = vshrl.u32 %v1329, 7
        %v1331 = vsub.s32 0, %v1330
        %v1332 = vrot.slane %v1283, %v1331
        %v1333 = vlaneseq
        %v1334 = vshrl.u32 %v1333, 7
        %v1335 = vsub.s32 0, %v1334
        %v1336 = vrot.slane %v1266, %v1335
        %v1337 = vlaneseq
        %v1338 = vshrl.u32 %v1337, 7
        %v1339 = vsub.s32 0, %v1338
        %v1340 = vrot.slane %v1280, %v1339
        %v1341 = vlaneseq
        %v1342 = vshrl.u32 %v1341, 7
        %v1343 = vsub.s32 0, %v1342
        %v1344 = vrot.slane %v1282, %v1343
        %v1345 = vlaneseq
        %v1346 = vshrl.u32 %v1345, 7
        %v1347 = vsub.s32 0, %v1346
        %v1348 = vrot.slane %v1284, %v1347
        %v1365 = vsub.f32 %v1288, %v1169
        %v1366 = vsub.f32 %v1292, %v1170
        %v1367 = vsub.f32 %v1296, %v1171
        %v1368 = vsub.f32 %v1300, %v1172
        %v1369 = vsub.f32 %v1304, %v1173
        %v1370 = vsub.f32 %v1308, %v1174
        %v1371 = vsub.f32 %v1312, %v1175
        %v1372 = vsub.f32 %v1316, %v1176
        %v1373 = vsub.f32 %v1320, %v1177
        %v1374 = vsub.f32 %v1324, %v1178
        %v1375 = vsub.f32 %v1328, %v1179
        %v1376 = vsub.f32 %v1332, %v1180
        %v1377 = vsub.f32 %v1336, %v1181
        %v1378 = vsub.f32 %v1340, %v1182
        %v1379 = vsub.f32 %v1344, %v1183
        %v1380 = vsub.f32 %v1348, %v1184
        %v1381 = vlaneseq
        %v1382 = vshrl.u32 %v1381, 7
        %v1383 = vsub.s32 3, %v1382
        %v1384 = vrot.slane %v514, %v1383
        %v1385 = vadd.f32 %v1365, %v1384
        %v1386 = vadd.f32 %v1366, %v1384
        %v1387 = vadd.f32 %v1367, %v1384
        %v1388 = vadd.f32 %v1368, %v1384
        %v1389 = vadd.f32 %v1369, %v1384
        %v1390 = vadd.f32 %v1370, %v1384
        %v1391 = vadd.f32 %v1371, %v1384
        %v1392 = vadd.f32 %v1372, %v1384
        %v1393 = vadd.f32 %v1373, %v1384
        %v1394 = vadd.f32 %v1374, %v1384
        %v1395 = vadd.f32 %v1375, %v1384
        %v1396 = vadd.f32 %v1376, %v1384
        %v1397 = vadd.f32 %v1377, %v1384
        %v1398 = vadd.f32 %v1378, %v1384
        %v1399 = vadd.f32 %v1379, %v1384
        %v1400 = vadd.f32 %v1380, %v1384
        %v1401 = vlaneseq
        %v1402 = vshrl.u32 %v1401, 7
        %v1403 = vsub.s32 4, %v1402
        %v1404 = vrot.slane %v514, %v1403
        %v1405 = vmul.f32 %v1385, %v1404
        %v1406 = vmul.f32 %v1386, %v1404
        %v1407 = vmul.f32 %v1387, %v1404
        %v1408 = vmul.f32 %v1388, %v1404
        %v1409 = vmul.f32 %v1389, %v1404
        %v1410 = vmul.f32 %v1390, %v1404
        %v1411 = vmul.f32 %v1391, %v1404
        %v1412 = vmul.f32 %v1392, %v1404
        %v1413 = vmul.f32 %v1393, %v1404
        %v1414 = vmul.f32 %v1394, %v1404
        %v1415 = vmul.f32 %v1395, %v1404
        %v1416 = vmul.f32 %v1396, %v1404
        %v1417 = vmul.f32 %v1397, %v1404
        %v1418 = vmul.f32 %v1398, %v1404
        %v1419 = vmul.f32 %v1399, %v1404
        %v1420 = vmul.f32 %v1400, %v1404
        %v1421 = vlaneseq
        %v1422 = vshrl.u32 %v1421, 7
        %v1423 = vsub.s32 5, %v1422
        %v1424 = vrot.slane %v514, %v1423
        %v1425 = vadd.f32 %v1405, %v1424
        %v1426 = vadd.f32 %v1406, %v1424
        %v1427 = vadd.f32 %v1407, %v1424
        %v1428 = vadd.f32 %v1408, %v1424
        %v1429 = vadd.f32 %v1409, %v1424
        %v1430 = vadd.f32 %v1410, %v1424
        %v1431 = vadd.f32 %v1411, %v1424
        %v1432 = vadd.f32 %v1412, %v1424
        %v1433 = vadd.f32 %v1413, %v1424
        %v1434 = vadd.f32 %v1414, %v1424
        %v1435 = vadd.f32 %v1415, %v1424
        %v1436 = vadd.f32 %v1416, %v1424
        %v1437 = vadd.f32 %v1417, %v1424
        %v1438 = vadd.f32 %v1418, %v1424
        %v1439 = vadd.f32 %v1419, %v1424
        %v1440 = vadd.f32 %v1420, %v1424
        %v1441 = vmax.f32 %v1425, 0.0
        %v1442 = vmax.f32 %v1426, 0.0
        %v1443 = vmax.f32 %v1427, 0.0
        %v1444 = vmax.f32 %v1428, 0.0
        %v1445 = vmax.f32 %v1429, 0.0
        %v1446 = vmax.f32 %v1430, 0.0
        %v1447 = vmax.f32 %v1431, 0.0
        %v1448 = vmax.f32 %v1432, 0.0
        %v1449 = vmax.f32 %v1433, 0.0
        %v1450 = vmax.f32 %v1434, 0.0
        %v1451 = vmax.f32 %v1435, 0.0
        %v1452 = vmax.f32 %v1436, 0.0
        %v1453 = vmax.f32 %v1437, 0.0
        %v1454 = vmax.f32 %v1438, 0.0
        %v1455 = vmax.f32 %v1439, 0.0
        %v1456 = vmax.f32 %v1440, 0.0
        %v1457 = vpack.c.bf16 %v1442, %v1441
        %v1458 = vpack.c.bf16 %v1444, %v1443
        %v1459 = vpack.c.bf16 %v1446, %v1445
        %v1460 = vpack.c.bf16 %v1448, %v1447
        %v1461 = vpack.c.bf16 %v1450, %v1449
        %v1462 = vpack.c.bf16 %v1452, %v1451
        %v1463 = vpack.c.bf16 %v1454, %v1453
        %v1464 = vpack.c.bf16 %v1456, %v1455
        %v1465 = vld [vmem:[%s7] sm:$0xf]
        %v1466 = vld [vmem:[%s7 + $0x4] sm:$0xf]
        %v1467 = vld [vmem:[%s7 + $0x8] sm:$0xf]
        %v1468 = vld [vmem:[%s7 + $0xc] sm:$0xf]
        %v1469 = vld [vmem:[%s7 + $0x10] sm:$0xf]
        %v1470 = vld [vmem:[%s7 + $0x14] sm:$0xf]
        %v1471 = vld [vmem:[%s7 + $0x18] sm:$0xf]
        %v1472 = vld [vmem:[%s7 + $0x1c] sm:$0xf]
        %v1473 = vld [vmem:[%s7 + $0x20] sm:$0xf]
        %v1474 = vld [vmem:[%s7 + $0x24] sm:$0xf]
        %v1475 = vld [vmem:[%s7 + $0x28] sm:$0xf]
        %v1476 = vld [vmem:[%s7 + $0x2c] sm:$0xf]
        %v1477 = vld [vmem:[%s7 + $0x30] sm:$0xf]
        %v1478 = vld [vmem:[%s7 + $0x34] sm:$0xf]
        %v1479 = vld [vmem:[%s7 + $0x38] sm:$0xf]
        %v1480 = vld [vmem:[%s7 + $0x3c] sm:$0xf]
        %v1481 = vlaneseq
        %v1482 = vshrl.u32 %v1481, 7
        %v1483 = vsub.s32 6, %v1482
        %v1484 = vrot.slane %v514, %v1483
        %v1501 = vunpack.c.l.b16 %v1465
        %v1502 = vunpack.c.l.b16 %v1466
        %v1503 = vunpack.c.l.b16 %v1467
        %v1504 = vunpack.c.l.b16 %v1468
        %v1505 = vunpack.c.l.b16 %v1469
        %v1506 = vunpack.c.l.b16 %v1470
        %v1507 = vunpack.c.l.b16 %v1471
        %v1508 = vunpack.c.l.b16 %v1472
        %v1509 = vunpack.c.l.b16 %v1473
        %v1510 = vunpack.c.l.b16 %v1474
        %v1511 = vunpack.c.l.b16 %v1475
        %v1512 = vunpack.c.l.b16 %v1476
        %v1513 = vunpack.c.l.b16 %v1477
        %v1514 = vunpack.c.l.b16 %v1478
        %v1515 = vunpack.c.l.b16 %v1479
        %v1516 = vunpack.c.l.b16 %v1480
        %v1517 = vpack.c.b16 %v1502, %v1501
        %v1518 = vpack.c.b16 %v1504, %v1503
        %v1519 = vpack.c.b16 %v1506, %v1505
        %v1520 = vpack.c.b16 %v1508, %v1507
        %v1521 = vpack.c.b16 %v1510, %v1509
        %v1522 = vpack.c.b16 %v1512, %v1511
        %v1523 = vpack.c.b16 %v1514, %v1513
        %v1524 = vpack.c.b16 %v1516, %v1515
        %1533 = vmatprep.subr.bf16.mxu0 0
        %1534 = vmatpush1.bf16.msra.mxu0 %v1517
        %1535 = vmatprep.subr.bf16.mxu0 0
        %1536 = vmatpush1.bf16.msra.mxu0 %v1518
        %1537 = vmatprep.subr.bf16.mxu0 0
        %1538 = vmatpush1.bf16.msra.mxu0 %v1519
        %1539 = vmatprep.subr.bf16.mxu0 0
        %1540 = vmatpush1.bf16.msra.mxu0 %v1520
        %1541 = vmatprep.subr.bf16.mxu0 0
        %1542 = vmatpush1.bf16.msra.mxu0 %v1521
        %1543 = vmatprep.subr.bf16.mxu0 0
        %1544 = vmatpush1.bf16.msra.mxu0 %v1522
        %1545 = vmatprep.subr.bf16.mxu0 0
        %1546 = vmatpush1.bf16.msra.mxu0 %v1523
        %1547 = vmatprep.subr.bf16.mxu0 0
        %1548 = vmatpush1.bf16.msra.mxu0 %v1524
        %1549 = vmatprep.subr.bf16.mxu0 0
        %1550 = vmatpush1.bf16.msra.mxu0 0
        %1551 = vmatprep.subr.bf16.mxu0 0
        %1552 = vmatpush1.bf16.msra.mxu0 0
        %1553 = vmatprep.subr.bf16.mxu0 0
        %1554 = vmatpush1.bf16.msra.mxu0 0
        %1555 = vmatprep.subr.bf16.mxu0 0
        %1556 = vmatpush1.bf16.msra.mxu0 0
        %1557 = vmatprep.subr.bf16.mxu0 0
        %1558 = vmatpush1.bf16.msra.mxu0 0
        %1559 = vmatprep.subr.bf16.mxu0 0
        %1560 = vmatpush1.bf16.msra.mxu0 0
        %1561 = vmatprep.subr.bf16.mxu0 0
        %1562 = vmatpush1.bf16.msra.mxu0 0
        %1563 = vmatprep.subr.bf16.mxu0 0
        %1564 = vmatpush1.bf16.msra.mxu0 0
        %1565 = vmatprep.mubr.bf16.mxu0 0
        %1566 = vmatmul.mubr.bf16.gmra.mrb[0].mxu0 %v1457
        %v1567 = vpop.f32.mrb[0].mxu0
        %v1568 = vadd.f32 %v1484, %v1567
        %v1569 = vpop.f32.mrb[0].mxu0
        %v1570 = vpop.f32.mrb[0].mxu0
        %v1571 = vadd.f32 %v1484, %v1570
        %v1572 = vpop.f32.mrb[0].mxu0
        %1573 = vmatprep.mubr.bf16.mxu0 0
        %1574 = vmatmul.mubr.bf16.gmra.mrb[0].mxu0 %v1458
        %v1575 = vpop.f32.mrb[0].mxu0
        %v1576 = vadd.f32 %v1484, %v1575
        %v1577 = vpop.f32.mrb[0].mxu0
        %v1578 = vpop.f32.mrb[0].mxu0
        %v1579 = vadd.f32 %v1484, %v1578
        %v1580 = vpop.f32.mrb[0].mxu0
        %1581 = vmatprep.mubr.bf16.mxu0 0
        %1582 = vmatmul.mubr.bf16.gmra.mrb[0].mxu0 %v1459
        %v1583 = vpop.f32.mrb[0].mxu0
        %v1584 = vadd.f32 %v1484, %v1583
        %v1585 = vpop.f32.mrb[0].mxu0
        %v1586 = vpop.f32.mrb[0].mxu0
        %v1587 = vadd.f32 %v1484, %v1586
        %v1588 = vpop.f32.mrb[0].mxu0
        %1589 = vmatprep.mubr.bf16.mxu0 0
        %1590 = vmatmul.mubr.bf16.gmra.mrb[0].mxu0 %v1460
        %v1591 = vpop.f32.mrb[0].mxu0
        %v1592 = vadd.f32 %v1484, %v1591
        %v1593 = vpop.f32.mrb[0].mxu0
        %v1594 = vpop.f32.mrb[0].mxu0
        %v1595 = vadd.f32 %v1484, %v1594
        %v1596 = vpop.f32.mrb[0].mxu0
        %1597 = vmatprep.mubr.bf16.mxu0 0
        %1598 = vmatmul.mubr.bf16.gmra.mrb[0].mxu0 %v1461
        %v1599 = vpop.f32.mrb[0].mxu0
        %v1600 = vadd.f32 %v1484, %v1599
        %v1601 = vpop.f32.mrb[0].mxu0
        %v1602 = vpop.f32.mrb[0].mxu0
        %v1603 = vadd.f32 %v1484, %v1602
        %v1604 = vpop.f32.mrb[0].mxu0
        %1605 = vmatprep.mubr.bf16.mxu0 0
        %1606 = vmatmul.mubr.bf16.gmra.mrb[0].mxu0 %v1462
        %v1607 = vpop.f32.mrb[0].mxu0
        %v1608 = vadd.f32 %v1484, %v1607
        %v1609 = vpop.f32.mrb[0].mxu0
        %v1610 = vpop.f32.mrb[0].mxu0
        %v1611 = vadd.f32 %v1484, %v1610
        %v1612 = vpop.f32.mrb[0].mxu0
        %1613 = vmatprep.mubr.bf16.mxu0 0
        %1614 = vmatmul.mubr.bf16.gmra.mrb[0].mxu0 %v1463
        %v1615 = vpop.f32.mrb[0].mxu0
        %v1616 = vadd.f32 %v1484, %v1615
        %v1617 = vpop.f32.mrb[0].mxu0
        %v1618 = vpop.f32.mrb[0].mxu0
        %v1619 = vadd.f32 %v1484, %v1618
        %v1620 = vpop.f32.mrb[0].mxu0
        %1621 = vmatprep.mubr.bf16.mxu0 0
        %1622 = vmatmul.mubr.bf16.gmra.mrb[0].mxu0 %v1464
        %v1623 = vpop.f32.mrb[0].mxu0
        %v1624 = vadd.f32 %v1484, %v1623
        %v1625 = vpop.f32.mrb[0].mxu0
        %v1626 = vpop.f32.mrb[0].mxu0
        %v1627 = vadd.f32 %v1484, %v1626
        %v1628 = vpop.f32.mrb[0].mxu0
        %1629 = vdwg.mxu0
        %v1630 = vpack.c.bf16 %v767, %v766
        %v1631 = vpack.c.bf16 %v769, %v768
        %v1632 = vpack.c.bf16 %v771, %v770
        %v1633 = vpack.c.bf16 %v773, %v772
        %v1634 = vpack.c.bf16 %v775, %v774
        %v1635 = vpack.c.bf16 %v777, %v776
        %v1636 = vpack.c.bf16 %v779, %v778
        %v1637 = vpack.c.bf16 %v781, %v780
        %v1638 = vld [vmem:[%s5] sm:$0xf]
        %v1639 = vld [vmem:[%s5 + $0x4] sm:$0xf]
        %v1640 = vld [vmem:[%s5 + $0x8] sm:$0xf]
        %v1641 = vld [vmem:[%s5 + $0xc] sm:$0xf]
        %v1646 = vunpack.c.l.b16 %v1638
        %v1647 = vunpack.c.l.b16 %v1639
        %v1648 = vunpack.c.l.b16 %v1640
        %v1649 = vunpack.c.l.b16 %v1641
        %v1650 = vpack.c.b16 %v1647, %v1646
        %v1651 = vpack.c.b16 %v1649, %v1648
        %v1655 = vsel %vm532, %v1630, 0
        %v1658 = vsel %vm532, %v1631, 0
        %v1661 = vsel %vm532, %v1632, 0
        %v1664 = vsel %vm532, %v1633, 0
        %v1667 = vsel %vm532, %v1634, 0
        %v1670 = vsel %vm532, %v1635, 0
        %v1673 = vsel %vm532, %v1636, 0
        %v1676 = vsel %vm532, %v1637, 0
        %1678 = vmatprep.subr.bf16.mxu0 0
        %1679 = vmatpush1.bf16.msra.mxu0 %v1650
        %1680 = vmatprep.subr.bf16.mxu0 0
        %1681 = vmatpush1.bf16.msra.mxu0 %v1651
        %1682 = vmatprep.subr.bf16.mxu0 0
        %1683 = vmatpush1.bf16.msra.mxu0 0
        %1684 = vmatprep.subr.bf16.mxu0 0
        %1685 = vmatpush1.bf16.msra.mxu0 0
        %1686 = vmatprep.subr.bf16.mxu0 0
        %1687 = vmatpush1.bf16.msra.mxu0 0
        %1688 = vmatprep.subr.bf16.mxu0 0
        %1689 = vmatpush1.bf16.msra.mxu0 0
        %1690 = vmatprep.subr.bf16.mxu0 0
        %1691 = vmatpush1.bf16.msra.mxu0 0
        %1692 = vmatprep.subr.bf16.mxu0 0
        %1693 = vmatpush1.bf16.msra.mxu0 0
        %1694 = vmatprep.subr.bf16.mxu0 0
        %1695 = vmatpush1.bf16.msra.mxu0 0
        %1696 = vmatprep.subr.bf16.mxu0 0
        %1697 = vmatpush1.bf16.msra.mxu0 0
        %1698 = vmatprep.subr.bf16.mxu0 0
        %1699 = vmatpush1.bf16.msra.mxu0 0
        %1700 = vmatprep.subr.bf16.mxu0 0
        %1701 = vmatpush1.bf16.msra.mxu0 0
        %1702 = vmatprep.subr.bf16.mxu0 0
        %1703 = vmatpush1.bf16.msra.mxu0 0
        %1704 = vmatprep.subr.bf16.mxu0 0
        %1705 = vmatpush1.bf16.msra.mxu0 0
        %1706 = vmatprep.subr.bf16.mxu0 0
        %1707 = vmatpush1.bf16.msra.mxu0 0
        %1708 = vmatprep.subr.bf16.mxu0 0
        %1709 = vmatpush1.bf16.msra.mxu0 0
        %1710 = vmatprep.mubr.bf16.mxu0 0
        %1711 = vmatmul.mubr.bf16.gmra.mrb[0].mxu0 %v1655
        %v1712 = vpop.f32.mrb[0].mxu0
        %v1713 = vadd.f32 0.0, %v1712
        %v1714 = vpop.f32.mrb[0].mxu0
        %v1715 = vpop.f32.mrb[0].mxu0
        %v1716 = vadd.f32 0.0, %v1715
        %v1717 = vpop.f32.mrb[0].mxu0
        %1718 = vmatprep.mubr.bf16.mxu0 0
        %1719 = vmatmul.mubr.bf16.gmra.mrb[0].mxu0 %v1658
        %v1720 = vpop.f32.mrb[0].mxu0
        %v1721 = vadd.f32 0.0, %v1720
        %v1722 = vpop.f32.mrb[0].mxu0
        %v1723 = vpop.f32.mrb[0].mxu0
        %v1724 = vadd.f32 0.0, %v1723
        %v1725 = vpop.f32.mrb[0].mxu0
        %1726 = vmatprep.mubr.bf16.mxu0 0
        %1727 = vmatmul.mubr.bf16.gmra.mrb[0].mxu0 %v1661
        %v1728 = vpop.f32.mrb[0].mxu0
        %v1729 = vadd.f32 0.0, %v1728
        %v1730 = vpop.f32.mrb[0].mxu0
        %v1731 = vpop.f32.mrb[0].mxu0
        %v1732 = vadd.f32 0.0, %v1731
        %v1733 = vpop.f32.mrb[0].mxu0
        %1734 = vmatprep.mubr.bf16.mxu0 0
        %1735 = vmatmul.mubr.bf16.gmra.mrb[0].mxu0 %v1664
        %v1736 = vpop.f32.mrb[0].mxu0
        %v1737 = vadd.f32 0.0, %v1736
        %v1738 = vpop.f32.mrb[0].mxu0
        %v1739 = vpop.f32.mrb[0].mxu0
        %v1740 = vadd.f32 0.0, %v1739
        %v1741 = vpop.f32.mrb[0].mxu0
        %1742 = vmatprep.mubr.bf16.mxu0 0
        %1743 = vmatmul.mubr.bf16.gmra.mrb[0].mxu0 %v1667
        %v1744 = vpop.f32.mrb[0].mxu0
        %v1745 = vadd.f32 0.0, %v1744
        %v1746 = vpop.f32.mrb[0].mxu0
        %v1747 = vpop.f32.mrb[0].mxu0
        %v1748 = vadd.f32 0.0, %v1747
        %v1749 = vpop.f32.mrb[0].mxu0
        %1750 = vmatprep.mubr.bf16.mxu0 0
        %1751 = vmatmul.mubr.bf16.gmra.mrb[0].mxu0 %v1670
        %v1752 = vpop.f32.mrb[0].mxu0
        %v1753 = vadd.f32 0.0, %v1752
        %v1754 = vpop.f32.mrb[0].mxu0
        %v1755 = vpop.f32.mrb[0].mxu0
        %v1756 = vadd.f32 0.0, %v1755
        %v1757 = vpop.f32.mrb[0].mxu0
        %1758 = vmatprep.mubr.bf16.mxu0 0
        %1759 = vmatmul.mubr.bf16.gmra.mrb[0].mxu0 %v1673
        %v1760 = vpop.f32.mrb[0].mxu0
        %v1761 = vadd.f32 0.0, %v1760
        %v1762 = vpop.f32.mrb[0].mxu0
        %v1763 = vpop.f32.mrb[0].mxu0
        %v1764 = vadd.f32 0.0, %v1763
        %v1765 = vpop.f32.mrb[0].mxu0
        %1766 = vmatprep.mubr.bf16.mxu0 0
        %1767 = vmatmul.mubr.bf16.gmra.mrb[0].mxu0 %v1676
        %v1768 = vpop.f32.mrb[0].mxu0
        %v1769 = vadd.f32 0.0, %v1768
        %v1770 = vpop.f32.mrb[0].mxu0
        %v1771 = vpop.f32.mrb[0].mxu0
        %v1772 = vadd.f32 0.0, %v1771
        %v1773 = vpop.f32.mrb[0].mxu0
        %1774 = vdwg.mxu0
        %v1775 = vld [vmem:[%s6] sm:$0xf]
        %v1776 = vld [vmem:[%s6 + $0x4] sm:$0xf]
        %v1777 = vld [vmem:[%s6 + $0x8] sm:$0xf]
        %v1778 = vld [vmem:[%s6 + $0xc] sm:$0xf]
        %v1779 = vadd.f32 %v1713, %v1568
        %v1780 = vadd.f32 %v1716, %v1571
        %v1781 = vadd.f32 %v1721, %v1576
        %v1782 = vadd.f32 %v1724, %v1579
        %v1783 = vadd.f32 %v1729, %v1584
        %v1784 = vadd.f32 %v1732, %v1587
        %v1785 = vadd.f32 %v1737, %v1592
        %v1786 = vadd.f32 %v1740, %v1595
        %v1787 = vadd.f32 %v1745, %v1600
        %v1788 = vadd.f32 %v1748, %v1603
        %v1789 = vadd.f32 %v1753, %v1608
        %v1790 = vadd.f32 %v1756, %v1611
        %v1791 = vadd.f32 %v1761, %v1616
        %v1792 = vadd.f32 %v1764, %v1619
        %v1793 = vadd.f32 %v1769, %v1624
        %v1794 = vadd.f32 %v1772, %v1627
        %v1799 = vunpack.c.l.b16 %v1775
        %v1800 = vunpack.c.l.b16 %v1776
        %v1801 = vunpack.c.l.b16 %v1777
        %v1802 = vunpack.c.l.b16 %v1778
        %v1803 = vpack.c.b16 %v1800, %v1799
        %v1804 = vpack.c.b16 %v1802, %v1801
        %1807 = vmatprep.subr.bf16.mxu0 0
        %1808 = vmatpush1.bf16.msra.mxu0 %v1803
        %1809 = vmatprep.subr.bf16.mxu0 0
        %1810 = vmatpush1.bf16.msra.mxu0 %v1804
        %1811 = vmatprep.subr.bf16.mxu0 0
        %1812 = vmatpush1.bf16.msra.mxu0 0
        %1813 = vmatprep.subr.bf16.mxu0 0
        %1814 = vmatpush1.bf16.msra.mxu0 0
        %1815 = vmatprep.subr.bf16.mxu0 0
        %1816 = vmatpush1.bf16.msra.mxu0 0
        %1817 = vmatprep.subr.bf16.mxu0 0
        %1818 = vmatpush1.bf16.msra.mxu0 0
        %1819 = vmatprep.subr.bf16.mxu0 0
        %1820 = vmatpush1.bf16.msra.mxu0 0
        %1821 = vmatprep.subr.bf16.mxu0 0
        %1822 = vmatpush1.bf16.msra.mxu0 0
        %1823 = vmatprep.subr.bf16.mxu0 0
        %1824 = vmatpush1.bf16.msra.mxu0 0
        %1825 = vmatprep.subr.bf16.mxu0 0
        %1826 = vmatpush1.bf16.msra.mxu0 0
        %1827 = vmatprep.subr.bf16.mxu0 0
        %1828 = vmatpush1.bf16.msra.mxu0 0
        %1829 = vmatprep.subr.bf16.mxu0 0
        %1830 = vmatpush1.bf16.msra.mxu0 0
        %1831 = vmatprep.subr.bf16.mxu0 0
        %1832 = vmatpush1.bf16.msra.mxu0 0
        %1833 = vmatprep.subr.bf16.mxu0 0
        %1834 = vmatpush1.bf16.msra.mxu0 0
        %1835 = vmatprep.subr.bf16.mxu0 0
        %1836 = vmatpush1.bf16.msra.mxu0 0
        %1837 = vmatprep.subr.bf16.mxu0 0
        %1838 = vmatpush1.bf16.msra.mxu0 0
        %1839 = vmatprep.mubr.bf16.mxu0 0
        %1840 = vmatmul.mubr.bf16.gmra.mrb[0].mxu0 %v1655
        %v1841 = vpop.f32.mrb[0].mxu0
        %v1842 = vadd.f32 %v1568, %v1841
        %v1843 = vpop.f32.mrb[0].mxu0
        %v1844 = vpop.f32.mrb[0].mxu0
        %v1845 = vadd.f32 %v1571, %v1844
        %v1846 = vpop.f32.mrb[0].mxu0
        %1847 = vmatprep.mubr.bf16.mxu0 0
        %1848 = vmatmul.mubr.bf16.gmra.mrb[0].mxu0 %v1658
        %v1849 = vpop.f32.mrb[0].mxu0
        %v1850 = vadd.f32 %v1576, %v1849
        %v1851 = vpop.f32.mrb[0].mxu0
        %v1852 = vpop.f32.mrb[0].mxu0
        %v1853 = vadd.f32 %v1579, %v1852
        %v1854 = vpop.f32.mrb[0].mxu0
        %1855 = vmatprep.mubr.bf16.mxu0 0
        %1856 = vmatmul.mubr.bf16.gmra.mrb[0].mxu0 %v1661
        %v1857 = vpop.f32.mrb[0].mxu0
        %v1858 = vadd.f32 %v1584, %v1857
        %v1859 = vpop.f32.mrb[0].mxu0
        %v1860 = vpop.f32.mrb[0].mxu0
        %v1861 = vadd.f32 %v1587, %v1860
        %v1862 = vpop.f32.mrb[0].mxu0
        %1863 = vmatprep.mubr.bf16.mxu0 0
        %1864 = vmatmul.mubr.bf16.gmra.mrb[0].mxu0 %v1664
        %v1865 = vpop.f32.mrb[0].mxu0
        %v1866 = vadd.f32 %v1592, %v1865
        %v1867 = vpop.f32.mrb[0].mxu0
        %v1868 = vpop.f32.mrb[0].mxu0
        %v1869 = vadd.f32 %v1595, %v1868
        %v1870 = vpop.f32.mrb[0].mxu0
        %1871 = vmatprep.mubr.bf16.mxu0 0
        %1872 = vmatmul.mubr.bf16.gmra.mrb[0].mxu0 %v1667
        %v1873 = vpop.f32.mrb[0].mxu0
        %v1874 = vadd.f32 %v1600, %v1873
        %v1875 = vpop.f32.mrb[0].mxu0
        %v1876 = vpop.f32.mrb[0].mxu0
        %v1877 = vadd.f32 %v1603, %v1876
        %v1878 = vpop.f32.mrb[0].mxu0
        %1879 = vmatprep.mubr.bf16.mxu0 0
        %1880 = vmatmul.mubr.bf16.gmra.mrb[0].mxu0 %v1670
        %v1881 = vpop.f32.mrb[0].mxu0
        %v1882 = vadd.f32 %v1608, %v1881
        %v1883 = vpop.f32.mrb[0].mxu0
        %v1884 = vpop.f32.mrb[0].mxu0
        %v1885 = vadd.f32 %v1611, %v1884
        %v1886 = vpop.f32.mrb[0].mxu0
        %1887 = vmatprep.mubr.bf16.mxu0 0
        %1888 = vmatmul.mubr.bf16.gmra.mrb[0].mxu0 %v1673
        %v1889 = vpop.f32.mrb[0].mxu0
        %v1890 = vadd.f32 %v1616, %v1889
        %v1891 = vpop.f32.mrb[0].mxu0
        %v1892 = vpop.f32.mrb[0].mxu0
        %v1893 = vadd.f32 %v1619, %v1892
        %v1894 = vpop.f32.mrb[0].mxu0
        %1895 = vmatprep.mubr.bf16.mxu0 0
        %1896 = vmatmul.mubr.bf16.gmra.mrb[0].mxu0 %v1676
        %v1897 = vpop.f32.mrb[0].mxu0
        %v1898 = vadd.f32 %v1624, %v1897
        %v1899 = vpop.f32.mrb[0].mxu0
        %v1900 = vpop.f32.mrb[0].mxu0
        %v1901 = vadd.f32 %v1627, %v1900
        %v1902 = vpop.f32.mrb[0].mxu0
        %1903 = vdwg.mxu0
        %v1904 = vld [vmem:[%s11] sm:$0xff]
        %v1905 = vld [vmem:[%s11 + $0x8] sm:$0xff]
        %v1906 = vld [vmem:[%s11 + $0x10] sm:$0xff]
        %v1907 = vld [vmem:[%s11 + $0x18] sm:$0xff]
        %v1908 = vld [vmem:[%s11 + $0x20] sm:$0xff]
        %v1909 = vld [vmem:[%s11 + $0x28] sm:$0xff]
        %v1910 = vld [vmem:[%s11 + $0x30] sm:$0xff]
        %v1911 = vld [vmem:[%s11 + $0x38] sm:$0xff]
        %v1912 = vld [vmem:[%s11 + $0x40] sm:$0xff]
        %v1913 = vld [vmem:[%s11 + $0x48] sm:$0xff]
        %v1914 = vld [vmem:[%s11 + $0x50] sm:$0xff]
        %v1915 = vld [vmem:[%s11 + $0x58] sm:$0xff]
        %v1916 = vld [vmem:[%s11 + $0x60] sm:$0xff]
        %v1917 = vld [vmem:[%s11 + $0x68] sm:$0xff]
        %v1918 = vld [vmem:[%s11 + $0x70] sm:$0xff]
        %v1919 = vld [vmem:[%s11 + $0x78] sm:$0xff]
        %v1920 = vld [vmem:[%s11 + $0x80] sm:$0xff]
        %v1921 = vld [vmem:[%s11 + $0x88] sm:$0xff]
        %v1922 = vld [vmem:[%s11 + $0x90] sm:$0xff]
        %v1923 = vld [vmem:[%s11 + $0x98] sm:$0xff]
        %v1924 = vld [vmem:[%s11 + $0xa0] sm:$0xff]
        %v1925 = vld [vmem:[%s11 + $0xa8] sm:$0xff]
        %v1926 = vld [vmem:[%s11 + $0xb0] sm:$0xff]
        %v1927 = vld [vmem:[%s11 + $0xb8] sm:$0xff]
        %v1928 = vld [vmem:[%s11 + $0xc0] sm:$0xff]
        %v1929 = vld [vmem:[%s11 + $0xc8] sm:$0xff]
        %v1930 = vld [vmem:[%s11 + $0xd0] sm:$0xff]
        %v1931 = vld [vmem:[%s11 + $0xd8] sm:$0xff]
        %v1932 = vld [vmem:[%s11 + $0xe0] sm:$0xff]
        %v1933 = vld [vmem:[%s11 + $0xe8] sm:$0xff]
        %v1934 = vld [vmem:[%s11 + $0xf0] sm:$0xff]
        %v1935 = vld [vmem:[%s11 + $0xf8] sm:$0xff]
        %v1936 = vld [vmem:[%s11 + $0x100] sm:$0xff]
        %v1937 = vld [vmem:[%s11 + $0x108] sm:$0xff]
        %v1938 = vld [vmem:[%s11 + $0x110] sm:$0xff]
        %v1939 = vld [vmem:[%s11 + $0x118] sm:$0xff]
        %v1940 = vld [vmem:[%s11 + $0x120] sm:$0xff]
        %v1941 = vld [vmem:[%s11 + $0x128] sm:$0xff]
        %v1942 = vld [vmem:[%s11 + $0x130] sm:$0xff]
        %v1943 = vld [vmem:[%s11 + $0x138] sm:$0xff]
        %v1944 = vld [vmem:[%s11 + $0x140] sm:$0xff]
        %v1945 = vld [vmem:[%s11 + $0x148] sm:$0xff]
        %v1946 = vld [vmem:[%s11 + $0x150] sm:$0xff]
        %v1947 = vld [vmem:[%s11 + $0x158] sm:$0xff]
        %v1948 = vld [vmem:[%s11 + $0x160] sm:$0xff]
        %v1949 = vld [vmem:[%s11 + $0x168] sm:$0xff]
        %v1950 = vld [vmem:[%s11 + $0x170] sm:$0xff]
        %v1951 = vld [vmem:[%s11 + $0x178] sm:$0xff]
        %v1952 = vld [vmem:[%s11 + $0x180] sm:$0xff]
        %v1953 = vld [vmem:[%s11 + $0x188] sm:$0xff]
        %v1954 = vld [vmem:[%s11 + $0x190] sm:$0xff]
        %v1955 = vld [vmem:[%s11 + $0x198] sm:$0xff]
        %v1956 = vld [vmem:[%s11 + $0x1a0] sm:$0xff]
        %v1957 = vld [vmem:[%s11 + $0x1a8] sm:$0xff]
        %v1958 = vld [vmem:[%s11 + $0x1b0] sm:$0xff]
        %v1959 = vld [vmem:[%s11 + $0x1b8] sm:$0xff]
        %v1960 = vld [vmem:[%s11 + $0x1c0] sm:$0xff]
        %v1961 = vld [vmem:[%s11 + $0x1c8] sm:$0xff]
        %v1962 = vld [vmem:[%s11 + $0x1d0] sm:$0xff]
        %v1963 = vld [vmem:[%s11 + $0x1d8] sm:$0xff]
        %v1964 = vld [vmem:[%s11 + $0x1e0] sm:$0xff]
        %v1965 = vld [vmem:[%s11 + $0x1e8] sm:$0xff]
        %v1966 = vld [vmem:[%s11 + $0x1f0] sm:$0xff]
        %v1967 = vld [vmem:[%s11 + $0x1f8] sm:$0xff]
        %v1968 = vld [vmem:[%s12] sm:$0xff]
        %v1969 = vld [vmem:[%s12 + $0x8] sm:$0xff]
        %v1970 = vld [vmem:[%s12 + $0x10] sm:$0xff]
        %v1971 = vld [vmem:[%s12 + $0x18] sm:$0xff]
        %v1972 = vld [vmem:[%s12 + $0x20] sm:$0xff]
        %v1973 = vld [vmem:[%s12 + $0x28] sm:$0xff]
        %v1974 = vld [vmem:[%s12 + $0x30] sm:$0xff]
        %v1975 = vld [vmem:[%s12 + $0x38] sm:$0xff]
        %v1976 = vld [vmem:[%s12 + $0x40] sm:$0xff]
        %v1977 = vld [vmem:[%s12 + $0x48] sm:$0xff]
        %v1978 = vld [vmem:[%s12 + $0x50] sm:$0xff]
        %v1979 = vld [vmem:[%s12 + $0x58] sm:$0xff]
        %v1980 = vld [vmem:[%s12 + $0x60] sm:$0xff]
        %v1981 = vld [vmem:[%s12 + $0x68] sm:$0xff]
        %v1982 = vld [vmem:[%s12 + $0x70] sm:$0xff]
        %v1983 = vld [vmem:[%s12 + $0x78] sm:$0xff]
        %v1984 = vld [vmem:[%s12 + $0x80] sm:$0xff]
        %v1985 = vld [vmem:[%s12 + $0x88] sm:$0xff]
        %v1986 = vld [vmem:[%s12 + $0x90] sm:$0xff]
        %v1987 = vld [vmem:[%s12 + $0x98] sm:$0xff]
        %v1988 = vld [vmem:[%s12 + $0xa0] sm:$0xff]
        %v1989 = vld [vmem:[%s12 + $0xa8] sm:$0xff]
        %v1990 = vld [vmem:[%s12 + $0xb0] sm:$0xff]
        %v1991 = vld [vmem:[%s12 + $0xb8] sm:$0xff]
        %v1992 = vld [vmem:[%s12 + $0xc0] sm:$0xff]
        %v1993 = vld [vmem:[%s12 + $0xc8] sm:$0xff]
        %v1994 = vld [vmem:[%s12 + $0xd0] sm:$0xff]
        %v1995 = vld [vmem:[%s12 + $0xd8] sm:$0xff]
        %v1996 = vld [vmem:[%s12 + $0xe0] sm:$0xff]
        %v1997 = vld [vmem:[%s12 + $0xe8] sm:$0xff]
        %v1998 = vld [vmem:[%s12 + $0xf0] sm:$0xff]
        %v1999 = vld [vmem:[%s12 + $0xf8] sm:$0xff]
        %v2000 = vld [vmem:[%s13] sm:$0xff]
        %v2001 = vld [vmem:[%s13 + $0x8] sm:$0xff]
        %v2002 = vld [vmem:[%s13 + $0x10] sm:$0xff]
        %v2003 = vld [vmem:[%s13 + $0x18] sm:$0xff]
        %v2004 = vlaneseq
        %v2005 = vshrl.u32 %v2004, 7
        %v2006 = vsub.s32 0, %v2005
        %v2007 = vrot.slane %v1779, %v2006
        %v2008 = vlaneseq
        %v2009 = vshrl.u32 %v2008, 7
        %v2010 = vsub.s32 0, %v2009
        %v2011 = vrot.slane %v1780, %v2010
        %v2012 = vlaneseq
        %v2013 = vshrl.u32 %v2012, 7
        %v2014 = vsub.s32 0, %v2013
        %v2015 = vrot.slane %v1781, %v2014
        %v2016 = vlaneseq
        %v2017 = vshrl.u32 %v2016, 7
        %v2018 = vsub.s32 0, %v2017
        %v2019 = vrot.slane %v1782, %v2018
        %v2020 = vlaneseq
        %v2021 = vshrl.u32 %v2020, 7
        %v2022 = vsub.s32 0, %v2021
        %v2023 = vrot.slane %v1783, %v2022
        %v2024 = vlaneseq
        %v2025 = vshrl.u32 %v2024, 7
        %v2026 = vsub.s32 0, %v2025
        %v2027 = vrot.slane %v1784, %v2026
        %v2028 = vlaneseq
        %v2029 = vshrl.u32 %v2028, 7
        %v2030 = vsub.s32 0, %v2029
        %v2031 = vrot.slane %v1785, %v2030
        %v2032 = vlaneseq
        %v2033 = vshrl.u32 %v2032, 7
        %v2034 = vsub.s32 0, %v2033
        %v2035 = vrot.slane %v1786, %v2034
        %v2036 = vlaneseq
        %v2037 = vshrl.u32 %v2036, 7
        %v2038 = vsub.s32 0, %v2037
        %v2039 = vrot.slane %v1787, %v2038
        %v2040 = vlaneseq
        %v2041 = vshrl.u32 %v2040, 7
        %v2042 = vsub.s32 0, %v2041
        %v2043 = vrot.slane %v1788, %v2042
        %v2044 = vlaneseq
        %v2045 = vshrl.u32 %v2044, 7
        %v2046 = vsub.s32 0, %v2045
        %v2047 = vrot.slane %v1789, %v2046
        %v2048 = vlaneseq
        %v2049 = vshrl.u32 %v2048, 7
        %v2050 = vsub.s32 0, %v2049
        %v2051 = vrot.slane %v1790, %v2050
        %v2052 = vlaneseq
        %v2053 = vshrl.u32 %v2052, 7
        %v2054 = vsub.s32 0, %v2053
        %v2055 = vrot.slane %v1791, %v2054
        %v2056 = vlaneseq
        %v2057 = vshrl.u32 %v2056, 7
        %v2058 = vsub.s32 0, %v2057
        %v2059 = vrot.slane %v1792, %v2058
        %v2060 = vlaneseq
        %v2061 = vshrl.u32 %v2060, 7
        %v2062 = vsub.s32 0, %v2061
        %v2063 = vrot.slane %v1793, %v2062
        %v2064 = vlaneseq
        %v2065 = vshrl.u32 %v2064, 7
        %v2066 = vsub.s32 0, %v2065
        %v2067 = vrot.slane %v1794, %v2066
        %2084 = vrot.lane.b32.xlu0 %v2007, 64
        %v2085 = vpop.permute.xlu0 %2084
        %2086 = vrot.lane.b32.xlu0 %v2011, 64
        %v2087 = vpop.permute.xlu0 %2086
        %2088 = vrot.lane.b32.xlu0 %v2015, 64
        %v2089 = vpop.permute.xlu0 %2088
        %2090 = vrot.lane.b32.xlu0 %v2019, 64
        %v2091 = vpop.permute.xlu0 %2090
        %2092 = vrot.lane.b32.xlu0 %v2023, 64
        %v2093 = vpop.permute.xlu0 %2092
        %2094 = vrot.lane.b32.xlu0 %v2027, 64
        %v2095 = vpop.permute.xlu0 %2094
        %2096 = vrot.lane.b32.xlu0 %v2031, 64
        %v2097 = vpop.permute.xlu0 %2096
        %2098 = vrot.lane.b32.xlu0 %v2035, 64
        %v2099 = vpop.permute.xlu0 %2098
        %2100 = vrot.lane.b32.xlu0 %v2039, 64
        %v2101 = vpop.permute.xlu0 %2100
        %2102 = vrot.lane.b32.xlu0 %v2043, 64
        %v2103 = vpop.permute.xlu0 %2102
        %2104 = vrot.lane.b32.xlu0 %v2047, 64
        %v2105 = vpop.permute.xlu0 %2104
        %2106 = vrot.lane.b32.xlu0 %v2051, 64
        %v2107 = vpop.permute.xlu0 %2106
        %2108 = vrot.lane.b32.xlu0 %v2055, 64
        %v2109 = vpop.permute.xlu0 %2108
        %2110 = vrot.lane.b32.xlu0 %v2059, 64
        %v2111 = vpop.permute.xlu0 %2110
        %2112 = vrot.lane.b32.xlu0 %v2063, 64
        %v2113 = vpop.permute.xlu0 %2112
        %2114 = vrot.lane.b32.xlu0 %v2067, 64
        %v2115 = vpop.permute.xlu0 %2114
        %v2132 = vmul.f32 %v1713, %v2085
        %v2133 = vmul.f32 %v1716, %v2087
        %v2134 = vmul.f32 %v1721, %v2089
        %v2135 = vmul.f32 %v1724, %v2091
        %v2136 = vmul.f32 %v1729, %v2093
        %v2137 = vmul.f32 %v1732, %v2095
        %v2138 = vmul.f32 %v1737, %v2097
        %v2139 = vmul.f32 %v1740, %v2099
        %v2140 = vmul.f32 %v1745, %v2101
        %v2141 = vmul.f32 %v1748, %v2103
        %v2142 = vmul.f32 %v1753, %v2105
        %v2143 = vmul.f32 %v1756, %v2107
        %v2144 = vmul.f32 %v1761, %v2109
        %v2145 = vmul.f32 %v1764, %v2111
        %v2146 = vmul.f32 %v1769, %v2113
        %v2147 = vmul.f32 %v1772, %v2115
        %v2148 = vlaneseq
        %v2149 = vshrl.u32 %v2148, 7
        %v2150 = vsub.s32 1, %v2149
        %v2151 = vrot.slane %v1779, %v2150
        %v2152 = vlaneseq
        %v2153 = vshrl.u32 %v2152, 7
        %v2154 = vsub.s32 1, %v2153
        %v2155 = vrot.slane %v1780, %v2154
        %v2156 = vlaneseq
        %v2157 = vshrl.u32 %v2156, 7
        %v2158 = vsub.s32 1, %v2157
        %v2159 = vrot.slane %v1781, %v2158
        %v2160 = vlaneseq
        %v2161 = vshrl.u32 %v2160, 7
        %v2162 = vsub.s32 1, %v2161
        %v2163 = vrot.slane %v1782, %v2162
        %v2164 = vlaneseq
        %v2165 = vshrl.u32 %v2164, 7
        %v2166 = vsub.s32 1, %v2165
        %v2167 = vrot.slane %v1783, %v2166
        %v2168 = vlaneseq
        %v2169 = vshrl.u32 %v2168, 7
        %v2170 = vsub.s32 1, %v2169
        %v2171 = vrot.slane %v1784, %v2170
        %v2172 = vlaneseq
        %v2173 = vshrl.u32 %v2172, 7
        %v2174 = vsub.s32 1, %v2173
        %v2175 = vrot.slane %v1785, %v2174
        %v2176 = vlaneseq
        %v2177 = vshrl.u32 %v2176, 7
        %v2178 = vsub.s32 1, %v2177
        %v2179 = vrot.slane %v1786, %v2178
        %v2180 = vlaneseq
        %v2181 = vshrl.u32 %v2180, 7
        %v2182 = vsub.s32 1, %v2181
        %v2183 = vrot.slane %v1787, %v2182
        %v2184 = vlaneseq
        %v2185 = vshrl.u32 %v2184, 7
        %v2186 = vsub.s32 1, %v2185
        %v2187 = vrot.slane %v1788, %v2186
        %v2188 = vlaneseq
        %v2189 = vshrl.u32 %v2188, 7
        %v2190 = vsub.s32 1, %v2189
        %v2191 = vrot.slane %v1789, %v2190
        %v2192 = vlaneseq
        %v2193 = vshrl.u32 %v2192, 7
        %v2194 = vsub.s32 1, %v2193
        %v2195 = vrot.slane %v1790, %v2194
        %v2196 = vlaneseq
        %v2197 = vshrl.u32 %v2196, 7
        %v2198 = vsub.s32 1, %v2197
        %v2199 = vrot.slane %v1791, %v2198
        %v2200 = vlaneseq
        %v2201 = vshrl.u32 %v2200, 7
        %v2202 = vsub.s32 1, %v2201
        %v2203 = vrot.slane %v1792, %v2202
        %v2204 = vlaneseq
        %v2205 = vshrl.u32 %v2204, 7
        %v2206 = vsub.s32 1, %v2205
        %v2207 = vrot.slane %v1793, %v2206
        %v2208 = vlaneseq
        %v2209 = vshrl.u32 %v2208, 7
        %v2210 = vsub.s32 1, %v2209
        %v2211 = vrot.slane %v1794, %v2210
        %2228 = vrot.lane.b32.xlu0 %v2151, 64
        %v2229 = vpop.permute.xlu0 %2228
        %2230 = vrot.lane.b32.xlu0 %v2155, 64
        %v2231 = vpop.permute.xlu0 %2230
        %2232 = vrot.lane.b32.xlu0 %v2159, 64
        %v2233 = vpop.permute.xlu0 %2232
        %2234 = vrot.lane.b32.xlu0 %v2163, 64
        %v2235 = vpop.permute.xlu0 %2234
        %2236 = vrot.lane.b32.xlu0 %v2167, 64
        %v2237 = vpop.permute.xlu0 %2236
        %2238 = vrot.lane.b32.xlu0 %v2171, 64
        %v2239 = vpop.permute.xlu0 %2238
        %2240 = vrot.lane.b32.xlu0 %v2175, 64
        %v2241 = vpop.permute.xlu0 %2240
        %2242 = vrot.lane.b32.xlu0 %v2179, 64
        %v2243 = vpop.permute.xlu0 %2242
        %2244 = vrot.lane.b32.xlu0 %v2183, 64
        %v2245 = vpop.permute.xlu0 %2244
        %2246 = vrot.lane.b32.xlu0 %v2187, 64
        %v2247 = vpop.permute.xlu0 %2246
        %2248 = vrot.lane.b32.xlu0 %v2191, 64
        %v2249 = vpop.permute.xlu0 %2248
        %2250 = vrot.lane.b32.xlu0 %v2195, 64
        %v2251 = vpop.permute.xlu0 %2250
        %2252 = vrot.lane.b32.xlu0 %v2199, 64
        %v2253 = vpop.permute.xlu0 %2252
        %2254 = vrot.lane.b32.xlu0 %v2203, 64
        %v2255 = vpop.permute.xlu0 %2254
        %2256 = vrot.lane.b32.xlu0 %v2207, 64
        %v2257 = vpop.permute.xlu0 %2256
        %2258 = vrot.lane.b32.xlu0 %v2211, 64
        %v2259 = vpop.permute.xlu0 %2258
        %v2276 = vmul.f32 %v1713, %v2229
        %v2277 = vmul.f32 %v1716, %v2231
        %v2278 = vmul.f32 %v1721, %v2233
        %v2279 = vmul.f32 %v1724, %v2235
        %v2280 = vmul.f32 %v1729, %v2237
        %v2281 = vmul.f32 %v1732, %v2239
        %v2282 = vmul.f32 %v1737, %v2241
        %v2283 = vmul.f32 %v1740, %v2243
        %v2284 = vmul.f32 %v1745, %v2245
        %v2285 = vmul.f32 %v1748, %v2247
        %v2286 = vmul.f32 %v1753, %v2249
        %v2287 = vmul.f32 %v1756, %v2251
        %v2288 = vmul.f32 %v1761, %v2253
        %v2289 = vmul.f32 %v1764, %v2255
        %v2290 = vmul.f32 %v1769, %v2257
        %v2291 = vmul.f32 %v1772, %v2259
        %vm2292 = vcmask 523264
        %v2294 = vsel %vm2292, %v2276, 0
        %v2297 = vsel %vm2292, %v2277, 0
        %v2300 = vsel %vm2292, %v2278, 0
        %v2303 = vsel %vm2292, %v2279, 0
        %v2306 = vsel %vm2292, %v2280, 0
        %v2309 = vsel %vm2292, %v2281, 0
        %v2312 = vsel %vm2292, %v2282, 0
        %v2315 = vsel %vm2292, %v2283, 0
        %v2318 = vsel %vm2292, %v2284, 0
        %v2321 = vsel %vm2292, %v2285, 0
        %v2324 = vsel %vm2292, %v2286, 0
        %v2327 = vsel %vm2292, %v2287, 0
        %v2330 = vsel %vm2292, %v2288, 0
        %v2333 = vsel %vm2292, %v2289, 0
        %v2336 = vsel %vm2292, %v2290, 0
        %v2339 = vsel %vm2292, %v2291, 0
        %2341 = vmatprep.subr.mxu0 0.0
        %2342 = vmatpush1.msra.mxu0 %v1912
        %2343 = vmatprep.subr.mxu0 0.0
        %2344 = vmatpush1.msra.mxu0 %v1913
        %2345 = vmatprep.subr.mxu0 0.0
        %2346 = vmatpush1.msra.mxu0 %v1914
        %2347 = vmatprep.subr.mxu0 0.0
        %2348 = vmatpush1.msra.mxu0 %v1915
        %2349 = vmatprep.subr.mxu0 0.0
        %2350 = vmatpush1.msra.mxu0 %v1916
        %2351 = vmatprep.subr.mxu0 0.0
        %2352 = vmatpush1.msra.mxu0 %v1917
        %2353 = vmatprep.subr.mxu0 0.0
        %2354 = vmatpush1.msra.mxu0 %v1918
        %2355 = vmatprep.subr.mxu0 0.0
        %2356 = vmatpush1.msra.mxu0 %v1919
        %2357 = vmatprep.subr.mxu0 0.0
        %2358 = vmatpush1.msra.mxu0 0.0
        %2359 = vmatprep.subr.mxu0 0.0
        %2360 = vmatpush1.msra.mxu0 0.0
        %2361 = vmatprep.subr.mxu0 0.0
        %2362 = vmatpush1.msra.mxu0 0.0
        %2363 = vmatprep.subr.mxu0 0.0
        %2364 = vmatpush1.msra.mxu0 0.0
        %2365 = vmatprep.subr.mxu0 0.0
        %2366 = vmatpush1.msra.mxu0 0.0
        %2367 = vmatprep.subr.mxu0 0.0
        %2368 = vmatpush1.msra.mxu0 0.0
        %2369 = vmatprep.subr.mxu0 0.0
        %2370 = vmatpush1.msra.mxu0 0.0
        %2371 = vmatprep.subr.mxu0 0.0
        %2372 = vmatpush1.msra.mxu0 0.0
        %2373 = vmatprep.subr.mxu0 0.0
        %2374 = vmatpush1.msra.mxu0 0.0
        %2375 = vmatprep.subr.mxu0 0.0
        %2376 = vmatpush1.msra.mxu0 0.0
        %2377 = vmatprep.subr.mxu0 0.0
        %2378 = vmatpush1.msra.mxu0 0.0
        %2379 = vmatprep.subr.mxu0 0.0
        %2380 = vmatpush1.msra.mxu0 0.0
        %2381 = vmatprep.subr.mxu0 0.0
        %2382 = vmatpush1.msra.mxu0 0.0
        %2383 = vmatprep.subr.mxu0 0.0
        %2384 = vmatpush1.msra.mxu0 0.0
        %2385 = vmatprep.subr.mxu0 0.0
        %2386 = vmatpush1.msra.mxu0 0.0
        %2387 = vmatprep.subr.mxu0 0.0
        %2388 = vmatpush1.msra.mxu0 0.0
        %2389 = vmatprep.subr.mxu0 0.0
        %2390 = vmatpush1.msra.mxu0 0.0
        %2391 = vmatprep.subr.mxu0 0.0
        %2392 = vmatpush1.msra.mxu0 0.0
        %2393 = vmatprep.subr.mxu0 0.0
        %2394 = vmatpush1.msra.mxu0 0.0
        %2395 = vmatprep.subr.mxu0 0.0
        %2396 = vmatpush1.msra.mxu0 0.0
        %2397 = vmatprep.subr.mxu0 0.0
        %2398 = vmatpush1.msra.mxu0 0.0
        %2399 = vmatprep.subr.mxu0 0.0
        %2400 = vmatpush1.msra.mxu0 0.0
        %2401 = vmatprep.subr.mxu0 0.0
        %2402 = vmatpush1.msra.mxu0 0.0
        %2403 = vmatprep.subr.mxu0 0.0
        %2404 = vmatpush1.msra.mxu0 0.0
        %2405 = vmatprep.mubr.f32.mxu0 0.0
        %2406 = vmatmul.mubr.f32.gmra.mrb[0].mxu0 %v2294
        %v2407 = vpop.f32.mrb[0].mxu0
        %v2408 = vadd.f32 0.0, %v2407
        %v2409 = vpop.f32.mrb[0].mxu0
        %2410 = vmatprep.mubr.f32.mxu0 0.0
        %2411 = vmatmul.mubr.f32.gmra.mrb[0].mxu0 %v2297
        %v2412 = vpop.f32.mrb[0].mxu0
        %v2413 = vadd.f32 0.0, %v2412
        %v2414 = vpop.f32.mrb[0].mxu0
        %2415 = vmatprep.mubr.f32.mxu0 0.0
        %2416 = vmatmul.mubr.f32.gmra.mrb[0].mxu0 %v2300
        %v2417 = vpop.f32.mrb[0].mxu0
        %v2418 = vadd.f32 0.0, %v2417
        %v2419 = vpop.f32.mrb[0].mxu0
        %2420 = vmatprep.mubr.f32.mxu0 0.0
        %2421 = vmatmul.mubr.f32.gmra.mrb[0].mxu0 %v2303
        %v2422 = vpop.f32.mrb[0].mxu0
        %v2423 = vadd.f32 0.0, %v2422
        %v2424 = vpop.f32.mrb[0].mxu0
        %2425 = vmatprep.mubr.f32.mxu0 0.0
        %2426 = vmatmul.mubr.f32.gmra.mrb[0].mxu0 %v2306
        %v2427 = vpop.f32.mrb[0].mxu0
        %v2428 = vadd.f32 0.0, %v2427
        %v2429 = vpop.f32.mrb[0].mxu0
        %2430 = vmatprep.mubr.f32.mxu0 0.0
        %2431 = vmatmul.mubr.f32.gmra.mrb[0].mxu0 %v2309
        %v2432 = vpop.f32.mrb[0].mxu0
        %v2433 = vadd.f32 0.0, %v2432
        %v2434 = vpop.f32.mrb[0].mxu0
        %2435 = vmatprep.mubr.f32.mxu0 0.0
        %2436 = vmatmul.mubr.f32.gmra.mrb[0].mxu0 %v2312
        %v2437 = vpop.f32.mrb[0].mxu0
        %v2438 = vadd.f32 0.0, %v2437
        %v2439 = vpop.f32.mrb[0].mxu0
        %2440 = vmatprep.mubr.f32.mxu0 0.0
        %2441 = vmatmul.mubr.f32.gmra.mrb[0].mxu0 %v2315
        %v2442 = vpop.f32.mrb[0].mxu0
        %v2443 = vadd.f32 0.0, %v2442
        %v2444 = vpop.f32.mrb[0].mxu0
        %2445 = vmatprep.mubr.f32.mxu0 0.0
        %2446 = vmatmul.mubr.f32.gmra.mrb[0].mxu0 %v2318
        %v2447 = vpop.f32.mrb[0].mxu0
        %v2448 = vadd.f32 0.0, %v2447
        %v2449 = vpop.f32.mrb[0].mxu0
        %2450 = vmatprep.mubr.f32.mxu0 0.0
        %2451 = vmatmul.mubr.f32.gmra.mrb[0].mxu0 %v2321
        %v2452 = vpop.f32.mrb[0].mxu0
        %v2453 = vadd.f32 0.0, %v2452
        %v2454 = vpop.f32.mrb[0].mxu0
        %2455 = vmatprep.mubr.f32.mxu0 0.0
        %2456 = vmatmul.mubr.f32.gmra.mrb[0].mxu0 %v2324
        %v2457 = vpop.f32.mrb[0].mxu0
        %v2458 = vadd.f32 0.0, %v2457
        %v2459 = vpop.f32.mrb[0].mxu0
        %2460 = vmatprep.mubr.f32.mxu0 0.0
        %2461 = vmatmul.mubr.f32.gmra.mrb[0].mxu0 %v2327
        %v2462 = vpop.f32.mrb[0].mxu0
        %v2463 = vadd.f32 0.0, %v2462
        %v2464 = vpop.f32.mrb[0].mxu0
        %2465 = vmatprep.mubr.f32.mxu0 0.0
        %2466 = vmatmul.mubr.f32.gmra.mrb[0].mxu0 %v2330
        %v2467 = vpop.f32.mrb[0].mxu0
        %v2468 = vadd.f32 0.0, %v2467
        %v2469 = vpop.f32.mrb[0].mxu0
        %2470 = vmatprep.mubr.f32.mxu0 0.0
        %2471 = vmatmul.mubr.f32.gmra.mrb[0].mxu0 %v2333
        %v2472 = vpop.f32.mrb[0].mxu0
        %v2473 = vadd.f32 0.0, %v2472
        %v2474 = vpop.f32.mrb[0].mxu0
        %2475 = vmatprep.mubr.f32.mxu0 0.0
        %2476 = vmatmul.mubr.f32.gmra.mrb[0].mxu0 %v2336
        %v2477 = vpop.f32.mrb[0].mxu0
        %v2478 = vadd.f32 0.0, %v2477
        %v2479 = vpop.f32.mrb[0].mxu0
        %2480 = vmatprep.mubr.f32.mxu0 0.0
        %2481 = vmatmul.mubr.f32.gmra.mrb[0].mxu0 %v2339
        %v2482 = vpop.f32.mrb[0].mxu0
        %v2483 = vadd.f32 0.0, %v2482
        %v2484 = vpop.f32.mrb[0].mxu0
        %2485 = vdwg.mxu0
        %v2487 = vsel %vm2292, %v2132, 0
        %v2490 = vsel %vm2292, %v2133, 0
        %v2493 = vsel %vm2292, %v2134, 0
        %v2496 = vsel %vm2292, %v2135, 0
        %v2499 = vsel %vm2292, %v2136, 0
        %v2502 = vsel %vm2292, %v2137, 0
        %v2505 = vsel %vm2292, %v2138, 0
        %v2508 = vsel %vm2292, %v2139, 0
        %v2511 = vsel %vm2292, %v2140, 0
        %v2514 = vsel %vm2292, %v2141, 0
        %v2517 = vsel %vm2292, %v2142, 0
        %v2520 = vsel %vm2292, %v2143, 0
        %v2523 = vsel %vm2292, %v2144, 0
        %v2526 = vsel %vm2292, %v2145, 0
        %v2529 = vsel %vm2292, %v2146, 0
        %v2532 = vsel %vm2292, %v2147, 0
        %2534 = vmatprep.subr.mxu0 0.0
        %2535 = vmatpush1.msra.mxu0 %v1904
        %2536 = vmatprep.subr.mxu0 0.0
        %2537 = vmatpush1.msra.mxu0 %v1905
        %2538 = vmatprep.subr.mxu0 0.0
        %2539 = vmatpush1.msra.mxu0 %v1906
        %2540 = vmatprep.subr.mxu0 0.0
        %2541 = vmatpush1.msra.mxu0 %v1907
        %2542 = vmatprep.subr.mxu0 0.0
        %2543 = vmatpush1.msra.mxu0 %v1908
        %2544 = vmatprep.subr.mxu0 0.0
        %2545 = vmatpush1.msra.mxu0 %v1909
        %2546 = vmatprep.subr.mxu0 0.0
        %2547 = vmatpush1.msra.mxu0 %v1910
        %2548 = vmatprep.subr.mxu0 0.0
        %2549 = vmatpush1.msra.mxu0 %v1911
        %2550 = vmatprep.subr.mxu0 0.0
        %2551 = vmatpush1.msra.mxu0 0.0
        %2552 = vmatprep.subr.mxu0 0.0
        %2553 = vmatpush1.msra.mxu0 0.0
        %2554 = vmatprep.subr.mxu0 0.0
        %2555 = vmatpush1.msra.mxu0 0.0
        %2556 = vmatprep.subr.mxu0 0.0
        %2557 = vmatpush1.msra.mxu0 0.0
        %2558 = vmatprep.subr.mxu0 0.0
        %2559 = vmatpush1.msra.mxu0 0.0
        %2560 = vmatprep.subr.mxu0 0.0
        %2561 = vmatpush1.msra.mxu0 0.0
        %2562 = vmatprep.subr.mxu0 0.0
        %2563 = vmatpush1.msra.mxu0 0.0
        %2564 = vmatprep.subr.mxu0 0.0
        %2565 = vmatpush1.msra.mxu0 0.0
        %2566 = vmatprep.subr.mxu0 0.0
        %2567 = vmatpush1.msra.mxu0 0.0
        %2568 = vmatprep.subr.mxu0 0.0
        %2569 = vmatpush1.msra.mxu0 0.0
        %2570 = vmatprep.subr.mxu0 0.0
        %2571 = vmatpush1.msra.mxu0 0.0
        %2572 = vmatprep.subr.mxu0 0.0
        %2573 = vmatpush1.msra.mxu0 0.0
        %2574 = vmatprep.subr.mxu0 0.0
        %2575 = vmatpush1.msra.mxu0 0.0
        %2576 = vmatprep.subr.mxu0 0.0
        %2577 = vmatpush1.msra.mxu0 0.0
        %2578 = vmatprep.subr.mxu0 0.0
        %2579 = vmatpush1.msra.mxu0 0.0
        %2580 = vmatprep.subr.mxu0 0.0
        %2581 = vmatpush1.msra.mxu0 0.0
        %2582 = vmatprep.subr.mxu0 0.0
        %2583 = vmatpush1.msra.mxu0 0.0
        %2584 = vmatprep.subr.mxu0 0.0
        %2585 = vmatpush1.msra.mxu0 0.0
        %2586 = vmatprep.subr.mxu0 0.0
        %2587 = vmatpush1.msra.mxu0 0.0
        %2588 = vmatprep.subr.mxu0 0.0
        %2589 = vmatpush1.msra.mxu0 0.0
        %2590 = vmatprep.subr.mxu0 0.0
        %2591 = vmatpush1.msra.mxu0 0.0
        %2592 = vmatprep.subr.mxu0 0.0
        %2593 = vmatpush1.msra.mxu0 0.0
        %2594 = vmatprep.subr.mxu0 0.0
        %2595 = vmatpush1.msra.mxu0 0.0
        %2596 = vmatprep.subr.mxu0 0.0
        %2597 = vmatpush1.msra.mxu0 0.0
        %2598 = vmatprep.mubr.f32.mxu0 0.0
        %2599 = vmatmul.mubr.f32.gmra.mrb[0].mxu0 %v2487
        %v2600 = vpop.f32.mrb[0].mxu0
        %v2601 = vadd.f32 %v2408, %v2600
        %v2602 = vpop.f32.mrb[0].mxu0
        %2603 = vmatprep.mubr.f32.mxu0 0.0
        %2604 = vmatmul.mubr.f32.gmra.mrb[0].mxu0 %v2490
        %v2605 = vpop.f32.mrb[0].mxu0
        %v2606 = vadd.f32 %v2413, %v2605
        %v2607 = vpop.f32.mrb[0].mxu0
        %2608 = vmatprep.mubr.f32.mxu0 0.0
        %2609 = vmatmul.mubr.f32.gmra.mrb[0].mxu0 %v2493
        %v2610 = vpop.f32.mrb[0].mxu0
        %v2611 = vadd.f32 %v2418, %v2610
        %v2612 = vpop.f32.mrb[0].mxu0
        %2613 = vmatprep.mubr.f32.mxu0 0.0
        %2614 = vmatmul.mubr.f32.gmra.mrb[0].mxu0 %v2496
        %v2615 = vpop.f32.mrb[0].mxu0
        %v2616 = vadd.f32 %v2423, %v2615
        %v2617 = vpop.f32.mrb[0].mxu0
        %2618 = vmatprep.mubr.f32.mxu0 0.0
        %2619 = vmatmul.mubr.f32.gmra.mrb[0].mxu0 %v2499
        %v2620 = vpop.f32.mrb[0].mxu0
        %v2621 = vadd.f32 %v2428, %v2620
        %v2622 = vpop.f32.mrb[0].mxu0
        %2623 = vmatprep.mubr.f32.mxu0 0.0
        %2624 = vmatmul.mubr.f32.gmra.mrb[0].mxu0 %v2502
        %v2625 = vpop.f32.mrb[0].mxu0
        %v2626 = vadd.f32 %v2433, %v2625
        %v2627 = vpop.f32.mrb[0].mxu0
        %2628 = vmatprep.mubr.f32.mxu0 0.0
        %2629 = vmatmul.mubr.f32.gmra.mrb[0].mxu0 %v2505
        %v2630 = vpop.f32.mrb[0].mxu0
        %v2631 = vadd.f32 %v2438, %v2630
        %v2632 = vpop.f32.mrb[0].mxu0
        %2633 = vmatprep.mubr.f32.mxu0 0.0
        %2634 = vmatmul.mubr.f32.gmra.mrb[0].mxu0 %v2508
        %v2635 = vpop.f32.mrb[0].mxu0
        %v2636 = vadd.f32 %v2443, %v2635
        %v2637 = vpop.f32.mrb[0].mxu0
        %2638 = vmatprep.mubr.f32.mxu0 0.0
        %2639 = vmatmul.mubr.f32.gmra.mrb[0].mxu0 %v2511
        %v2640 = vpop.f32.mrb[0].mxu0
        %v2641 = vadd.f32 %v2448, %v2640
        %v2642 = vpop.f32.mrb[0].mxu0
        %2643 = vmatprep.mubr.f32.mxu0 0.0
        %2644 = vmatmul.mubr.f32.gmra.mrb[0].mxu0 %v2514
        %v2645 = vpop.f32.mrb[0].mxu0
        %v2646 = vadd.f32 %v2453, %v2645
        %v2647 = vpop.f32.mrb[0].mxu0
        %2648 = vmatprep.mubr.f32.mxu0 0.0
        %2649 = vmatmul.mubr.f32.gmra.mrb[0].mxu0 %v2517
        %v2650 = vpop.f32.mrb[0].mxu0
        %v2651 = vadd.f32 %v2458, %v2650
        %v2652 = vpop.f32.mrb[0].mxu0
        %2653 = vmatprep.mubr.f32.mxu0 0.0
        %2654 = vmatmul.mubr.f32.gmra.mrb[0].mxu0 %v2520
        %v2655 = vpop.f32.mrb[0].mxu0
        %v2656 = vadd.f32 %v2463, %v2655
        %v2657 = vpop.f32.mrb[0].mxu0
        %2658 = vmatprep.mubr.f32.mxu0 0.0
        %2659 = vmatmul.mubr.f32.gmra.mrb[0].mxu0 %v2523
        %v2660 = vpop.f32.mrb[0].mxu0
        %v2661 = vadd.f32 %v2468, %v2660
        %v2662 = vpop.f32.mrb[0].mxu0
        %2663 = vmatprep.mubr.f32.mxu0 0.0
        %2664 = vmatmul.mubr.f32.gmra.mrb[0].mxu0 %v2526
        %v2665 = vpop.f32.mrb[0].mxu0
        %v2666 = vadd.f32 %v2473, %v2665
        %v2667 = vpop.f32.mrb[0].mxu0
        %2668 = vmatprep.mubr.f32.mxu0 0.0
        %2669 = vmatmul.mubr.f32.gmra.mrb[0].mxu0 %v2529
        %v2670 = vpop.f32.mrb[0].mxu0
        %v2671 = vadd.f32 %v2478, %v2670
        %v2672 = vpop.f32.mrb[0].mxu0
        %2673 = vmatprep.mubr.f32.mxu0 0.0
        %2674 = vmatmul.mubr.f32.gmra.mrb[0].mxu0 %v2532
        %v2675 = vpop.f32.mrb[0].mxu0
        %v2676 = vadd.f32 %v2483, %v2675
        %v2677 = vpop.f32.mrb[0].mxu0
        %2678 = vdwg.mxu0
        %v2679 = vlaneseq
        %v2680 = vshrl.u32 %v2679, 7
        %v2681 = vsub.s32 2, %v2680
        %v2682 = vrot.slane %v1779, %v2681
        %v2683 = vlaneseq
        %v2684 = vshrl.u32 %v2683, 7
        %v2685 = vsub.s32 2, %v2684
        %v2686 = vrot.slane %v1780, %v2685
        %v2687 = vlaneseq
        %v2688 = vshrl.u32 %v2687, 7
        %v2689 = vsub.s32 2, %v2688
        %v2690 = vrot.slane %v1781, %v2689
        %v2691 = vlaneseq
        %v2692 = vshrl.u32 %v2691, 7
        %v2693 = vsub.s32 2, %v2692
        %v2694 = vrot.slane %v1782, %v2693
        %v2695 = vlaneseq
        %v2696 = vshrl.u32 %v2695, 7
        %v2697 = vsub.s32 2, %v2696
        %v2698 = vrot.slane %v1783, %v2697
        %v2699 = vlaneseq
        %v2700 = vshrl.u32 %v2699, 7
        %v2701 = vsub.s32 2, %v2700
        %v2702 = vrot.slane %v1784, %v2701
        %v2703 = vlaneseq
        %v2704 = vshrl.u32 %v2703, 7
        %v2705 = vsub.s32 2, %v2704
        %v2706 = vrot.slane %v1785, %v2705
        %v2707 = vlaneseq
        %v2708 = vshrl.u32 %v2707, 7
        %v2709 = vsub.s32 2, %v2708
        %v2710 = vrot.slane %v1786, %v2709
        %v2711 = vlaneseq
        %v2712 = vshrl.u32 %v2711, 7
        %v2713 = vsub.s32 2, %v2712
        %v2714 = vrot.slane %v1787, %v2713
        %v2715 = vlaneseq
        %v2716 = vshrl.u32 %v2715, 7
        %v2717 = vsub.s32 2, %v2716
        %v2718 = vrot.slane %v1788, %v2717
        %v2719 = vlaneseq
        %v2720 = vshrl.u32 %v2719, 7
        %v2721 = vsub.s32 2, %v2720
        %v2722 = vrot.slane %v1789, %v2721
        %v2723 = vlaneseq
        %v2724 = vshrl.u32 %v2723, 7
        %v2725 = vsub.s32 2, %v2724
        %v2726 = vrot.slane %v1790, %v2725
        %v2727 = vlaneseq
        %v2728 = vshrl.u32 %v2727, 7
        %v2729 = vsub.s32 2, %v2728
        %v2730 = vrot.slane %v1791, %v2729
        %v2731 = vlaneseq
        %v2732 = vshrl.u32 %v2731, 7
        %v2733 = vsub.s32 2, %v2732
        %v2734 = vrot.slane %v1792, %v2733
        %v2735 = vlaneseq
        %v2736 = vshrl.u32 %v2735, 7
        %v2737 = vsub.s32 2, %v2736
        %v2738 = vrot.slane %v1793, %v2737
        %v2739 = vlaneseq
        %v2740 = vshrl.u32 %v2739, 7
        %v2741 = vsub.s32 2, %v2740
        %v2742 = vrot.slane %v1794, %v2741
        %2759 = vrot.lane.b32.xlu0 %v2682, 64
        %v2760 = vpop.permute.xlu0 %2759
        %2761 = vrot.lane.b32.xlu0 %v2686, 64
        %v2762 = vpop.permute.xlu0 %2761
        %2763 = vrot.lane.b32.xlu0 %v2690, 64
        %v2764 = vpop.permute.xlu0 %2763
        %2765 = vrot.lane.b32.xlu0 %v2694, 64
        %v2766 = vpop.permute.xlu0 %2765
        %2767 = vrot.lane.b32.xlu0 %v2698, 64
        %v2768 = vpop.permute.xlu0 %2767
        %2769 = vrot.lane.b32.xlu0 %v2702, 64
        %v2770 = vpop.permute.xlu0 %2769
        %2771 = vrot.lane.b32.xlu0 %v2706, 64
        %v2772 = vpop.permute.xlu0 %2771
        %2773 = vrot.lane.b32.xlu0 %v2710, 64
        %v2774 = vpop.permute.xlu0 %2773
        %2775 = vrot.lane.b32.xlu0 %v2714, 64
        %v2776 = vpop.permute.xlu0 %2775
        %2777 = vrot.lane.b32.xlu0 %v2718, 64
        %v2778 = vpop.permute.xlu0 %2777
        %2779 = vrot.lane.b32.xlu0 %v2722, 64
        %v2780 = vpop.permute.xlu0 %2779
        %2781 = vrot.lane.b32.xlu0 %v2726, 64
        %v2782 = vpop.permute.xlu0 %2781
        %2783 = vrot.lane.b32.xlu0 %v2730, 64
        %v2784 = vpop.permute.xlu0 %2783
        %2785 = vrot.lane.b32.xlu0 %v2734, 64
        %v2786 = vpop.permute.xlu0 %2785
        %2787 = vrot.lane.b32.xlu0 %v2738, 64
        %v2788 = vpop.permute.xlu0 %2787
        %2789 = vrot.lane.b32.xlu0 %v2742, 64
        %v2790 = vpop.permute.xlu0 %2789
        %v2807 = vmul.f32 %v1713, %v2760
        %v2808 = vmul.f32 %v1716, %v2762
        %v2809 = vmul.f32 %v1721, %v2764
        %v2810 = vmul.f32 %v1724, %v2766
        %v2811 = vmul.f32 %v1729, %v2768
        %v2812 = vmul.f32 %v1732, %v2770
        %v2813 = vmul.f32 %v1737, %v2772
        %v2814 = vmul.f32 %v1740, %v2774
        %v2815 = vmul.f32 %v1745, %v2776
        %v2816 = vmul.f32 %v1748, %v2778
        %v2817 = vmul.f32 %v1753, %v2780
        %v2818 = vmul.f32 %v1756, %v2782
        %v2819 = vmul.f32 %v1761, %v2784
        %v2820 = vmul.f32 %v1764, %v2786
        %v2821 = vmul.f32 %v1769, %v2788
        %v2822 = vmul.f32 %v1772, %v2790
        %v2824 = vsel %vm2292, %v2807, 0
        %v2827 = vsel %vm2292, %v2808, 0
        %v2830 = vsel %vm2292, %v2809, 0
        %v2833 = vsel %vm2292, %v2810, 0
        %v2836 = vsel %vm2292, %v2811, 0
        %v2839 = vsel %vm2292, %v2812, 0
        %v2842 = vsel %vm2292, %v2813, 0
        %v2845 = vsel %vm2292, %v2814, 0
        %v2848 = vsel %vm2292, %v2815, 0
        %v2851 = vsel %vm2292, %v2816, 0
        %v2854 = vsel %vm2292, %v2817, 0
        %v2857 = vsel %vm2292, %v2818, 0
        %v2860 = vsel %vm2292, %v2819, 0
        %v2863 = vsel %vm2292, %v2820, 0
        %v2866 = vsel %vm2292, %v2821, 0
        %v2869 = vsel %vm2292, %v2822, 0
        %2871 = vmatprep.subr.mxu0 0.0
        %2872 = vmatpush1.msra.mxu0 %v1920
        %2873 = vmatprep.subr.mxu0 0.0
        %2874 = vmatpush1.msra.mxu0 %v1921
        %2875 = vmatprep.subr.mxu0 0.0
        %2876 = vmatpush1.msra.mxu0 %v1922
        %2877 = vmatprep.subr.mxu0 0.0
        %2878 = vmatpush1.msra.mxu0 %v1923
        %2879 = vmatprep.subr.mxu0 0.0
        %2880 = vmatpush1.msra.mxu0 %v1924
        %2881 = vmatprep.subr.mxu0 0.0
        %2882 = vmatpush1.msra.mxu0 %v1925
        %2883 = vmatprep.subr.mxu0 0.0
        %2884 = vmatpush1.msra.mxu0 %v1926
        %2885 = vmatprep.subr.mxu0 0.0
        %2886 = vmatpush1.msra.mxu0 %v1927
        %2887 = vmatprep.subr.mxu0 0.0
        %2888 = vmatpush1.msra.mxu0 0.0
        %2889 = vmatprep.subr.mxu0 0.0
        %2890 = vmatpush1.msra.mxu0 0.0
        %2891 = vmatprep.subr.mxu0 0.0
        %2892 = vmatpush1.msra.mxu0 0.0
        %2893 = vmatprep.subr.mxu0 0.0
        %2894 = vmatpush1.msra.mxu0 0.0
        %2895 = vmatprep.subr.mxu0 0.0
        %2896 = vmatpush1.msra.mxu0 0.0
        %2897 = vmatprep.subr.mxu0 0.0
        %2898 = vmatpush1.msra.mxu0 0.0
        %2899 = vmatprep.subr.mxu0 0.0
        %2900 = vmatpush1.msra.mxu0 0.0
        %2901 = vmatprep.subr.mxu0 0.0
        %2902 = vmatpush1.msra.mxu0 0.0
        %2903 = vmatprep.subr.mxu0 0.0
        %2904 = vmatpush1.msra.mxu0 0.0
        %2905 = vmatprep.subr.mxu0 0.0
        %2906 = vmatpush1.msra.mxu0 0.0
        %2907 = vmatprep.subr.mxu0 0.0
        %2908 = vmatpush1.msra.mxu0 0.0
        %2909 = vmatprep.subr.mxu0 0.0
        %2910 = vmatpush1.msra.mxu0 0.0
        %2911 = vmatprep.subr.mxu0 0.0
        %2912 = vmatpush1.msra.mxu0 0.0
        %2913 = vmatprep.subr.mxu0 0.0
        %2914 = vmatpush1.msra.mxu0 0.0
        %2915 = vmatprep.subr.mxu0 0.0
        %2916 = vmatpush1.msra.mxu0 0.0
        %2917 = vmatprep.subr.mxu0 0.0
        %2918 = vmatpush1.msra.mxu0 0.0
        %2919 = vmatprep.subr.mxu0 0.0
        %2920 = vmatpush1.msra.mxu0 0.0
        %2921 = vmatprep.subr.mxu0 0.0
        %2922 = vmatpush1.msra.mxu0 0.0
        %2923 = vmatprep.subr.mxu0 0.0
        %2924 = vmatpush1.msra.mxu0 0.0
        %2925 = vmatprep.subr.mxu0 0.0
        %2926 = vmatpush1.msra.mxu0 0.0
        %2927 = vmatprep.subr.mxu0 0.0
        %2928 = vmatpush1.msra.mxu0 0.0
        %2929 = vmatprep.subr.mxu0 0.0
        %2930 = vmatpush1.msra.mxu0 0.0
        %2931 = vmatprep.subr.mxu0 0.0
        %2932 = vmatpush1.msra.mxu0 0.0
        %2933 = vmatprep.subr.mxu0 0.0
        %2934 = vmatpush1.msra.mxu0 0.0
        %2935 = vmatprep.mubr.f32.mxu0 0.0
        %2936 = vmatmul.mubr.f32.gmra.mrb[0].mxu0 %v2824
        %v2937 = vpop.f32.mrb[0].mxu0
        %v2938 = vadd.f32 0.0, %v2937
        %v2939 = vpop.f32.mrb[0].mxu0
        %2940 = vmatprep.mubr.f32.mxu0 0.0
        %2941 = vmatmul.mubr.f32.gmra.mrb[0].mxu0 %v2827
        %v2942 = vpop.f32.mrb[0].mxu0
        %v2943 = vadd.f32 0.0, %v2942
        %v2944 = vpop.f32.mrb[0].mxu0
        %2945 = vmatprep.mubr.f32.mxu0 0.0
        %2946 = vmatmul.mubr.f32.gmra.mrb[0].mxu0 %v2830
        %v2947 = vpop.f32.mrb[0].mxu0
        %v2948 = vadd.f32 0.0, %v2947
        %v2949 = vpop.f32.mrb[0].mxu0
        %2950 = vmatprep.mubr.f32.mxu0 0.0
        %2951 = vmatmul.mubr.f32.gmra.mrb[0].mxu0 %v2833
        %v2952 = vpop.f32.mrb[0].mxu0
        %v2953 = vadd.f32 0.0, %v2952
        %v2954 = vpop.f32.mrb[0].mxu0
        %2955 = vmatprep.mubr.f32.mxu0 0.0
        %2956 = vmatmul.mubr.f32.gmra.mrb[0].mxu0 %v2836
        %v2957 = vpop.f32.mrb[0].mxu0
        %v2958 = vadd.f32 0.0, %v2957
        %v2959 = vpop.f32.mrb[0].mxu0
        %2960 = vmatprep.mubr.f32.mxu0 0.0
        %2961 = vmatmul.mubr.f32.gmra.mrb[0].mxu0 %v2839
        %v2962 = vpop.f32.mrb[0].mxu0
        %v2963 = vadd.f32 0.0, %v2962
        %v2964 = vpop.f32.mrb[0].mxu0
        %2965 = vmatprep.mubr.f32.mxu0 0.0
        %2966 = vmatmul.mubr.f32.gmra.mrb[0].mxu0 %v2842
        %v2967 = vpop.f32.mrb[0].mxu0
        %v2968 = vadd.f32 0.0, %v2967
        %v2969 = vpop.f32.mrb[0].mxu0
        %2970 = vmatprep.mubr.f32.mxu0 0.0
        %2971 = vmatmul.mubr.f32.gmra.mrb[0].mxu0 %v2845
        %v2972 = vpop.f32.mrb[0].mxu0
        %v2973 = vadd.f32 0.0, %v2972
        %v2974 = vpop.f32.mrb[0].mxu0
        %2975 = vmatprep.mubr.f32.mxu0 0.0
        %2976 = vmatmul.mubr.f32.gmra.mrb[0].mxu0 %v2848
        %v2977 = vpop.f32.mrb[0].mxu0
        %v2978 = vadd.f32 0.0, %v2977
        %v2979 = vpop.f32.mrb[0].mxu0
        %2980 = vmatprep.mubr.f32.mxu0 0.0
        %2981 = vmatmul.mubr.f32.gmra.mrb[0].mxu0 %v2851
        %v2982 = vpop.f32.mrb[0].mxu0
        %v2983 = vadd.f32 0.0, %v2982
        %v2984 = vpop.f32.mrb[0].mxu0
        %2985 = vmatprep.mubr.f32.mxu0 0.0
        %2986 = vmatmul.mubr.f32.gmra.mrb[0].mxu0 %v2854
        %v2987 = vpop.f32.mrb[0].mxu0
        %v2988 = vadd.f32 0.0, %v2987
        %v2989 = vpop.f32.mrb[0].mxu0
        %2990 = vmatprep.mubr.f32.mxu0 0.0
        %2991 = vmatmul.mubr.f32.gmra.mrb[0].mxu0 %v2857
        %v2992 = vpop.f32.mrb[0].mxu0
        %v2993 = vadd.f32 0.0, %v2992
        %v2994 = vpop.f32.mrb[0].mxu0
        %2995 = vmatprep.mubr.f32.mxu0 0.0
        %2996 = vmatmul.mubr.f32.gmra.mrb[0].mxu0 %v2860
        %v2997 = vpop.f32.mrb[0].mxu0
        %v2998 = vadd.f32 0.0, %v2997
        %v2999 = vpop.f32.mrb[0].mxu0
        %3000 = vmatprep.mubr.f32.mxu0 0.0
        %3001 = vmatmul.mubr.f32.gmra.mrb[0].mxu0 %v2863
        %v3002 = vpop.f32.mrb[0].mxu0
        %v3003 = vadd.f32 0.0, %v3002
        %v3004 = vpop.f32.mrb[0].mxu0
        %3005 = vmatprep.mubr.f32.mxu0 0.0
        %3006 = vmatmul.mubr.f32.gmra.mrb[0].mxu0 %v2866
        %v3007 = vpop.f32.mrb[0].mxu0
        %v3008 = vadd.f32 0.0, %v3007
        %v3009 = vpop.f32.mrb[0].mxu0
        %3010 = vmatprep.mubr.f32.mxu0 0.0
        %3011 = vmatmul.mubr.f32.gmra.mrb[0].mxu0 %v2869
        %v3012 = vpop.f32.mrb[0].mxu0
        %v3013 = vadd.f32 0.0, %v3012
        %v3014 = vpop.f32.mrb[0].mxu0
        %3015 = vdwg.mxu0
        %v3016 = vadd.f32 %v2601, %v2938
        %v3017 = vadd.f32 %v2606, %v2943
        %v3018 = vadd.f32 %v2611, %v2948
        %v3019 = vadd.f32 %v2616, %v2953
        %v3020 = vadd.f32 %v2621, %v2958
        %v3021 = vadd.f32 %v2626, %v2963
        %v3022 = vadd.f32 %v2631, %v2968
        %v3023 = vadd.f32 %v2636, %v2973
        %v3024 = vadd.f32 %v2641, %v2978
        %v3025 = vadd.f32 %v2646, %v2983
        %v3026 = vadd.f32 %v2651, %v2988
        %v3027 = vadd.f32 %v2656, %v2993
        %v3028 = vadd.f32 %v2661, %v2998
        %v3029 = vadd.f32 %v2666, %v3003
        %v3030 = vadd.f32 %v2671, %v3008
        %v3031 = vadd.f32 %v2676, %v3013
        %v3032 = vlaneseq
        %v3033 = vshrl.u32 %v3032, 7
        %v3034 = vsub.s32 3, %v3033
        %v3035 = vrot.slane %v1779, %v3034
        %v3036 = vlaneseq
        %v3037 = vshrl.u32 %v3036, 7
        %v3038 = vsub.s32 3, %v3037
        %v3039 = vrot.slane %v1780, %v3038
        %v3040 = vlaneseq
        %v3041 = vshrl.u32 %v3040, 7
        %v3042 = vsub.s32 3, %v3041
        %v3043 = vrot.slane %v1781, %v3042
        %v3044 = vlaneseq
        %v3045 = vshrl.u32 %v3044, 7
        %v3046 = vsub.s32 3, %v3045
        %v3047 = vrot.slane %v1782, %v3046
        %v3048 = vlaneseq
        %v3049 = vshrl.u32 %v3048, 7
        %v3050 = vsub.s32 3, %v3049
        %v3051 = vrot.slane %v1783, %v3050
        %v3052 = vlaneseq
        %v3053 = vshrl.u32 %v3052, 7
        %v3054 = vsub.s32 3, %v3053
        %v3055 = vrot.slane %v1784, %v3054
        %v3056 = vlaneseq
        %v3057 = vshrl.u32 %v3056, 7
        %v3058 = vsub.s32 3, %v3057
        %v3059 = vrot.slane %v1785, %v3058
        %v3060 = vlaneseq
        %v3061 = vshrl.u32 %v3060, 7
        %v3062 = vsub.s32 3, %v3061
        %v3063 = vrot.slane %v1786, %v3062
        %v3064 = vlaneseq
        %v3065 = vshrl.u32 %v3064, 7
        %v3066 = vsub.s32 3, %v3065
        %v3067 = vrot.slane %v1787, %v3066
        %v3068 = vlaneseq
        %v3069 = vshrl.u32 %v3068, 7
        %v3070 = vsub.s32 3, %v3069
        %v3071 = vrot.slane %v1788, %v3070
        %v3072 = vlaneseq
        %v3073 = vshrl.u32 %v3072, 7
        %v3074 = vsub.s32 3, %v3073
        %v3075 = vrot.slane %v1789, %v3074
        %v3076 = vlaneseq
        %v3077 = vshrl.u32 %v3076, 7
        %v3078 = vsub.s32 3, %v3077
        %v3079 = vrot.slane %v1790, %v3078
        %v3080 = vlaneseq
        %v3081 = vshrl.u32 %v3080, 7
        %v3082 = vsub.s32 3, %v3081
        %v3083 = vrot.slane %v1791, %v3082
        %v3084 = vlaneseq
        %v3085 = vshrl.u32 %v3084, 7
        %v3086 = vsub.s32 3, %v3085
        %v3087 = vrot.slane %v1792, %v3086
        %v3088 = vlaneseq
        %v3089 = vshrl.u32 %v3088, 7
        %v3090 = vsub.s32 3, %v3089
        %v3091 = vrot.slane %v1793, %v3090
        %v3092 = vlaneseq
        %v3093 = vshrl.u32 %v3092, 7
        %v3094 = vsub.s32 3, %v3093
        %v3095 = vrot.slane %v1794, %v3094
        %3112 = vrot.lane.b32.xlu0 %v3035, 64
        %v3113 = vpop.permute.xlu0 %3112
        %3114 = vrot.lane.b32.xlu0 %v3039, 64
        %v3115 = vpop.permute.xlu0 %3114
        %3116 = vrot.lane.b32.xlu0 %v3043, 64
        %v3117 = vpop.permute.xlu0 %3116
        %3118 = vrot.lane.b32.xlu0 %v3047, 64
        %v3119 = vpop.permute.xlu0 %3118
        %3120 = vrot.lane.b32.xlu0 %v3051, 64
        %v3121 = vpop.permute.xlu0 %3120
        %3122 = vrot.lane.b32.xlu0 %v3055, 64
        %v3123 = vpop.permute.xlu0 %3122
        %3124 = vrot.lane.b32.xlu0 %v3059, 64
        %v3125 = vpop.permute.xlu0 %3124
        %3126 = vrot.lane.b32.xlu0 %v3063, 64
        %v3127 = vpop.permute.xlu0 %3126
        %3128 = vrot.lane.b32.xlu0 %v3067, 64
        %v3129 = vpop.permute.xlu0 %3128
        %3130 = vrot.lane.b32.xlu0 %v3071, 64
        %v3131 = vpop.permute.xlu0 %3130
        %3132 = vrot.lane.b32.xlu0 %v3075, 64
        %v3133 = vpop.permute.xlu0 %3132
        %3134 = vrot.lane.b32.xlu0 %v3079, 64
        %v3135 = vpop.permute.xlu0 %3134
        %3136 = vrot.lane.b32.xlu0 %v3083, 64
        %v3137 = vpop.permute.xlu0 %3136
        %3138 = vrot.lane.b32.xlu0 %v3087, 64
        %v3139 = vpop.permute.xlu0 %3138
        %3140 = vrot.lane.b32.xlu0 %v3091, 64
        %v3141 = vpop.permute.xlu0 %3140
        %3142 = vrot.lane.b32.xlu0 %v3095, 64
        %v3143 = vpop.permute.xlu0 %3142
        %v3160 = vmul.f32 %v1713, %v3113
        %v3161 = vmul.f32 %v1716, %v3115
        %v3162 = vmul.f32 %v1721, %v3117
        %v3163 = vmul.f32 %v1724, %v3119
        %v3164 = vmul.f32 %v1729, %v3121
        %v3165 = vmul.f32 %v1732, %v3123
        %v3166 = vmul.f32 %v1737, %v3125
        %v3167 = vmul.f32 %v1740, %v3127
        %v3168 = vmul.f32 %v1745, %v3129
        %v3169 = vmul.f32 %v1748, %v3131
        %v3170 = vmul.f32 %v1753, %v3133
        %v3171 = vmul.f32 %v1756, %v3135
        %v3172 = vmul.f32 %v1761, %v3137
        %v3173 = vmul.f32 %v1764, %v3139
        %v3174 = vmul.f32 %v1769, %v3141
        %v3175 = vmul.f32 %v1772, %v3143
        %v3177 = vsel %vm2292, %v3160, 0
        %v3180 = vsel %vm2292, %v3161, 0
        %v3183 = vsel %vm2292, %v3162, 0
        %v3186 = vsel %vm2292, %v3163, 0
        %v3189 = vsel %vm2292, %v3164, 0
        %v3192 = vsel %vm2292, %v3165, 0
        %v3195 = vsel %vm2292, %v3166, 0
        %v3198 = vsel %vm2292, %v3167, 0
        %v3201 = vsel %vm2292, %v3168, 0
        %v3204 = vsel %vm2292, %v3169, 0
        %v3207 = vsel %vm2292, %v3170, 0
        %v3210 = vsel %vm2292, %v3171, 0
        %v3213 = vsel %vm2292, %v3172, 0
        %v3216 = vsel %vm2292, %v3173, 0
        %v3219 = vsel %vm2292, %v3174, 0
        %v3222 = vsel %vm2292, %v3175, 0
        %3224 = vmatprep.subr.mxu0 0.0
        %3225 = vmatpush1.msra.mxu0 %v1928
        %3226 = vmatprep.subr.mxu0 0.0
        %3227 = vmatpush1.msra.mxu0 %v1929
        %3228 = vmatprep.subr.mxu0 0.0
        %3229 = vmatpush1.msra.mxu0 %v1930
        %3230 = vmatprep.subr.mxu0 0.0
        %3231 = vmatpush1.msra.mxu0 %v1931
        %3232 = vmatprep.subr.mxu0 0.0
        %3233 = vmatpush1.msra.mxu0 %v1932
        %3234 = vmatprep.subr.mxu0 0.0
        %3235 = vmatpush1.msra.mxu0 %v1933
        %3236 = vmatprep.subr.mxu0 0.0
        %3237 = vmatpush1.msra.mxu0 %v1934
        %3238 = vmatprep.subr.mxu0 0.0
        %3239 = vmatpush1.msra.mxu0 %v1935
        %3240 = vmatprep.subr.mxu0 0.0
        %3241 = vmatpush1.msra.mxu0 0.0
        %3242 = vmatprep.subr.mxu0 0.0
        %3243 = vmatpush1.msra.mxu0 0.0
        %3244 = vmatprep.subr.mxu0 0.0
        %3245 = vmatpush1.msra.mxu0 0.0
        %3246 = vmatprep.subr.mxu0 0.0
        %3247 = vmatpush1.msra.mxu0 0.0
        %3248 = vmatprep.subr.mxu0 0.0
        %3249 = vmatpush1.msra.mxu0 0.0
        %3250 = vmatprep.subr.mxu0 0.0
        %3251 = vmatpush1.msra.mxu0 0.0
        %3252 = vmatprep.subr.mxu0 0.0
        %3253 = vmatpush1.msra.mxu0 0.0
        %3254 = vmatprep.subr.mxu0 0.0
        %3255 = vmatpush1.msra.mxu0 0.0
        %3256 = vmatprep.subr.mxu0 0.0
        %3257 = vmatpush1.msra.mxu0 0.0
        %3258 = vmatprep.subr.mxu0 0.0
        %3259 = vmatpush1.msra.mxu0 0.0
        %3260 = vmatprep.subr.mxu0 0.0
        %3261 = vmatpush1.msra.mxu0 0.0
        %3262 = vmatprep.subr.mxu0 0.0
        %3263 = vmatpush1.msra.mxu0 0.0
        %3264 = vmatprep.subr.mxu0 0.0
        %3265 = vmatpush1.msra.mxu0 0.0
        %3266 = vmatprep.subr.mxu0 0.0
        %3267 = vmatpush1.msra.mxu0 0.0
        %3268 = vmatprep.subr.mxu0 0.0
        %3269 = vmatpush1.msra.mxu0 0.0
        %3270 = vmatprep.subr.mxu0 0.0
        %3271 = vmatpush1.msra.mxu0 0.0
        %3272 = vmatprep.subr.mxu0 0.0
        %3273 = vmatpush1.msra.mxu0 0.0
        %3274 = vmatprep.subr.mxu0 0.0
        %3275 = vmatpush1.msra.mxu0 0.0
        %3276 = vmatprep.subr.mxu0 0.0
        %3277 = vmatpush1.msra.mxu0 0.0
        %3278 = vmatprep.subr.mxu0 0.0
        %3279 = vmatpush1.msra.mxu0 0.0
        %3280 = vmatprep.subr.mxu0 0.0
        %3281 = vmatpush1.msra.mxu0 0.0
        %3282 = vmatprep.subr.mxu0 0.0
        %3283 = vmatpush1.msra.mxu0 0.0
        %3284 = vmatprep.subr.mxu0 0.0
        %3285 = vmatpush1.msra.mxu0 0.0
        %3286 = vmatprep.subr.mxu0 0.0
        %3287 = vmatpush1.msra.mxu0 0.0
        %3288 = vmatprep.mubr.f32.mxu0 0.0
        %3289 = vmatmul.mubr.f32.gmra.mrb[0].mxu0 %v3177
        %v3290 = vpop.f32.mrb[0].mxu0
        %v3291 = vadd.f32 0.0, %v3290
        %v3292 = vpop.f32.mrb[0].mxu0
        %3293 = vmatprep.mubr.f32.mxu0 0.0
        %3294 = vmatmul.mubr.f32.gmra.mrb[0].mxu0 %v3180
        %v3295 = vpop.f32.mrb[0].mxu0
        %v3296 = vadd.f32 0.0, %v3295
        %v3297 = vpop.f32.mrb[0].mxu0
        %3298 = vmatprep.mubr.f32.mxu0 0.0
        %3299 = vmatmul.mubr.f32.gmra.mrb[0].mxu0 %v3183
        %v3300 = vpop.f32.mrb[0].mxu0
        %v3301 = vadd.f32 0.0, %v3300
        %v3302 = vpop.f32.mrb[0].mxu0
        %3303 = vmatprep.mubr.f32.mxu0 0.0
        %3304 = vmatmul.mubr.f32.gmra.mrb[0].mxu0 %v3186
        %v3305 = vpop.f32.mrb[0].mxu0
        %v3306 = vadd.f32 0.0, %v3305
        %v3307 = vpop.f32.mrb[0].mxu0
        %3308 = vmatprep.mubr.f32.mxu0 0.0
        %3309 = vmatmul.mubr.f32.gmra.mrb[0].mxu0 %v3189
        %v3310 = vpop.f32.mrb[0].mxu0
        %v3311 = vadd.f32 0.0, %v3310
        %v3312 = vpop.f32.mrb[0].mxu0
        %3313 = vmatprep.mubr.f32.mxu0 0.0
        %3314 = vmatmul.mubr.f32.gmra.mrb[0].mxu0 %v3192
        %v3315 = vpop.f32.mrb[0].mxu0
        %v3316 = vadd.f32 0.0, %v3315
        %v3317 = vpop.f32.mrb[0].mxu0
        %3318 = vmatprep.mubr.f32.mxu0 0.0
        %3319 = vmatmul.mubr.f32.gmra.mrb[0].mxu0 %v3195
        %v3320 = vpop.f32.mrb[0].mxu0
        %v3321 = vadd.f32 0.0, %v3320
        %v3322 = vpop.f32.mrb[0].mxu0
        %3323 = vmatprep.mubr.f32.mxu0 0.0
        %3324 = vmatmul.mubr.f32.gmra.mrb[0].mxu0 %v3198
        %v3325 = vpop.f32.mrb[0].mxu0
        %v3326 = vadd.f32 0.0, %v3325
        %v3327 = vpop.f32.mrb[0].mxu0
        %3328 = vmatprep.mubr.f32.mxu0 0.0
        %3329 = vmatmul.mubr.f32.gmra.mrb[0].mxu0 %v3201
        %v3330 = vpop.f32.mrb[0].mxu0
        %v3331 = vadd.f32 0.0, %v3330
        %v3332 = vpop.f32.mrb[0].mxu0
        %3333 = vmatprep.mubr.f32.mxu0 0.0
        %3334 = vmatmul.mubr.f32.gmra.mrb[0].mxu0 %v3204
        %v3335 = vpop.f32.mrb[0].mxu0
        %v3336 = vadd.f32 0.0, %v3335
        %v3337 = vpop.f32.mrb[0].mxu0
        %3338 = vmatprep.mubr.f32.mxu0 0.0
        %3339 = vmatmul.mubr.f32.gmra.mrb[0].mxu0 %v3207
        %v3340 = vpop.f32.mrb[0].mxu0
        %v3341 = vadd.f32 0.0, %v3340
        %v3342 = vpop.f32.mrb[0].mxu0
        %3343 = vmatprep.mubr.f32.mxu0 0.0
        %3344 = vmatmul.mubr.f32.gmra.mrb[0].mxu0 %v3210
        %v3345 = vpop.f32.mrb[0].mxu0
        %v3346 = vadd.f32 0.0, %v3345
        %v3347 = vpop.f32.mrb[0].mxu0
        %3348 = vmatprep.mubr.f32.mxu0 0.0
        %3349 = vmatmul.mubr.f32.gmra.mrb[0].mxu0 %v3213
        %v3350 = vpop.f32.mrb[0].mxu0
        %v3351 = vadd.f32 0.0, %v3350
        %v3352 = vpop.f32.mrb[0].mxu0
        %3353 = vmatprep.mubr.f32.mxu0 0.0
        %3354 = vmatmul.mubr.f32.gmra.mrb[0].mxu0 %v3216
        %v3355 = vpop.f32.mrb[0].mxu0
        %v3356 = vadd.f32 0.0, %v3355
        %v3357 = vpop.f32.mrb[0].mxu0
        %3358 = vmatprep.mubr.f32.mxu0 0.0
        %3359 = vmatmul.mubr.f32.gmra.mrb[0].mxu0 %v3219
        %v3360 = vpop.f32.mrb[0].mxu0
        %v3361 = vadd.f32 0.0, %v3360
        %v3362 = vpop.f32.mrb[0].mxu0
        %3363 = vmatprep.mubr.f32.mxu0 0.0
        %3364 = vmatmul.mubr.f32.gmra.mrb[0].mxu0 %v3222
        %v3365 = vpop.f32.mrb[0].mxu0
        %v3366 = vadd.f32 0.0, %v3365
        %v3367 = vpop.f32.mrb[0].mxu0
        %3368 = vdwg.mxu0
        %v3369 = vadd.f32 %v3016, %v3291
        %v3370 = vadd.f32 %v3017, %v3296
        %v3371 = vadd.f32 %v3018, %v3301
        %v3372 = vadd.f32 %v3019, %v3306
        %v3373 = vadd.f32 %v3020, %v3311
        %v3374 = vadd.f32 %v3021, %v3316
        %v3375 = vadd.f32 %v3022, %v3321
        %v3376 = vadd.f32 %v3023, %v3326
        %v3377 = vadd.f32 %v3024, %v3331
        %v3378 = vadd.f32 %v3025, %v3336
        %v3379 = vadd.f32 %v3026, %v3341
        %v3380 = vadd.f32 %v3027, %v3346
        %v3381 = vadd.f32 %v3028, %v3351
        %v3382 = vadd.f32 %v3029, %v3356
        %v3383 = vadd.f32 %v3030, %v3361
        %v3384 = vadd.f32 %v3031, %v3366
        %v3385 = vlaneseq
        %v3386 = vshrl.u32 %v3385, 7
        %v3387 = vsub.s32 4, %v3386
        %v3388 = vrot.slane %v1779, %v3387
        %v3389 = vlaneseq
        %v3390 = vshrl.u32 %v3389, 7
        %v3391 = vsub.s32 4, %v3390
        %v3392 = vrot.slane %v1780, %v3391
        %v3393 = vlaneseq
        %v3394 = vshrl.u32 %v3393, 7
        %v3395 = vsub.s32 4, %v3394
        %v3396 = vrot.slane %v1781, %v3395
        %v3397 = vlaneseq
        %v3398 = vshrl.u32 %v3397, 7
        %v3399 = vsub.s32 4, %v3398
        %v3400 = vrot.slane %v1782, %v3399
        %v3401 = vlaneseq
        %v3402 = vshrl.u32 %v3401, 7
        %v3403 = vsub.s32 4, %v3402
        %v3404 = vrot.slane %v1783, %v3403
        %v3405 = vlaneseq
        %v3406 = vshrl.u32 %v3405, 7
        %v3407 = vsub.s32 4, %v3406
        %v3408 = vrot.slane %v1784, %v3407
        %v3409 = vlaneseq
        %v3410 = vshrl.u32 %v3409, 7
        %v3411 = vsub.s32 4, %v3410
        %v3412 = vrot.slane %v1785, %v3411
        %v3413 = vlaneseq
        %v3414 = vshrl.u32 %v3413, 7
        %v3415 = vsub.s32 4, %v3414
        %v3416 = vrot.slane %v1786, %v3415
        %v3417 = vlaneseq
        %v3418 = vshrl.u32 %v3417, 7
        %v3419 = vsub.s32 4, %v3418
        %v3420 = vrot.slane %v1787, %v3419
        %v3421 = vlaneseq
        %v3422 = vshrl.u32 %v3421, 7
        %v3423 = vsub.s32 4, %v3422
        %v3424 = vrot.slane %v1788, %v3423
        %v3425 = vlaneseq
        %v3426 = vshrl.u32 %v3425, 7
        %v3427 = vsub.s32 4, %v3426
        %v3428 = vrot.slane %v1789, %v3427
        %v3429 = vlaneseq
        %v3430 = vshrl.u32 %v3429, 7
        %v3431 = vsub.s32 4, %v3430
        %v3432 = vrot.slane %v1790, %v3431
        %v3433 = vlaneseq
        %v3434 = vshrl.u32 %v3433, 7
        %v3435 = vsub.s32 4, %v3434
        %v3436 = vrot.slane %v1791, %v3435
        %v3437 = vlaneseq
        %v3438 = vshrl.u32 %v3437, 7
        %v3439 = vsub.s32 4, %v3438
        %v3440 = vrot.slane %v1792, %v3439
        %v3441 = vlaneseq
        %v3442 = vshrl.u32 %v3441, 7
        %v3443 = vsub.s32 4, %v3442
        %v3444 = vrot.slane %v1793, %v3443
        %v3445 = vlaneseq
        %v3446 = vshrl.u32 %v3445, 7
        %v3447 = vsub.s32 4, %v3446
        %v3448 = vrot.slane %v1794, %v3447
        %3465 = vrot.lane.b32.xlu0 %v3388, 64
        %v3466 = vpop.permute.xlu0 %3465
        %3467 = vrot.lane.b32.xlu0 %v3392, 64
        %v3468 = vpop.permute.xlu0 %3467
        %3469 = vrot.lane.b32.xlu0 %v3396, 64
        %v3470 = vpop.permute.xlu0 %3469
        %3471 = vrot.lane.b32.xlu0 %v3400, 64
        %v3472 = vpop.permute.xlu0 %3471
        %3473 = vrot.lane.b32.xlu0 %v3404, 64
        %v3474 = vpop.permute.xlu0 %3473
        %3475 = vrot.lane.b32.xlu0 %v3408, 64
        %v3476 = vpop.permute.xlu0 %3475
        %3477 = vrot.lane.b32.xlu0 %v3412, 64
        %v3478 = vpop.permute.xlu0 %3477
        %3479 = vrot.lane.b32.xlu0 %v3416, 64
        %v3480 = vpop.permute.xlu0 %3479
        %3481 = vrot.lane.b32.xlu0 %v3420, 64
        %v3482 = vpop.permute.xlu0 %3481
        %3483 = vrot.lane.b32.xlu0 %v3424, 64
        %v3484 = vpop.permute.xlu0 %3483
        %3485 = vrot.lane.b32.xlu0 %v3428, 64
        %v3486 = vpop.permute.xlu0 %3485
        %3487 = vrot.lane.b32.xlu0 %v3432, 64
        %v3488 = vpop.permute.xlu0 %3487
        %3489 = vrot.lane.b32.xlu0 %v3436, 64
        %v3490 = vpop.permute.xlu0 %3489
        %3491 = vrot.lane.b32.xlu0 %v3440, 64
        %v3492 = vpop.permute.xlu0 %3491
        %3493 = vrot.lane.b32.xlu0 %v3444, 64
        %v3494 = vpop.permute.xlu0 %3493
        %3495 = vrot.lane.b32.xlu0 %v3448, 64
        %v3496 = vpop.permute.xlu0 %3495
        %v3513 = vmul.f32 %v1713, %v3466
        %v3514 = vmul.f32 %v1716, %v3468
        %v3515 = vmul.f32 %v1721, %v3470
        %v3516 = vmul.f32 %v1724, %v3472
        %v3517 = vmul.f32 %v1729, %v3474
        %v3518 = vmul.f32 %v1732, %v3476
        %v3519 = vmul.f32 %v1737, %v3478
        %v3520 = vmul.f32 %v1740, %v3480
        %v3521 = vmul.f32 %v1745, %v3482
        %v3522 = vmul.f32 %v1748, %v3484
        %v3523 = vmul.f32 %v1753, %v3486
        %v3524 = vmul.f32 %v1756, %v3488
        %v3525 = vmul.f32 %v1761, %v3490
        %v3526 = vmul.f32 %v1764, %v3492
        %v3527 = vmul.f32 %v1769, %v3494
        %v3528 = vmul.f32 %v1772, %v3496
        %v3530 = vsel %vm2292, %v3513, 0
        %v3533 = vsel %vm2292, %v3514, 0
        %v3536 = vsel %vm2292, %v3515, 0
        %v3539 = vsel %vm2292, %v3516, 0
        %v3542 = vsel %vm2292, %v3517, 0
        %v3545 = vsel %vm2292, %v3518, 0
        %v3548 = vsel %vm2292, %v3519, 0
        %v3551 = vsel %vm2292, %v3520, 0
        %v3554 = vsel %vm2292, %v3521, 0
        %v3557 = vsel %vm2292, %v3522, 0
        %v3560 = vsel %vm2292, %v3523, 0
        %v3563 = vsel %vm2292, %v3524, 0
        %v3566 = vsel %vm2292, %v3525, 0
        %v3569 = vsel %vm2292, %v3526, 0
        %v3572 = vsel %vm2292, %v3527, 0
        %v3575 = vsel %vm2292, %v3528, 0
        %3577 = vmatprep.subr.mxu0 0.0
        %3578 = vmatpush1.msra.mxu0 %v1936
        %3579 = vmatprep.subr.mxu0 0.0
        %3580 = vmatpush1.msra.mxu0 %v1937
        %3581 = vmatprep.subr.mxu0 0.0
        %3582 = vmatpush1.msra.mxu0 %v1938
        %3583 = vmatprep.subr.mxu0 0.0
        %3584 = vmatpush1.msra.mxu0 %v1939
        %3585 = vmatprep.subr.mxu0 0.0
        %3586 = vmatpush1.msra.mxu0 %v1940
        %3587 = vmatprep.subr.mxu0 0.0
        %3588 = vmatpush1.msra.mxu0 %v1941
        %3589 = vmatprep.subr.mxu0 0.0
        %3590 = vmatpush1.msra.mxu0 %v1942
        %3591 = vmatprep.subr.mxu0 0.0
        %3592 = vmatpush1.msra.mxu0 %v1943
        %3593 = vmatprep.subr.mxu0 0.0
        %3594 = vmatpush1.msra.mxu0 0.0
        %3595 = vmatprep.subr.mxu0 0.0
        %3596 = vmatpush1.msra.mxu0 0.0
        %3597 = vmatprep.subr.mxu0 0.0
        %3598 = vmatpush1.msra.mxu0 0.0
        %3599 = vmatprep.subr.mxu0 0.0
        %3600 = vmatpush1.msra.mxu0 0.0
        %3601 = vmatprep.subr.mxu0 0.0
        %3602 = vmatpush1.msra.mxu0 0.0
        %3603 = vmatprep.subr.mxu0 0.0
        %3604 = vmatpush1.msra.mxu0 0.0
        %3605 = vmatprep.subr.mxu0 0.0
        %3606 = vmatpush1.msra.mxu0 0.0
        %3607 = vmatprep.subr.mxu0 0.0
        %3608 = vmatpush1.msra.mxu0 0.0
        %3609 = vmatprep.subr.mxu0 0.0
        %3610 = vmatpush1.msra.mxu0 0.0
        %3611 = vmatprep.subr.mxu0 0.0
        %3612 = vmatpush1.msra.mxu0 0.0
        %3613 = vmatprep.subr.mxu0 0.0
        %3614 = vmatpush1.msra.mxu0 0.0
        %3615 = vmatprep.subr.mxu0 0.0
        %3616 = vmatpush1.msra.mxu0 0.0
        %3617 = vmatprep.subr.mxu0 0.0
        %3618 = vmatpush1.msra.mxu0 0.0
        %3619 = vmatprep.subr.mxu0 0.0
        %3620 = vmatpush1.msra.mxu0 0.0
        %3621 = vmatprep.subr.mxu0 0.0
        %3622 = vmatpush1.msra.mxu0 0.0
        %3623 = vmatprep.subr.mxu0 0.0
        %3624 = vmatpush1.msra.mxu0 0.0
        %3625 = vmatprep.subr.mxu0 0.0
        %3626 = vmatpush1.msra.mxu0 0.0
        %3627 = vmatprep.subr.mxu0 0.0
        %3628 = vmatpush1.msra.mxu0 0.0
        %3629 = vmatprep.subr.mxu0 0.0
        %3630 = vmatpush1.msra.mxu0 0.0
        %3631 = vmatprep.subr.mxu0 0.0
        %3632 = vmatpush1.msra.mxu0 0.0
        %3633 = vmatprep.subr.mxu0 0.0
        %3634 = vmatpush1.msra.mxu0 0.0
        %3635 = vmatprep.subr.mxu0 0.0
        %3636 = vmatpush1.msra.mxu0 0.0
        %3637 = vmatprep.subr.mxu0 0.0
        %3638 = vmatpush1.msra.mxu0 0.0
        %3639 = vmatprep.subr.mxu0 0.0
        %3640 = vmatpush1.msra.mxu0 0.0
        %3641 = vmatprep.mubr.f32.mxu0 0.0
        %3642 = vmatmul.mubr.f32.gmra.mrb[0].mxu0 %v3530
        %v3643 = vpop.f32.mrb[0].mxu0
        %v3644 = vadd.f32 0.0, %v3643
        %v3645 = vpop.f32.mrb[0].mxu0
        %3646 = vmatprep.mubr.f32.mxu0 0.0
        %3647 = vmatmul.mubr.f32.gmra.mrb[0].mxu0 %v3533
        %v3648 = vpop.f32.mrb[0].mxu0
        %v3649 = vadd.f32 0.0, %v3648
        %v3650 = vpop.f32.mrb[0].mxu0
        %3651 = vmatprep.mubr.f32.mxu0 0.0
        %3652 = vmatmul.mubr.f32.gmra.mrb[0].mxu0 %v3536
        %v3653 = vpop.f32.mrb[0].mxu0
        %v3654 = vadd.f32 0.0, %v3653
        %v3655 = vpop.f32.mrb[0].mxu0
        %3656 = vmatprep.mubr.f32.mxu0 0.0
        %3657 = vmatmul.mubr.f32.gmra.mrb[0].mxu0 %v3539
        %v3658 = vpop.f32.mrb[0].mxu0
        %v3659 = vadd.f32 0.0, %v3658
        %v3660 = vpop.f32.mrb[0].mxu0
        %3661 = vmatprep.mubr.f32.mxu0 0.0
        %3662 = vmatmul.mubr.f32.gmra.mrb[0].mxu0 %v3542
        %v3663 = vpop.f32.mrb[0].mxu0
        %v3664 = vadd.f32 0.0, %v3663
        %v3665 = vpop.f32.mrb[0].mxu0
        %3666 = vmatprep.mubr.f32.mxu0 0.0
        %3667 = vmatmul.mubr.f32.gmra.mrb[0].mxu0 %v3545
        %v3668 = vpop.f32.mrb[0].mxu0
        %v3669 = vadd.f32 0.0, %v3668
        %v3670 = vpop.f32.mrb[0].mxu0
        %3671 = vmatprep.mubr.f32.mxu0 0.0
        %3672 = vmatmul.mubr.f32.gmra.mrb[0].mxu0 %v3548
        %v3673 = vpop.f32.mrb[0].mxu0
        %v3674 = vadd.f32 0.0, %v3673
        %v3675 = vpop.f32.mrb[0].mxu0
        %3676 = vmatprep.mubr.f32.mxu0 0.0
        %3677 = vmatmul.mubr.f32.gmra.mrb[0].mxu0 %v3551
        %v3678 = vpop.f32.mrb[0].mxu0
        %v3679 = vadd.f32 0.0, %v3678
        %v3680 = vpop.f32.mrb[0].mxu0
        %3681 = vmatprep.mubr.f32.mxu0 0.0
        %3682 = vmatmul.mubr.f32.gmra.mrb[0].mxu0 %v3554
        %v3683 = vpop.f32.mrb[0].mxu0
        %v3684 = vadd.f32 0.0, %v3683
        %v3685 = vpop.f32.mrb[0].mxu0
        %3686 = vmatprep.mubr.f32.mxu0 0.0
        %3687 = vmatmul.mubr.f32.gmra.mrb[0].mxu0 %v3557
        %v3688 = vpop.f32.mrb[0].mxu0
        %v3689 = vadd.f32 0.0, %v3688
        %v3690 = vpop.f32.mrb[0].mxu0
        %3691 = vmatprep.mubr.f32.mxu0 0.0
        %3692 = vmatmul.mubr.f32.gmra.mrb[0].mxu0 %v3560
        %v3693 = vpop.f32.mrb[0].mxu0
        %v3694 = vadd.f32 0.0, %v3693
        %v3695 = vpop.f32.mrb[0].mxu0
        %3696 = vmatprep.mubr.f32.mxu0 0.0
        %3697 = vmatmul.mubr.f32.gmra.mrb[0].mxu0 %v3563
        %v3698 = vpop.f32.mrb[0].mxu0
        %v3699 = vadd.f32 0.0, %v3698
        %v3700 = vpop.f32.mrb[0].mxu0
        %3701 = vmatprep.mubr.f32.mxu0 0.0
        %3702 = vmatmul.mubr.f32.gmra.mrb[0].mxu0 %v3566
        %v3703 = vpop.f32.mrb[0].mxu0
        %v3704 = vadd.f32 0.0, %v3703
        %v3705 = vpop.f32.mrb[0].mxu0
        %3706 = vmatprep.mubr.f32.mxu0 0.0
        %3707 = vmatmul.mubr.f32.gmra.mrb[0].mxu0 %v3569
        %v3708 = vpop.f32.mrb[0].mxu0
        %v3709 = vadd.f32 0.0, %v3708
        %v3710 = vpop.f32.mrb[0].mxu0
        %3711 = vmatprep.mubr.f32.mxu0 0.0
        %3712 = vmatmul.mubr.f32.gmra.mrb[0].mxu0 %v3572
        %v3713 = vpop.f32.mrb[0].mxu0
        %v3714 = vadd.f32 0.0, %v3713
        %v3715 = vpop.f32.mrb[0].mxu0
        %3716 = vmatprep.mubr.f32.mxu0 0.0
        %3717 = vmatmul.mubr.f32.gmra.mrb[0].mxu0 %v3575
        %v3718 = vpop.f32.mrb[0].mxu0
        %v3719 = vadd.f32 0.0, %v3718
        %v3720 = vpop.f32.mrb[0].mxu0
        %3721 = vdwg.mxu0
        %v3722 = vadd.f32 %v3369, %v3644
        %v3723 = vadd.f32 %v3370, %v3649
        %v3724 = vadd.f32 %v3371, %v3654
        %v3725 = vadd.f32 %v3372, %v3659
        %v3726 = vadd.f32 %v3373, %v3664
        %v3727 = vadd.f32 %v3374, %v3669
        %v3728 = vadd.f32 %v3375, %v3674
        %v3729 = vadd.f32 %v3376, %v3679
        %v3730 = vadd.f32 %v3377, %v3684
        %v3731 = vadd.f32 %v3378, %v3689
        %v3732 = vadd.f32 %v3379, %v3694
        %v3733 = vadd.f32 %v3380, %v3699
        %v3734 = vadd.f32 %v3381, %v3704
        %v3735 = vadd.f32 %v3382, %v3709
        %v3736 = vadd.f32 %v3383, %v3714
        %v3737 = vadd.f32 %v3384, %v3719
        %v3738 = vlaneseq
        %v3739 = vshrl.u32 %v3738, 7
        %v3740 = vsub.s32 5, %v3739
        %v3741 = vrot.slane %v1779, %v3740
        %v3742 = vlaneseq
        %v3743 = vshrl.u32 %v3742, 7
        %v3744 = vsub.s32 5, %v3743
        %v3745 = vrot.slane %v1780, %v3744
        %v3746 = vlaneseq
        %v3747 = vshrl.u32 %v3746, 7
        %v3748 = vsub.s32 5, %v3747
        %v3749 = vrot.slane %v1781, %v3748
        %v3750 = vlaneseq
        %v3751 = vshrl.u32 %v3750, 7
        %v3752 = vsub.s32 5, %v3751
        %v3753 = vrot.slane %v1782, %v3752
        %v3754 = vlaneseq
        %v3755 = vshrl.u32 %v3754, 7
        %v3756 = vsub.s32 5, %v3755
        %v3757 = vrot.slane %v1783, %v3756
        %v3758 = vlaneseq
        %v3759 = vshrl.u32 %v3758, 7
        %v3760 = vsub.s32 5, %v3759
        %v3761 = vrot.slane %v1784, %v3760
        %v3762 = vlaneseq
        %v3763 = vshrl.u32 %v3762, 7
        %v3764 = vsub.s32 5, %v3763
        %v3765 = vrot.slane %v1785, %v3764
        %v3766 = vlaneseq
        %v3767 = vshrl.u32 %v3766, 7
        %v3768 = vsub.s32 5, %v3767
        %v3769 = vrot.slane %v1786, %v3768
        %v3770 = vlaneseq
        %v3771 = vshrl.u32 %v3770, 7
        %v3772 = vsub.s32 5, %v3771
        %v3773 = vrot.slane %v1787, %v3772
        %v3774 = vlaneseq
        %v3775 = vshrl.u32 %v3774, 7
        %v3776 = vsub.s32 5, %v3775
        %v3777 = vrot.slane %v1788, %v3776
        %v3778 = vlaneseq
        %v3779 = vshrl.u32 %v3778, 7
        %v3780 = vsub.s32 5, %v3779
        %v3781 = vrot.slane %v1789, %v3780
        %v3782 = vlaneseq
        %v3783 = vshrl.u32 %v3782, 7
        %v3784 = vsub.s32 5, %v3783
        %v3785 = vrot.slane %v1790, %v3784
        %v3786 = vlaneseq
        %v3787 = vshrl.u32 %v3786, 7
        %v3788 = vsub.s32 5, %v3787
        %v3789 = vrot.slane %v1791, %v3788
        %v3790 = vlaneseq
        %v3791 = vshrl.u32 %v3790, 7
        %v3792 = vsub.s32 5, %v3791
        %v3793 = vrot.slane %v1792, %v3792
        %v3794 = vlaneseq
        %v3795 = vshrl.u32 %v3794, 7
        %v3796 = vsub.s32 5, %v3795
        %v3797 = vrot.slane %v1793, %v3796
        %v3798 = vlaneseq
        %v3799 = vshrl.u32 %v3798, 7
        %v3800 = vsub.s32 5, %v3799
        %v3801 = vrot.slane %v1794, %v3800
        %3818 = vrot.lane.b32.xlu0 %v3741, 64
        %v3819 = vpop.permute.xlu0 %3818
        %3820 = vrot.lane.b32.xlu0 %v3745, 64
        %v3821 = vpop.permute.xlu0 %3820
        %3822 = vrot.lane.b32.xlu0 %v3749, 64
        %v3823 = vpop.permute.xlu0 %3822
        %3824 = vrot.lane.b32.xlu0 %v3753, 64
        %v3825 = vpop.permute.xlu0 %3824
        %3826 = vrot.lane.b32.xlu0 %v3757, 64
        %v3827 = vpop.permute.xlu0 %3826
        %3828 = vrot.lane.b32.xlu0 %v3761, 64
        %v3829 = vpop.permute.xlu0 %3828
        %3830 = vrot.lane.b32.xlu0 %v3765, 64
        %v3831 = vpop.permute.xlu0 %3830
        %3832 = vrot.lane.b32.xlu0 %v3769, 64
        %v3833 = vpop.permute.xlu0 %3832
        %3834 = vrot.lane.b32.xlu0 %v3773, 64
        %v3835 = vpop.permute.xlu0 %3834
        %3836 = vrot.lane.b32.xlu0 %v3777, 64
        %v3837 = vpop.permute.xlu0 %3836
        %3838 = vrot.lane.b32.xlu0 %v3781, 64
        %v3839 = vpop.permute.xlu0 %3838
        %3840 = vrot.lane.b32.xlu0 %v3785, 64
        %v3841 = vpop.permute.xlu0 %3840
        %3842 = vrot.lane.b32.xlu0 %v3789, 64
        %v3843 = vpop.permute.xlu0 %3842
        %3844 = vrot.lane.b32.xlu0 %v3793, 64
        %v3845 = vpop.permute.xlu0 %3844
        %3846 = vrot.lane.b32.xlu0 %v3797, 64
        %v3847 = vpop.permute.xlu0 %3846
        %3848 = vrot.lane.b32.xlu0 %v3801, 64
        %v3849 = vpop.permute.xlu0 %3848
        %v3866 = vmul.f32 %v1713, %v3819
        %v3867 = vmul.f32 %v1716, %v3821
        %v3868 = vmul.f32 %v1721, %v3823
        %v3869 = vmul.f32 %v1724, %v3825
        %v3870 = vmul.f32 %v1729, %v3827
        %v3871 = vmul.f32 %v1732, %v3829
        %v3872 = vmul.f32 %v1737, %v3831
        %v3873 = vmul.f32 %v1740, %v3833
        %v3874 = vmul.f32 %v1745, %v3835
        %v3875 = vmul.f32 %v1748, %v3837
        %v3876 = vmul.f32 %v1753, %v3839
        %v3877 = vmul.f32 %v1756, %v3841
        %v3878 = vmul.f32 %v1761, %v3843
        %v3879 = vmul.f32 %v1764, %v3845
        %v3880 = vmul.f32 %v1769, %v3847
        %v3881 = vmul.f32 %v1772, %v3849
        %v3883 = vsel %vm2292, %v3866, 0
        %v3886 = vsel %vm2292, %v3867, 0
        %v3889 = vsel %vm2292, %v3868, 0
        %v3892 = vsel %vm2292, %v3869, 0
        %v3895 = vsel %vm2292, %v3870, 0
        %v3898 = vsel %vm2292, %v3871, 0
        %v3901 = vsel %vm2292, %v3872, 0
        %v3904 = vsel %vm2292, %v3873, 0
        %v3907 = vsel %vm2292, %v3874, 0
        %v3910 = vsel %vm2292, %v3875, 0
        %v3913 = vsel %vm2292, %v3876, 0
        %v3916 = vsel %vm2292, %v3877, 0
        %v3919 = vsel %vm2292, %v3878, 0
        %v3922 = vsel %vm2292, %v3879, 0
        %v3925 = vsel %vm2292, %v3880, 0
        %v3928 = vsel %vm2292, %v3881, 0
        %3930 = vmatprep.subr.mxu0 0.0
        %3931 = vmatpush1.msra.mxu0 %v1944
        %3932 = vmatprep.subr.mxu0 0.0
        %3933 = vmatpush1.msra.mxu0 %v1945
        %3934 = vmatprep.subr.mxu0 0.0
        %3935 = vmatpush1.msra.mxu0 %v1946
        %3936 = vmatprep.subr.mxu0 0.0
        %3937 = vmatpush1.msra.mxu0 %v1947
        %3938 = vmatprep.subr.mxu0 0.0
        %3939 = vmatpush1.msra.mxu0 %v1948
        %3940 = vmatprep.subr.mxu0 0.0
        %3941 = vmatpush1.msra.mxu0 %v1949
        %3942 = vmatprep.subr.mxu0 0.0
        %3943 = vmatpush1.msra.mxu0 %v1950
        %3944 = vmatprep.subr.mxu0 0.0
        %3945 = vmatpush1.msra.mxu0 %v1951
        %3946 = vmatprep.subr.mxu0 0.0
        %3947 = vmatpush1.msra.mxu0 0.0
        %3948 = vmatprep.subr.mxu0 0.0
        %3949 = vmatpush1.msra.mxu0 0.0
        %3950 = vmatprep.subr.mxu0 0.0
        %3951 = vmatpush1.msra.mxu0 0.0
        %3952 = vmatprep.subr.mxu0 0.0
        %3953 = vmatpush1.msra.mxu0 0.0
        %3954 = vmatprep.subr.mxu0 0.0
        %3955 = vmatpush1.msra.mxu0 0.0
        %3956 = vmatprep.subr.mxu0 0.0
        %3957 = vmatpush1.msra.mxu0 0.0
        %3958 = vmatprep.subr.mxu0 0.0
        %3959 = vmatpush1.msra.mxu0 0.0
        %3960 = vmatprep.subr.mxu0 0.0
        %3961 = vmatpush1.msra.mxu0 0.0
        %3962 = vmatprep.subr.mxu0 0.0
        %3963 = vmatpush1.msra.mxu0 0.0
        %3964 = vmatprep.subr.mxu0 0.0
        %3965 = vmatpush1.msra.mxu0 0.0
        %3966 = vmatprep.subr.mxu0 0.0
        %3967 = vmatpush1.msra.mxu0 0.0
        %3968 = vmatprep.subr.mxu0 0.0
        %3969 = vmatpush1.msra.mxu0 0.0
        %3970 = vmatprep.subr.mxu0 0.0
        %3971 = vmatpush1.msra.mxu0 0.0
        %3972 = vmatprep.subr.mxu0 0.0
        %3973 = vmatpush1.msra.mxu0 0.0
        %3974 = vmatprep.subr.mxu0 0.0
        %3975 = vmatpush1.msra.mxu0 0.0
        %3976 = vmatprep.subr.mxu0 0.0
        %3977 = vmatpush1.msra.mxu0 0.0
        %3978 = vmatprep.subr.mxu0 0.0
        %3979 = vmatpush1.msra.mxu0 0.0
        %3980 = vmatprep.subr.mxu0 0.0
        %3981 = vmatpush1.msra.mxu0 0.0
        %3982 = vmatprep.subr.mxu0 0.0
        %3983 = vmatpush1.msra.mxu0 0.0
        %3984 = vmatprep.subr.mxu0 0.0
        %3985 = vmatpush1.msra.mxu0 0.0
        %3986 = vmatprep.subr.mxu0 0.0
        %3987 = vmatpush1.msra.mxu0 0.0
        %3988 = vmatprep.subr.mxu0 0.0
        %3989 = vmatpush1.msra.mxu0 0.0
        %3990 = vmatprep.subr.mxu0 0.0
        %3991 = vmatpush1.msra.mxu0 0.0
        %3992 = vmatprep.subr.mxu0 0.0
        %3993 = vmatpush1.msra.mxu0 0.0
        %3994 = vmatprep.mubr.f32.mxu0 0.0
        %3995 = vmatmul.mubr.f32.gmra.mrb[0].mxu0 %v3883
        %v3996 = vpop.f32.mrb[0].mxu0
        %v3997 = vadd.f32 0.0, %v3996
        %v3998 = vpop.f32.mrb[0].mxu0
        %3999 = vmatprep.mubr.f32.mxu0 0.0
        %4000 = vmatmul.mubr.f32.gmra.mrb[0].mxu0 %v3886
        %v4001 = vpop.f32.mrb[0].mxu0
        %v4002 = vadd.f32 0.0, %v4001
        %v4003 = vpop.f32.mrb[0].mxu0
        %4004 = vmatprep.mubr.f32.mxu0 0.0
        %4005 = vmatmul.mubr.f32.gmra.mrb[0].mxu0 %v3889
        %v4006 = vpop.f32.mrb[0].mxu0
        %v4007 = vadd.f32 0.0, %v4006
        %v4008 = vpop.f32.mrb[0].mxu0
        %4009 = vmatprep.mubr.f32.mxu0 0.0
        %4010 = vmatmul.mubr.f32.gmra.mrb[0].mxu0 %v3892
        %v4011 = vpop.f32.mrb[0].mxu0
        %v4012 = vadd.f32 0.0, %v4011
        %v4013 = vpop.f32.mrb[0].mxu0
        %4014 = vmatprep.mubr.f32.mxu0 0.0
        %4015 = vmatmul.mubr.f32.gmra.mrb[0].mxu0 %v3895
        %v4016 = vpop.f32.mrb[0].mxu0
        %v4017 = vadd.f32 0.0, %v4016
        %v4018 = vpop.f32.mrb[0].mxu0
        %4019 = vmatprep.mubr.f32.mxu0 0.0
        %4020 = vmatmul.mubr.f32.gmra.mrb[0].mxu0 %v3898
        %v4021 = vpop.f32.mrb[0].mxu0
        %v4022 = vadd.f32 0.0, %v4021
        %v4023 = vpop.f32.mrb[0].mxu0
        %4024 = vmatprep.mubr.f32.mxu0 0.0
        %4025 = vmatmul.mubr.f32.gmra.mrb[0].mxu0 %v3901
        %v4026 = vpop.f32.mrb[0].mxu0
        %v4027 = vadd.f32 0.0, %v4026
        %v4028 = vpop.f32.mrb[0].mxu0
        %4029 = vmatprep.mubr.f32.mxu0 0.0
        %4030 = vmatmul.mubr.f32.gmra.mrb[0].mxu0 %v3904
        %v4031 = vpop.f32.mrb[0].mxu0
        %v4032 = vadd.f32 0.0, %v4031
        %v4033 = vpop.f32.mrb[0].mxu0
        %4034 = vmatprep.mubr.f32.mxu0 0.0
        %4035 = vmatmul.mubr.f32.gmra.mrb[0].mxu0 %v3907
        %v4036 = vpop.f32.mrb[0].mxu0
        %v4037 = vadd.f32 0.0, %v4036
        %v4038 = vpop.f32.mrb[0].mxu0
        %4039 = vmatprep.mubr.f32.mxu0 0.0
        %4040 = vmatmul.mubr.f32.gmra.mrb[0].mxu0 %v3910
        %v4041 = vpop.f32.mrb[0].mxu0
        %v4042 = vadd.f32 0.0, %v4041
        %v4043 = vpop.f32.mrb[0].mxu0
        %4044 = vmatprep.mubr.f32.mxu0 0.0
        %4045 = vmatmul.mubr.f32.gmra.mrb[0].mxu0 %v3913
        %v4046 = vpop.f32.mrb[0].mxu0
        %v4047 = vadd.f32 0.0, %v4046
        %v4048 = vpop.f32.mrb[0].mxu0
        %4049 = vmatprep.mubr.f32.mxu0 0.0
        %4050 = vmatmul.mubr.f32.gmra.mrb[0].mxu0 %v3916
        %v4051 = vpop.f32.mrb[0].mxu0
        %v4052 = vadd.f32 0.0, %v4051
        %v4053 = vpop.f32.mrb[0].mxu0
        %4054 = vmatprep.mubr.f32.mxu0 0.0
        %4055 = vmatmul.mubr.f32.gmra.mrb[0].mxu0 %v3919
        %v4056 = vpop.f32.mrb[0].mxu0
        %v4057 = vadd.f32 0.0, %v4056
        %v4058 = vpop.f32.mrb[0].mxu0
        %4059 = vmatprep.mubr.f32.mxu0 0.0
        %4060 = vmatmul.mubr.f32.gmra.mrb[0].mxu0 %v3922
        %v4061 = vpop.f32.mrb[0].mxu0
        %v4062 = vadd.f32 0.0, %v4061
        %v4063 = vpop.f32.mrb[0].mxu0
        %4064 = vmatprep.mubr.f32.mxu0 0.0
        %4065 = vmatmul.mubr.f32.gmra.mrb[0].mxu0 %v3925
        %v4066 = vpop.f32.mrb[0].mxu0
        %v4067 = vadd.f32 0.0, %v4066
        %v4068 = vpop.f32.mrb[0].mxu0
        %4069 = vmatprep.mubr.f32.mxu0 0.0
        %4070 = vmatmul.mubr.f32.gmra.mrb[0].mxu0 %v3928
        %v4071 = vpop.f32.mrb[0].mxu0
        %v4072 = vadd.f32 0.0, %v4071
        %v4073 = vpop.f32.mrb[0].mxu0
        %4074 = vdwg.mxu0
        %v4075 = vadd.f32 %v3722, %v3997
        %v4076 = vadd.f32 %v3723, %v4002
        %v4077 = vadd.f32 %v3724, %v4007
        %v4078 = vadd.f32 %v3725, %v4012
        %v4079 = vadd.f32 %v3726, %v4017
        %v4080 = vadd.f32 %v3727, %v4022
        %v4081 = vadd.f32 %v3728, %v4027
        %v4082 = vadd.f32 %v3729, %v4032
        %v4083 = vadd.f32 %v3730, %v4037
        %v4084 = vadd.f32 %v3731, %v4042
        %v4085 = vadd.f32 %v3732, %v4047
        %v4086 = vadd.f32 %v3733, %v4052
        %v4087 = vadd.f32 %v3734, %v4057
        %v4088 = vadd.f32 %v3735, %v4062
        %v4089 = vadd.f32 %v3736, %v4067
        %v4090 = vadd.f32 %v3737, %v4072
        %v4091 = vlaneseq
        %v4092 = vshrl.u32 %v4091, 7
        %v4093 = vsub.s32 6, %v4092
        %v4094 = vrot.slane %v1779, %v4093
        %v4095 = vlaneseq
        %v4096 = vshrl.u32 %v4095, 7
        %v4097 = vsub.s32 6, %v4096
        %v4098 = vrot.slane %v1780, %v4097
        %v4099 = vlaneseq
        %v4100 = vshrl.u32 %v4099, 7
        %v4101 = vsub.s32 6, %v4100
        %v4102 = vrot.slane %v1781, %v4101
        %v4103 = vlaneseq
        %v4104 = vshrl.u32 %v4103, 7
        %v4105 = vsub.s32 6, %v4104
        %v4106 = vrot.slane %v1782, %v4105
        %v4107 = vlaneseq
        %v4108 = vshrl.u32 %v4107, 7
        %v4109 = vsub.s32 6, %v4108
        %v4110 = vrot.slane %v1783, %v4109
        %v4111 = vlaneseq
        %v4112 = vshrl.u32 %v4111, 7
        %v4113 = vsub.s32 6, %v4112
        %v4114 = vrot.slane %v1784, %v4113
        %v4115 = vlaneseq
        %v4116 = vshrl.u32 %v4115, 7
        %v4117 = vsub.s32 6, %v4116
        %v4118 = vrot.slane %v1785, %v4117
        %v4119 = vlaneseq
        %v4120 = vshrl.u32 %v4119, 7
        %v4121 = vsub.s32 6, %v4120
        %v4122 = vrot.slane %v1786, %v4121
        %v4123 = vlaneseq
        %v4124 = vshrl.u32 %v4123, 7
        %v4125 = vsub.s32 6, %v4124
        %v4126 = vrot.slane %v1787, %v4125
        %v4127 = vlaneseq
        %v4128 = vshrl.u32 %v4127, 7
        %v4129 = vsub.s32 6, %v4128
        %v4130 = vrot.slane %v1788, %v4129
        %v4131 = vlaneseq
        %v4132 = vshrl.u32 %v4131, 7
        %v4133 = vsub.s32 6, %v4132
        %v4134 = vrot.slane %v1789, %v4133
        %v4135 = vlaneseq
        %v4136 = vshrl.u32 %v4135, 7
        %v4137 = vsub.s32 6, %v4136
        %v4138 = vrot.slane %v1790, %v4137
        %v4139 = vlaneseq
        %v4140 = vshrl.u32 %v4139, 7
        %v4141 = vsub.s32 6, %v4140
        %v4142 = vrot.slane %v1791, %v4141
        %v4143 = vlaneseq
        %v4144 = vshrl.u32 %v4143, 7
        %v4145 = vsub.s32 6, %v4144
        %v4146 = vrot.slane %v1792, %v4145
        %v4147 = vlaneseq
        %v4148 = vshrl.u32 %v4147, 7
        %v4149 = vsub.s32 6, %v4148
        %v4150 = vrot.slane %v1793, %v4149
        %v4151 = vlaneseq
        %v4152 = vshrl.u32 %v4151, 7
        %v4153 = vsub.s32 6, %v4152
        %v4154 = vrot.slane %v1794, %v4153
        %4171 = vrot.lane.b32.xlu0 %v4094, 64
        %v4172 = vpop.permute.xlu0 %4171
        %4173 = vrot.lane.b32.xlu0 %v4098, 64
        %v4174 = vpop.permute.xlu0 %4173
        %4175 = vrot.lane.b32.xlu0 %v4102, 64
        %v4176 = vpop.permute.xlu0 %4175
        %4177 = vrot.lane.b32.xlu0 %v4106, 64
        %v4178 = vpop.permute.xlu0 %4177
        %4179 = vrot.lane.b32.xlu0 %v4110, 64
        %v4180 = vpop.permute.xlu0 %4179
        %4181 = vrot.lane.b32.xlu0 %v4114, 64
        %v4182 = vpop.permute.xlu0 %4181
        %4183 = vrot.lane.b32.xlu0 %v4118, 64
        %v4184 = vpop.permute.xlu0 %4183
        %4185 = vrot.lane.b32.xlu0 %v4122, 64
        %v4186 = vpop.permute.xlu0 %4185
        %4187 = vrot.lane.b32.xlu0 %v4126, 64
        %v4188 = vpop.permute.xlu0 %4187
        %4189 = vrot.lane.b32.xlu0 %v4130, 64
        %v4190 = vpop.permute.xlu0 %4189
        %4191 = vrot.lane.b32.xlu0 %v4134, 64
        %v4192 = vpop.permute.xlu0 %4191
        %4193 = vrot.lane.b32.xlu0 %v4138, 64
        %v4194 = vpop.permute.xlu0 %4193
        %4195 = vrot.lane.b32.xlu0 %v4142, 64
        %v4196 = vpop.permute.xlu0 %4195
        %4197 = vrot.lane.b32.xlu0 %v4146, 64
        %v4198 = vpop.permute.xlu0 %4197
        %4199 = vrot.lane.b32.xlu0 %v4150, 64
        %v4200 = vpop.permute.xlu0 %4199
        %4201 = vrot.lane.b32.xlu0 %v4154, 64
        %v4202 = vpop.permute.xlu0 %4201
        %v4219 = vmul.f32 %v1713, %v4172
        %v4220 = vmul.f32 %v1716, %v4174
        %v4221 = vmul.f32 %v1721, %v4176
        %v4222 = vmul.f32 %v1724, %v4178
        %v4223 = vmul.f32 %v1729, %v4180
        %v4224 = vmul.f32 %v1732, %v4182
        %v4225 = vmul.f32 %v1737, %v4184
        %v4226 = vmul.f32 %v1740, %v4186
        %v4227 = vmul.f32 %v1745, %v4188
        %v4228 = vmul.f32 %v1748, %v4190
        %v4229 = vmul.f32 %v1753, %v4192
        %v4230 = vmul.f32 %v1756, %v4194
        %v4231 = vmul.f32 %v1761, %v4196
        %v4232 = vmul.f32 %v1764, %v4198
        %v4233 = vmul.f32 %v1769, %v4200
        %v4234 = vmul.f32 %v1772, %v4202
        %v4236 = vsel %vm2292, %v4219, 0
        %v4239 = vsel %vm2292, %v4220, 0
        %v4242 = vsel %vm2292, %v4221, 0
        %v4245 = vsel %vm2292, %v4222, 0
        %v4248 = vsel %vm2292, %v4223, 0
        %v4251 = vsel %vm2292, %v4224, 0
        %v4254 = vsel %vm2292, %v4225, 0
        %v4257 = vsel %vm2292, %v4226, 0
        %v4260 = vsel %vm2292, %v4227, 0
        %v4263 = vsel %vm2292, %v4228, 0
        %v4266 = vsel %vm2292, %v4229, 0
        %v4269 = vsel %vm2292, %v4230, 0
        %v4272 = vsel %vm2292, %v4231, 0
        %v4275 = vsel %vm2292, %v4232, 0
        %v4278 = vsel %vm2292, %v4233, 0
        %v4281 = vsel %vm2292, %v4234, 0
        %4283 = vmatprep.subr.mxu0 0.0
        %4284 = vmatpush1.msra.mxu0 %v1952
        %4285 = vmatprep.subr.mxu0 0.0
        %4286 = vmatpush1.msra.mxu0 %v1953
        %4287 = vmatprep.subr.mxu0 0.0
        %4288 = vmatpush1.msra.mxu0 %v1954
        %4289 = vmatprep.subr.mxu0 0.0
        %4290 = vmatpush1.msra.mxu0 %v1955
        %4291 = vmatprep.subr.mxu0 0.0
        %4292 = vmatpush1.msra.mxu0 %v1956
        %4293 = vmatprep.subr.mxu0 0.0
        %4294 = vmatpush1.msra.mxu0 %v1957
        %4295 = vmatprep.subr.mxu0 0.0
        %4296 = vmatpush1.msra.mxu0 %v1958
        %4297 = vmatprep.subr.mxu0 0.0
        %4298 = vmatpush1.msra.mxu0 %v1959
        %4299 = vmatprep.subr.mxu0 0.0
        %4300 = vmatpush1.msra.mxu0 0.0
        %4301 = vmatprep.subr.mxu0 0.0
        %4302 = vmatpush1.msra.mxu0 0.0
        %4303 = vmatprep.subr.mxu0 0.0
        %4304 = vmatpush1.msra.mxu0 0.0
        %4305 = vmatprep.subr.mxu0 0.0
        %4306 = vmatpush1.msra.mxu0 0.0
        %4307 = vmatprep.subr.mxu0 0.0
        %4308 = vmatpush1.msra.mxu0 0.0
        %4309 = vmatprep.subr.mxu0 0.0
        %4310 = vmatpush1.msra.mxu0 0.0
        %4311 = vmatprep.subr.mxu0 0.0
        %4312 = vmatpush1.msra.mxu0 0.0
        %4313 = vmatprep.subr.mxu0 0.0
        %4314 = vmatpush1.msra.mxu0 0.0
        %4315 = vmatprep.subr.mxu0 0.0
        %4316 = vmatpush1.msra.mxu0 0.0
        %4317 = vmatprep.subr.mxu0 0.0
        %4318 = vmatpush1.msra.mxu0 0.0
        %4319 = vmatprep.subr.mxu0 0.0
        %4320 = vmatpush1.msra.mxu0 0.0
        %4321 = vmatprep.subr.mxu0 0.0
        %4322 = vmatpush1.msra.mxu0 0.0
        %4323 = vmatprep.subr.mxu0 0.0
        %4324 = vmatpush1.msra.mxu0 0.0
        %4325 = vmatprep.subr.mxu0 0.0
        %4326 = vmatpush1.msra.mxu0 0.0
        %4327 = vmatprep.subr.mxu0 0.0
        %4328 = vmatpush1.msra.mxu0 0.0
        %4329 = vmatprep.subr.mxu0 0.0
        %4330 = vmatpush1.msra.mxu0 0.0
        %4331 = vmatprep.subr.mxu0 0.0
        %4332 = vmatpush1.msra.mxu0 0.0
        %4333 = vmatprep.subr.mxu0 0.0
        %4334 = vmatpush1.msra.mxu0 0.0
        %4335 = vmatprep.subr.mxu0 0.0
        %4336 = vmatpush1.msra.mxu0 0.0
        %4337 = vmatprep.subr.mxu0 0.0
        %4338 = vmatpush1.msra.mxu0 0.0
        %4339 = vmatprep.subr.mxu0 0.0
        %4340 = vmatpush1.msra.mxu0 0.0
        %4341 = vmatprep.subr.mxu0 0.0
        %4342 = vmatpush1.msra.mxu0 0.0
        %4343 = vmatprep.subr.mxu0 0.0
        %4344 = vmatpush1.msra.mxu0 0.0
        %4345 = vmatprep.subr.mxu0 0.0
        %4346 = vmatpush1.msra.mxu0 0.0
        %4347 = vmatprep.mubr.f32.mxu0 0.0
        %4348 = vmatmul.mubr.f32.gmra.mrb[0].mxu0 %v4236
        %v4349 = vpop.f32.mrb[0].mxu0
        %v4350 = vadd.f32 0.0, %v4349
        %v4351 = vpop.f32.mrb[0].mxu0
        %4352 = vmatprep.mubr.f32.mxu0 0.0
        %4353 = vmatmul.mubr.f32.gmra.mrb[0].mxu0 %v4239
        %v4354 = vpop.f32.mrb[0].mxu0
        %v4355 = vadd.f32 0.0, %v4354
        %v4356 = vpop.f32.mrb[0].mxu0
        %4357 = vmatprep.mubr.f32.mxu0 0.0
        %4358 = vmatmul.mubr.f32.gmra.mrb[0].mxu0 %v4242
        %v4359 = vpop.f32.mrb[0].mxu0
        %v4360 = vadd.f32 0.0, %v4359
        %v4361 = vpop.f32.mrb[0].mxu0
        %4362 = vmatprep.mubr.f32.mxu0 0.0
        %4363 = vmatmul.mubr.f32.gmra.mrb[0].mxu0 %v4245
        %v4364 = vpop.f32.mrb[0].mxu0
        %v4365 = vadd.f32 0.0, %v4364
        %v4366 = vpop.f32.mrb[0].mxu0
        %4367 = vmatprep.mubr.f32.mxu0 0.0
        %4368 = vmatmul.mubr.f32.gmra.mrb[0].mxu0 %v4248
        %v4369 = vpop.f32.mrb[0].mxu0
        %v4370 = vadd.f32 0.0, %v4369
        %v4371 = vpop.f32.mrb[0].mxu0
        %4372 = vmatprep.mubr.f32.mxu0 0.0
        %4373 = vmatmul.mubr.f32.gmra.mrb[0].mxu0 %v4251
        %v4374 = vpop.f32.mrb[0].mxu0
        %v4375 = vadd.f32 0.0, %v4374
        %v4376 = vpop.f32.mrb[0].mxu0
        %4377 = vmatprep.mubr.f32.mxu0 0.0
        %4378 = vmatmul.mubr.f32.gmra.mrb[0].mxu0 %v4254
        %v4379 = vpop.f32.mrb[0].mxu0
        %v4380 = vadd.f32 0.0, %v4379
        %v4381 = vpop.f32.mrb[0].mxu0
        %4382 = vmatprep.mubr.f32.mxu0 0.0
        %4383 = vmatmul.mubr.f32.gmra.mrb[0].mxu0 %v4257
        %v4384 = vpop.f32.mrb[0].mxu0
        %v4385 = vadd.f32 0.0, %v4384
        %v4386 = vpop.f32.mrb[0].mxu0
        %4387 = vmatprep.mubr.f32.mxu0 0.0
        %4388 = vmatmul.mubr.f32.gmra.mrb[0].mxu0 %v4260
        %v4389 = vpop.f32.mrb[0].mxu0
        %v4390 = vadd.f32 0.0, %v4389
        %v4391 = vpop.f32.mrb[0].mxu0
        %4392 = vmatprep.mubr.f32.mxu0 0.0
        %4393 = vmatmul.mubr.f32.gmra.mrb[0].mxu0 %v4263
        %v4394 = vpop.f32.mrb[0].mxu0
        %v4395 = vadd.f32 0.0, %v4394
        %v4396 = vpop.f32.mrb[0].mxu0
        %4397 = vmatprep.mubr.f32.mxu0 0.0
        %4398 = vmatmul.mubr.f32.gmra.mrb[0].mxu0 %v4266
        %v4399 = vpop.f32.mrb[0].mxu0
        %v4400 = vadd.f32 0.0, %v4399
        %v4401 = vpop.f32.mrb[0].mxu0
        %4402 = vmatprep.mubr.f32.mxu0 0.0
        %4403 = vmatmul.mubr.f32.gmra.mrb[0].mxu0 %v4269
        %v4404 = vpop.f32.mrb[0].mxu0
        %v4405 = vadd.f32 0.0, %v4404
        %v4406 = vpop.f32.mrb[0].mxu0
        %4407 = vmatprep.mubr.f32.mxu0 0.0
        %4408 = vmatmul.mubr.f32.gmra.mrb[0].mxu0 %v4272
        %v4409 = vpop.f32.mrb[0].mxu0
        %v4410 = vadd.f32 0.0, %v4409
        %v4411 = vpop.f32.mrb[0].mxu0
        %4412 = vmatprep.mubr.f32.mxu0 0.0
        %4413 = vmatmul.mubr.f32.gmra.mrb[0].mxu0 %v4275
        %v4414 = vpop.f32.mrb[0].mxu0
        %v4415 = vadd.f32 0.0, %v4414
        %v4416 = vpop.f32.mrb[0].mxu0
        %4417 = vmatprep.mubr.f32.mxu0 0.0
        %4418 = vmatmul.mubr.f32.gmra.mrb[0].mxu0 %v4278
        %v4419 = vpop.f32.mrb[0].mxu0
        %v4420 = vadd.f32 0.0, %v4419
        %v4421 = vpop.f32.mrb[0].mxu0
        %4422 = vmatprep.mubr.f32.mxu0 0.0
        %4423 = vmatmul.mubr.f32.gmra.mrb[0].mxu0 %v4281
        %v4424 = vpop.f32.mrb[0].mxu0
        %v4425 = vadd.f32 0.0, %v4424
        %v4426 = vpop.f32.mrb[0].mxu0
        %4427 = vdwg.mxu0
        %v4428 = vadd.f32 %v4075, %v4350
        %v4429 = vadd.f32 %v4076, %v4355
        %v4430 = vadd.f32 %v4077, %v4360
        %v4431 = vadd.f32 %v4078, %v4365
        %v4432 = vadd.f32 %v4079, %v4370
        %v4433 = vadd.f32 %v4080, %v4375
        %v4434 = vadd.f32 %v4081, %v4380
        %v4435 = vadd.f32 %v4082, %v4385
        %v4436 = vadd.f32 %v4083, %v4390
        %v4437 = vadd.f32 %v4084, %v4395
        %v4438 = vadd.f32 %v4085, %v4400
        %v4439 = vadd.f32 %v4086, %v4405
        %v4440 = vadd.f32 %v4087, %v4410
        %v4441 = vadd.f32 %v4088, %v4415
        %v4442 = vadd.f32 %v4089, %v4420
        %v4443 = vadd.f32 %v4090, %v4425
        %v4444 = vlaneseq
        %v4445 = vshrl.u32 %v4444, 7
        %v4446 = vsub.s32 7, %v4445
        %v4447 = vrot.slane %v1779, %v4446
        %v4448 = vlaneseq
        %v4449 = vshrl.u32 %v4448, 7
        %v4450 = vsub.s32 7, %v4449
        %v4451 = vrot.slane %v1780, %v4450
        %v4452 = vlaneseq
        %v4453 = vshrl.u32 %v4452, 7
        %v4454 = vsub.s32 7, %v4453
        %v4455 = vrot.slane %v1781, %v4454
        %v4456 = vlaneseq
        %v4457 = vshrl.u32 %v4456, 7
        %v4458 = vsub.s32 7, %v4457
        %v4459 = vrot.slane %v1782, %v4458
        %v4460 = vlaneseq
        %v4461 = vshrl.u32 %v4460, 7
        %v4462 = vsub.s32 7, %v4461
        %v4463 = vrot.slane %v1783, %v4462
        %v4464 = vlaneseq
        %v4465 = vshrl.u32 %v4464, 7
        %v4466 = vsub.s32 7, %v4465
        %v4467 = vrot.slane %v1784, %v4466
        %v4468 = vlaneseq
        %v4469 = vshrl.u32 %v4468, 7
        %v4470 = vsub.s32 7, %v4469
        %v4471 = vrot.slane %v1785, %v4470
        %v4472 = vlaneseq
        %v4473 = vshrl.u32 %v4472, 7
        %v4474 = vsub.s32 7, %v4473
        %v4475 = vrot.slane %v1786, %v4474
        %v4476 = vlaneseq
        %v4477 = vshrl.u32 %v4476, 7
        %v4478 = vsub.s32 7, %v4477
        %v4479 = vrot.slane %v1787, %v4478
        %v4480 = vlaneseq
        %v4481 = vshrl.u32 %v4480, 7
        %v4482 = vsub.s32 7, %v4481
        %v4483 = vrot.slane %v1788, %v4482
        %v4484 = vlaneseq
        %v4485 = vshrl.u32 %v4484, 7
        %v4486 = vsub.s32 7, %v4485
        %v4487 = vrot.slane %v1789, %v4486
        %v4488 = vlaneseq
        %v4489 = vshrl.u32 %v4488, 7
        %v4490 = vsub.s32 7, %v4489
        %v4491 = vrot.slane %v1790, %v4490
        %v4492 = vlaneseq
        %v4493 = vshrl.u32 %v4492, 7
        %v4494 = vsub.s32 7, %v4493
        %v4495 = vrot.slane %v1791, %v4494
        %v4496 = vlaneseq
        %v4497 = vshrl.u32 %v4496, 7
        %v4498 = vsub.s32 7, %v4497
        %v4499 = vrot.slane %v1792, %v4498
        %v4500 = vlaneseq
        %v4501 = vshrl.u32 %v4500, 7
        %v4502 = vsub.s32 7, %v4501
        %v4503 = vrot.slane %v1793, %v4502
        %v4504 = vlaneseq
        %v4505 = vshrl.u32 %v4504, 7
        %v4506 = vsub.s32 7, %v4505
        %v4507 = vrot.slane %v1794, %v4506
        %4524 = vrot.lane.b32.xlu0 %v4447, 64
        %v4525 = vpop.permute.xlu0 %4524
        %4526 = vrot.lane.b32.xlu0 %v4451, 64
        %v4527 = vpop.permute.xlu0 %4526
        %4528 = vrot.lane.b32.xlu0 %v4455, 64
        %v4529 = vpop.permute.xlu0 %4528
        %4530 = vrot.lane.b32.xlu0 %v4459, 64
        %v4531 = vpop.permute.xlu0 %4530
        %4532 = vrot.lane.b32.xlu0 %v4463, 64
        %v4533 = vpop.permute.xlu0 %4532
        %4534 = vrot.lane.b32.xlu0 %v4467, 64
        %v4535 = vpop.permute.xlu0 %4534
        %4536 = vrot.lane.b32.xlu0 %v4471, 64
        %v4537 = vpop.permute.xlu0 %4536
        %4538 = vrot.lane.b32.xlu0 %v4475, 64
        %v4539 = vpop.permute.xlu0 %4538
        %4540 = vrot.lane.b32.xlu0 %v4479, 64
        %v4541 = vpop.permute.xlu0 %4540
        %4542 = vrot.lane.b32.xlu0 %v4483, 64
        %v4543 = vpop.permute.xlu0 %4542
        %4544 = vrot.lane.b32.xlu0 %v4487, 64
        %v4545 = vpop.permute.xlu0 %4544
        %4546 = vrot.lane.b32.xlu0 %v4491, 64
        %v4547 = vpop.permute.xlu0 %4546
        %4548 = vrot.lane.b32.xlu0 %v4495, 64
        %v4549 = vpop.permute.xlu0 %4548
        %4550 = vrot.lane.b32.xlu0 %v4499, 64
        %v4551 = vpop.permute.xlu0 %4550
        %4552 = vrot.lane.b32.xlu0 %v4503, 64
        %v4553 = vpop.permute.xlu0 %4552
        %4554 = vrot.lane.b32.xlu0 %v4507, 64
        %v4555 = vpop.permute.xlu0 %4554
        %v4572 = vmul.f32 %v1713, %v4525
        %v4573 = vmul.f32 %v1716, %v4527
        %v4574 = vmul.f32 %v1721, %v4529
        %v4575 = vmul.f32 %v1724, %v4531
        %v4576 = vmul.f32 %v1729, %v4533
        %v4577 = vmul.f32 %v1732, %v4535
        %v4578 = vmul.f32 %v1737, %v4537
        %v4579 = vmul.f32 %v1740, %v4539
        %v4580 = vmul.f32 %v1745, %v4541
        %v4581 = vmul.f32 %v1748, %v4543
        %v4582 = vmul.f32 %v1753, %v4545
        %v4583 = vmul.f32 %v1756, %v4547
        %v4584 = vmul.f32 %v1761, %v4549
        %v4585 = vmul.f32 %v1764, %v4551
        %v4586 = vmul.f32 %v1769, %v4553
        %v4587 = vmul.f32 %v1772, %v4555
        %v4589 = vsel %vm2292, %v4572, 0
        %v4592 = vsel %vm2292, %v4573, 0
        %v4595 = vsel %vm2292, %v4574, 0
        %v4598 = vsel %vm2292, %v4575, 0
        %v4601 = vsel %vm2292, %v4576, 0
        %v4604 = vsel %vm2292, %v4577, 0
        %v4607 = vsel %vm2292, %v4578, 0
        %v4610 = vsel %vm2292, %v4579, 0
        %v4613 = vsel %vm2292, %v4580, 0
        %v4616 = vsel %vm2292, %v4581, 0
        %v4619 = vsel %vm2292, %v4582, 0
        %v4622 = vsel %vm2292, %v4583, 0
        %v4625 = vsel %vm2292, %v4584, 0
        %v4628 = vsel %vm2292, %v4585, 0
        %v4631 = vsel %vm2292, %v4586, 0
        %v4634 = vsel %vm2292, %v4587, 0
        %4636 = vmatprep.subr.mxu0 0.0
        %4637 = vmatpush1.msra.mxu0 %v1960
        %4638 = vmatprep.subr.mxu0 0.0
        %4639 = vmatpush1.msra.mxu0 %v1961
        %4640 = vmatprep.subr.mxu0 0.0
        %4641 = vmatpush1.msra.mxu0 %v1962
        %4642 = vmatprep.subr.mxu0 0.0
        %4643 = vmatpush1.msra.mxu0 %v1963
        %4644 = vmatprep.subr.mxu0 0.0
        %4645 = vmatpush1.msra.mxu0 %v1964
        %4646 = vmatprep.subr.mxu0 0.0
        %4647 = vmatpush1.msra.mxu0 %v1965
        %4648 = vmatprep.subr.mxu0 0.0
        %4649 = vmatpush1.msra.mxu0 %v1966
        %4650 = vmatprep.subr.mxu0 0.0
        %4651 = vmatpush1.msra.mxu0 %v1967
        %4652 = vmatprep.subr.mxu0 0.0
        %4653 = vmatpush1.msra.mxu0 0.0
        %4654 = vmatprep.subr.mxu0 0.0
        %4655 = vmatpush1.msra.mxu0 0.0
        %4656 = vmatprep.subr.mxu0 0.0
        %4657 = vmatpush1.msra.mxu0 0.0
        %4658 = vmatprep.subr.mxu0 0.0
        %4659 = vmatpush1.msra.mxu0 0.0
        %4660 = vmatprep.subr.mxu0 0.0
        %4661 = vmatpush1.msra.mxu0 0.0
        %4662 = vmatprep.subr.mxu0 0.0
        %4663 = vmatpush1.msra.mxu0 0.0
        %4664 = vmatprep.subr.mxu0 0.0
        %4665 = vmatpush1.msra.mxu0 0.0
        %4666 = vmatprep.subr.mxu0 0.0
        %4667 = vmatpush1.msra.mxu0 0.0
        %4668 = vmatprep.subr.mxu0 0.0
        %4669 = vmatpush1.msra.mxu0 0.0
        %4670 = vmatprep.subr.mxu0 0.0
        %4671 = vmatpush1.msra.mxu0 0.0
        %4672 = vmatprep.subr.mxu0 0.0
        %4673 = vmatpush1.msra.mxu0 0.0
        %4674 = vmatprep.subr.mxu0 0.0
        %4675 = vmatpush1.msra.mxu0 0.0
        %4676 = vmatprep.subr.mxu0 0.0
        %4677 = vmatpush1.msra.mxu0 0.0
        %4678 = vmatprep.subr.mxu0 0.0
        %4679 = vmatpush1.msra.mxu0 0.0
        %4680 = vmatprep.subr.mxu0 0.0
        %4681 = vmatpush1.msra.mxu0 0.0
        %4682 = vmatprep.subr.mxu0 0.0
        %4683 = vmatpush1.msra.mxu0 0.0
        %4684 = vmatprep.subr.mxu0 0.0
        %4685 = vmatpush1.msra.mxu0 0.0
        %4686 = vmatprep.subr.mxu0 0.0
        %4687 = vmatpush1.msra.mxu0 0.0
        %4688 = vmatprep.subr.mxu0 0.0
        %4689 = vmatpush1.msra.mxu0 0.0
        %4690 = vmatprep.subr.mxu0 0.0
        %4691 = vmatpush1.msra.mxu0 0.0
        %4692 = vmatprep.subr.mxu0 0.0
        %4693 = vmatpush1.msra.mxu0 0.0
        %4694 = vmatprep.subr.mxu0 0.0
        %4695 = vmatpush1.msra.mxu0 0.0
        %4696 = vmatprep.subr.mxu0 0.0
        %4697 = vmatpush1.msra.mxu0 0.0
        %4698 = vmatprep.subr.mxu0 0.0
        %4699 = vmatpush1.msra.mxu0 0.0
        %4700 = vmatprep.mubr.f32.mxu0 0.0
        %4701 = vmatmul.mubr.f32.gmra.mrb[0].mxu0 %v4589
        %v4702 = vpop.f32.mrb[0].mxu0
        %v4703 = vadd.f32 0.0, %v4702
        %v4704 = vpop.f32.mrb[0].mxu0
        %4705 = vmatprep.mubr.f32.mxu0 0.0
        %4706 = vmatmul.mubr.f32.gmra.mrb[0].mxu0 %v4592
        %v4707 = vpop.f32.mrb[0].mxu0
        %v4708 = vadd.f32 0.0, %v4707
        %v4709 = vpop.f32.mrb[0].mxu0
        %4710 = vmatprep.mubr.f32.mxu0 0.0
        %4711 = vmatmul.mubr.f32.gmra.mrb[0].mxu0 %v4595
        %v4712 = vpop.f32.mrb[0].mxu0
        %v4713 = vadd.f32 0.0, %v4712
        %v4714 = vpop.f32.mrb[0].mxu0
        %4715 = vmatprep.mubr.f32.mxu0 0.0
        %4716 = vmatmul.mubr.f32.gmra.mrb[0].mxu0 %v4598
        %v4717 = vpop.f32.mrb[0].mxu0
        %v4718 = vadd.f32 0.0, %v4717
        %v4719 = vpop.f32.mrb[0].mxu0
        %4720 = vmatprep.mubr.f32.mxu0 0.0
        %4721 = vmatmul.mubr.f32.gmra.mrb[0].mxu0 %v4601
        %v4722 = vpop.f32.mrb[0].mxu0
        %v4723 = vadd.f32 0.0, %v4722
        %v4724 = vpop.f32.mrb[0].mxu0
        %4725 = vmatprep.mubr.f32.mxu0 0.0
        %4726 = vmatmul.mubr.f32.gmra.mrb[0].mxu0 %v4604
        %v4727 = vpop.f32.mrb[0].mxu0
        %v4728 = vadd.f32 0.0, %v4727
        %v4729 = vpop.f32.mrb[0].mxu0
        %4730 = vmatprep.mubr.f32.mxu0 0.0
        %4731 = vmatmul.mubr.f32.gmra.mrb[0].mxu0 %v4607
        %v4732 = vpop.f32.mrb[0].mxu0
        %v4733 = vadd.f32 0.0, %v4732
        %v4734 = vpop.f32.mrb[0].mxu0
        %4735 = vmatprep.mubr.f32.mxu0 0.0
        %4736 = vmatmul.mubr.f32.gmra.mrb[0].mxu0 %v4610
        %v4737 = vpop.f32.mrb[0].mxu0
        %v4738 = vadd.f32 0.0, %v4737
        %v4739 = vpop.f32.mrb[0].mxu0
        %4740 = vmatprep.mubr.f32.mxu0 0.0
        %4741 = vmatmul.mubr.f32.gmra.mrb[0].mxu0 %v4613
        %v4742 = vpop.f32.mrb[0].mxu0
        %v4743 = vadd.f32 0.0, %v4742
        %v4744 = vpop.f32.mrb[0].mxu0
        %4745 = vmatprep.mubr.f32.mxu0 0.0
        %4746 = vmatmul.mubr.f32.gmra.mrb[0].mxu0 %v4616
        %v4747 = vpop.f32.mrb[0].mxu0
        %v4748 = vadd.f32 0.0, %v4747
        %v4749 = vpop.f32.mrb[0].mxu0
        %4750 = vmatprep.mubr.f32.mxu0 0.0
        %4751 = vmatmul.mubr.f32.gmra.mrb[0].mxu0 %v4619
        %v4752 = vpop.f32.mrb[0].mxu0
        %v4753 = vadd.f32 0.0, %v4752
        %v4754 = vpop.f32.mrb[0].mxu0
        %4755 = vmatprep.mubr.f32.mxu0 0.0
        %4756 = vmatmul.mubr.f32.gmra.mrb[0].mxu0 %v4622
        %v4757 = vpop.f32.mrb[0].mxu0
        %v4758 = vadd.f32 0.0, %v4757
        %v4759 = vpop.f32.mrb[0].mxu0
        %4760 = vmatprep.mubr.f32.mxu0 0.0
        %4761 = vmatmul.mubr.f32.gmra.mrb[0].mxu0 %v4625
        %v4762 = vpop.f32.mrb[0].mxu0
        %v4763 = vadd.f32 0.0, %v4762
        %v4764 = vpop.f32.mrb[0].mxu0
        %4765 = vmatprep.mubr.f32.mxu0 0.0
        %4766 = vmatmul.mubr.f32.gmra.mrb[0].mxu0 %v4628
        %v4767 = vpop.f32.mrb[0].mxu0
        %v4768 = vadd.f32 0.0, %v4767
        %v4769 = vpop.f32.mrb[0].mxu0
        %4770 = vmatprep.mubr.f32.mxu0 0.0
        %4771 = vmatmul.mubr.f32.gmra.mrb[0].mxu0 %v4631
        %v4772 = vpop.f32.mrb[0].mxu0
        %v4773 = vadd.f32 0.0, %v4772
        %v4774 = vpop.f32.mrb[0].mxu0
        %4775 = vmatprep.mubr.f32.mxu0 0.0
        %4776 = vmatmul.mubr.f32.gmra.mrb[0].mxu0 %v4634
        %v4777 = vpop.f32.mrb[0].mxu0
        %v4778 = vadd.f32 0.0, %v4777
        %v4779 = vpop.f32.mrb[0].mxu0
        %4780 = vdwg.mxu0
        %v4781 = vadd.f32 %v4428, %v4703
        %v4782 = vadd.f32 %v4429, %v4708
        %v4783 = vadd.f32 %v4430, %v4713
        %v4784 = vadd.f32 %v4431, %v4718
        %v4785 = vadd.f32 %v4432, %v4723
        %v4786 = vadd.f32 %v4433, %v4728
        %v4787 = vadd.f32 %v4434, %v4733
        %v4788 = vadd.f32 %v4435, %v4738
        %v4789 = vadd.f32 %v4436, %v4743
        %v4790 = vadd.f32 %v4437, %v4748
        %v4791 = vadd.f32 %v4438, %v4753
        %v4792 = vadd.f32 %v4439, %v4758
        %v4793 = vadd.f32 %v4440, %v4763
        %v4794 = vadd.f32 %v4441, %v4768
        %v4795 = vadd.f32 %v4442, %v4773
        %v4796 = vadd.f32 %v4443, %v4778
        %v4797 = vsel %vm532, %v4781, -inf
        %4798 = vmax.xlane.f32.xlu0 %v4797
        %v4799 = vpop.xlane.xlu0 %4798
        %v4800 = vsel %vm532, %v4782, -inf
        %4801 = vmax.xlane.f32.xlu0 %v4800
        %v4802 = vpop.xlane.xlu0 %4801
        %v4803 = vsel %vm532, %v4783, -inf
        %4804 = vmax.xlane.f32.xlu0 %v4803
        %v4805 = vpop.xlane.xlu0 %4804
        %v4806 = vsel %vm532, %v4784, -inf
        %4807 = vmax.xlane.f32.xlu0 %v4806
        %v4808 = vpop.xlane.xlu0 %4807
        %v4809 = vsel %vm532, %v4785, -inf
        %4810 = vmax.xlane.f32.xlu0 %v4809
        %v4811 = vpop.xlane.xlu0 %4810
        %v4812 = vsel %vm532, %v4786, -inf
        %4813 = vmax.xlane.f32.xlu0 %v4812
        %v4814 = vpop.xlane.xlu0 %4813
        %v4815 = vsel %vm532, %v4787, -inf
        %4816 = vmax.xlane.f32.xlu0 %v4815
        %v4817 = vpop.xlane.xlu0 %4816
        %v4818 = vsel %vm532, %v4788, -inf
        %4819 = vmax.xlane.f32.xlu0 %v4818
        %v4820 = vpop.xlane.xlu0 %4819
        %v4821 = vsel %vm532, %v4789, -inf
        %4822 = vmax.xlane.f32.xlu0 %v4821
        %v4823 = vpop.xlane.xlu0 %4822
        %v4824 = vsel %vm532, %v4790, -inf
        %4825 = vmax.xlane.f32.xlu0 %v4824
        %v4826 = vpop.xlane.xlu0 %4825
        %v4827 = vsel %vm532, %v4791, -inf
        %4828 = vmax.xlane.f32.xlu0 %v4827
        %v4829 = vpop.xlane.xlu0 %4828
        %v4830 = vsel %vm532, %v4792, -inf
        %4831 = vmax.xlane.f32.xlu0 %v4830
        %v4832 = vpop.xlane.xlu0 %4831
        %v4833 = vsel %vm532, %v4793, -inf
        %4834 = vmax.xlane.f32.xlu0 %v4833
        %v4835 = vpop.xlane.xlu0 %4834
        %v4836 = vsel %vm532, %v4794, -inf
        %4837 = vmax.xlane.f32.xlu0 %v4836
        %v4838 = vpop.xlane.xlu0 %4837
        %v4839 = vsel %vm532, %v4795, -inf
        %4840 = vmax.xlane.f32.xlu0 %v4839
        %v4841 = vpop.xlane.xlu0 %4840
        %v4842 = vsel %vm532, %v4796, -inf
        %4843 = vmax.xlane.f32.xlu0 %v4842
        %v4844 = vpop.xlane.xlu0 %4843
        %v4845 = vsub.f32 %v4781, %v4799
        %v4846 = vsub.f32 %v4782, %v4802
        %v4847 = vsub.f32 %v4783, %v4805
        %v4848 = vsub.f32 %v4784, %v4808
        %v4849 = vsub.f32 %v4785, %v4811
        %v4850 = vsub.f32 %v4786, %v4814
        %v4851 = vsub.f32 %v4787, %v4817
        %v4852 = vsub.f32 %v4788, %v4820
        %v4853 = vsub.f32 %v4789, %v4823
        %v4854 = vsub.f32 %v4790, %v4826
        %v4855 = vsub.f32 %v4791, %v4829
        %v4856 = vsub.f32 %v4792, %v4832
        %v4857 = vsub.f32 %v4793, %v4835
        %v4858 = vsub.f32 %v4794, %v4838
        %v4859 = vsub.f32 %v4795, %v4841
        %v4860 = vsub.f32 %v4796, %v4844
        %v4861 = vmul.f32 %v4845, 1.442695
        %v4862 = vpow.pop %v4861
        %v4863 = vmul.f32 %v4846, 1.442695
        %v4864 = vpow.pop %v4863
        %v4865 = vmul.f32 %v4847, 1.442695
        %v4866 = vpow.pop %v4865
        %v4867 = vmul.f32 %v4848, 1.442695
        %v4868 = vpow.pop %v4867
        %v4869 = vmul.f32 %v4849, 1.442695
        %v4870 = vpow.pop %v4869
        %v4871 = vmul.f32 %v4850, 1.442695
        %v4872 = vpow.pop %v4871
        %v4873 = vmul.f32 %v4851, 1.442695
        %v4874 = vpow.pop %v4873
        %v4875 = vmul.f32 %v4852, 1.442695
        %v4876 = vpow.pop %v4875
        %v4877 = vmul.f32 %v4853, 1.442695
        %v4878 = vpow.pop %v4877
        %v4879 = vmul.f32 %v4854, 1.442695
        %v4880 = vpow.pop %v4879
        %v4881 = vmul.f32 %v4855, 1.442695
        %v4882 = vpow.pop %v4881
        %v4883 = vmul.f32 %v4856, 1.442695
        %v4884 = vpow.pop %v4883
        %v4885 = vmul.f32 %v4857, 1.442695
        %v4886 = vpow.pop %v4885
        %v4887 = vmul.f32 %v4858, 1.442695
        %v4888 = vpow.pop %v4887
        %v4889 = vmul.f32 %v4859, 1.442695
        %v4890 = vpow.pop %v4889
        %v4891 = vmul.f32 %v4860, 1.442695
        %v4892 = vpow.pop %v4891
        %v4894 = vsel %vm532, %v4862, 0
        %v4897 = vsel %vm532, %v4864, 0
        %v4900 = vsel %vm532, %v4866, 0
        %v4903 = vsel %vm532, %v4868, 0
        %v4906 = vsel %vm532, %v4870, 0
        %v4909 = vsel %vm532, %v4872, 0
        %v4912 = vsel %vm532, %v4874, 0
        %v4915 = vsel %vm532, %v4876, 0
        %v4918 = vsel %vm532, %v4878, 0
        %v4921 = vsel %vm532, %v4880, 0
        %v4924 = vsel %vm532, %v4882, 0
        %v4927 = vsel %vm532, %v4884, 0
        %v4930 = vsel %vm532, %v4886, 0
        %v4933 = vsel %vm532, %v4888, 0
        %v4936 = vsel %vm532, %v4890, 0
        %v4939 = vsel %vm532, %v4892, 0
        %4941 = vmatprep.subr.mxu0 0.0
        %4942 = vmatpush1.msra.mxu0 %v2000
        %4943 = vmatprep.subr.mxu0 0.0
        %4944 = vmatpush1.msra.mxu0 %v2001
        %4945 = vmatprep.subr.mxu0 0.0
        %4946 = vmatpush1.msra.mxu0 %v2002
        %4947 = vmatprep.subr.mxu0 0.0
        %4948 = vmatpush1.msra.mxu0 %v2003
        %4949 = vmatprep.subr.mxu0 0.0
        %4950 = vmatpush1.msra.mxu0 0.0
        %4951 = vmatprep.subr.mxu0 0.0
        %4952 = vmatpush1.msra.mxu0 0.0
        %4953 = vmatprep.subr.mxu0 0.0
        %4954 = vmatpush1.msra.mxu0 0.0
        %4955 = vmatprep.subr.mxu0 0.0
        %4956 = vmatpush1.msra.mxu0 0.0
        %4957 = vmatprep.subr.mxu0 0.0
        %4958 = vmatpush1.msra.mxu0 0.0
        %4959 = vmatprep.subr.mxu0 0.0
        %4960 = vmatpush1.msra.mxu0 0.0
        %4961 = vmatprep.subr.mxu0 0.0
        %4962 = vmatpush1.msra.mxu0 0.0
        %4963 = vmatprep.subr.mxu0 0.0
        %4964 = vmatpush1.msra.mxu0 0.0
        %4965 = vmatprep.subr.mxu0 0.0
        %4966 = vmatpush1.msra.mxu0 0.0
        %4967 = vmatprep.subr.mxu0 0.0
        %4968 = vmatpush1.msra.mxu0 0.0
        %4969 = vmatprep.subr.mxu0 0.0
        %4970 = vmatpush1.msra.mxu0 0.0
        %4971 = vmatprep.subr.mxu0 0.0
        %4972 = vmatpush1.msra.mxu0 0.0
        %4973 = vmatprep.subr.mxu0 0.0
        %4974 = vmatpush1.msra.mxu0 0.0
        %4975 = vmatprep.subr.mxu0 0.0
        %4976 = vmatpush1.msra.mxu0 0.0
        %4977 = vmatprep.subr.mxu0 0.0
        %4978 = vmatpush1.msra.mxu0 0.0
        %4979 = vmatprep.subr.mxu0 0.0
        %4980 = vmatpush1.msra.mxu0 0.0
        %4981 = vmatprep.subr.mxu0 0.0
        %4982 = vmatpush1.msra.mxu0 0.0
        %4983 = vmatprep.subr.mxu0 0.0
        %4984 = vmatpush1.msra.mxu0 0.0
        %4985 = vmatprep.subr.mxu0 0.0
        %4986 = vmatpush1.msra.mxu0 0.0
        %4987 = vmatprep.subr.mxu0 0.0
        %4988 = vmatpush1.msra.mxu0 0.0
        %4989 = vmatprep.subr.mxu0 0.0
        %4990 = vmatpush1.msra.mxu0 0.0
        %4991 = vmatprep.subr.mxu0 0.0
        %4992 = vmatpush1.msra.mxu0 0.0
        %4993 = vmatprep.subr.mxu0 0.0
        %4994 = vmatpush1.msra.mxu0 0.0
        %4995 = vmatprep.subr.mxu0 0.0
        %4996 = vmatpush1.msra.mxu0 0.0
        %4997 = vmatprep.subr.mxu0 0.0
        %4998 = vmatpush1.msra.mxu0 0.0
        %4999 = vmatprep.subr.mxu0 0.0
        %5000 = vmatpush1.msra.mxu0 0.0
        %5001 = vmatprep.subr.mxu0 0.0
        %5002 = vmatpush1.msra.mxu0 0.0
        %5003 = vmatprep.subr.mxu0 0.0
        %5004 = vmatpush1.msra.mxu0 0.0
        %5005 = vmatprep.mubr.f32.mxu0 0.0
        %5006 = vmatmul.mubr.f32.gmra.mrb[0].mxu0 %v4894
        %v5007 = vpop.f32.mrb[0].mxu0
        %v5008 = vadd.f32 0.0, %v5007
        %v5009 = vpop.f32.mrb[0].mxu0
        %5010 = vmatprep.mubr.f32.mxu0 0.0
        %5011 = vmatmul.mubr.f32.gmra.mrb[0].mxu0 %v4897
        %v5012 = vpop.f32.mrb[0].mxu0
        %v5013 = vadd.f32 0.0, %v5012
        %v5014 = vpop.f32.mrb[0].mxu0
        %5015 = vmatprep.mubr.f32.mxu0 0.0
        %5016 = vmatmul.mubr.f32.gmra.mrb[0].mxu0 %v4900
        %v5017 = vpop.f32.mrb[0].mxu0
        %v5018 = vadd.f32 0.0, %v5017
        %v5019 = vpop.f32.mrb[0].mxu0
        %5020 = vmatprep.mubr.f32.mxu0 0.0
        %5021 = vmatmul.mubr.f32.gmra.mrb[0].mxu0 %v4903
        %v5022 = vpop.f32.mrb[0].mxu0
        %v5023 = vadd.f32 0.0, %v5022
        %v5024 = vpop.f32.mrb[0].mxu0
        %5025 = vmatprep.mubr.f32.mxu0 0.0
        %5026 = vmatmul.mubr.f32.gmra.mrb[0].mxu0 %v4906
        %v5027 = vpop.f32.mrb[0].mxu0
        %v5028 = vadd.f32 0.0, %v5027
        %v5029 = vpop.f32.mrb[0].mxu0
        %5030 = vmatprep.mubr.f32.mxu0 0.0
        %5031 = vmatmul.mubr.f32.gmra.mrb[0].mxu0 %v4909
        %v5032 = vpop.f32.mrb[0].mxu0
        %v5033 = vadd.f32 0.0, %v5032
        %v5034 = vpop.f32.mrb[0].mxu0
        %5035 = vmatprep.mubr.f32.mxu0 0.0
        %5036 = vmatmul.mubr.f32.gmra.mrb[0].mxu0 %v4912
        %v5037 = vpop.f32.mrb[0].mxu0
        %v5038 = vadd.f32 0.0, %v5037
        %v5039 = vpop.f32.mrb[0].mxu0
        %5040 = vmatprep.mubr.f32.mxu0 0.0
        %5041 = vmatmul.mubr.f32.gmra.mrb[0].mxu0 %v4915
        %v5042 = vpop.f32.mrb[0].mxu0
        %v5043 = vadd.f32 0.0, %v5042
        %v5044 = vpop.f32.mrb[0].mxu0
        %5045 = vmatprep.mubr.f32.mxu0 0.0
        %5046 = vmatmul.mubr.f32.gmra.mrb[0].mxu0 %v4918
        %v5047 = vpop.f32.mrb[0].mxu0
        %v5048 = vadd.f32 0.0, %v5047
        %v5049 = vpop.f32.mrb[0].mxu0
        %5050 = vmatprep.mubr.f32.mxu0 0.0
        %5051 = vmatmul.mubr.f32.gmra.mrb[0].mxu0 %v4921
        %v5052 = vpop.f32.mrb[0].mxu0
        %v5053 = vadd.f32 0.0, %v5052
        %v5054 = vpop.f32.mrb[0].mxu0
        %5055 = vmatprep.mubr.f32.mxu0 0.0
        %5056 = vmatmul.mubr.f32.gmra.mrb[0].mxu0 %v4924
        %v5057 = vpop.f32.mrb[0].mxu0
        %v5058 = vadd.f32 0.0, %v5057
        %v5059 = vpop.f32.mrb[0].mxu0
        %5060 = vmatprep.mubr.f32.mxu0 0.0
        %5061 = vmatmul.mubr.f32.gmra.mrb[0].mxu0 %v4927
        %v5062 = vpop.f32.mrb[0].mxu0
        %v5063 = vadd.f32 0.0, %v5062
        %v5064 = vpop.f32.mrb[0].mxu0
        %5065 = vmatprep.mubr.f32.mxu0 0.0
        %5066 = vmatmul.mubr.f32.gmra.mrb[0].mxu0 %v4930
        %v5067 = vpop.f32.mrb[0].mxu0
        %v5068 = vadd.f32 0.0, %v5067
        %v5069 = vpop.f32.mrb[0].mxu0
        %5070 = vmatprep.mubr.f32.mxu0 0.0
        %5071 = vmatmul.mubr.f32.gmra.mrb[0].mxu0 %v4933
        %v5072 = vpop.f32.mrb[0].mxu0
        %v5073 = vadd.f32 0.0, %v5072
        %v5074 = vpop.f32.mrb[0].mxu0
        %5075 = vmatprep.mubr.f32.mxu0 0.0
        %5076 = vmatmul.mubr.f32.gmra.mrb[0].mxu0 %v4936
        %v5077 = vpop.f32.mrb[0].mxu0
        %v5078 = vadd.f32 0.0, %v5077
        %v5079 = vpop.f32.mrb[0].mxu0
        %5080 = vmatprep.mubr.f32.mxu0 0.0
        %5081 = vmatmul.mubr.f32.gmra.mrb[0].mxu0 %v4939
        %v5082 = vpop.f32.mrb[0].mxu0
        %v5083 = vadd.f32 0.0, %v5082
        %v5084 = vpop.f32.mrb[0].mxu0
        %5085 = vdwg.mxu0
        %v5086 = vrcp.pop %v5008
        %v5087 = vrcp.pop %v5013
        %v5088 = vrcp.pop %v5018
        %v5089 = vrcp.pop %v5023
        %v5090 = vrcp.pop %v5028
        %v5091 = vrcp.pop %v5033
        %v5092 = vrcp.pop %v5038
        %v5093 = vrcp.pop %v5043
        %v5094 = vrcp.pop %v5048
        %v5095 = vrcp.pop %v5053
        %v5096 = vrcp.pop %v5058
        %v5097 = vrcp.pop %v5063
        %v5098 = vrcp.pop %v5068
        %v5099 = vrcp.pop %v5073
        %v5100 = vrcp.pop %v5078
        %v5101 = vrcp.pop %v5083
        %5102 = vmatprep.subr.mxu0 0.0
        %5103 = vmatpush1.msra.mxu0 %v1968
        %5104 = vmatprep.subr.mxu0 0.0
        %5105 = vmatpush1.msra.mxu0 %v1969
        %5106 = vmatprep.subr.mxu0 0.0
        %5107 = vmatpush1.msra.mxu0 %v1970
        %5108 = vmatprep.subr.mxu0 0.0
        %5109 = vmatpush1.msra.mxu0 %v1971
        %5110 = vmatprep.subr.mxu0 0.0
        %5111 = vmatpush1.msra.mxu0 0.0
        %5112 = vmatprep.subr.mxu0 0.0
        %5113 = vmatpush1.msra.mxu0 0.0
        %5114 = vmatprep.subr.mxu0 0.0
        %5115 = vmatpush1.msra.mxu0 0.0
        %5116 = vmatprep.subr.mxu0 0.0
        %5117 = vmatpush1.msra.mxu0 0.0
        %5118 = vmatprep.subr.mxu0 0.0
        %5119 = vmatpush1.msra.mxu0 0.0
        %5120 = vmatprep.subr.mxu0 0.0
        %5121 = vmatpush1.msra.mxu0 0.0
        %5122 = vmatprep.subr.mxu0 0.0
        %5123 = vmatpush1.msra.mxu0 0.0
        %5124 = vmatprep.subr.mxu0 0.0
        %5125 = vmatpush1.msra.mxu0 0.0
        %5126 = vmatprep.subr.mxu0 0.0
        %5127 = vmatpush1.msra.mxu0 0.0
        %5128 = vmatprep.subr.mxu0 0.0
        %5129 = vmatpush1.msra.mxu0 0.0
        %5130 = vmatprep.subr.mxu0 0.0
        %5131 = vmatpush1.msra.mxu0 0.0
        %5132 = vmatprep.subr.mxu0 0.0
        %5133 = vmatpush1.msra.mxu0 0.0
        %5134 = vmatprep.subr.mxu0 0.0
        %5135 = vmatpush1.msra.mxu0 0.0
        %5136 = vmatprep.subr.mxu0 0.0
        %5137 = vmatpush1.msra.mxu0 0.0
        %5138 = vmatprep.subr.mxu0 0.0
        %5139 = vmatpush1.msra.mxu0 0.0
        %5140 = vmatprep.subr.mxu0 0.0
        %5141 = vmatpush1.msra.mxu0 0.0
        %5142 = vmatprep.subr.mxu0 0.0
        %5143 = vmatpush1.msra.mxu0 0.0
        %5144 = vmatprep.subr.mxu0 0.0
        %5145 = vmatpush1.msra.mxu0 0.0
        %5146 = vmatprep.subr.mxu0 0.0
        %5147 = vmatpush1.msra.mxu0 0.0
        %5148 = vmatprep.subr.mxu0 0.0
        %5149 = vmatpush1.msra.mxu0 0.0
        %5150 = vmatprep.subr.mxu0 0.0
        %5151 = vmatpush1.msra.mxu0 0.0
        %5152 = vmatprep.subr.mxu0 0.0
        %5153 = vmatpush1.msra.mxu0 0.0
        %5154 = vmatprep.subr.mxu0 0.0
        %5155 = vmatpush1.msra.mxu0 0.0
        %5156 = vmatprep.subr.mxu0 0.0
        %5157 = vmatpush1.msra.mxu0 0.0
        %5158 = vmatprep.subr.mxu0 0.0
        %5159 = vmatpush1.msra.mxu0 0.0
        %5160 = vmatprep.subr.mxu0 0.0
        %5161 = vmatpush1.msra.mxu0 0.0
        %5162 = vmatprep.subr.mxu0 0.0
        %5163 = vmatpush1.msra.mxu0 0.0
        %5164 = vmatprep.subr.mxu0 0.0
        %5165 = vmatpush1.msra.mxu0 0.0
        %5166 = vmatprep.mubr.f32.mxu0 0.0
        %5167 = vmatmul.mubr.f32.gmra.mrb[0].mxu0 %v4894
        %v5168 = vpop.f32.mrb[0].mxu0
        %v5169 = vadd.f32 0.0, %v5168
        %v5170 = vpop.f32.mrb[0].mxu0
        %5171 = vmatprep.mubr.f32.mxu0 0.0
        %5172 = vmatmul.mubr.f32.gmra.mrb[0].mxu0 %v4897
        %v5173 = vpop.f32.mrb[0].mxu0
        %v5174 = vadd.f32 0.0, %v5173
        %v5175 = vpop.f32.mrb[0].mxu0
        %5176 = vmatprep.mubr.f32.mxu0 0.0
        %5177 = vmatmul.mubr.f32.gmra.mrb[0].mxu0 %v4900
        %v5178 = vpop.f32.mrb[0].mxu0
        %v5179 = vadd.f32 0.0, %v5178
        %v5180 = vpop.f32.mrb[0].mxu0
        %5181 = vmatprep.mubr.f32.mxu0 0.0
        %5182 = vmatmul.mubr.f32.gmra.mrb[0].mxu0 %v4903
        %v5183 = vpop.f32.mrb[0].mxu0
        %v5184 = vadd.f32 0.0, %v5183
        %v5185 = vpop.f32.mrb[0].mxu0
        %5186 = vmatprep.mubr.f32.mxu0 0.0
        %5187 = vmatmul.mubr.f32.gmra.mrb[0].mxu0 %v4906
        %v5188 = vpop.f32.mrb[0].mxu0
        %v5189 = vadd.f32 0.0, %v5188
        %v5190 = vpop.f32.mrb[0].mxu0
        %5191 = vmatprep.mubr.f32.mxu0 0.0
        %5192 = vmatmul.mubr.f32.gmra.mrb[0].mxu0 %v4909
        %v5193 = vpop.f32.mrb[0].mxu0
        %v5194 = vadd.f32 0.0, %v5193
        %v5195 = vpop.f32.mrb[0].mxu0
        %5196 = vmatprep.mubr.f32.mxu0 0.0
        %5197 = vmatmul.mubr.f32.gmra.mrb[0].mxu0 %v4912
        %v5198 = vpop.f32.mrb[0].mxu0
        %v5199 = vadd.f32 0.0, %v5198
        %v5200 = vpop.f32.mrb[0].mxu0
        %5201 = vmatprep.mubr.f32.mxu0 0.0
        %5202 = vmatmul.mubr.f32.gmra.mrb[0].mxu0 %v4915
        %v5203 = vpop.f32.mrb[0].mxu0
        %v5204 = vadd.f32 0.0, %v5203
        %v5205 = vpop.f32.mrb[0].mxu0
        %5206 = vmatprep.mubr.f32.mxu0 0.0
        %5207 = vmatmul.mubr.f32.gmra.mrb[0].mxu0 %v4918
        %v5208 = vpop.f32.mrb[0].mxu0
        %v5209 = vadd.f32 0.0, %v5208
        %v5210 = vpop.f32.mrb[0].mxu0
        %5211 = vmatprep.mubr.f32.mxu0 0.0
        %5212 = vmatmul.mubr.f32.gmra.mrb[0].mxu0 %v4921
        %v5213 = vpop.f32.mrb[0].mxu0
        %v5214 = vadd.f32 0.0, %v5213
        %v5215 = vpop.f32.mrb[0].mxu0
        %5216 = vmatprep.mubr.f32.mxu0 0.0
        %5217 = vmatmul.mubr.f32.gmra.mrb[0].mxu0 %v4924
        %v5218 = vpop.f32.mrb[0].mxu0
        %v5219 = vadd.f32 0.0, %v5218
        %v5220 = vpop.f32.mrb[0].mxu0
        %5221 = vmatprep.mubr.f32.mxu0 0.0
        %5222 = vmatmul.mubr.f32.gmra.mrb[0].mxu0 %v4927
        %v5223 = vpop.f32.mrb[0].mxu0
        %v5224 = vadd.f32 0.0, %v5223
        %v5225 = vpop.f32.mrb[0].mxu0
        %5226 = vmatprep.mubr.f32.mxu0 0.0
        %5227 = vmatmul.mubr.f32.gmra.mrb[0].mxu0 %v4930
        %v5228 = vpop.f32.mrb[0].mxu0
        %v5229 = vadd.f32 0.0, %v5228
        %v5230 = vpop.f32.mrb[0].mxu0
        %5231 = vmatprep.mubr.f32.mxu0 0.0
        %5232 = vmatmul.mubr.f32.gmra.mrb[0].mxu0 %v4933
        %v5233 = vpop.f32.mrb[0].mxu0
        %v5234 = vadd.f32 0.0, %v5233
        %v5235 = vpop.f32.mrb[0].mxu0
        %5236 = vmatprep.mubr.f32.mxu0 0.0
        %5237 = vmatmul.mubr.f32.gmra.mrb[0].mxu0 %v4936
        %v5238 = vpop.f32.mrb[0].mxu0
        %v5239 = vadd.f32 0.0, %v5238
        %v5240 = vpop.f32.mrb[0].mxu0
        %5241 = vmatprep.mubr.f32.mxu0 0.0
        %5242 = vmatmul.mubr.f32.gmra.mrb[0].mxu0 %v4939
        %v5243 = vpop.f32.mrb[0].mxu0
        %v5244 = vadd.f32 0.0, %v5243
        %v5245 = vpop.f32.mrb[0].mxu0
        %5246 = vdwg.mxu0
        %v5247 = vlaneseq
        %v5248 = vshrl.u32 %v5247, 7
        %v5249 = vsub.s32 0, %v5248
        %v5250 = vrot.slane %v1842, %v5249
        %v5251 = vlaneseq
        %v5252 = vshrl.u32 %v5251, 7
        %v5253 = vsub.s32 0, %v5252
        %v5254 = vrot.slane %v1845, %v5253
        %v5255 = vlaneseq
        %v5256 = vshrl.u32 %v5255, 7
        %v5257 = vsub.s32 0, %v5256
        %v5258 = vrot.slane %v1850, %v5257
        %v5259 = vlaneseq
        %v5260 = vshrl.u32 %v5259, 7
        %v5261 = vsub.s32 0, %v5260
        %v5262 = vrot.slane %v1853, %v5261
        %v5263 = vlaneseq
        %v5264 = vshrl.u32 %v5263, 7
        %v5265 = vsub.s32 0, %v5264
        %v5266 = vrot.slane %v1858, %v5265
        %v5267 = vlaneseq
        %v5268 = vshrl.u32 %v5267, 7
        %v5269 = vsub.s32 0, %v5268
        %v5270 = vrot.slane %v1861, %v5269
        %v5271 = vlaneseq
        %v5272 = vshrl.u32 %v5271, 7
        %v5273 = vsub.s32 0, %v5272
        %v5274 = vrot.slane %v1866, %v5273
        %v5275 = vlaneseq
        %v5276 = vshrl.u32 %v5275, 7
        %v5277 = vsub.s32 0, %v5276
        %v5278 = vrot.slane %v1869, %v5277
        %v5279 = vlaneseq
        %v5280 = vshrl.u32 %v5279, 7
        %v5281 = vsub.s32 0, %v5280
        %v5282 = vrot.slane %v1874, %v5281
        %v5283 = vlaneseq
        %v5284 = vshrl.u32 %v5283, 7
        %v5285 = vsub.s32 0, %v5284
        %v5286 = vrot.slane %v1877, %v5285
        %v5287 = vlaneseq
        %v5288 = vshrl.u32 %v5287, 7
        %v5289 = vsub.s32 0, %v5288
        %v5290 = vrot.slane %v1882, %v5289
        %v5291 = vlaneseq
        %v5292 = vshrl.u32 %v5291, 7
        %v5293 = vsub.s32 0, %v5292
        %v5294 = vrot.slane %v1885, %v5293
        %v5295 = vlaneseq
        %v5296 = vshrl.u32 %v5295, 7
        %v5297 = vsub.s32 0, %v5296
        %v5298 = vrot.slane %v1890, %v5297
        %v5299 = vlaneseq
        %v5300 = vshrl.u32 %v5299, 7
        %v5301 = vsub.s32 0, %v5300
        %v5302 = vrot.slane %v1893, %v5301
        %v5303 = vlaneseq
        %v5304 = vshrl.u32 %v5303, 7
        %v5305 = vsub.s32 0, %v5304
        %v5306 = vrot.slane %v1898, %v5305
        %v5307 = vlaneseq
        %v5308 = vshrl.u32 %v5307, 7
        %v5309 = vsub.s32 0, %v5308
        %v5310 = vrot.slane %v1901, %v5309
        %v5311 = vmul.f32 %v5169, %v5250
        %v5312 = vmul.f32 %v5174, %v5254
        %v5313 = vmul.f32 %v5179, %v5258
        %v5314 = vmul.f32 %v5184, %v5262
        %v5315 = vmul.f32 %v5189, %v5266
        %v5316 = vmul.f32 %v5194, %v5270
        %v5317 = vmul.f32 %v5199, %v5274
        %v5318 = vmul.f32 %v5204, %v5278
        %v5319 = vmul.f32 %v5209, %v5282
        %v5320 = vmul.f32 %v5214, %v5286
        %v5321 = vmul.f32 %v5219, %v5290
        %v5322 = vmul.f32 %v5224, %v5294
        %v5323 = vmul.f32 %v5229, %v5298
        %v5324 = vmul.f32 %v5234, %v5302
        %v5325 = vmul.f32 %v5239, %v5306
        %v5326 = vmul.f32 %v5244, %v5310
        %v5327 = vadd.f32 %v5311, 0.0
        %v5328 = vadd.f32 %v5312, 0.0
        %v5329 = vadd.f32 %v5313, 0.0
        %v5330 = vadd.f32 %v5314, 0.0
        %v5331 = vadd.f32 %v5315, 0.0
        %v5332 = vadd.f32 %v5316, 0.0
        %v5333 = vadd.f32 %v5317, 0.0
        %v5334 = vadd.f32 %v5318, 0.0
        %v5335 = vadd.f32 %v5319, 0.0
        %v5336 = vadd.f32 %v5320, 0.0
        %v5337 = vadd.f32 %v5321, 0.0
        %v5338 = vadd.f32 %v5322, 0.0
        %v5339 = vadd.f32 %v5323, 0.0
        %v5340 = vadd.f32 %v5324, 0.0
        %v5341 = vadd.f32 %v5325, 0.0
        %v5342 = vadd.f32 %v5326, 0.0
        %5343 = vmatprep.subr.mxu0 0.0
        %5344 = vmatpush1.msra.mxu0 %v1972
        %5345 = vmatprep.subr.mxu0 0.0
        %5346 = vmatpush1.msra.mxu0 %v1973
        %5347 = vmatprep.subr.mxu0 0.0
        %5348 = vmatpush1.msra.mxu0 %v1974
        %5349 = vmatprep.subr.mxu0 0.0
        %5350 = vmatpush1.msra.mxu0 %v1975
        %5351 = vmatprep.subr.mxu0 0.0
        %5352 = vmatpush1.msra.mxu0 0.0
        %5353 = vmatprep.subr.mxu0 0.0
        %5354 = vmatpush1.msra.mxu0 0.0
        %5355 = vmatprep.subr.mxu0 0.0
        %5356 = vmatpush1.msra.mxu0 0.0
        %5357 = vmatprep.subr.mxu0 0.0
        %5358 = vmatpush1.msra.mxu0 0.0
        %5359 = vmatprep.subr.mxu0 0.0
        %5360 = vmatpush1.msra.mxu0 0.0
        %5361 = vmatprep.subr.mxu0 0.0
        %5362 = vmatpush1.msra.mxu0 0.0
        %5363 = vmatprep.subr.mxu0 0.0
        %5364 = vmatpush1.msra.mxu0 0.0
        %5365 = vmatprep.subr.mxu0 0.0
        %5366 = vmatpush1.msra.mxu0 0.0
        %5367 = vmatprep.subr.mxu0 0.0
        %5368 = vmatpush1.msra.mxu0 0.0
        %5369 = vmatprep.subr.mxu0 0.0
        %5370 = vmatpush1.msra.mxu0 0.0
        %5371 = vmatprep.subr.mxu0 0.0
        %5372 = vmatpush1.msra.mxu0 0.0
        %5373 = vmatprep.subr.mxu0 0.0
        %5374 = vmatpush1.msra.mxu0 0.0
        %5375 = vmatprep.subr.mxu0 0.0
        %5376 = vmatpush1.msra.mxu0 0.0
        %5377 = vmatprep.subr.mxu0 0.0
        %5378 = vmatpush1.msra.mxu0 0.0
        %5379 = vmatprep.subr.mxu0 0.0
        %5380 = vmatpush1.msra.mxu0 0.0
        %5381 = vmatprep.subr.mxu0 0.0
        %5382 = vmatpush1.msra.mxu0 0.0
        %5383 = vmatprep.subr.mxu0 0.0
        %5384 = vmatpush1.msra.mxu0 0.0
        %5385 = vmatprep.subr.mxu0 0.0
        %5386 = vmatpush1.msra.mxu0 0.0
        %5387 = vmatprep.subr.mxu0 0.0
        %5388 = vmatpush1.msra.mxu0 0.0
        %5389 = vmatprep.subr.mxu0 0.0
        %5390 = vmatpush1.msra.mxu0 0.0
        %5391 = vmatprep.subr.mxu0 0.0
        %5392 = vmatpush1.msra.mxu0 0.0
        %5393 = vmatprep.subr.mxu0 0.0
        %5394 = vmatpush1.msra.mxu0 0.0
        %5395 = vmatprep.subr.mxu0 0.0
        %5396 = vmatpush1.msra.mxu0 0.0
        %5397 = vmatprep.subr.mxu0 0.0
        %5398 = vmatpush1.msra.mxu0 0.0
        %5399 = vmatprep.subr.mxu0 0.0
        %5400 = vmatpush1.msra.mxu0 0.0
        %5401 = vmatprep.subr.mxu0 0.0
        %5402 = vmatpush1.msra.mxu0 0.0
        %5403 = vmatprep.subr.mxu0 0.0
        %5404 = vmatpush1.msra.mxu0 0.0
        %5405 = vmatprep.subr.mxu0 0.0
        %5406 = vmatpush1.msra.mxu0 0.0
        %5407 = vmatprep.mubr.f32.mxu0 0.0
        %5408 = vmatmul.mubr.f32.gmra.mrb[0].mxu0 %v4894
        %v5409 = vpop.f32.mrb[0].mxu0
        %v5410 = vadd.f32 0.0, %v5409
        %v5411 = vpop.f32.mrb[0].mxu0
        %5412 = vmatprep.mubr.f32.mxu0 0.0
        %5413 = vmatmul.mubr.f32.gmra.mrb[0].mxu0 %v4897
        %v5414 = vpop.f32.mrb[0].mxu0
        %v5415 = vadd.f32 0.0, %v5414
        %v5416 = vpop.f32.mrb[0].mxu0
        %5417 = vmatprep.mubr.f32.mxu0 0.0
        %5418 = vmatmul.mubr.f32.gmra.mrb[0].mxu0 %v4900
        %v5419 = vpop.f32.mrb[0].mxu0
        %v5420 = vadd.f32 0.0, %v5419
        %v5421 = vpop.f32.mrb[0].mxu0
        %5422 = vmatprep.mubr.f32.mxu0 0.0
        %5423 = vmatmul.mubr.f32.gmra.mrb[0].mxu0 %v4903
        %v5424 = vpop.f32.mrb[0].mxu0
        %v5425 = vadd.f32 0.0, %v5424
        %v5426 = vpop.f32.mrb[0].mxu0
        %5427 = vmatprep.mubr.f32.mxu0 0.0
        %5428 = vmatmul.mubr.f32.gmra.mrb[0].mxu0 %v4906
        %v5429 = vpop.f32.mrb[0].mxu0
        %v5430 = vadd.f32 0.0, %v5429
        %v5431 = vpop.f32.mrb[0].mxu0
        %5432 = vmatprep.mubr.f32.mxu0 0.0
        %5433 = vmatmul.mubr.f32.gmra.mrb[0].mxu0 %v4909
        %v5434 = vpop.f32.mrb[0].mxu0
        %v5435 = vadd.f32 0.0, %v5434
        %v5436 = vpop.f32.mrb[0].mxu0
        %5437 = vmatprep.mubr.f32.mxu0 0.0
        %5438 = vmatmul.mubr.f32.gmra.mrb[0].mxu0 %v4912
        %v5439 = vpop.f32.mrb[0].mxu0
        %v5440 = vadd.f32 0.0, %v5439
        %v5441 = vpop.f32.mrb[0].mxu0
        %5442 = vmatprep.mubr.f32.mxu0 0.0
        %5443 = vmatmul.mubr.f32.gmra.mrb[0].mxu0 %v4915
        %v5444 = vpop.f32.mrb[0].mxu0
        %v5445 = vadd.f32 0.0, %v5444
        %v5446 = vpop.f32.mrb[0].mxu0
        %5447 = vmatprep.mubr.f32.mxu0 0.0
        %5448 = vmatmul.mubr.f32.gmra.mrb[0].mxu0 %v4918
        %v5449 = vpop.f32.mrb[0].mxu0
        %v5450 = vadd.f32 0.0, %v5449
        %v5451 = vpop.f32.mrb[0].mxu0
        %5452 = vmatprep.mubr.f32.mxu0 0.0
        %5453 = vmatmul.mubr.f32.gmra.mrb[0].mxu0 %v4921
        %v5454 = vpop.f32.mrb[0].mxu0
        %v5455 = vadd.f32 0.0, %v5454
        %v5456 = vpop.f32.mrb[0].mxu0
        %5457 = vmatprep.mubr.f32.mxu0 0.0
        %5458 = vmatmul.mubr.f32.gmra.mrb[0].mxu0 %v4924
        %v5459 = vpop.f32.mrb[0].mxu0
        %v5460 = vadd.f32 0.0, %v5459
        %v5461 = vpop.f32.mrb[0].mxu0
        %5462 = vmatprep.mubr.f32.mxu0 0.0
        %5463 = vmatmul.mubr.f32.gmra.mrb[0].mxu0 %v4927
        %v5464 = vpop.f32.mrb[0].mxu0
        %v5465 = vadd.f32 0.0, %v5464
        %v5466 = vpop.f32.mrb[0].mxu0
        %5467 = vmatprep.mubr.f32.mxu0 0.0
        %5468 = vmatmul.mubr.f32.gmra.mrb[0].mxu0 %v4930
        %v5469 = vpop.f32.mrb[0].mxu0
        %v5470 = vadd.f32 0.0, %v5469
        %v5471 = vpop.f32.mrb[0].mxu0
        %5472 = vmatprep.mubr.f32.mxu0 0.0
        %5473 = vmatmul.mubr.f32.gmra.mrb[0].mxu0 %v4933
        %v5474 = vpop.f32.mrb[0].mxu0
        %v5475 = vadd.f32 0.0, %v5474
        %v5476 = vpop.f32.mrb[0].mxu0
        %5477 = vmatprep.mubr.f32.mxu0 0.0
        %5478 = vmatmul.mubr.f32.gmra.mrb[0].mxu0 %v4936
        %v5479 = vpop.f32.mrb[0].mxu0
        %v5480 = vadd.f32 0.0, %v5479
        %v5481 = vpop.f32.mrb[0].mxu0
        %5482 = vmatprep.mubr.f32.mxu0 0.0
        %5483 = vmatmul.mubr.f32.gmra.mrb[0].mxu0 %v4939
        %v5484 = vpop.f32.mrb[0].mxu0
        %v5485 = vadd.f32 0.0, %v5484
        %v5486 = vpop.f32.mrb[0].mxu0
        %5487 = vdwg.mxu0
        %v5488 = vlaneseq
        %v5489 = vshrl.u32 %v5488, 7
        %v5490 = vsub.s32 1, %v5489
        %v5491 = vrot.slane %v1842, %v5490
        %v5492 = vlaneseq
        %v5493 = vshrl.u32 %v5492, 7
        %v5494 = vsub.s32 1, %v5493
        %v5495 = vrot.slane %v1845, %v5494
        %v5496 = vlaneseq
        %v5497 = vshrl.u32 %v5496, 7
        %v5498 = vsub.s32 1, %v5497
        %v5499 = vrot.slane %v1850, %v5498
        %v5500 = vlaneseq
        %v5501 = vshrl.u32 %v5500, 7
        %v5502 = vsub.s32 1, %v5501
        %v5503 = vrot.slane %v1853, %v5502
        %v5504 = vlaneseq
        %v5505 = vshrl.u32 %v5504, 7
        %v5506 = vsub.s32 1, %v5505
        %v5507 = vrot.slane %v1858, %v5506
        %v5508 = vlaneseq
        %v5509 = vshrl.u32 %v5508, 7
        %v5510 = vsub.s32 1, %v5509
        %v5511 = vrot.slane %v1861, %v5510
        %v5512 = vlaneseq
        %v5513 = vshrl.u32 %v5512, 7
        %v5514 = vsub.s32 1, %v5513
        %v5515 = vrot.slane %v1866, %v5514
        %v5516 = vlaneseq
        %v5517 = vshrl.u32 %v5516, 7
        %v5518 = vsub.s32 1, %v5517
        %v5519 = vrot.slane %v1869, %v5518
        %v5520 = vlaneseq
        %v5521 = vshrl.u32 %v5520, 7
        %v5522 = vsub.s32 1, %v5521
        %v5523 = vrot.slane %v1874, %v5522
        %v5524 = vlaneseq
        %v5525 = vshrl.u32 %v5524, 7
        %v5526 = vsub.s32 1, %v5525
        %v5527 = vrot.slane %v1877, %v5526
        %v5528 = vlaneseq
        %v5529 = vshrl.u32 %v5528, 7
        %v5530 = vsub.s32 1, %v5529
        %v5531 = vrot.slane %v1882, %v5530
        %v5532 = vlaneseq
        %v5533 = vshrl.u32 %v5532, 7
        %v5534 = vsub.s32 1, %v5533
        %v5535 = vrot.slane %v1885, %v5534
        %v5536 = vlaneseq
        %v5537 = vshrl.u32 %v5536, 7
        %v5538 = vsub.s32 1, %v5537
        %v5539 = vrot.slane %v1890, %v5538
        %v5540 = vlaneseq
        %v5541 = vshrl.u32 %v5540, 7
        %v5542 = vsub.s32 1, %v5541
        %v5543 = vrot.slane %v1893, %v5542
        %v5544 = vlaneseq
        %v5545 = vshrl.u32 %v5544, 7
        %v5546 = vsub.s32 1, %v5545
        %v5547 = vrot.slane %v1898, %v5546
        %v5548 = vlaneseq
        %v5549 = vshrl.u32 %v5548, 7
        %v5550 = vsub.s32 1, %v5549
        %v5551 = vrot.slane %v1901, %v5550
        %v5552 = vmul.f32 %v5410, %v5491
        %v5553 = vmul.f32 %v5415, %v5495
        %v5554 = vmul.f32 %v5420, %v5499
        %v5555 = vmul.f32 %v5425, %v5503
        %v5556 = vmul.f32 %v5430, %v5507
        %v5557 = vmul.f32 %v5435, %v5511
        %v5558 = vmul.f32 %v5440, %v5515
        %v5559 = vmul.f32 %v5445, %v5519
        %v5560 = vmul.f32 %v5450, %v5523
        %v5561 = vmul.f32 %v5455, %v5527
        %v5562 = vmul.f32 %v5460, %v5531
        %v5563 = vmul.f32 %v5465, %v5535
        %v5564 = vmul.f32 %v5470, %v5539
        %v5565 = vmul.f32 %v5475, %v5543
        %v5566 = vmul.f32 %v5480, %v5547
        %v5567 = vmul.f32 %v5485, %v5551
        %v5568 = vadd.f32 %v5327, %v5552
        %v5569 = vadd.f32 %v5328, %v5553
        %v5570 = vadd.f32 %v5329, %v5554
        %v5571 = vadd.f32 %v5330, %v5555
        %v5572 = vadd.f32 %v5331, %v5556
        %v5573 = vadd.f32 %v5332, %v5557
        %v5574 = vadd.f32 %v5333, %v5558
        %v5575 = vadd.f32 %v5334, %v5559
        %v5576 = vadd.f32 %v5335, %v5560
        %v5577 = vadd.f32 %v5336, %v5561
        %v5578 = vadd.f32 %v5337, %v5562
        %v5579 = vadd.f32 %v5338, %v5563
        %v5580 = vadd.f32 %v5339, %v5564
        %v5581 = vadd.f32 %v5340, %v5565
        %v5582 = vadd.f32 %v5341, %v5566
        %v5583 = vadd.f32 %v5342, %v5567
        %5584 = vmatprep.subr.mxu0 0.0
        %5585 = vmatpush1.msra.mxu0 %v1976
        %5586 = vmatprep.subr.mxu0 0.0
        %5587 = vmatpush1.msra.mxu0 %v1977
        %5588 = vmatprep.subr.mxu0 0.0
        %5589 = vmatpush1.msra.mxu0 %v1978
        %5590 = vmatprep.subr.mxu0 0.0
        %5591 = vmatpush1.msra.mxu0 %v1979
        %5592 = vmatprep.subr.mxu0 0.0
        %5593 = vmatpush1.msra.mxu0 0.0
        %5594 = vmatprep.subr.mxu0 0.0
        %5595 = vmatpush1.msra.mxu0 0.0
        %5596 = vmatprep.subr.mxu0 0.0
        %5597 = vmatpush1.msra.mxu0 0.0
        %5598 = vmatprep.subr.mxu0 0.0
        %5599 = vmatpush1.msra.mxu0 0.0
        %5600 = vmatprep.subr.mxu0 0.0
        %5601 = vmatpush1.msra.mxu0 0.0
        %5602 = vmatprep.subr.mxu0 0.0
        %5603 = vmatpush1.msra.mxu0 0.0
        %5604 = vmatprep.subr.mxu0 0.0
        %5605 = vmatpush1.msra.mxu0 0.0
        %5606 = vmatprep.subr.mxu0 0.0
        %5607 = vmatpush1.msra.mxu0 0.0
        %5608 = vmatprep.subr.mxu0 0.0
        %5609 = vmatpush1.msra.mxu0 0.0
        %5610 = vmatprep.subr.mxu0 0.0
        %5611 = vmatpush1.msra.mxu0 0.0
        %5612 = vmatprep.subr.mxu0 0.0
        %5613 = vmatpush1.msra.mxu0 0.0
        %5614 = vmatprep.subr.mxu0 0.0
        %5615 = vmatpush1.msra.mxu0 0.0
        %5616 = vmatprep.subr.mxu0 0.0
        %5617 = vmatpush1.msra.mxu0 0.0
        %5618 = vmatprep.subr.mxu0 0.0
        %5619 = vmatpush1.msra.mxu0 0.0
        %5620 = vmatprep.subr.mxu0 0.0
        %5621 = vmatpush1.msra.mxu0 0.0
        %5622 = vmatprep.subr.mxu0 0.0
        %5623 = vmatpush1.msra.mxu0 0.0
        %5624 = vmatprep.subr.mxu0 0.0
        %5625 = vmatpush1.msra.mxu0 0.0
        %5626 = vmatprep.subr.mxu0 0.0
        %5627 = vmatpush1.msra.mxu0 0.0
        %5628 = vmatprep.subr.mxu0 0.0
        %5629 = vmatpush1.msra.mxu0 0.0
        %5630 = vmatprep.subr.mxu0 0.0
        %5631 = vmatpush1.msra.mxu0 0.0
        %5632 = vmatprep.subr.mxu0 0.0
        %5633 = vmatpush1.msra.mxu0 0.0
        %5634 = vmatprep.subr.mxu0 0.0
        %5635 = vmatpush1.msra.mxu0 0.0
        %5636 = vmatprep.subr.mxu0 0.0
        %5637 = vmatpush1.msra.mxu0 0.0
        %5638 = vmatprep.subr.mxu0 0.0
        %5639 = vmatpush1.msra.mxu0 0.0
        %5640 = vmatprep.subr.mxu0 0.0
        %5641 = vmatpush1.msra.mxu0 0.0
        %5642 = vmatprep.subr.mxu0 0.0
        %5643 = vmatpush1.msra.mxu0 0.0
        %5644 = vmatprep.subr.mxu0 0.0
        %5645 = vmatpush1.msra.mxu0 0.0
        %5646 = vmatprep.subr.mxu0 0.0
        %5647 = vmatpush1.msra.mxu0 0.0
        %5648 = vmatprep.mubr.f32.mxu0 0.0
        %5649 = vmatmul.mubr.f32.gmra.mrb[0].mxu0 %v4894
        %v5650 = vpop.f32.mrb[0].mxu0
        %v5651 = vadd.f32 0.0, %v5650
        %v5652 = vpop.f32.mrb[0].mxu0
        %5653 = vmatprep.mubr.f32.mxu0 0.0
        %5654 = vmatmul.mubr.f32.gmra.mrb[0].mxu0 %v4897
        %v5655 = vpop.f32.mrb[0].mxu0
        %v5656 = vadd.f32 0.0, %v5655
        %v5657 = vpop.f32.mrb[0].mxu0
        %5658 = vmatprep.mubr.f32.mxu0 0.0
        %5659 = vmatmul.mubr.f32.gmra.mrb[0].mxu0 %v4900
        %v5660 = vpop.f32.mrb[0].mxu0
        %v5661 = vadd.f32 0.0, %v5660
        %v5662 = vpop.f32.mrb[0].mxu0
        %5663 = vmatprep.mubr.f32.mxu0 0.0
        %5664 = vmatmul.mubr.f32.gmra.mrb[0].mxu0 %v4903
        %v5665 = vpop.f32.mrb[0].mxu0
        %v5666 = vadd.f32 0.0, %v5665
        %v5667 = vpop.f32.mrb[0].mxu0
        %5668 = vmatprep.mubr.f32.mxu0 0.0
        %5669 = vmatmul.mubr.f32.gmra.mrb[0].mxu0 %v4906
        %v5670 = vpop.f32.mrb[0].mxu0
        %v5671 = vadd.f32 0.0, %v5670
        %v5672 = vpop.f32.mrb[0].mxu0
        %5673 = vmatprep.mubr.f32.mxu0 0.0
        %5674 = vmatmul.mubr.f32.gmra.mrb[0].mxu0 %v4909
        %v5675 = vpop.f32.mrb[0].mxu0
        %v5676 = vadd.f32 0.0, %v5675
        %v5677 = vpop.f32.mrb[0].mxu0
        %5678 = vmatprep.mubr.f32.mxu0 0.0
        %5679 = vmatmul.mubr.f32.gmra.mrb[0].mxu0 %v4912
        %v5680 = vpop.f32.mrb[0].mxu0
        %v5681 = vadd.f32 0.0, %v5680
        %v5682 = vpop.f32.mrb[0].mxu0
        %5683 = vmatprep.mubr.f32.mxu0 0.0
        %5684 = vmatmul.mubr.f32.gmra.mrb[0].mxu0 %v4915
        %v5685 = vpop.f32.mrb[0].mxu0
        %v5686 = vadd.f32 0.0, %v5685
        %v5687 = vpop.f32.mrb[0].mxu0
        %5688 = vmatprep.mubr.f32.mxu0 0.0
        %5689 = vmatmul.mubr.f32.gmra.mrb[0].mxu0 %v4918
        %v5690 = vpop.f32.mrb[0].mxu0
        %v5691 = vadd.f32 0.0, %v5690
        %v5692 = vpop.f32.mrb[0].mxu0
        %5693 = vmatprep.mubr.f32.mxu0 0.0
        %5694 = vmatmul.mubr.f32.gmra.mrb[0].mxu0 %v4921
        %v5695 = vpop.f32.mrb[0].mxu0
        %v5696 = vadd.f32 0.0, %v5695
        %v5697 = vpop.f32.mrb[0].mxu0
        %5698 = vmatprep.mubr.f32.mxu0 0.0
        %5699 = vmatmul.mubr.f32.gmra.mrb[0].mxu0 %v4924
        %v5700 = vpop.f32.mrb[0].mxu0
        %v5701 = vadd.f32 0.0, %v5700
        %v5702 = vpop.f32.mrb[0].mxu0
        %5703 = vmatprep.mubr.f32.mxu0 0.0
        %5704 = vmatmul.mubr.f32.gmra.mrb[0].mxu0 %v4927
        %v5705 = vpop.f32.mrb[0].mxu0
        %v5706 = vadd.f32 0.0, %v5705
        %v5707 = vpop.f32.mrb[0].mxu0
        %5708 = vmatprep.mubr.f32.mxu0 0.0
        %5709 = vmatmul.mubr.f32.gmra.mrb[0].mxu0 %v4930
        %v5710 = vpop.f32.mrb[0].mxu0
        %v5711 = vadd.f32 0.0, %v5710
        %v5712 = vpop.f32.mrb[0].mxu0
        %5713 = vmatprep.mubr.f32.mxu0 0.0
        %5714 = vmatmul.mubr.f32.gmra.mrb[0].mxu0 %v4933
        %v5715 = vpop.f32.mrb[0].mxu0
        %v5716 = vadd.f32 0.0, %v5715
        %v5717 = vpop.f32.mrb[0].mxu0
        %5718 = vmatprep.mubr.f32.mxu0 0.0
        %5719 = vmatmul.mubr.f32.gmra.mrb[0].mxu0 %v4936
        %v5720 = vpop.f32.mrb[0].mxu0
        %v5721 = vadd.f32 0.0, %v5720
        %v5722 = vpop.f32.mrb[0].mxu0
        %5723 = vmatprep.mubr.f32.mxu0 0.0
        %5724 = vmatmul.mubr.f32.gmra.mrb[0].mxu0 %v4939
        %v5725 = vpop.f32.mrb[0].mxu0
        %v5726 = vadd.f32 0.0, %v5725
        %v5727 = vpop.f32.mrb[0].mxu0
        %5728 = vdwg.mxu0
        %v5729 = vlaneseq
        %v5730 = vshrl.u32 %v5729, 7
        %v5731 = vsub.s32 2, %v5730
        %v5732 = vrot.slane %v1842, %v5731
        %v5733 = vlaneseq
        %v5734 = vshrl.u32 %v5733, 7
        %v5735 = vsub.s32 2, %v5734
        %v5736 = vrot.slane %v1845, %v5735
        %v5737 = vlaneseq
        %v5738 = vshrl.u32 %v5737, 7
        %v5739 = vsub.s32 2, %v5738
        %v5740 = vrot.slane %v1850, %v5739
        %v5741 = vlaneseq
        %v5742 = vshrl.u32 %v5741, 7
        %v5743 = vsub.s32 2, %v5742
        %v5744 = vrot.slane %v1853, %v5743
        %v5745 = vlaneseq
        %v5746 = vshrl.u32 %v5745, 7
        %v5747 = vsub.s32 2, %v5746
        %v5748 = vrot.slane %v1858, %v5747
        %v5749 = vlaneseq
        %v5750 = vshrl.u32 %v5749, 7
        %v5751 = vsub.s32 2, %v5750
        %v5752 = vrot.slane %v1861, %v5751
        %v5753 = vlaneseq
        %v5754 = vshrl.u32 %v5753, 7
        %v5755 = vsub.s32 2, %v5754
        %v5756 = vrot.slane %v1866, %v5755
        %v5757 = vlaneseq
        %v5758 = vshrl.u32 %v5757, 7
        %v5759 = vsub.s32 2, %v5758
        %v5760 = vrot.slane %v1869, %v5759
        %v5761 = vlaneseq
        %v5762 = vshrl.u32 %v5761, 7
        %v5763 = vsub.s32 2, %v5762
        %v5764 = vrot.slane %v1874, %v5763
        %v5765 = vlaneseq
        %v5766 = vshrl.u32 %v5765, 7
        %v5767 = vsub.s32 2, %v5766
        %v5768 = vrot.slane %v1877, %v5767
        %v5769 = vlaneseq
        %v5770 = vshrl.u32 %v5769, 7
        %v5771 = vsub.s32 2, %v5770
        %v5772 = vrot.slane %v1882, %v5771
        %v5773 = vlaneseq
        %v5774 = vshrl.u32 %v5773, 7
        %v5775 = vsub.s32 2, %v5774
        %v5776 = vrot.slane %v1885, %v5775
        %v5777 = vlaneseq
        %v5778 = vshrl.u32 %v5777, 7
        %v5779 = vsub.s32 2, %v5778
        %v5780 = vrot.slane %v1890, %v5779
        %v5781 = vlaneseq
        %v5782 = vshrl.u32 %v5781, 7
        %v5783 = vsub.s32 2, %v5782
        %v5784 = vrot.slane %v1893, %v5783
        %v5785 = vlaneseq
        %v5786 = vshrl.u32 %v5785, 7
        %v5787 = vsub.s32 2, %v5786
        %v5788 = vrot.slane %v1898, %v5787
        %v5789 = vlaneseq
        %v5790 = vshrl.u32 %v5789, 7
        %v5791 = vsub.s32 2, %v5790
        %v5792 = vrot.slane %v1901, %v5791
        %v5793 = vmul.f32 %v5651, %v5732
        %v5794 = vmul.f32 %v5656, %v5736
        %v5795 = vmul.f32 %v5661, %v5740
        %v5796 = vmul.f32 %v5666, %v5744
        %v5797 = vmul.f32 %v5671, %v5748
        %v5798 = vmul.f32 %v5676, %v5752
        %v5799 = vmul.f32 %v5681, %v5756
        %v5800 = vmul.f32 %v5686, %v5760
        %v5801 = vmul.f32 %v5691, %v5764
        %v5802 = vmul.f32 %v5696, %v5768
        %v5803 = vmul.f32 %v5701, %v5772
        %v5804 = vmul.f32 %v5706, %v5776
        %v5805 = vmul.f32 %v5711, %v5780
        %v5806 = vmul.f32 %v5716, %v5784
        %v5807 = vmul.f32 %v5721, %v5788
        %v5808 = vmul.f32 %v5726, %v5792
        %v5809 = vadd.f32 %v5568, %v5793
        %v5810 = vadd.f32 %v5569, %v5794
        %v5811 = vadd.f32 %v5570, %v5795
        %v5812 = vadd.f32 %v5571, %v5796
        %v5813 = vadd.f32 %v5572, %v5797
        %v5814 = vadd.f32 %v5573, %v5798
        %v5815 = vadd.f32 %v5574, %v5799
        %v5816 = vadd.f32 %v5575, %v5800
        %v5817 = vadd.f32 %v5576, %v5801
        %v5818 = vadd.f32 %v5577, %v5802
        %v5819 = vadd.f32 %v5578, %v5803
        %v5820 = vadd.f32 %v5579, %v5804
        %v5821 = vadd.f32 %v5580, %v5805
        %v5822 = vadd.f32 %v5581, %v5806
        %v5823 = vadd.f32 %v5582, %v5807
        %v5824 = vadd.f32 %v5583, %v5808
        %5825 = vmatprep.subr.mxu0 0.0
        %5826 = vmatpush1.msra.mxu0 %v1980
        %5827 = vmatprep.subr.mxu0 0.0
        %5828 = vmatpush1.msra.mxu0 %v1981
        %5829 = vmatprep.subr.mxu0 0.0
        %5830 = vmatpush1.msra.mxu0 %v1982
        %5831 = vmatprep.subr.mxu0 0.0
        %5832 = vmatpush1.msra.mxu0 %v1983
        %5833 = vmatprep.subr.mxu0 0.0
        %5834 = vmatpush1.msra.mxu0 0.0
        %5835 = vmatprep.subr.mxu0 0.0
        %5836 = vmatpush1.msra.mxu0 0.0
        %5837 = vmatprep.subr.mxu0 0.0
        %5838 = vmatpush1.msra.mxu0 0.0
        %5839 = vmatprep.subr.mxu0 0.0
        %5840 = vmatpush1.msra.mxu0 0.0
        %5841 = vmatprep.subr.mxu0 0.0
        %5842 = vmatpush1.msra.mxu0 0.0
        %5843 = vmatprep.subr.mxu0 0.0
        %5844 = vmatpush1.msra.mxu0 0.0
        %5845 = vmatprep.subr.mxu0 0.0
        %5846 = vmatpush1.msra.mxu0 0.0
        %5847 = vmatprep.subr.mxu0 0.0
        %5848 = vmatpush1.msra.mxu0 0.0
        %5849 = vmatprep.subr.mxu0 0.0
        %5850 = vmatpush1.msra.mxu0 0.0
        %5851 = vmatprep.subr.mxu0 0.0
        %5852 = vmatpush1.msra.mxu0 0.0
        %5853 = vmatprep.subr.mxu0 0.0
        %5854 = vmatpush1.msra.mxu0 0.0
        %5855 = vmatprep.subr.mxu0 0.0
        %5856 = vmatpush1.msra.mxu0 0.0
        %5857 = vmatprep.subr.mxu0 0.0
        %5858 = vmatpush1.msra.mxu0 0.0
        %5859 = vmatprep.subr.mxu0 0.0
        %5860 = vmatpush1.msra.mxu0 0.0
        %5861 = vmatprep.subr.mxu0 0.0
        %5862 = vmatpush1.msra.mxu0 0.0
        %5863 = vmatprep.subr.mxu0 0.0
        %5864 = vmatpush1.msra.mxu0 0.0
        %5865 = vmatprep.subr.mxu0 0.0
        %5866 = vmatpush1.msra.mxu0 0.0
        %5867 = vmatprep.subr.mxu0 0.0
        %5868 = vmatpush1.msra.mxu0 0.0
        %5869 = vmatprep.subr.mxu0 0.0
        %5870 = vmatpush1.msra.mxu0 0.0
        %5871 = vmatprep.subr.mxu0 0.0
        %5872 = vmatpush1.msra.mxu0 0.0
        %5873 = vmatprep.subr.mxu0 0.0
        %5874 = vmatpush1.msra.mxu0 0.0
        %5875 = vmatprep.subr.mxu0 0.0
        %5876 = vmatpush1.msra.mxu0 0.0
        %5877 = vmatprep.subr.mxu0 0.0
        %5878 = vmatpush1.msra.mxu0 0.0
        %5879 = vmatprep.subr.mxu0 0.0
        %5880 = vmatpush1.msra.mxu0 0.0
        %5881 = vmatprep.subr.mxu0 0.0
        %5882 = vmatpush1.msra.mxu0 0.0
        %5883 = vmatprep.subr.mxu0 0.0
        %5884 = vmatpush1.msra.mxu0 0.0
        %5885 = vmatprep.subr.mxu0 0.0
        %5886 = vmatpush1.msra.mxu0 0.0
        %5887 = vmatprep.subr.mxu0 0.0
        %5888 = vmatpush1.msra.mxu0 0.0
        %5889 = vmatprep.mubr.f32.mxu0 0.0
        %5890 = vmatmul.mubr.f32.gmra.mrb[0].mxu0 %v4894
        %v5891 = vpop.f32.mrb[0].mxu0
        %v5892 = vadd.f32 0.0, %v5891
        %v5893 = vpop.f32.mrb[0].mxu0
        %5894 = vmatprep.mubr.f32.mxu0 0.0
        %5895 = vmatmul.mubr.f32.gmra.mrb[0].mxu0 %v4897
        %v5896 = vpop.f32.mrb[0].mxu0
        %v5897 = vadd.f32 0.0, %v5896
        %v5898 = vpop.f32.mrb[0].mxu0
        %5899 = vmatprep.mubr.f32.mxu0 0.0
        %5900 = vmatmul.mubr.f32.gmra.mrb[0].mxu0 %v4900
        %v5901 = vpop.f32.mrb[0].mxu0
        %v5902 = vadd.f32 0.0, %v5901
        %v5903 = vpop.f32.mrb[0].mxu0
        %5904 = vmatprep.mubr.f32.mxu0 0.0
        %5905 = vmatmul.mubr.f32.gmra.mrb[0].mxu0 %v4903
        %v5906 = vpop.f32.mrb[0].mxu0
        %v5907 = vadd.f32 0.0, %v5906
        %v5908 = vpop.f32.mrb[0].mxu0
        %5909 = vmatprep.mubr.f32.mxu0 0.0
        %5910 = vmatmul.mubr.f32.gmra.mrb[0].mxu0 %v4906
        %v5911 = vpop.f32.mrb[0].mxu0
        %v5912 = vadd.f32 0.0, %v5911
        %v5913 = vpop.f32.mrb[0].mxu0
        %5914 = vmatprep.mubr.f32.mxu0 0.0
        %5915 = vmatmul.mubr.f32.gmra.mrb[0].mxu0 %v4909
        %v5916 = vpop.f32.mrb[0].mxu0
        %v5917 = vadd.f32 0.0, %v5916
        %v5918 = vpop.f32.mrb[0].mxu0
        %5919 = vmatprep.mubr.f32.mxu0 0.0
        %5920 = vmatmul.mubr.f32.gmra.mrb[0].mxu0 %v4912
        %v5921 = vpop.f32.mrb[0].mxu0
        %v5922 = vadd.f32 0.0, %v5921
        %v5923 = vpop.f32.mrb[0].mxu0
        %5924 = vmatprep.mubr.f32.mxu0 0.0
        %5925 = vmatmul.mubr.f32.gmra.mrb[0].mxu0 %v4915
        %v5926 = vpop.f32.mrb[0].mxu0
        %v5927 = vadd.f32 0.0, %v5926
        %v5928 = vpop.f32.mrb[0].mxu0
        %5929 = vmatprep.mubr.f32.mxu0 0.0
        %5930 = vmatmul.mubr.f32.gmra.mrb[0].mxu0 %v4918
        %v5931 = vpop.f32.mrb[0].mxu0
        %v5932 = vadd.f32 0.0, %v5931
        %v5933 = vpop.f32.mrb[0].mxu0
        %5934 = vmatprep.mubr.f32.mxu0 0.0
        %5935 = vmatmul.mubr.f32.gmra.mrb[0].mxu0 %v4921
        %v5936 = vpop.f32.mrb[0].mxu0
        %v5937 = vadd.f32 0.0, %v5936
        %v5938 = vpop.f32.mrb[0].mxu0
        %5939 = vmatprep.mubr.f32.mxu0 0.0
        %5940 = vmatmul.mubr.f32.gmra.mrb[0].mxu0 %v4924
        %v5941 = vpop.f32.mrb[0].mxu0
        %v5942 = vadd.f32 0.0, %v5941
        %v5943 = vpop.f32.mrb[0].mxu0
        %5944 = vmatprep.mubr.f32.mxu0 0.0
        %5945 = vmatmul.mubr.f32.gmra.mrb[0].mxu0 %v4927
        %v5946 = vpop.f32.mrb[0].mxu0
        %v5947 = vadd.f32 0.0, %v5946
        %v5948 = vpop.f32.mrb[0].mxu0
        %5949 = vmatprep.mubr.f32.mxu0 0.0
        %5950 = vmatmul.mubr.f32.gmra.mrb[0].mxu0 %v4930
        %v5951 = vpop.f32.mrb[0].mxu0
        %v5952 = vadd.f32 0.0, %v5951
        %v5953 = vpop.f32.mrb[0].mxu0
        %5954 = vmatprep.mubr.f32.mxu0 0.0
        %5955 = vmatmul.mubr.f32.gmra.mrb[0].mxu0 %v4933
        %v5956 = vpop.f32.mrb[0].mxu0
        %v5957 = vadd.f32 0.0, %v5956
        %v5958 = vpop.f32.mrb[0].mxu0
        %5959 = vmatprep.mubr.f32.mxu0 0.0
        %5960 = vmatmul.mubr.f32.gmra.mrb[0].mxu0 %v4936
        %v5961 = vpop.f32.mrb[0].mxu0
        %v5962 = vadd.f32 0.0, %v5961
        %v5963 = vpop.f32.mrb[0].mxu0
        %5964 = vmatprep.mubr.f32.mxu0 0.0
        %5965 = vmatmul.mubr.f32.gmra.mrb[0].mxu0 %v4939
        %v5966 = vpop.f32.mrb[0].mxu0
        %v5967 = vadd.f32 0.0, %v5966
        %v5968 = vpop.f32.mrb[0].mxu0
        %5969 = vdwg.mxu0
        %v5970 = vlaneseq
        %v5971 = vshrl.u32 %v5970, 7
        %v5972 = vsub.s32 3, %v5971
        %v5973 = vrot.slane %v1842, %v5972
        %v5974 = vlaneseq
        %v5975 = vshrl.u32 %v5974, 7
        %v5976 = vsub.s32 3, %v5975
        %v5977 = vrot.slane %v1845, %v5976
        %v5978 = vlaneseq
        %v5979 = vshrl.u32 %v5978, 7
        %v5980 = vsub.s32 3, %v5979
        %v5981 = vrot.slane %v1850, %v5980
        %v5982 = vlaneseq
        %v5983 = vshrl.u32 %v5982, 7
        %v5984 = vsub.s32 3, %v5983
        %v5985 = vrot.slane %v1853, %v5984
        %v5986 = vlaneseq
        %v5987 = vshrl.u32 %v5986, 7
        %v5988 = vsub.s32 3, %v5987
        %v5989 = vrot.slane %v1858, %v5988
        %v5990 = vlaneseq
        %v5991 = vshrl.u32 %v5990, 7
        %v5992 = vsub.s32 3, %v5991
        %v5993 = vrot.slane %v1861, %v5992
        %v5994 = vlaneseq
        %v5995 = vshrl.u32 %v5994, 7
        %v5996 = vsub.s32 3, %v5995
        %v5997 = vrot.slane %v1866, %v5996
        %v5998 = vlaneseq
        %v5999 = vshrl.u32 %v5998, 7
        %v6000 = vsub.s32 3, %v5999
        %v6001 = vrot.slane %v1869, %v6000
        %v6002 = vlaneseq
        %v6003 = vshrl.u32 %v6002, 7
        %v6004 = vsub.s32 3, %v6003
        %v6005 = vrot.slane %v1874, %v6004
        %v6006 = vlaneseq
        %v6007 = vshrl.u32 %v6006, 7
        %v6008 = vsub.s32 3, %v6007
        %v6009 = vrot.slane %v1877, %v6008
        %v6010 = vlaneseq
        %v6011 = vshrl.u32 %v6010, 7
        %v6012 = vsub.s32 3, %v6011
        %v6013 = vrot.slane %v1882, %v6012
        %v6014 = vlaneseq
        %v6015 = vshrl.u32 %v6014, 7
        %v6016 = vsub.s32 3, %v6015
        %v6017 = vrot.slane %v1885, %v6016
        %v6018 = vlaneseq
        %v6019 = vshrl.u32 %v6018, 7
        %v6020 = vsub.s32 3, %v6019
        %v6021 = vrot.slane %v1890, %v6020
        %v6022 = vlaneseq
        %v6023 = vshrl.u32 %v6022, 7
        %v6024 = vsub.s32 3, %v6023
        %v6025 = vrot.slane %v1893, %v6024
        %v6026 = vlaneseq
        %v6027 = vshrl.u32 %v6026, 7
        %v6028 = vsub.s32 3, %v6027
        %v6029 = vrot.slane %v1898, %v6028
        %v6030 = vlaneseq
        %v6031 = vshrl.u32 %v6030, 7
        %v6032 = vsub.s32 3, %v6031
        %v6033 = vrot.slane %v1901, %v6032
        %v6034 = vmul.f32 %v5892, %v5973
        %v6035 = vmul.f32 %v5897, %v5977
        %v6036 = vmul.f32 %v5902, %v5981
        %v6037 = vmul.f32 %v5907, %v5985
        %v6038 = vmul.f32 %v5912, %v5989
        %v6039 = vmul.f32 %v5917, %v5993
        %v6040 = vmul.f32 %v5922, %v5997
        %v6041 = vmul.f32 %v5927, %v6001
        %v6042 = vmul.f32 %v5932, %v6005
        %v6043 = vmul.f32 %v5937, %v6009
        %v6044 = vmul.f32 %v5942, %v6013
        %v6045 = vmul.f32 %v5947, %v6017
        %v6046 = vmul.f32 %v5952, %v6021
        %v6047 = vmul.f32 %v5957, %v6025
        %v6048 = vmul.f32 %v5962, %v6029
        %v6049 = vmul.f32 %v5967, %v6033
        %v6050 = vadd.f32 %v5809, %v6034
        %v6051 = vadd.f32 %v5810, %v6035
        %v6052 = vadd.f32 %v5811, %v6036
        %v6053 = vadd.f32 %v5812, %v6037
        %v6054 = vadd.f32 %v5813, %v6038
        %v6055 = vadd.f32 %v5814, %v6039
        %v6056 = vadd.f32 %v5815, %v6040
        %v6057 = vadd.f32 %v5816, %v6041
        %v6058 = vadd.f32 %v5817, %v6042
        %v6059 = vadd.f32 %v5818, %v6043
        %v6060 = vadd.f32 %v5819, %v6044
        %v6061 = vadd.f32 %v5820, %v6045
        %v6062 = vadd.f32 %v5821, %v6046
        %v6063 = vadd.f32 %v5822, %v6047
        %v6064 = vadd.f32 %v5823, %v6048
        %v6065 = vadd.f32 %v5824, %v6049
        %6066 = vmatprep.subr.mxu0 0.0
        %6067 = vmatpush1.msra.mxu0 %v1984
        %6068 = vmatprep.subr.mxu0 0.0
        %6069 = vmatpush1.msra.mxu0 %v1985
        %6070 = vmatprep.subr.mxu0 0.0
        %6071 = vmatpush1.msra.mxu0 %v1986
        %6072 = vmatprep.subr.mxu0 0.0
        %6073 = vmatpush1.msra.mxu0 %v1987
        %6074 = vmatprep.subr.mxu0 0.0
        %6075 = vmatpush1.msra.mxu0 0.0
        %6076 = vmatprep.subr.mxu0 0.0
        %6077 = vmatpush1.msra.mxu0 0.0
        %6078 = vmatprep.subr.mxu0 0.0
        %6079 = vmatpush1.msra.mxu0 0.0
        %6080 = vmatprep.subr.mxu0 0.0
        %6081 = vmatpush1.msra.mxu0 0.0
        %6082 = vmatprep.subr.mxu0 0.0
        %6083 = vmatpush1.msra.mxu0 0.0
        %6084 = vmatprep.subr.mxu0 0.0
        %6085 = vmatpush1.msra.mxu0 0.0
        %6086 = vmatprep.subr.mxu0 0.0
        %6087 = vmatpush1.msra.mxu0 0.0
        %6088 = vmatprep.subr.mxu0 0.0
        %6089 = vmatpush1.msra.mxu0 0.0
        %6090 = vmatprep.subr.mxu0 0.0
        %6091 = vmatpush1.msra.mxu0 0.0
        %6092 = vmatprep.subr.mxu0 0.0
        %6093 = vmatpush1.msra.mxu0 0.0
        %6094 = vmatprep.subr.mxu0 0.0
        %6095 = vmatpush1.msra.mxu0 0.0
        %6096 = vmatprep.subr.mxu0 0.0
        %6097 = vmatpush1.msra.mxu0 0.0
        %6098 = vmatprep.subr.mxu0 0.0
        %6099 = vmatpush1.msra.mxu0 0.0
        %6100 = vmatprep.subr.mxu0 0.0
        %6101 = vmatpush1.msra.mxu0 0.0
        %6102 = vmatprep.subr.mxu0 0.0
        %6103 = vmatpush1.msra.mxu0 0.0
        %6104 = vmatprep.subr.mxu0 0.0
        %6105 = vmatpush1.msra.mxu0 0.0
        %6106 = vmatprep.subr.mxu0 0.0
        %6107 = vmatpush1.msra.mxu0 0.0
        %6108 = vmatprep.subr.mxu0 0.0
        %6109 = vmatpush1.msra.mxu0 0.0
        %6110 = vmatprep.subr.mxu0 0.0
        %6111 = vmatpush1.msra.mxu0 0.0
        %6112 = vmatprep.subr.mxu0 0.0
        %6113 = vmatpush1.msra.mxu0 0.0
        %6114 = vmatprep.subr.mxu0 0.0
        %6115 = vmatpush1.msra.mxu0 0.0
        %6116 = vmatprep.subr.mxu0 0.0
        %6117 = vmatpush1.msra.mxu0 0.0
        %6118 = vmatprep.subr.mxu0 0.0
        %6119 = vmatpush1.msra.mxu0 0.0
        %6120 = vmatprep.subr.mxu0 0.0
        %6121 = vmatpush1.msra.mxu0 0.0
        %6122 = vmatprep.subr.mxu0 0.0
        %6123 = vmatpush1.msra.mxu0 0.0
        %6124 = vmatprep.subr.mxu0 0.0
        %6125 = vmatpush1.msra.mxu0 0.0
        %6126 = vmatprep.subr.mxu0 0.0
        %6127 = vmatpush1.msra.mxu0 0.0
        %6128 = vmatprep.subr.mxu0 0.0
        %6129 = vmatpush1.msra.mxu0 0.0
        %6130 = vmatprep.mubr.f32.mxu0 0.0
        %6131 = vmatmul.mubr.f32.gmra.mrb[0].mxu0 %v4894
        %v6132 = vpop.f32.mrb[0].mxu0
        %v6133 = vadd.f32 0.0, %v6132
        %v6134 = vpop.f32.mrb[0].mxu0
        %6135 = vmatprep.mubr.f32.mxu0 0.0
        %6136 = vmatmul.mubr.f32.gmra.mrb[0].mxu0 %v4897
        %v6137 = vpop.f32.mrb[0].mxu0
        %v6138 = vadd.f32 0.0, %v6137
        %v6139 = vpop.f32.mrb[0].mxu0
        %6140 = vmatprep.mubr.f32.mxu0 0.0
        %6141 = vmatmul.mubr.f32.gmra.mrb[0].mxu0 %v4900
        %v6142 = vpop.f32.mrb[0].mxu0
        %v6143 = vadd.f32 0.0, %v6142
        %v6144 = vpop.f32.mrb[0].mxu0
        %6145 = vmatprep.mubr.f32.mxu0 0.0
        %6146 = vmatmul.mubr.f32.gmra.mrb[0].mxu0 %v4903
        %v6147 = vpop.f32.mrb[0].mxu0
        %v6148 = vadd.f32 0.0, %v6147
        %v6149 = vpop.f32.mrb[0].mxu0
        %6150 = vmatprep.mubr.f32.mxu0 0.0
        %6151 = vmatmul.mubr.f32.gmra.mrb[0].mxu0 %v4906
        %v6152 = vpop.f32.mrb[0].mxu0
        %v6153 = vadd.f32 0.0, %v6152
        %v6154 = vpop.f32.mrb[0].mxu0
        %6155 = vmatprep.mubr.f32.mxu0 0.0
        %6156 = vmatmul.mubr.f32.gmra.mrb[0].mxu0 %v4909
        %v6157 = vpop.f32.mrb[0].mxu0
        %v6158 = vadd.f32 0.0, %v6157
        %v6159 = vpop.f32.mrb[0].mxu0
        %6160 = vmatprep.mubr.f32.mxu0 0.0
        %6161 = vmatmul.mubr.f32.gmra.mrb[0].mxu0 %v4912
        %v6162 = vpop.f32.mrb[0].mxu0
        %v6163 = vadd.f32 0.0, %v6162
        %v6164 = vpop.f32.mrb[0].mxu0
        %6165 = vmatprep.mubr.f32.mxu0 0.0
        %6166 = vmatmul.mubr.f32.gmra.mrb[0].mxu0 %v4915
        %v6167 = vpop.f32.mrb[0].mxu0
        %v6168 = vadd.f32 0.0, %v6167
        %v6169 = vpop.f32.mrb[0].mxu0
        %6170 = vmatprep.mubr.f32.mxu0 0.0
        %6171 = vmatmul.mubr.f32.gmra.mrb[0].mxu0 %v4918
        %v6172 = vpop.f32.mrb[0].mxu0
        %v6173 = vadd.f32 0.0, %v6172
        %v6174 = vpop.f32.mrb[0].mxu0
        %6175 = vmatprep.mubr.f32.mxu0 0.0
        %6176 = vmatmul.mubr.f32.gmra.mrb[0].mxu0 %v4921
        %v6177 = vpop.f32.mrb[0].mxu0
        %v6178 = vadd.f32 0.0, %v6177
        %v6179 = vpop.f32.mrb[0].mxu0
        %6180 = vmatprep.mubr.f32.mxu0 0.0
        %6181 = vmatmul.mubr.f32.gmra.mrb[0].mxu0 %v4924
        %v6182 = vpop.f32.mrb[0].mxu0
        %v6183 = vadd.f32 0.0, %v6182
        %v6184 = vpop.f32.mrb[0].mxu0
        %6185 = vmatprep.mubr.f32.mxu0 0.0
        %6186 = vmatmul.mubr.f32.gmra.mrb[0].mxu0 %v4927
        %v6187 = vpop.f32.mrb[0].mxu0
        %v6188 = vadd.f32 0.0, %v6187
        %v6189 = vpop.f32.mrb[0].mxu0
        %6190 = vmatprep.mubr.f32.mxu0 0.0
        %6191 = vmatmul.mubr.f32.gmra.mrb[0].mxu0 %v4930
        %v6192 = vpop.f32.mrb[0].mxu0
        %v6193 = vadd.f32 0.0, %v6192
        %v6194 = vpop.f32.mrb[0].mxu0
        %6195 = vmatprep.mubr.f32.mxu0 0.0
        %6196 = vmatmul.mubr.f32.gmra.mrb[0].mxu0 %v4933
        %v6197 = vpop.f32.mrb[0].mxu0
        %v6198 = vadd.f32 0.0, %v6197
        %v6199 = vpop.f32.mrb[0].mxu0
        %6200 = vmatprep.mubr.f32.mxu0 0.0
        %6201 = vmatmul.mubr.f32.gmra.mrb[0].mxu0 %v4936
        %v6202 = vpop.f32.mrb[0].mxu0
        %v6203 = vadd.f32 0.0, %v6202
        %v6204 = vpop.f32.mrb[0].mxu0
        %6205 = vmatprep.mubr.f32.mxu0 0.0
        %6206 = vmatmul.mubr.f32.gmra.mrb[0].mxu0 %v4939
        %v6207 = vpop.f32.mrb[0].mxu0
        %v6208 = vadd.f32 0.0, %v6207
        %v6209 = vpop.f32.mrb[0].mxu0
        %6210 = vdwg.mxu0
        %v6211 = vlaneseq
        %v6212 = vshrl.u32 %v6211, 7
        %v6213 = vsub.s32 4, %v6212
        %v6214 = vrot.slane %v1842, %v6213
        %v6215 = vlaneseq
        %v6216 = vshrl.u32 %v6215, 7
        %v6217 = vsub.s32 4, %v6216
        %v6218 = vrot.slane %v1845, %v6217
        %v6219 = vlaneseq
        %v6220 = vshrl.u32 %v6219, 7
        %v6221 = vsub.s32 4, %v6220
        %v6222 = vrot.slane %v1850, %v6221
        %v6223 = vlaneseq
        %v6224 = vshrl.u32 %v6223, 7
        %v6225 = vsub.s32 4, %v6224
        %v6226 = vrot.slane %v1853, %v6225
        %v6227 = vlaneseq
        %v6228 = vshrl.u32 %v6227, 7
        %v6229 = vsub.s32 4, %v6228
        %v6230 = vrot.slane %v1858, %v6229
        %v6231 = vlaneseq
        %v6232 = vshrl.u32 %v6231, 7
        %v6233 = vsub.s32 4, %v6232
        %v6234 = vrot.slane %v1861, %v6233
        %v6235 = vlaneseq
        %v6236 = vshrl.u32 %v6235, 7
        %v6237 = vsub.s32 4, %v6236
        %v6238 = vrot.slane %v1866, %v6237
        %v6239 = vlaneseq
        %v6240 = vshrl.u32 %v6239, 7
        %v6241 = vsub.s32 4, %v6240
        %v6242 = vrot.slane %v1869, %v6241
        %v6243 = vlaneseq
        %v6244 = vshrl.u32 %v6243, 7
        %v6245 = vsub.s32 4, %v6244
        %v6246 = vrot.slane %v1874, %v6245
        %v6247 = vlaneseq
        %v6248 = vshrl.u32 %v6247, 7
        %v6249 = vsub.s32 4, %v6248
        %v6250 = vrot.slane %v1877, %v6249
        %v6251 = vlaneseq
        %v6252 = vshrl.u32 %v6251, 7
        %v6253 = vsub.s32 4, %v6252
        %v6254 = vrot.slane %v1882, %v6253
        %v6255 = vlaneseq
        %v6256 = vshrl.u32 %v6255, 7
        %v6257 = vsub.s32 4, %v6256
        %v6258 = vrot.slane %v1885, %v6257
        %v6259 = vlaneseq
        %v6260 = vshrl.u32 %v6259, 7
        %v6261 = vsub.s32 4, %v6260
        %v6262 = vrot.slane %v1890, %v6261
        %v6263 = vlaneseq
        %v6264 = vshrl.u32 %v6263, 7
        %v6265 = vsub.s32 4, %v6264
        %v6266 = vrot.slane %v1893, %v6265
        %v6267 = vlaneseq
        %v6268 = vshrl.u32 %v6267, 7
        %v6269 = vsub.s32 4, %v6268
        %v6270 = vrot.slane %v1898, %v6269
        %v6271 = vlaneseq
        %v6272 = vshrl.u32 %v6271, 7
        %v6273 = vsub.s32 4, %v6272
        %v6274 = vrot.slane %v1901, %v6273
        %v6275 = vmul.f32 %v6133, %v6214
        %v6276 = vmul.f32 %v6138, %v6218
        %v6277 = vmul.f32 %v6143, %v6222
        %v6278 = vmul.f32 %v6148, %v6226
        %v6279 = vmul.f32 %v6153, %v6230
        %v6280 = vmul.f32 %v6158, %v6234
        %v6281 = vmul.f32 %v6163, %v6238
        %v6282 = vmul.f32 %v6168, %v6242
        %v6283 = vmul.f32 %v6173, %v6246
        %v6284 = vmul.f32 %v6178, %v6250
        %v6285 = vmul.f32 %v6183, %v6254
        %v6286 = vmul.f32 %v6188, %v6258
        %v6287 = vmul.f32 %v6193, %v6262
        %v6288 = vmul.f32 %v6198, %v6266
        %v6289 = vmul.f32 %v6203, %v6270
        %v6290 = vmul.f32 %v6208, %v6274
        %v6291 = vadd.f32 %v6050, %v6275
        %v6292 = vadd.f32 %v6051, %v6276
        %v6293 = vadd.f32 %v6052, %v6277
        %v6294 = vadd.f32 %v6053, %v6278
        %v6295 = vadd.f32 %v6054, %v6279
        %v6296 = vadd.f32 %v6055, %v6280
        %v6297 = vadd.f32 %v6056, %v6281
        %v6298 = vadd.f32 %v6057, %v6282
        %v6299 = vadd.f32 %v6058, %v6283
        %v6300 = vadd.f32 %v6059, %v6284
        %v6301 = vadd.f32 %v6060, %v6285
        %v6302 = vadd.f32 %v6061, %v6286
        %v6303 = vadd.f32 %v6062, %v6287
        %v6304 = vadd.f32 %v6063, %v6288
        %v6305 = vadd.f32 %v6064, %v6289
        %v6306 = vadd.f32 %v6065, %v6290
        %6307 = vmatprep.subr.mxu0 0.0
        %6308 = vmatpush1.msra.mxu0 %v1988
        %6309 = vmatprep.subr.mxu0 0.0
        %6310 = vmatpush1.msra.mxu0 %v1989
        %6311 = vmatprep.subr.mxu0 0.0
        %6312 = vmatpush1.msra.mxu0 %v1990
        %6313 = vmatprep.subr.mxu0 0.0
        %6314 = vmatpush1.msra.mxu0 %v1991
        %6315 = vmatprep.subr.mxu0 0.0
        %6316 = vmatpush1.msra.mxu0 0.0
        %6317 = vmatprep.subr.mxu0 0.0
        %6318 = vmatpush1.msra.mxu0 0.0
        %6319 = vmatprep.subr.mxu0 0.0
        %6320 = vmatpush1.msra.mxu0 0.0
        %6321 = vmatprep.subr.mxu0 0.0
        %6322 = vmatpush1.msra.mxu0 0.0
        %6323 = vmatprep.subr.mxu0 0.0
        %6324 = vmatpush1.msra.mxu0 0.0
        %6325 = vmatprep.subr.mxu0 0.0
        %6326 = vmatpush1.msra.mxu0 0.0
        %6327 = vmatprep.subr.mxu0 0.0
        %6328 = vmatpush1.msra.mxu0 0.0
        %6329 = vmatprep.subr.mxu0 0.0
        %6330 = vmatpush1.msra.mxu0 0.0
        %6331 = vmatprep.subr.mxu0 0.0
        %6332 = vmatpush1.msra.mxu0 0.0
        %6333 = vmatprep.subr.mxu0 0.0
        %6334 = vmatpush1.msra.mxu0 0.0
        %6335 = vmatprep.subr.mxu0 0.0
        %6336 = vmatpush1.msra.mxu0 0.0
        %6337 = vmatprep.subr.mxu0 0.0
        %6338 = vmatpush1.msra.mxu0 0.0
        %6339 = vmatprep.subr.mxu0 0.0
        %6340 = vmatpush1.msra.mxu0 0.0
        %6341 = vmatprep.subr.mxu0 0.0
        %6342 = vmatpush1.msra.mxu0 0.0
        %6343 = vmatprep.subr.mxu0 0.0
        %6344 = vmatpush1.msra.mxu0 0.0
        %6345 = vmatprep.subr.mxu0 0.0
        %6346 = vmatpush1.msra.mxu0 0.0
        %6347 = vmatprep.subr.mxu0 0.0
        %6348 = vmatpush1.msra.mxu0 0.0
        %6349 = vmatprep.subr.mxu0 0.0
        %6350 = vmatpush1.msra.mxu0 0.0
        %6351 = vmatprep.subr.mxu0 0.0
        %6352 = vmatpush1.msra.mxu0 0.0
        %6353 = vmatprep.subr.mxu0 0.0
        %6354 = vmatpush1.msra.mxu0 0.0
        %6355 = vmatprep.subr.mxu0 0.0
        %6356 = vmatpush1.msra.mxu0 0.0
        %6357 = vmatprep.subr.mxu0 0.0
        %6358 = vmatpush1.msra.mxu0 0.0
        %6359 = vmatprep.subr.mxu0 0.0
        %6360 = vmatpush1.msra.mxu0 0.0
        %6361 = vmatprep.subr.mxu0 0.0
        %6362 = vmatpush1.msra.mxu0 0.0
        %6363 = vmatprep.subr.mxu0 0.0
        %6364 = vmatpush1.msra.mxu0 0.0
        %6365 = vmatprep.subr.mxu0 0.0
        %6366 = vmatpush1.msra.mxu0 0.0
        %6367 = vmatprep.subr.mxu0 0.0
        %6368 = vmatpush1.msra.mxu0 0.0
        %6369 = vmatprep.subr.mxu0 0.0
        %6370 = vmatpush1.msra.mxu0 0.0
        %6371 = vmatprep.mubr.f32.mxu0 0.0
        %6372 = vmatmul.mubr.f32.gmra.mrb[0].mxu0 %v4894
        %v6373 = vpop.f32.mrb[0].mxu0
        %v6374 = vadd.f32 0.0, %v6373
        %v6375 = vpop.f32.mrb[0].mxu0
        %6376 = vmatprep.mubr.f32.mxu0 0.0
        %6377 = vmatmul.mubr.f32.gmra.mrb[0].mxu0 %v4897
        %v6378 = vpop.f32.mrb[0].mxu0
        %v6379 = vadd.f32 0.0, %v6378
        %v6380 = vpop.f32.mrb[0].mxu0
        %6381 = vmatprep.mubr.f32.mxu0 0.0
        %6382 = vmatmul.mubr.f32.gmra.mrb[0].mxu0 %v4900
        %v6383 = vpop.f32.mrb[0].mxu0
        %v6384 = vadd.f32 0.0, %v6383
        %v6385 = vpop.f32.mrb[0].mxu0
        %6386 = vmatprep.mubr.f32.mxu0 0.0
        %6387 = vmatmul.mubr.f32.gmra.mrb[0].mxu0 %v4903
        %v6388 = vpop.f32.mrb[0].mxu0
        %v6389 = vadd.f32 0.0, %v6388
        %v6390 = vpop.f32.mrb[0].mxu0
        %6391 = vmatprep.mubr.f32.mxu0 0.0
        %6392 = vmatmul.mubr.f32.gmra.mrb[0].mxu0 %v4906
        %v6393 = vpop.f32.mrb[0].mxu0
        %v6394 = vadd.f32 0.0, %v6393
        %v6395 = vpop.f32.mrb[0].mxu0
        %6396 = vmatprep.mubr.f32.mxu0 0.0
        %6397 = vmatmul.mubr.f32.gmra.mrb[0].mxu0 %v4909
        %v6398 = vpop.f32.mrb[0].mxu0
        %v6399 = vadd.f32 0.0, %v6398
        %v6400 = vpop.f32.mrb[0].mxu0
        %6401 = vmatprep.mubr.f32.mxu0 0.0
        %6402 = vmatmul.mubr.f32.gmra.mrb[0].mxu0 %v4912
        %v6403 = vpop.f32.mrb[0].mxu0
        %v6404 = vadd.f32 0.0, %v6403
        %v6405 = vpop.f32.mrb[0].mxu0
        %6406 = vmatprep.mubr.f32.mxu0 0.0
        %6407 = vmatmul.mubr.f32.gmra.mrb[0].mxu0 %v4915
        %v6408 = vpop.f32.mrb[0].mxu0
        %v6409 = vadd.f32 0.0, %v6408
        %v6410 = vpop.f32.mrb[0].mxu0
        %6411 = vmatprep.mubr.f32.mxu0 0.0
        %6412 = vmatmul.mubr.f32.gmra.mrb[0].mxu0 %v4918
        %v6413 = vpop.f32.mrb[0].mxu0
        %v6414 = vadd.f32 0.0, %v6413
        %v6415 = vpop.f32.mrb[0].mxu0
        %6416 = vmatprep.mubr.f32.mxu0 0.0
        %6417 = vmatmul.mubr.f32.gmra.mrb[0].mxu0 %v4921
        %v6418 = vpop.f32.mrb[0].mxu0
        %v6419 = vadd.f32 0.0, %v6418
        %v6420 = vpop.f32.mrb[0].mxu0
        %6421 = vmatprep.mubr.f32.mxu0 0.0
        %6422 = vmatmul.mubr.f32.gmra.mrb[0].mxu0 %v4924
        %v6423 = vpop.f32.mrb[0].mxu0
        %v6424 = vadd.f32 0.0, %v6423
        %v6425 = vpop.f32.mrb[0].mxu0
        %6426 = vmatprep.mubr.f32.mxu0 0.0
        %6427 = vmatmul.mubr.f32.gmra.mrb[0].mxu0 %v4927
        %v6428 = vpop.f32.mrb[0].mxu0
        %v6429 = vadd.f32 0.0, %v6428
        %v6430 = vpop.f32.mrb[0].mxu0
        %6431 = vmatprep.mubr.f32.mxu0 0.0
        %6432 = vmatmul.mubr.f32.gmra.mrb[0].mxu0 %v4930
        %v6433 = vpop.f32.mrb[0].mxu0
        %v6434 = vadd.f32 0.0, %v6433
        %v6435 = vpop.f32.mrb[0].mxu0
        %6436 = vmatprep.mubr.f32.mxu0 0.0
        %6437 = vmatmul.mubr.f32.gmra.mrb[0].mxu0 %v4933
        %v6438 = vpop.f32.mrb[0].mxu0
        %v6439 = vadd.f32 0.0, %v6438
        %v6440 = vpop.f32.mrb[0].mxu0
        %6441 = vmatprep.mubr.f32.mxu0 0.0
        %6442 = vmatmul.mubr.f32.gmra.mrb[0].mxu0 %v4936
        %v6443 = vpop.f32.mrb[0].mxu0
        %v6444 = vadd.f32 0.0, %v6443
        %v6445 = vpop.f32.mrb[0].mxu0
        %6446 = vmatprep.mubr.f32.mxu0 0.0
        %6447 = vmatmul.mubr.f32.gmra.mrb[0].mxu0 %v4939
        %v6448 = vpop.f32.mrb[0].mxu0
        %v6449 = vadd.f32 0.0, %v6448
        %v6450 = vpop.f32.mrb[0].mxu0
        %6451 = vdwg.mxu0
        %v6452 = vlaneseq
        %v6453 = vshrl.u32 %v6452, 7
        %v6454 = vsub.s32 5, %v6453
        %v6455 = vrot.slane %v1842, %v6454
        %v6456 = vlaneseq
        %v6457 = vshrl.u32 %v6456, 7
        %v6458 = vsub.s32 5, %v6457
        %v6459 = vrot.slane %v1845, %v6458
        %v6460 = vlaneseq
        %v6461 = vshrl.u32 %v6460, 7
        %v6462 = vsub.s32 5, %v6461
        %v6463 = vrot.slane %v1850, %v6462
        %v6464 = vlaneseq
        %v6465 = vshrl.u32 %v6464, 7
        %v6466 = vsub.s32 5, %v6465
        %v6467 = vrot.slane %v1853, %v6466
        %v6468 = vlaneseq
        %v6469 = vshrl.u32 %v6468, 7
        %v6470 = vsub.s32 5, %v6469
        %v6471 = vrot.slane %v1858, %v6470
        %v6472 = vlaneseq
        %v6473 = vshrl.u32 %v6472, 7
        %v6474 = vsub.s32 5, %v6473
        %v6475 = vrot.slane %v1861, %v6474
        %v6476 = vlaneseq
        %v6477 = vshrl.u32 %v6476, 7
        %v6478 = vsub.s32 5, %v6477
        %v6479 = vrot.slane %v1866, %v6478
        %v6480 = vlaneseq
        %v6481 = vshrl.u32 %v6480, 7
        %v6482 = vsub.s32 5, %v6481
        %v6483 = vrot.slane %v1869, %v6482
        %v6484 = vlaneseq
        %v6485 = vshrl.u32 %v6484, 7
        %v6486 = vsub.s32 5, %v6485
        %v6487 = vrot.slane %v1874, %v6486
        %v6488 = vlaneseq
        %v6489 = vshrl.u32 %v6488, 7
        %v6490 = vsub.s32 5, %v6489
        %v6491 = vrot.slane %v1877, %v6490
        %v6492 = vlaneseq
        %v6493 = vshrl.u32 %v6492, 7
        %v6494 = vsub.s32 5, %v6493
        %v6495 = vrot.slane %v1882, %v6494
        %v6496 = vlaneseq
        %v6497 = vshrl.u32 %v6496, 7
        %v6498 = vsub.s32 5, %v6497
        %v6499 = vrot.slane %v1885, %v6498
        %v6500 = vlaneseq
        %v6501 = vshrl.u32 %v6500, 7
        %v6502 = vsub.s32 5, %v6501
        %v6503 = vrot.slane %v1890, %v6502
        %v6504 = vlaneseq
        %v6505 = vshrl.u32 %v6504, 7
        %v6506 = vsub.s32 5, %v6505
        %v6507 = vrot.slane %v1893, %v6506
        %v6508 = vlaneseq
        %v6509 = vshrl.u32 %v6508, 7
        %v6510 = vsub.s32 5, %v6509
        %v6511 = vrot.slane %v1898, %v6510
        %v6512 = vlaneseq
        %v6513 = vshrl.u32 %v6512, 7
        %v6514 = vsub.s32 5, %v6513
        %v6515 = vrot.slane %v1901, %v6514
        %v6516 = vmul.f32 %v6374, %v6455
        %v6517 = vmul.f32 %v6379, %v6459
        %v6518 = vmul.f32 %v6384, %v6463
        %v6519 = vmul.f32 %v6389, %v6467
        %v6520 = vmul.f32 %v6394, %v6471
        %v6521 = vmul.f32 %v6399, %v6475
        %v6522 = vmul.f32 %v6404, %v6479
        %v6523 = vmul.f32 %v6409, %v6483
        %v6524 = vmul.f32 %v6414, %v6487
        %v6525 = vmul.f32 %v6419, %v6491
        %v6526 = vmul.f32 %v6424, %v6495
        %v6527 = vmul.f32 %v6429, %v6499
        %v6528 = vmul.f32 %v6434, %v6503
        %v6529 = vmul.f32 %v6439, %v6507
        %v6530 = vmul.f32 %v6444, %v6511
        %v6531 = vmul.f32 %v6449, %v6515
        %v6532 = vadd.f32 %v6291, %v6516
        %v6533 = vadd.f32 %v6292, %v6517
        %v6534 = vadd.f32 %v6293, %v6518
        %v6535 = vadd.f32 %v6294, %v6519
        %v6536 = vadd.f32 %v6295, %v6520
        %v6537 = vadd.f32 %v6296, %v6521
        %v6538 = vadd.f32 %v6297, %v6522
        %v6539 = vadd.f32 %v6298, %v6523
        %v6540 = vadd.f32 %v6299, %v6524
        %v6541 = vadd.f32 %v6300, %v6525
        %v6542 = vadd.f32 %v6301, %v6526
        %v6543 = vadd.f32 %v6302, %v6527
        %v6544 = vadd.f32 %v6303, %v6528
        %v6545 = vadd.f32 %v6304, %v6529
        %v6546 = vadd.f32 %v6305, %v6530
        %v6547 = vadd.f32 %v6306, %v6531
        %6548 = vmatprep.subr.mxu0 0.0
        %6549 = vmatpush1.msra.mxu0 %v1992
        %6550 = vmatprep.subr.mxu0 0.0
        %6551 = vmatpush1.msra.mxu0 %v1993
        %6552 = vmatprep.subr.mxu0 0.0
        %6553 = vmatpush1.msra.mxu0 %v1994
        %6554 = vmatprep.subr.mxu0 0.0
        %6555 = vmatpush1.msra.mxu0 %v1995
        %6556 = vmatprep.subr.mxu0 0.0
        %6557 = vmatpush1.msra.mxu0 0.0
        %6558 = vmatprep.subr.mxu0 0.0
        %6559 = vmatpush1.msra.mxu0 0.0
        %6560 = vmatprep.subr.mxu0 0.0
        %6561 = vmatpush1.msra.mxu0 0.0
        %6562 = vmatprep.subr.mxu0 0.0
        %6563 = vmatpush1.msra.mxu0 0.0
        %6564 = vmatprep.subr.mxu0 0.0
        %6565 = vmatpush1.msra.mxu0 0.0
        %6566 = vmatprep.subr.mxu0 0.0
        %6567 = vmatpush1.msra.mxu0 0.0
        %6568 = vmatprep.subr.mxu0 0.0
        %6569 = vmatpush1.msra.mxu0 0.0
        %6570 = vmatprep.subr.mxu0 0.0
        %6571 = vmatpush1.msra.mxu0 0.0
        %6572 = vmatprep.subr.mxu0 0.0
        %6573 = vmatpush1.msra.mxu0 0.0
        %6574 = vmatprep.subr.mxu0 0.0
        %6575 = vmatpush1.msra.mxu0 0.0
        %6576 = vmatprep.subr.mxu0 0.0
        %6577 = vmatpush1.msra.mxu0 0.0
        %6578 = vmatprep.subr.mxu0 0.0
        %6579 = vmatpush1.msra.mxu0 0.0
        %6580 = vmatprep.subr.mxu0 0.0
        %6581 = vmatpush1.msra.mxu0 0.0
        %6582 = vmatprep.subr.mxu0 0.0
        %6583 = vmatpush1.msra.mxu0 0.0
        %6584 = vmatprep.subr.mxu0 0.0
        %6585 = vmatpush1.msra.mxu0 0.0
        %6586 = vmatprep.subr.mxu0 0.0
        %6587 = vmatpush1.msra.mxu0 0.0
        %6588 = vmatprep.subr.mxu0 0.0
        %6589 = vmatpush1.msra.mxu0 0.0
        %6590 = vmatprep.subr.mxu0 0.0
        %6591 = vmatpush1.msra.mxu0 0.0
        %6592 = vmatprep.subr.mxu0 0.0
        %6593 = vmatpush1.msra.mxu0 0.0
        %6594 = vmatprep.subr.mxu0 0.0
        %6595 = vmatpush1.msra.mxu0 0.0
        %6596 = vmatprep.subr.mxu0 0.0
        %6597 = vmatpush1.msra.mxu0 0.0
        %6598 = vmatprep.subr.mxu0 0.0
        %6599 = vmatpush1.msra.mxu0 0.0
        %6600 = vmatprep.subr.mxu0 0.0
        %6601 = vmatpush1.msra.mxu0 0.0
        %6602 = vmatprep.subr.mxu0 0.0
        %6603 = vmatpush1.msra.mxu0 0.0
        %6604 = vmatprep.subr.mxu0 0.0
        %6605 = vmatpush1.msra.mxu0 0.0
        %6606 = vmatprep.subr.mxu0 0.0
        %6607 = vmatpush1.msra.mxu0 0.0
        %6608 = vmatprep.subr.mxu0 0.0
        %6609 = vmatpush1.msra.mxu0 0.0
        %6610 = vmatprep.subr.mxu0 0.0
        %6611 = vmatpush1.msra.mxu0 0.0
        %6612 = vmatprep.mubr.f32.mxu0 0.0
        %6613 = vmatmul.mubr.f32.gmra.mrb[0].mxu0 %v4894
        %v6614 = vpop.f32.mrb[0].mxu0
        %v6615 = vadd.f32 0.0, %v6614
        %v6616 = vpop.f32.mrb[0].mxu0
        %6617 = vmatprep.mubr.f32.mxu0 0.0
        %6618 = vmatmul.mubr.f32.gmra.mrb[0].mxu0 %v4897
        %v6619 = vpop.f32.mrb[0].mxu0
        %v6620 = vadd.f32 0.0, %v6619
        %v6621 = vpop.f32.mrb[0].mxu0
        %6622 = vmatprep.mubr.f32.mxu0 0.0
        %6623 = vmatmul.mubr.f32.gmra.mrb[0].mxu0 %v4900
        %v6624 = vpop.f32.mrb[0].mxu0
        %v6625 = vadd.f32 0.0, %v6624
        %v6626 = vpop.f32.mrb[0].mxu0
        %6627 = vmatprep.mubr.f32.mxu0 0.0
        %6628 = vmatmul.mubr.f32.gmra.mrb[0].mxu0 %v4903
        %v6629 = vpop.f32.mrb[0].mxu0
        %v6630 = vadd.f32 0.0, %v6629
        %v6631 = vpop.f32.mrb[0].mxu0
        %6632 = vmatprep.mubr.f32.mxu0 0.0
        %6633 = vmatmul.mubr.f32.gmra.mrb[0].mxu0 %v4906
        %v6634 = vpop.f32.mrb[0].mxu0
        %v6635 = vadd.f32 0.0, %v6634
        %v6636 = vpop.f32.mrb[0].mxu0
        %6637 = vmatprep.mubr.f32.mxu0 0.0
        %6638 = vmatmul.mubr.f32.gmra.mrb[0].mxu0 %v4909
        %v6639 = vpop.f32.mrb[0].mxu0
        %v6640 = vadd.f32 0.0, %v6639
        %v6641 = vpop.f32.mrb[0].mxu0
        %6642 = vmatprep.mubr.f32.mxu0 0.0
        %6643 = vmatmul.mubr.f32.gmra.mrb[0].mxu0 %v4912
        %v6644 = vpop.f32.mrb[0].mxu0
        %v6645 = vadd.f32 0.0, %v6644
        %v6646 = vpop.f32.mrb[0].mxu0
        %6647 = vmatprep.mubr.f32.mxu0 0.0
        %6648 = vmatmul.mubr.f32.gmra.mrb[0].mxu0 %v4915
        %v6649 = vpop.f32.mrb[0].mxu0
        %v6650 = vadd.f32 0.0, %v6649
        %v6651 = vpop.f32.mrb[0].mxu0
        %6652 = vmatprep.mubr.f32.mxu0 0.0
        %6653 = vmatmul.mubr.f32.gmra.mrb[0].mxu0 %v4918
        %v6654 = vpop.f32.mrb[0].mxu0
        %v6655 = vadd.f32 0.0, %v6654
        %v6656 = vpop.f32.mrb[0].mxu0
        %6657 = vmatprep.mubr.f32.mxu0 0.0
        %6658 = vmatmul.mubr.f32.gmra.mrb[0].mxu0 %v4921
        %v6659 = vpop.f32.mrb[0].mxu0
        %v6660 = vadd.f32 0.0, %v6659
        %v6661 = vpop.f32.mrb[0].mxu0
        %6662 = vmatprep.mubr.f32.mxu0 0.0
        %6663 = vmatmul.mubr.f32.gmra.mrb[0].mxu0 %v4924
        %v6664 = vpop.f32.mrb[0].mxu0
        %v6665 = vadd.f32 0.0, %v6664
        %v6666 = vpop.f32.mrb[0].mxu0
        %6667 = vmatprep.mubr.f32.mxu0 0.0
        %6668 = vmatmul.mubr.f32.gmra.mrb[0].mxu0 %v4927
        %v6669 = vpop.f32.mrb[0].mxu0
        %v6670 = vadd.f32 0.0, %v6669
        %v6671 = vpop.f32.mrb[0].mxu0
        %6672 = vmatprep.mubr.f32.mxu0 0.0
        %6673 = vmatmul.mubr.f32.gmra.mrb[0].mxu0 %v4930
        %v6674 = vpop.f32.mrb[0].mxu0
        %v6675 = vadd.f32 0.0, %v6674
        %v6676 = vpop.f32.mrb[0].mxu0
        %6677 = vmatprep.mubr.f32.mxu0 0.0
        %6678 = vmatmul.mubr.f32.gmra.mrb[0].mxu0 %v4933
        %v6679 = vpop.f32.mrb[0].mxu0
        %v6680 = vadd.f32 0.0, %v6679
        %v6681 = vpop.f32.mrb[0].mxu0
        %6682 = vmatprep.mubr.f32.mxu0 0.0
        %6683 = vmatmul.mubr.f32.gmra.mrb[0].mxu0 %v4936
        %v6684 = vpop.f32.mrb[0].mxu0
        %v6685 = vadd.f32 0.0, %v6684
        %v6686 = vpop.f32.mrb[0].mxu0
        %6687 = vmatprep.mubr.f32.mxu0 0.0
        %6688 = vmatmul.mubr.f32.gmra.mrb[0].mxu0 %v4939
        %v6689 = vpop.f32.mrb[0].mxu0
        %v6690 = vadd.f32 0.0, %v6689
        %v6691 = vpop.f32.mrb[0].mxu0
        %6692 = vdwg.mxu0
        %v6693 = vlaneseq
        %v6694 = vshrl.u32 %v6693, 7
        %v6695 = vsub.s32 6, %v6694
        %v6696 = vrot.slane %v1842, %v6695
        %v6697 = vlaneseq
        %v6698 = vshrl.u32 %v6697, 7
        %v6699 = vsub.s32 6, %v6698
        %v6700 = vrot.slane %v1845, %v6699
        %v6701 = vlaneseq
        %v6702 = vshrl.u32 %v6701, 7
        %v6703 = vsub.s32 6, %v6702
        %v6704 = vrot.slane %v1850, %v6703
        %v6705 = vlaneseq
        %v6706 = vshrl.u32 %v6705, 7
        %v6707 = vsub.s32 6, %v6706
        %v6708 = vrot.slane %v1853, %v6707
        %v6709 = vlaneseq
        %v6710 = vshrl.u32 %v6709, 7
        %v6711 = vsub.s32 6, %v6710
        %v6712 = vrot.slane %v1858, %v6711
        %v6713 = vlaneseq
        %v6714 = vshrl.u32 %v6713, 7
        %v6715 = vsub.s32 6, %v6714
        %v6716 = vrot.slane %v1861, %v6715
        %v6717 = vlaneseq
        %v6718 = vshrl.u32 %v6717, 7
        %v6719 = vsub.s32 6, %v6718
        %v6720 = vrot.slane %v1866, %v6719
        %v6721 = vlaneseq
        %v6722 = vshrl.u32 %v6721, 7
        %v6723 = vsub.s32 6, %v6722
        %v6724 = vrot.slane %v1869, %v6723
        %v6725 = vlaneseq
        %v6726 = vshrl.u32 %v6725, 7
        %v6727 = vsub.s32 6, %v6726
        %v6728 = vrot.slane %v1874, %v6727
        %v6729 = vlaneseq
        %v6730 = vshrl.u32 %v6729, 7
        %v6731 = vsub.s32 6, %v6730
        %v6732 = vrot.slane %v1877, %v6731
        %v6733 = vlaneseq
        %v6734 = vshrl.u32 %v6733, 7
        %v6735 = vsub.s32 6, %v6734
        %v6736 = vrot.slane %v1882, %v6735
        %v6737 = vlaneseq
        %v6738 = vshrl.u32 %v6737, 7
        %v6739 = vsub.s32 6, %v6738
        %v6740 = vrot.slane %v1885, %v6739
        %v6741 = vlaneseq
        %v6742 = vshrl.u32 %v6741, 7
        %v6743 = vsub.s32 6, %v6742
        %v6744 = vrot.slane %v1890, %v6743
        %v6745 = vlaneseq
        %v6746 = vshrl.u32 %v6745, 7
        %v6747 = vsub.s32 6, %v6746
        %v6748 = vrot.slane %v1893, %v6747
        %v6749 = vlaneseq
        %v6750 = vshrl.u32 %v6749, 7
        %v6751 = vsub.s32 6, %v6750
        %v6752 = vrot.slane %v1898, %v6751
        %v6753 = vlaneseq
        %v6754 = vshrl.u32 %v6753, 7
        %v6755 = vsub.s32 6, %v6754
        %v6756 = vrot.slane %v1901, %v6755
        %v6757 = vmul.f32 %v6615, %v6696
        %v6758 = vmul.f32 %v6620, %v6700
        %v6759 = vmul.f32 %v6625, %v6704
        %v6760 = vmul.f32 %v6630, %v6708
        %v6761 = vmul.f32 %v6635, %v6712
        %v6762 = vmul.f32 %v6640, %v6716
        %v6763 = vmul.f32 %v6645, %v6720
        %v6764 = vmul.f32 %v6650, %v6724
        %v6765 = vmul.f32 %v6655, %v6728
        %v6766 = vmul.f32 %v6660, %v6732
        %v6767 = vmul.f32 %v6665, %v6736
        %v6768 = vmul.f32 %v6670, %v6740
        %v6769 = vmul.f32 %v6675, %v6744
        %v6770 = vmul.f32 %v6680, %v6748
        %v6771 = vmul.f32 %v6685, %v6752
        %v6772 = vmul.f32 %v6690, %v6756
        %v6773 = vadd.f32 %v6532, %v6757
        %v6774 = vadd.f32 %v6533, %v6758
        %v6775 = vadd.f32 %v6534, %v6759
        %v6776 = vadd.f32 %v6535, %v6760
        %v6777 = vadd.f32 %v6536, %v6761
        %v6778 = vadd.f32 %v6537, %v6762
        %v6779 = vadd.f32 %v6538, %v6763
        %v6780 = vadd.f32 %v6539, %v6764
        %v6781 = vadd.f32 %v6540, %v6765
        %v6782 = vadd.f32 %v6541, %v6766
        %v6783 = vadd.f32 %v6542, %v6767
        %v6784 = vadd.f32 %v6543, %v6768
        %v6785 = vadd.f32 %v6544, %v6769
        %v6786 = vadd.f32 %v6545, %v6770
        %v6787 = vadd.f32 %v6546, %v6771
        %v6788 = vadd.f32 %v6547, %v6772
        %6789 = vmatprep.subr.mxu0 0.0
        %6790 = vmatpush1.msra.mxu0 %v1996
        %6791 = vmatprep.subr.mxu0 0.0
        %6792 = vmatpush1.msra.mxu0 %v1997
        %6793 = vmatprep.subr.mxu0 0.0
        %6794 = vmatpush1.msra.mxu0 %v1998
        %6795 = vmatprep.subr.mxu0 0.0
        %6796 = vmatpush1.msra.mxu0 %v1999
        %6797 = vmatprep.subr.mxu0 0.0
        %6798 = vmatpush1.msra.mxu0 0.0
        %6799 = vmatprep.subr.mxu0 0.0
        %6800 = vmatpush1.msra.mxu0 0.0
        %6801 = vmatprep.subr.mxu0 0.0
        %6802 = vmatpush1.msra.mxu0 0.0
        %6803 = vmatprep.subr.mxu0 0.0
        %6804 = vmatpush1.msra.mxu0 0.0
        %6805 = vmatprep.subr.mxu0 0.0
        %6806 = vmatpush1.msra.mxu0 0.0
        %6807 = vmatprep.subr.mxu0 0.0
        %6808 = vmatpush1.msra.mxu0 0.0
        %6809 = vmatprep.subr.mxu0 0.0
        %6810 = vmatpush1.msra.mxu0 0.0
        %6811 = vmatprep.subr.mxu0 0.0
        %6812 = vmatpush1.msra.mxu0 0.0
        %6813 = vmatprep.subr.mxu0 0.0
        %6814 = vmatpush1.msra.mxu0 0.0
        %6815 = vmatprep.subr.mxu0 0.0
        %6816 = vmatpush1.msra.mxu0 0.0
        %6817 = vmatprep.subr.mxu0 0.0
        %6818 = vmatpush1.msra.mxu0 0.0
        %6819 = vmatprep.subr.mxu0 0.0
        %6820 = vmatpush1.msra.mxu0 0.0
        %6821 = vmatprep.subr.mxu0 0.0
        %6822 = vmatpush1.msra.mxu0 0.0
        %6823 = vmatprep.subr.mxu0 0.0
        %6824 = vmatpush1.msra.mxu0 0.0
        %6825 = vmatprep.subr.mxu0 0.0
        %6826 = vmatpush1.msra.mxu0 0.0
        %6827 = vmatprep.subr.mxu0 0.0
        %6828 = vmatpush1.msra.mxu0 0.0
        %6829 = vmatprep.subr.mxu0 0.0
        %6830 = vmatpush1.msra.mxu0 0.0
        %6831 = vmatprep.subr.mxu0 0.0
        %6832 = vmatpush1.msra.mxu0 0.0
        %6833 = vmatprep.subr.mxu0 0.0
        %6834 = vmatpush1.msra.mxu0 0.0
        %6835 = vmatprep.subr.mxu0 0.0
        %6836 = vmatpush1.msra.mxu0 0.0
        %6837 = vmatprep.subr.mxu0 0.0
        %6838 = vmatpush1.msra.mxu0 0.0
        %6839 = vmatprep.subr.mxu0 0.0
        %6840 = vmatpush1.msra.mxu0 0.0
        %6841 = vmatprep.subr.mxu0 0.0
        %6842 = vmatpush1.msra.mxu0 0.0
        %6843 = vmatprep.subr.mxu0 0.0
        %6844 = vmatpush1.msra.mxu0 0.0
        %6845 = vmatprep.subr.mxu0 0.0
        %6846 = vmatpush1.msra.mxu0 0.0
        %6847 = vmatprep.subr.mxu0 0.0
        %6848 = vmatpush1.msra.mxu0 0.0
        %6849 = vmatprep.subr.mxu0 0.0
        %6850 = vmatpush1.msra.mxu0 0.0
        %6851 = vmatprep.subr.mxu0 0.0
        %6852 = vmatpush1.msra.mxu0 0.0
        %6853 = vmatprep.mubr.f32.mxu0 0.0
        %6854 = vmatmul.mubr.f32.gmra.mrb[0].mxu0 %v4894
        %v6855 = vpop.f32.mrb[0].mxu0
        %v6856 = vadd.f32 0.0, %v6855
        %v6857 = vpop.f32.mrb[0].mxu0
        %6858 = vmatprep.mubr.f32.mxu0 0.0
        %6859 = vmatmul.mubr.f32.gmra.mrb[0].mxu0 %v4897
        %v6860 = vpop.f32.mrb[0].mxu0
        %v6861 = vadd.f32 0.0, %v6860
        %v6862 = vpop.f32.mrb[0].mxu0
        %6863 = vmatprep.mubr.f32.mxu0 0.0
        %6864 = vmatmul.mubr.f32.gmra.mrb[0].mxu0 %v4900
        %v6865 = vpop.f32.mrb[0].mxu0
        %v6866 = vadd.f32 0.0, %v6865
        %v6867 = vpop.f32.mrb[0].mxu0
        %6868 = vmatprep.mubr.f32.mxu0 0.0
        %6869 = vmatmul.mubr.f32.gmra.mrb[0].mxu0 %v4903
        %v6870 = vpop.f32.mrb[0].mxu0
        %v6871 = vadd.f32 0.0, %v6870
        %v6872 = vpop.f32.mrb[0].mxu0
        %6873 = vmatprep.mubr.f32.mxu0 0.0
        %6874 = vmatmul.mubr.f32.gmra.mrb[0].mxu0 %v4906
        %v6875 = vpop.f32.mrb[0].mxu0
        %v6876 = vadd.f32 0.0, %v6875
        %v6877 = vpop.f32.mrb[0].mxu0
        %6878 = vmatprep.mubr.f32.mxu0 0.0
        %6879 = vmatmul.mubr.f32.gmra.mrb[0].mxu0 %v4909
        %v6880 = vpop.f32.mrb[0].mxu0
        %v6881 = vadd.f32 0.0, %v6880
        %v6882 = vpop.f32.mrb[0].mxu0
        %6883 = vmatprep.mubr.f32.mxu0 0.0
        %6884 = vmatmul.mubr.f32.gmra.mrb[0].mxu0 %v4912
        %v6885 = vpop.f32.mrb[0].mxu0
        %v6886 = vadd.f32 0.0, %v6885
        %v6887 = vpop.f32.mrb[0].mxu0
        %6888 = vmatprep.mubr.f32.mxu0 0.0
        %6889 = vmatmul.mubr.f32.gmra.mrb[0].mxu0 %v4915
        %v6890 = vpop.f32.mrb[0].mxu0
        %v6891 = vadd.f32 0.0, %v6890
        %v6892 = vpop.f32.mrb[0].mxu0
        %6893 = vmatprep.mubr.f32.mxu0 0.0
        %6894 = vmatmul.mubr.f32.gmra.mrb[0].mxu0 %v4918
        %v6895 = vpop.f32.mrb[0].mxu0
        %v6896 = vadd.f32 0.0, %v6895
        %v6897 = vpop.f32.mrb[0].mxu0
        %6898 = vmatprep.mubr.f32.mxu0 0.0
        %6899 = vmatmul.mubr.f32.gmra.mrb[0].mxu0 %v4921
        %v6900 = vpop.f32.mrb[0].mxu0
        %v6901 = vadd.f32 0.0, %v6900
        %v6902 = vpop.f32.mrb[0].mxu0
        %6903 = vmatprep.mubr.f32.mxu0 0.0
        %6904 = vmatmul.mubr.f32.gmra.mrb[0].mxu0 %v4924
        %v6905 = vpop.f32.mrb[0].mxu0
        %v6906 = vadd.f32 0.0, %v6905
        %v6907 = vpop.f32.mrb[0].mxu0
        %6908 = vmatprep.mubr.f32.mxu0 0.0
        %6909 = vmatmul.mubr.f32.gmra.mrb[0].mxu0 %v4927
        %v6910 = vpop.f32.mrb[0].mxu0
        %v6911 = vadd.f32 0.0, %v6910
        %v6912 = vpop.f32.mrb[0].mxu0
        %6913 = vmatprep.mubr.f32.mxu0 0.0
        %6914 = vmatmul.mubr.f32.gmra.mrb[0].mxu0 %v4930
        %v6915 = vpop.f32.mrb[0].mxu0
        %v6916 = vadd.f32 0.0, %v6915
        %v6917 = vpop.f32.mrb[0].mxu0
        %6918 = vmatprep.mubr.f32.mxu0 0.0
        %6919 = vmatmul.mubr.f32.gmra.mrb[0].mxu0 %v4933
        %v6920 = vpop.f32.mrb[0].mxu0
        %v6921 = vadd.f32 0.0, %v6920
        %v6922 = vpop.f32.mrb[0].mxu0
        %6923 = vmatprep.mubr.f32.mxu0 0.0
        %6924 = vmatmul.mubr.f32.gmra.mrb[0].mxu0 %v4936
        %v6925 = vpop.f32.mrb[0].mxu0
        %v6926 = vadd.f32 0.0, %v6925
        %v6927 = vpop.f32.mrb[0].mxu0
        %6928 = vmatprep.mubr.f32.mxu0 0.0
        %6929 = vmatmul.mubr.f32.gmra.mrb[0].mxu0 %v4939
        %v6930 = vpop.f32.mrb[0].mxu0
        %v6931 = vadd.f32 0.0, %v6930
        %v6932 = vpop.f32.mrb[0].mxu0
        %6933 = vdwg.mxu0
        %v6934 = vlaneseq
        %v6935 = vshrl.u32 %v6934, 7
        %v6936 = vsub.s32 7, %v6935
        %v6937 = vrot.slane %v1842, %v6936
        %v6938 = vlaneseq
        %v6939 = vshrl.u32 %v6938, 7
        %v6940 = vsub.s32 7, %v6939
        %v6941 = vrot.slane %v1845, %v6940
        %v6942 = vlaneseq
        %v6943 = vshrl.u32 %v6942, 7
        %v6944 = vsub.s32 7, %v6943
        %v6945 = vrot.slane %v1850, %v6944
        %v6946 = vlaneseq
        %v6947 = vshrl.u32 %v6946, 7
        %v6948 = vsub.s32 7, %v6947
        %v6949 = vrot.slane %v1853, %v6948
        %v6950 = vlaneseq
        %v6951 = vshrl.u32 %v6950, 7
        %v6952 = vsub.s32 7, %v6951
        %v6953 = vrot.slane %v1858, %v6952
        %v6954 = vlaneseq
        %v6955 = vshrl.u32 %v6954, 7
        %v6956 = vsub.s32 7, %v6955
        %v6957 = vrot.slane %v1861, %v6956
        %v6958 = vlaneseq
        %v6959 = vshrl.u32 %v6958, 7
        %v6960 = vsub.s32 7, %v6959
        %v6961 = vrot.slane %v1866, %v6960
        %v6962 = vlaneseq
        %v6963 = vshrl.u32 %v6962, 7
        %v6964 = vsub.s32 7, %v6963
        %v6965 = vrot.slane %v1869, %v6964
        %v6966 = vlaneseq
        %v6967 = vshrl.u32 %v6966, 7
        %v6968 = vsub.s32 7, %v6967
        %v6969 = vrot.slane %v1874, %v6968
        %v6970 = vlaneseq
        %v6971 = vshrl.u32 %v6970, 7
        %v6972 = vsub.s32 7, %v6971
        %v6973 = vrot.slane %v1877, %v6972
        %v6974 = vlaneseq
        %v6975 = vshrl.u32 %v6974, 7
        %v6976 = vsub.s32 7, %v6975
        %v6977 = vrot.slane %v1882, %v6976
        %v6978 = vlaneseq
        %v6979 = vshrl.u32 %v6978, 7
        %v6980 = vsub.s32 7, %v6979
        %v6981 = vrot.slane %v1885, %v6980
        %v6982 = vlaneseq
        %v6983 = vshrl.u32 %v6982, 7
        %v6984 = vsub.s32 7, %v6983
        %v6985 = vrot.slane %v1890, %v6984
        %v6986 = vlaneseq
        %v6987 = vshrl.u32 %v6986, 7
        %v6988 = vsub.s32 7, %v6987
        %v6989 = vrot.slane %v1893, %v6988
        %v6990 = vlaneseq
        %v6991 = vshrl.u32 %v6990, 7
        %v6992 = vsub.s32 7, %v6991
        %v6993 = vrot.slane %v1898, %v6992
        %v6994 = vlaneseq
        %v6995 = vshrl.u32 %v6994, 7
        %v6996 = vsub.s32 7, %v6995
        %v6997 = vrot.slane %v1901, %v6996
        %v6998 = vmul.f32 %v6856, %v6937
        %v6999 = vmul.f32 %v6861, %v6941
        %v7000 = vmul.f32 %v6866, %v6945
        %v7001 = vmul.f32 %v6871, %v6949
        %v7002 = vmul.f32 %v6876, %v6953
        %v7003 = vmul.f32 %v6881, %v6957
        %v7004 = vmul.f32 %v6886, %v6961
        %v7005 = vmul.f32 %v6891, %v6965
        %v7006 = vmul.f32 %v6896, %v6969
        %v7007 = vmul.f32 %v6901, %v6973
        %v7008 = vmul.f32 %v6906, %v6977
        %v7009 = vmul.f32 %v6911, %v6981
        %v7010 = vmul.f32 %v6916, %v6985
        %v7011 = vmul.f32 %v6921, %v6989
        %v7012 = vmul.f32 %v6926, %v6993
        %v7013 = vmul.f32 %v6931, %v6997
        %v7014 = vadd.f32 %v6773, %v6998
        %v7015 = vadd.f32 %v6774, %v6999
        %v7016 = vadd.f32 %v6775, %v7000
        %v7017 = vadd.f32 %v6776, %v7001
        %v7018 = vadd.f32 %v6777, %v7002
        %v7019 = vadd.f32 %v6778, %v7003
        %v7020 = vadd.f32 %v6779, %v7004
        %v7021 = vadd.f32 %v6780, %v7005
        %v7022 = vadd.f32 %v6781, %v7006
        %v7023 = vadd.f32 %v6782, %v7007
        %v7024 = vadd.f32 %v6783, %v7008
        %v7025 = vadd.f32 %v6784, %v7009
        %v7026 = vadd.f32 %v6785, %v7010
        %v7027 = vadd.f32 %v6786, %v7011
        %v7028 = vadd.f32 %v6787, %v7012
        %v7029 = vadd.f32 %v6788, %v7013
        %v7030 = vmul.f32 %v7014, %v5086
        %v7031 = vmul.f32 %v7015, %v5087
        %v7032 = vmul.f32 %v7016, %v5088
        %v7033 = vmul.f32 %v7017, %v5089
        %v7034 = vmul.f32 %v7018, %v5090
        %v7035 = vmul.f32 %v7019, %v5091
        %v7036 = vmul.f32 %v7020, %v5092
        %v7037 = vmul.f32 %v7021, %v5093
        %v7038 = vmul.f32 %v7022, %v5094
        %v7039 = vmul.f32 %v7023, %v5095
        %v7040 = vmul.f32 %v7024, %v5096
        %v7041 = vmul.f32 %v7025, %v5097
        %v7042 = vmul.f32 %v7026, %v5098
        %v7043 = vmul.f32 %v7027, %v5099
        %v7044 = vmul.f32 %v7028, %v5100
        %v7045 = vmul.f32 %v7029, %v5101
        %v7046 = vpack.c.bf16 %v7031, %v7030
        %v7047 = vpack.c.bf16 %v7033, %v7032
        %v7048 = vpack.c.bf16 %v7035, %v7034
        %v7049 = vpack.c.bf16 %v7037, %v7036
        %v7050 = vpack.c.bf16 %v7039, %v7038
        %v7051 = vpack.c.bf16 %v7041, %v7040
        %v7052 = vpack.c.bf16 %v7043, %v7042
        %v7053 = vpack.c.bf16 %v7045, %v7044
        %v7054 = vld [vmem:[%s8] sm:$0xf]
        %v7055 = vld [vmem:[%s8 + $0x4] sm:$0xf]
        %v7056 = vld [vmem:[%s8 + $0x8] sm:$0xf]
        %v7057 = vld [vmem:[%s8 + $0xc] sm:$0xf]
        %v7058 = vlaneseq
        %v7059 = vshrl.u32 %v7058, 7
        %v7060 = vsub.s32 1, %v7059
        %v7061 = vrot.slane %v514, %v7060
        %v7066 = vunpack.c.l.b16 %v7054
        %v7067 = vunpack.c.l.b16 %v7055
        %v7068 = vunpack.c.l.b16 %v7056
        %v7069 = vunpack.c.l.b16 %v7057
        %v7070 = vpack.c.b16 %v7067, %v7066
        %v7071 = vpack.c.b16 %v7069, %v7068
        %v7075 = vsel %vm532, %v7046, 0
        %v7078 = vsel %vm532, %v7047, 0
        %v7081 = vsel %vm532, %v7048, 0
        %v7084 = vsel %vm532, %v7049, 0
        %v7087 = vsel %vm532, %v7050, 0
        %v7090 = vsel %vm532, %v7051, 0
        %v7093 = vsel %vm532, %v7052, 0
        %v7096 = vsel %vm532, %v7053, 0
        %7098 = vmatprep.subr.bf16.mxu0 0
        %7099 = vmatpush1.bf16.msra.mxu0 %v7070
        %7100 = vmatprep.subr.bf16.mxu0 0
        %7101 = vmatpush1.bf16.msra.mxu0 %v7071
        %7102 = vmatprep.subr.bf16.mxu0 0
        %7103 = vmatpush1.bf16.msra.mxu0 0
        %7104 = vmatprep.subr.bf16.mxu0 0
        %7105 = vmatpush1.bf16.msra.mxu0 0
        %7106 = vmatprep.subr.bf16.mxu0 0
        %7107 = vmatpush1.bf16.msra.mxu0 0
        %7108 = vmatprep.subr.bf16.mxu0 0
        %7109 = vmatpush1.bf16.msra.mxu0 0
        %7110 = vmatprep.subr.bf16.mxu0 0
        %7111 = vmatpush1.bf16.msra.mxu0 0
        %7112 = vmatprep.subr.bf16.mxu0 0
        %7113 = vmatpush1.bf16.msra.mxu0 0
        %7114 = vmatprep.subr.bf16.mxu0 0
        %7115 = vmatpush1.bf16.msra.mxu0 0
        %7116 = vmatprep.subr.bf16.mxu0 0
        %7117 = vmatpush1.bf16.msra.mxu0 0
        %7118 = vmatprep.subr.bf16.mxu0 0
        %7119 = vmatpush1.bf16.msra.mxu0 0
        %7120 = vmatprep.subr.bf16.mxu0 0
        %7121 = vmatpush1.bf16.msra.mxu0 0
        %7122 = vmatprep.subr.bf16.mxu0 0
        %7123 = vmatpush1.bf16.msra.mxu0 0
        %7124 = vmatprep.subr.bf16.mxu0 0
        %7125 = vmatpush1.bf16.msra.mxu0 0
        %7126 = vmatprep.subr.bf16.mxu0 0
        %7127 = vmatpush1.bf16.msra.mxu0 0
        %7128 = vmatprep.subr.bf16.mxu0 0
        %7129 = vmatpush1.bf16.msra.mxu0 0
        %7130 = vmatprep.mubr.bf16.mxu0 0
        %7131 = vmatmul.mubr.bf16.gmra.mrb[0].mxu0 %v7075
        %v7132 = vpop.f32.mrb[0].mxu0
        %v7133 = vadd.f32 %v7061, %v7132
        %v7134 = vpop.f32.mrb[0].mxu0
        %v7135 = vpop.f32.mrb[0].mxu0
        %v7136 = vadd.f32 %v7061, %v7135
        %v7137 = vpop.f32.mrb[0].mxu0
        %7138 = vmatprep.mubr.bf16.mxu0 0
        %7139 = vmatmul.mubr.bf16.gmra.mrb[0].mxu0 %v7078
        %v7140 = vpop.f32.mrb[0].mxu0
        %v7141 = vadd.f32 %v7061, %v7140
        %v7142 = vpop.f32.mrb[0].mxu0
        %v7143 = vpop.f32.mrb[0].mxu0
        %v7144 = vadd.f32 %v7061, %v7143
        %v7145 = vpop.f32.mrb[0].mxu0
        %7146 = vmatprep.mubr.bf16.mxu0 0
        %7147 = vmatmul.mubr.bf16.gmra.mrb[0].mxu0 %v7081
        %v7148 = vpop.f32.mrb[0].mxu0
        %v7149 = vadd.f32 %v7061, %v7148
        %v7150 = vpop.f32.mrb[0].mxu0
        %v7151 = vpop.f32.mrb[0].mxu0
        %v7152 = vadd.f32 %v7061, %v7151
        %v7153 = vpop.f32.mrb[0].mxu0
        %7154 = vmatprep.mubr.bf16.mxu0 0
        %7155 = vmatmul.mubr.bf16.gmra.mrb[0].mxu0 %v7084
        %v7156 = vpop.f32.mrb[0].mxu0
        %v7157 = vadd.f32 %v7061, %v7156
        %v7158 = vpop.f32.mrb[0].mxu0
        %v7159 = vpop.f32.mrb[0].mxu0
        %v7160 = vadd.f32 %v7061, %v7159
        %v7161 = vpop.f32.mrb[0].mxu0
        %7162 = vmatprep.mubr.bf16.mxu0 0
        %7163 = vmatmul.mubr.bf16.gmra.mrb[0].mxu0 %v7087
        %v7164 = vpop.f32.mrb[0].mxu0
        %v7165 = vadd.f32 %v7061, %v7164
        %v7166 = vpop.f32.mrb[0].mxu0
        %v7167 = vpop.f32.mrb[0].mxu0
        %v7168 = vadd.f32 %v7061, %v7167
        %v7169 = vpop.f32.mrb[0].mxu0
        %7170 = vmatprep.mubr.bf16.mxu0 0
        %7171 = vmatmul.mubr.bf16.gmra.mrb[0].mxu0 %v7090
        %v7172 = vpop.f32.mrb[0].mxu0
        %v7173 = vadd.f32 %v7061, %v7172
        %v7174 = vpop.f32.mrb[0].mxu0
        %v7175 = vpop.f32.mrb[0].mxu0
        %v7176 = vadd.f32 %v7061, %v7175
        %v7177 = vpop.f32.mrb[0].mxu0
        %7178 = vmatprep.mubr.bf16.mxu0 0
        %7179 = vmatmul.mubr.bf16.gmra.mrb[0].mxu0 %v7093
        %v7180 = vpop.f32.mrb[0].mxu0
        %v7181 = vadd.f32 %v7061, %v7180
        %v7182 = vpop.f32.mrb[0].mxu0
        %v7183 = vpop.f32.mrb[0].mxu0
        %v7184 = vadd.f32 %v7061, %v7183
        %v7185 = vpop.f32.mrb[0].mxu0
        %7186 = vmatprep.mubr.bf16.mxu0 0
        %7187 = vmatmul.mubr.bf16.gmra.mrb[0].mxu0 %v7096
        %v7188 = vpop.f32.mrb[0].mxu0
        %v7189 = vadd.f32 %v7061, %v7188
        %v7190 = vpop.f32.mrb[0].mxu0
        %v7191 = vpop.f32.mrb[0].mxu0
        %v7192 = vadd.f32 %v7061, %v7191
        %v7193 = vpop.f32.mrb[0].mxu0
        %7194 = vdwg.mxu0
        %v7195 = vadd.f32 %v516, %v7133
        %v7196 = vadd.f32 %v517, %v7136
        %v7197 = vadd.f32 %v518, %v7141
        %v7198 = vadd.f32 %v519, %v7144
        %v7199 = vadd.f32 %v520, %v7149
        %v7200 = vadd.f32 %v521, %v7152
        %v7201 = vadd.f32 %v522, %v7157
        %v7202 = vadd.f32 %v523, %v7160
        %v7203 = vadd.f32 %v524, %v7165
        %v7204 = vadd.f32 %v525, %v7168
        %v7205 = vadd.f32 %v526, %v7173
        %v7206 = vadd.f32 %v527, %v7176
        %v7207 = vadd.f32 %v528, %v7181
        %v7208 = vadd.f32 %v529, %v7184
        %v7209 = vadd.f32 %v530, %v7189
        %v7210 = vadd.f32 %v531, %v7192
        %v7211 = vsel %vm532, %v7195, 0.0
        %7212 = vadd.xlane.f32.xlu0 %v7211
        %v7213 = vpop.xlane.xlu0 %7212
        %v7214 = vsel %vm532, %v7196, 0.0
        %7215 = vadd.xlane.f32.xlu0 %v7214
        %v7216 = vpop.xlane.xlu0 %7215
        %v7217 = vsel %vm532, %v7197, 0.0
        %7218 = vadd.xlane.f32.xlu0 %v7217
        %v7219 = vpop.xlane.xlu0 %7218
        %v7220 = vsel %vm532, %v7198, 0.0
        %7221 = vadd.xlane.f32.xlu0 %v7220
        %v7222 = vpop.xlane.xlu0 %7221
        %v7223 = vsel %vm532, %v7199, 0.0
        %7224 = vadd.xlane.f32.xlu0 %v7223
        %v7225 = vpop.xlane.xlu0 %7224
        %v7226 = vsel %vm532, %v7200, 0.0
        %7227 = vadd.xlane.f32.xlu0 %v7226
        %v7228 = vpop.xlane.xlu0 %7227
        %v7229 = vsel %vm532, %v7201, 0.0
        %7230 = vadd.xlane.f32.xlu0 %v7229
        %v7231 = vpop.xlane.xlu0 %7230
        %v7232 = vsel %vm532, %v7202, 0.0
        %7233 = vadd.xlane.f32.xlu0 %v7232
        %v7234 = vpop.xlane.xlu0 %7233
        %v7235 = vsel %vm532, %v7203, 0.0
        %7236 = vadd.xlane.f32.xlu0 %v7235
        %v7237 = vpop.xlane.xlu0 %7236
        %v7238 = vsel %vm532, %v7204, 0.0
        %7239 = vadd.xlane.f32.xlu0 %v7238
        %v7240 = vpop.xlane.xlu0 %7239
        %v7241 = vsel %vm532, %v7205, 0.0
        %7242 = vadd.xlane.f32.xlu0 %v7241
        %v7243 = vpop.xlane.xlu0 %7242
        %v7244 = vsel %vm532, %v7206, 0.0
        %7245 = vadd.xlane.f32.xlu0 %v7244
        %v7246 = vpop.xlane.xlu0 %7245
        %v7247 = vsel %vm532, %v7207, 0.0
        %7248 = vadd.xlane.f32.xlu0 %v7247
        %v7249 = vpop.xlane.xlu0 %7248
        %v7250 = vsel %vm532, %v7208, 0.0
        %7251 = vadd.xlane.f32.xlu0 %v7250
        %v7252 = vpop.xlane.xlu0 %7251
        %v7253 = vsel %vm532, %v7209, 0.0
        %7254 = vadd.xlane.f32.xlu0 %v7253
        %v7255 = vpop.xlane.xlu0 %7254
        %v7256 = vsel %vm532, %v7210, 0.0
        %7257 = vadd.xlane.f32.xlu0 %v7256
        %v7258 = vpop.xlane.xlu0 %7257
        %v7259 = vmul.f32 %v7213, %v581
        %v7260 = vmul.f32 %v7216, %v581
        %v7261 = vmul.f32 %v7219, %v581
        %v7262 = vmul.f32 %v7222, %v581
        %v7263 = vmul.f32 %v7225, %v581
        %v7264 = vmul.f32 %v7228, %v581
        %v7265 = vmul.f32 %v7231, %v581
        %v7266 = vmul.f32 %v7234, %v581
        %v7267 = vmul.f32 %v7237, %v581
        %v7268 = vmul.f32 %v7240, %v581
        %v7269 = vmul.f32 %v7243, %v581
        %v7270 = vmul.f32 %v7246, %v581
        %v7271 = vmul.f32 %v7249, %v581
        %v7272 = vmul.f32 %v7252, %v581
        %v7273 = vmul.f32 %v7255, %v581
        %v7274 = vmul.f32 %v7258, %v581
        %v7275 = vsub.f32 %v7195, %v7259
        %v7276 = vsub.f32 %v7196, %v7260
        %v7277 = vsub.f32 %v7197, %v7261
        %v7278 = vsub.f32 %v7198, %v7262
        %v7279 = vsub.f32 %v7199, %v7263
        %v7280 = vsub.f32 %v7200, %v7264
        %v7281 = vsub.f32 %v7201, %v7265
        %v7282 = vsub.f32 %v7202, %v7266
        %v7283 = vsub.f32 %v7203, %v7267
        %v7284 = vsub.f32 %v7204, %v7268
        %v7285 = vsub.f32 %v7205, %v7269
        %v7286 = vsub.f32 %v7206, %v7270
        %v7287 = vsub.f32 %v7207, %v7271
        %v7288 = vsub.f32 %v7208, %v7272
        %v7289 = vsub.f32 %v7209, %v7273
        %v7290 = vsub.f32 %v7210, %v7274
        %v7291 = vmul.f32 %v7275, %v7275
        %v7292 = vmul.f32 %v7276, %v7276
        %v7293 = vmul.f32 %v7277, %v7277
        %v7294 = vmul.f32 %v7278, %v7278
        %v7295 = vmul.f32 %v7279, %v7279
        %v7296 = vmul.f32 %v7280, %v7280
        %v7297 = vmul.f32 %v7281, %v7281
        %v7298 = vmul.f32 %v7282, %v7282
        %v7299 = vmul.f32 %v7283, %v7283
        %v7300 = vmul.f32 %v7284, %v7284
        %v7301 = vmul.f32 %v7285, %v7285
        %v7302 = vmul.f32 %v7286, %v7286
        %v7303 = vmul.f32 %v7287, %v7287
        %v7304 = vmul.f32 %v7288, %v7288
        %v7305 = vmul.f32 %v7289, %v7289
        %v7306 = vmul.f32 %v7290, %v7290
        %v7307 = vsel %vm532, %v7291, 0.0
        %7308 = vadd.xlane.f32.xlu0 %v7307
        %v7309 = vpop.xlane.xlu0 %7308
        %v7310 = vsel %vm532, %v7292, 0.0
        %7311 = vadd.xlane.f32.xlu0 %v7310
        %v7312 = vpop.xlane.xlu0 %7311
        %v7313 = vsel %vm532, %v7293, 0.0
        %7314 = vadd.xlane.f32.xlu0 %v7313
        %v7315 = vpop.xlane.xlu0 %7314
        %v7316 = vsel %vm532, %v7294, 0.0
        %7317 = vadd.xlane.f32.xlu0 %v7316
        %v7318 = vpop.xlane.xlu0 %7317
        %v7319 = vsel %vm532, %v7295, 0.0
        %7320 = vadd.xlane.f32.xlu0 %v7319
        %v7321 = vpop.xlane.xlu0 %7320
        %v7322 = vsel %vm532, %v7296, 0.0
        %7323 = vadd.xlane.f32.xlu0 %v7322
        %v7324 = vpop.xlane.xlu0 %7323
        %v7325 = vsel %vm532, %v7297, 0.0
        %7326 = vadd.xlane.f32.xlu0 %v7325
        %v7327 = vpop.xlane.xlu0 %7326
        %v7328 = vsel %vm532, %v7298, 0.0
        %7329 = vadd.xlane.f32.xlu0 %v7328
        %v7330 = vpop.xlane.xlu0 %7329
        %v7331 = vsel %vm532, %v7299, 0.0
        %7332 = vadd.xlane.f32.xlu0 %v7331
        %v7333 = vpop.xlane.xlu0 %7332
        %v7334 = vsel %vm532, %v7300, 0.0
        %7335 = vadd.xlane.f32.xlu0 %v7334
        %v7336 = vpop.xlane.xlu0 %7335
        %v7337 = vsel %vm532, %v7301, 0.0
        %7338 = vadd.xlane.f32.xlu0 %v7337
        %v7339 = vpop.xlane.xlu0 %7338
        %v7340 = vsel %vm532, %v7302, 0.0
        %7341 = vadd.xlane.f32.xlu0 %v7340
        %v7342 = vpop.xlane.xlu0 %7341
        %v7343 = vsel %vm532, %v7303, 0.0
        %7344 = vadd.xlane.f32.xlu0 %v7343
        %v7345 = vpop.xlane.xlu0 %7344
        %v7346 = vsel %vm532, %v7304, 0.0
        %7347 = vadd.xlane.f32.xlu0 %v7346
        %v7348 = vpop.xlane.xlu0 %7347
        %v7349 = vsel %vm532, %v7305, 0.0
        %7350 = vadd.xlane.f32.xlu0 %v7349
        %v7351 = vpop.xlane.xlu0 %7350
        %v7352 = vsel %vm532, %v7306, 0.0
        %7353 = vadd.xlane.f32.xlu0 %v7352
        %v7354 = vpop.xlane.xlu0 %7353
        %v7355 = vmul.f32 %v7309, %v581
        %v7356 = vmul.f32 %v7312, %v581
        %v7357 = vmul.f32 %v7315, %v581
        %v7358 = vmul.f32 %v7318, %v581
        %v7359 = vmul.f32 %v7321, %v581
        %v7360 = vmul.f32 %v7324, %v581
        %v7361 = vmul.f32 %v7327, %v581
        %v7362 = vmul.f32 %v7330, %v581
        %v7363 = vmul.f32 %v7333, %v581
        %v7364 = vmul.f32 %v7336, %v581
        %v7365 = vmul.f32 %v7339, %v581
        %v7366 = vmul.f32 %v7342, %v581
        %v7367 = vmul.f32 %v7345, %v581
        %v7368 = vmul.f32 %v7348, %v581
        %v7369 = vmul.f32 %v7351, %v581
        %v7370 = vmul.f32 %v7354, %v581
        %v7371 = vadd.f32 %v7355, 1e-05
        %v7372 = vadd.f32 %v7356, 1e-05
        %v7373 = vadd.f32 %v7357, 1e-05
        %v7374 = vadd.f32 %v7358, 1e-05
        %v7375 = vadd.f32 %v7359, 1e-05
        %v7376 = vadd.f32 %v7360, 1e-05
        %v7377 = vadd.f32 %v7361, 1e-05
        %v7378 = vadd.f32 %v7362, 1e-05
        %v7379 = vadd.f32 %v7363, 1e-05
        %v7380 = vadd.f32 %v7364, 1e-05
        %v7381 = vadd.f32 %v7365, 1e-05
        %v7382 = vadd.f32 %v7366, 1e-05
        %v7383 = vadd.f32 %v7367, 1e-05
        %v7384 = vadd.f32 %v7368, 1e-05
        %v7385 = vadd.f32 %v7369, 1e-05
        %v7386 = vadd.f32 %v7370, 1e-05
        %v7387 = vrsqrt.pop %v7371
        %v7388 = vrsqrt.pop %v7372
        %v7389 = vrsqrt.pop %v7373
        %v7390 = vrsqrt.pop %v7374
        %v7391 = vrsqrt.pop %v7375
        %v7392 = vrsqrt.pop %v7376
        %v7393 = vrsqrt.pop %v7377
        %v7394 = vrsqrt.pop %v7378
        %v7395 = vrsqrt.pop %v7379
        %v7396 = vrsqrt.pop %v7380
        %v7397 = vrsqrt.pop %v7381
        %v7398 = vrsqrt.pop %v7382
        %v7399 = vrsqrt.pop %v7383
        %v7400 = vrsqrt.pop %v7384
        %v7401 = vrsqrt.pop %v7385
        %v7402 = vrsqrt.pop %v7386
        %v7403 = vmul.f32 %v7275, %v7387
        %v7404 = vmul.f32 %v7276, %v7388
        %v7405 = vmul.f32 %v7277, %v7389
        %v7406 = vmul.f32 %v7278, %v7390
        %v7407 = vmul.f32 %v7279, %v7391
        %v7408 = vmul.f32 %v7280, %v7392
        %v7409 = vmul.f32 %v7281, %v7393
        %v7410 = vmul.f32 %v7282, %v7394
        %v7411 = vmul.f32 %v7283, %v7395
        %v7412 = vmul.f32 %v7284, %v7396
        %v7413 = vmul.f32 %v7285, %v7397
        %v7414 = vmul.f32 %v7286, %v7398
        %v7415 = vmul.f32 %v7287, %v7399
        %v7416 = vmul.f32 %v7288, %v7400
        %v7417 = vmul.f32 %v7289, %v7401
        %v7418 = vmul.f32 %v7290, %v7402
        %7419 = vrot.lane.b32.xlu0 %v745, 64
        %v7420 = vpop.permute.xlu0 %7419
        %v7422 = vmul.f32 %v7403, %v7420
        %v7423 = vmul.f32 %v7404, %v7420
        %v7424 = vmul.f32 %v7405, %v7420
        %v7425 = vmul.f32 %v7406, %v7420
        %v7426 = vmul.f32 %v7407, %v7420
        %v7427 = vmul.f32 %v7408, %v7420
        %v7428 = vmul.f32 %v7409, %v7420
        %v7429 = vmul.f32 %v7410, %v7420
        %v7430 = vmul.f32 %v7411, %v7420
        %v7431 = vmul.f32 %v7412, %v7420
        %v7432 = vmul.f32 %v7413, %v7420
        %v7433 = vmul.f32 %v7414, %v7420
        %v7434 = vmul.f32 %v7415, %v7420
        %v7435 = vmul.f32 %v7416, %v7420
        %v7436 = vmul.f32 %v7417, %v7420
        %v7437 = vmul.f32 %v7418, %v7420
        %7438 = vrot.lane.b32.xlu0 %v745, 32
        %v7439 = vpop.permute.xlu0 %7438
        %v7441 = vadd.f32 %v7422, %v7439
        %v7442 = vadd.f32 %v7423, %v7439
        %v7443 = vadd.f32 %v7424, %v7439
        %v7444 = vadd.f32 %v7425, %v7439
        %v7445 = vadd.f32 %v7426, %v7439
        %v7446 = vadd.f32 %v7427, %v7439
        %v7447 = vadd.f32 %v7428, %v7439
        %v7448 = vadd.f32 %v7429, %v7439
        %v7449 = vadd.f32 %v7430, %v7439
        %v7450 = vadd.f32 %v7431, %v7439
        %v7451 = vadd.f32 %v7432, %v7439
        %v7452 = vadd.f32 %v7433, %v7439
        %v7453 = vadd.f32 %v7434, %v7439
        %v7454 = vadd.f32 %v7435, %v7439
        %v7455 = vadd.f32 %v7436, %v7439
        %v7456 = vadd.f32 %v7437, %v7439
        %v7457 = vpack.c.bf16 %v7442, %v7441
        %v7458 = vpack.c.bf16 %v7444, %v7443
        %v7459 = vpack.c.bf16 %v7446, %v7445
        %v7460 = vpack.c.bf16 %v7448, %v7447
        %v7461 = vpack.c.bf16 %v7450, %v7449
        %v7462 = vpack.c.bf16 %v7452, %v7451
        %v7463 = vpack.c.bf16 %v7454, %v7453
        %v7464 = vpack.c.bf16 %v7456, %v7455
        %v7465 = vld [vmem:[%s9] sm:$0xf]
        %v7466 = vld [vmem:[%s9 + $0x4] sm:$0xf]
        %v7467 = vld [vmem:[%s9 + $0x8] sm:$0xf]
        %v7468 = vld [vmem:[%s9 + $0xc] sm:$0xf]
        %v7469 = vlaneseq
        %v7470 = vshrl.u32 %v7469, 7
        %v7471 = vsub.s32 2, %v7470
        %v7472 = vrot.slane %v514, %v7471
        %v7477 = vunpack.c.l.b16 %v7465
        %v7478 = vunpack.c.l.b16 %v7466
        %v7479 = vunpack.c.l.b16 %v7467
        %v7480 = vunpack.c.l.b16 %v7468
        %v7481 = vpack.c.b16 %v7478, %v7477
        %v7482 = vpack.c.b16 %v7480, %v7479
        %v7486 = vsel %vm532, %v7457, 0
        %v7489 = vsel %vm532, %v7458, 0
        %v7492 = vsel %vm532, %v7459, 0
        %v7495 = vsel %vm532, %v7460, 0
        %v7498 = vsel %vm532, %v7461, 0
        %v7501 = vsel %vm532, %v7462, 0
        %v7504 = vsel %vm532, %v7463, 0
        %v7507 = vsel %vm532, %v7464, 0
        %7509 = vmatprep.subr.bf16.mxu0 0
        %7510 = vmatpush1.bf16.msra.mxu0 %v7481
        %7511 = vmatprep.subr.bf16.mxu0 0
        %7512 = vmatpush1.bf16.msra.mxu0 %v7482
        %7513 = vmatprep.subr.bf16.mxu0 0
        %7514 = vmatpush1.bf16.msra.mxu0 0
        %7515 = vmatprep.subr.bf16.mxu0 0
        %7516 = vmatpush1.bf16.msra.mxu0 0
        %7517 = vmatprep.subr.bf16.mxu0 0
        %7518 = vmatpush1.bf16.msra.mxu0 0
        %7519 = vmatprep.subr.bf16.mxu0 0
        %7520 = vmatpush1.bf16.msra.mxu0 0
        %7521 = vmatprep.subr.bf16.mxu0 0
        %7522 = vmatpush1.bf16.msra.mxu0 0
        %7523 = vmatprep.subr.bf16.mxu0 0
        %7524 = vmatpush1.bf16.msra.mxu0 0
        %7525 = vmatprep.subr.bf16.mxu0 0
        %7526 = vmatpush1.bf16.msra.mxu0 0
        %7527 = vmatprep.subr.bf16.mxu0 0
        %7528 = vmatpush1.bf16.msra.mxu0 0
        %7529 = vmatprep.subr.bf16.mxu0 0
        %7530 = vmatpush1.bf16.msra.mxu0 0
        %7531 = vmatprep.subr.bf16.mxu0 0
        %7532 = vmatpush1.bf16.msra.mxu0 0
        %7533 = vmatprep.subr.bf16.mxu0 0
        %7534 = vmatpush1.bf16.msra.mxu0 0
        %7535 = vmatprep.subr.bf16.mxu0 0
        %7536 = vmatpush1.bf16.msra.mxu0 0
        %7537 = vmatprep.subr.bf16.mxu0 0
        %7538 = vmatpush1.bf16.msra.mxu0 0
        %7539 = vmatprep.subr.bf16.mxu0 0
        %7540 = vmatpush1.bf16.msra.mxu0 0
        %7541 = vmatprep.mubr.bf16.mxu0 0
        %7542 = vmatmul.mubr.bf16.gmra.mrb[0].mxu0 %v7486
        %v7543 = vpop.f32.mrb[0].mxu0
        %v7544 = vadd.f32 %v7472, %v7543
        %v7545 = vpop.f32.mrb[0].mxu0
        %v7546 = vpop.f32.mrb[0].mxu0
        %v7547 = vadd.f32 %v7472, %v7546
        %v7548 = vpop.f32.mrb[0].mxu0
        %7549 = vmatprep.mubr.bf16.mxu0 0
        %7550 = vmatmul.mubr.bf16.gmra.mrb[0].mxu0 %v7489
        %v7551 = vpop.f32.mrb[0].mxu0
        %v7552 = vadd.f32 %v7472, %v7551
        %v7553 = vpop.f32.mrb[0].mxu0
        %v7554 = vpop.f32.mrb[0].mxu0
        %v7555 = vadd.f32 %v7472, %v7554
        %v7556 = vpop.f32.mrb[0].mxu0
        %7557 = vmatprep.mubr.bf16.mxu0 0
        %7558 = vmatmul.mubr.bf16.gmra.mrb[0].mxu0 %v7492
        %v7559 = vpop.f32.mrb[0].mxu0
        %v7560 = vadd.f32 %v7472, %v7559
        %v7561 = vpop.f32.mrb[0].mxu0
        %v7562 = vpop.f32.mrb[0].mxu0
        %v7563 = vadd.f32 %v7472, %v7562
        %v7564 = vpop.f32.mrb[0].mxu0
        %7565 = vmatprep.mubr.bf16.mxu0 0
        %7566 = vmatmul.mubr.bf16.gmra.mrb[0].mxu0 %v7495
        %v7567 = vpop.f32.mrb[0].mxu0
        %v7568 = vadd.f32 %v7472, %v7567
        %v7569 = vpop.f32.mrb[0].mxu0
        %v7570 = vpop.f32.mrb[0].mxu0
        %v7571 = vadd.f32 %v7472, %v7570
        %v7572 = vpop.f32.mrb[0].mxu0
        %7573 = vmatprep.mubr.bf16.mxu0 0
        %7574 = vmatmul.mubr.bf16.gmra.mrb[0].mxu0 %v7498
        %v7575 = vpop.f32.mrb[0].mxu0
        %v7576 = vadd.f32 %v7472, %v7575
        %v7577 = vpop.f32.mrb[0].mxu0
        %v7578 = vpop.f32.mrb[0].mxu0
        %v7579 = vadd.f32 %v7472, %v7578
        %v7580 = vpop.f32.mrb[0].mxu0
        %7581 = vmatprep.mubr.bf16.mxu0 0
        %7582 = vmatmul.mubr.bf16.gmra.mrb[0].mxu0 %v7501
        %v7583 = vpop.f32.mrb[0].mxu0
        %v7584 = vadd.f32 %v7472, %v7583
        %v7585 = vpop.f32.mrb[0].mxu0
        %v7586 = vpop.f32.mrb[0].mxu0
        %v7587 = vadd.f32 %v7472, %v7586
        %v7588 = vpop.f32.mrb[0].mxu0
        %7589 = vmatprep.mubr.bf16.mxu0 0
        %7590 = vmatmul.mubr.bf16.gmra.mrb[0].mxu0 %v7504
        %v7591 = vpop.f32.mrb[0].mxu0
        %v7592 = vadd.f32 %v7472, %v7591
        %v7593 = vpop.f32.mrb[0].mxu0
        %v7594 = vpop.f32.mrb[0].mxu0
        %v7595 = vadd.f32 %v7472, %v7594
        %v7596 = vpop.f32.mrb[0].mxu0
        %7597 = vmatprep.mubr.bf16.mxu0 0
        %7598 = vmatmul.mubr.bf16.gmra.mrb[0].mxu0 %v7507
        %v7599 = vpop.f32.mrb[0].mxu0
        %v7600 = vadd.f32 %v7472, %v7599
        %v7601 = vpop.f32.mrb[0].mxu0
        %v7602 = vpop.f32.mrb[0].mxu0
        %v7603 = vadd.f32 %v7472, %v7602
        %v7604 = vpop.f32.mrb[0].mxu0
        %7605 = vdwg.mxu0
        %v7606 = vmul.f32 %v7544, %v7544
        %v7607 = vmul.f32 %v7547, %v7547
        %v7608 = vmul.f32 %v7552, %v7552
        %v7609 = vmul.f32 %v7555, %v7555
        %v7610 = vmul.f32 %v7560, %v7560
        %v7611 = vmul.f32 %v7563, %v7563
        %v7612 = vmul.f32 %v7568, %v7568
        %v7613 = vmul.f32 %v7571, %v7571
        %v7614 = vmul.f32 %v7576, %v7576
        %v7615 = vmul.f32 %v7579, %v7579
        %v7616 = vmul.f32 %v7584, %v7584
        %v7617 = vmul.f32 %v7587, %v7587
        %v7618 = vmul.f32 %v7592, %v7592
        %v7619 = vmul.f32 %v7595, %v7595
        %v7620 = vmul.f32 %v7600, %v7600
        %v7621 = vmul.f32 %v7603, %v7603
        %v7622 = vmul.f32 %v7544, %v7606
        %v7623 = vmul.f32 %v7547, %v7607
        %v7624 = vmul.f32 %v7552, %v7608
        %v7625 = vmul.f32 %v7555, %v7609
        %v7626 = vmul.f32 %v7560, %v7610
        %v7627 = vmul.f32 %v7563, %v7611
        %v7628 = vmul.f32 %v7568, %v7612
        %v7629 = vmul.f32 %v7571, %v7613
        %v7630 = vmul.f32 %v7576, %v7614
        %v7631 = vmul.f32 %v7579, %v7615
        %v7632 = vmul.f32 %v7584, %v7616
        %v7633 = vmul.f32 %v7587, %v7617
        %v7634 = vmul.f32 %v7592, %v7618
        %v7635 = vmul.f32 %v7595, %v7619
        %v7636 = vmul.f32 %v7600, %v7620
        %v7637 = vmul.f32 %v7603, %v7621
        %v7638 = vmul.f32 %v7622, 0.044715
        %v7639 = vmul.f32 %v7623, 0.044715
        %v7640 = vmul.f32 %v7624, 0.044715
        %v7641 = vmul.f32 %v7625, 0.044715
        %v7642 = vmul.f32 %v7626, 0.044715
        %v7643 = vmul.f32 %v7627, 0.044715
        %v7644 = vmul.f32 %v7628, 0.044715
        %v7645 = vmul.f32 %v7629, 0.044715
        %v7646 = vmul.f32 %v7630, 0.044715
        %v7647 = vmul.f32 %v7631, 0.044715
        %v7648 = vmul.f32 %v7632, 0.044715
        %v7649 = vmul.f32 %v7633, 0.044715
        %v7650 = vmul.f32 %v7634, 0.044715
        %v7651 = vmul.f32 %v7635, 0.044715
        %v7652 = vmul.f32 %v7636, 0.044715
        %v7653 = vmul.f32 %v7637, 0.044715
        %v7654 = vadd.f32 %v7544, %v7638
        %v7655 = vadd.f32 %v7547, %v7639
        %v7656 = vadd.f32 %v7552, %v7640
        %v7657 = vadd.f32 %v7555, %v7641
        %v7658 = vadd.f32 %v7560, %v7642
        %v7659 = vadd.f32 %v7563, %v7643
        %v7660 = vadd.f32 %v7568, %v7644
        %v7661 = vadd.f32 %v7571, %v7645
        %v7662 = vadd.f32 %v7576, %v7646
        %v7663 = vadd.f32 %v7579, %v7647
        %v7664 = vadd.f32 %v7584, %v7648
        %v7665 = vadd.f32 %v7587, %v7649
        %v7666 = vadd.f32 %v7592, %v7650
        %v7667 = vadd.f32 %v7595, %v7651
        %v7668 = vadd.f32 %v7600, %v7652
        %v7669 = vadd.f32 %v7603, %v7653
        %v7670 = vmul.f32 %v7654, 0.7978846
        %v7671 = vmul.f32 %v7655, 0.7978846
        %v7672 = vmul.f32 %v7656, 0.7978846
        %v7673 = vmul.f32 %v7657, 0.7978846
        %v7674 = vmul.f32 %v7658, 0.7978846
        %v7675 = vmul.f32 %v7659, 0.7978846
        %v7676 = vmul.f32 %v7660, 0.7978846
        %v7677 = vmul.f32 %v7661, 0.7978846
        %v7678 = vmul.f32 %v7662, 0.7978846
        %v7679 = vmul.f32 %v7663, 0.7978846
        %v7680 = vmul.f32 %v7664, 0.7978846
        %v7681 = vmul.f32 %v7665, 0.7978846
        %v7682 = vmul.f32 %v7666, 0.7978846
        %v7683 = vmul.f32 %v7667, 0.7978846
        %v7684 = vmul.f32 %v7668, 0.7978846
        %v7685 = vmul.f32 %v7669, 0.7978846
        %v7686 = vtanh.pop %v7670
        %v7687 = vtanh.pop %v7671
        %v7688 = vtanh.pop %v7672
        %v7689 = vtanh.pop %v7673
        %v7690 = vtanh.pop %v7674
        %v7691 = vtanh.pop %v7675
        %v7692 = vtanh.pop %v7676
        %v7693 = vtanh.pop %v7677
        %v7694 = vtanh.pop %v7678
        %v7695 = vtanh.pop %v7679
        %v7696 = vtanh.pop %v7680
        %v7697 = vtanh.pop %v7681
        %v7698 = vtanh.pop %v7682
        %v7699 = vtanh.pop %v7683
        %v7700 = vtanh.pop %v7684
        %v7701 = vtanh.pop %v7685
        %v7702 = vadd.f32 %v7686, 1.0
        %v7703 = vadd.f32 %v7687, 1.0
        %v7704 = vadd.f32 %v7688, 1.0
        %v7705 = vadd.f32 %v7689, 1.0
        %v7706 = vadd.f32 %v7690, 1.0
        %v7707 = vadd.f32 %v7691, 1.0
        %v7708 = vadd.f32 %v7692, 1.0
        %v7709 = vadd.f32 %v7693, 1.0
        %v7710 = vadd.f32 %v7694, 1.0
        %v7711 = vadd.f32 %v7695, 1.0
        %v7712 = vadd.f32 %v7696, 1.0
        %v7713 = vadd.f32 %v7697, 1.0
        %v7714 = vadd.f32 %v7698, 1.0
        %v7715 = vadd.f32 %v7699, 1.0
        %v7716 = vadd.f32 %v7700, 1.0
        %v7717 = vadd.f32 %v7701, 1.0
        %v7718 = vmul.f32 %v7702, 0.5
        %v7719 = vmul.f32 %v7703, 0.5
        %v7720 = vmul.f32 %v7704, 0.5
        %v7721 = vmul.f32 %v7705, 0.5
        %v7722 = vmul.f32 %v7706, 0.5
        %v7723 = vmul.f32 %v7707, 0.5
        %v7724 = vmul.f32 %v7708, 0.5
        %v7725 = vmul.f32 %v7709, 0.5
        %v7726 = vmul.f32 %v7710, 0.5
        %v7727 = vmul.f32 %v7711, 0.5
        %v7728 = vmul.f32 %v7712, 0.5
        %v7729 = vmul.f32 %v7713, 0.5
        %v7730 = vmul.f32 %v7714, 0.5
        %v7731 = vmul.f32 %v7715, 0.5
        %v7732 = vmul.f32 %v7716, 0.5
        %v7733 = vmul.f32 %v7717, 0.5
        %v7734 = vmul.f32 %v7544, %v7718
        %v7735 = vmul.f32 %v7547, %v7719
        %v7736 = vmul.f32 %v7552, %v7720
        %v7737 = vmul.f32 %v7555, %v7721
        %v7738 = vmul.f32 %v7560, %v7722
        %v7739 = vmul.f32 %v7563, %v7723
        %v7740 = vmul.f32 %v7568, %v7724
        %v7741 = vmul.f32 %v7571, %v7725
        %v7742 = vmul.f32 %v7576, %v7726
        %v7743 = vmul.f32 %v7579, %v7727
        %v7744 = vmul.f32 %v7584, %v7728
        %v7745 = vmul.f32 %v7587, %v7729
        %v7746 = vmul.f32 %v7592, %v7730
        %v7747 = vmul.f32 %v7595, %v7731
        %v7748 = vmul.f32 %v7600, %v7732
        %v7749 = vmul.f32 %v7603, %v7733
        %v7750 = vpack.c.bf16 %v7735, %v7734
        %v7751 = vpack.c.bf16 %v7737, %v7736
        %v7752 = vpack.c.bf16 %v7739, %v7738
        %v7753 = vpack.c.bf16 %v7741, %v7740
        %v7754 = vpack.c.bf16 %v7743, %v7742
        %v7755 = vpack.c.bf16 %v7745, %v7744
        %v7756 = vpack.c.bf16 %v7747, %v7746
        %v7757 = vpack.c.bf16 %v7749, %v7748
        %v7758 = vld [vmem:[%s10] sm:$0xf]
        %v7759 = vld [vmem:[%s10 + $0x4] sm:$0xf]
        %v7760 = vld [vmem:[%s10 + $0x8] sm:$0xf]
        %v7761 = vld [vmem:[%s10 + $0xc] sm:$0xf]
        %v7762 = vld [vmem:[%s10 + $0x10] sm:$0xf]
        %v7763 = vld [vmem:[%s10 + $0x14] sm:$0xf]
        %v7764 = vld [vmem:[%s10 + $0x18] sm:$0xf]
        %v7765 = vld [vmem:[%s10 + $0x1c] sm:$0xf]
        %v7766 = vld [vmem:[%s10 + $0x20] sm:$0xf]
        %v7767 = vld [vmem:[%s10 + $0x24] sm:$0xf]
        %v7768 = vld [vmem:[%s10 + $0x28] sm:$0xf]
        %v7769 = vld [vmem:[%s10 + $0x2c] sm:$0xf]
        %v7770 = vld [vmem:[%s10 + $0x30] sm:$0xf]
        %v7771 = vld [vmem:[%s10 + $0x34] sm:$0xf]
        %v7772 = vld [vmem:[%s10 + $0x38] sm:$0xf]
        %v7773 = vld [vmem:[%s10 + $0x3c] sm:$0xf]
        %v7790 = vunpack.c.l.b16 %v7758
        %v7791 = vunpack.c.l.b16 %v7759
        %v7792 = vunpack.c.l.b16 %v7760
        %v7793 = vunpack.c.l.b16 %v7761
        %v7794 = vunpack.c.l.b16 %v7762
        %v7795 = vunpack.c.l.b16 %v7763
        %v7796 = vunpack.c.l.b16 %v7764
        %v7797 = vunpack.c.l.b16 %v7765
        %v7798 = vunpack.c.l.b16 %v7766
        %v7799 = vunpack.c.l.b16 %v7767
        %v7800 = vunpack.c.l.b16 %v7768
        %v7801 = vunpack.c.l.b16 %v7769
        %v7802 = vunpack.c.l.b16 %v7770
        %v7803 = vunpack.c.l.b16 %v7771
        %v7804 = vunpack.c.l.b16 %v7772
        %v7805 = vunpack.c.l.b16 %v7773
        %v7806 = vpack.c.b16 %v7791, %v7790
        %v7807 = vpack.c.b16 %v7793, %v7792
        %v7808 = vpack.c.b16 %v7795, %v7794
        %v7809 = vpack.c.b16 %v7797, %v7796
        %v7810 = vpack.c.b16 %v7799, %v7798
        %v7811 = vpack.c.b16 %v7801, %v7800
        %v7812 = vpack.c.b16 %v7803, %v7802
        %v7813 = vpack.c.b16 %v7805, %v7804
        %7823 = vrot.lane.b32.xlu0 %v7061, 96
        %v7824 = vpop.permute.xlu0 %7823
        %7826 = vmatprep.subr.bf16.mxu0 0
        %7827 = vmatpush1.bf16.msra.mxu0 %v7806
        %7828 = vmatprep.subr.bf16.mxu0 0
        %7829 = vmatpush1.bf16.msra.mxu0 %v7807
        %7830 = vmatprep.subr.bf16.mxu0 0
        %7831 = vmatpush1.bf16.msra.mxu0 %v7808
        %7832 = vmatprep.subr.bf16.mxu0 0
        %7833 = vmatpush1.bf16.msra.mxu0 %v7809
        %7834 = vmatprep.subr.bf16.mxu0 0
        %7835 = vmatpush1.bf16.msra.mxu0 %v7810
        %7836 = vmatprep.subr.bf16.mxu0 0
        %7837 = vmatpush1.bf16.msra.mxu0 %v7811
        %7838 = vmatprep.subr.bf16.mxu0 0
        %7839 = vmatpush1.bf16.msra.mxu0 %v7812
        %7840 = vmatprep.subr.bf16.mxu0 0
        %7841 = vmatpush1.bf16.msra.mxu0 %v7813
        %7842 = vmatprep.subr.bf16.mxu0 0
        %7843 = vmatpush1.bf16.msra.mxu0 0
        %7844 = vmatprep.subr.bf16.mxu0 0
        %7845 = vmatpush1.bf16.msra.mxu0 0
        %7846 = vmatprep.subr.bf16.mxu0 0
        %7847 = vmatpush1.bf16.msra.mxu0 0
        %7848 = vmatprep.subr.bf16.mxu0 0
        %7849 = vmatpush1.bf16.msra.mxu0 0
        %7850 = vmatprep.subr.bf16.mxu0 0
        %7851 = vmatpush1.bf16.msra.mxu0 0
        %7852 = vmatprep.subr.bf16.mxu0 0
        %7853 = vmatpush1.bf16.msra.mxu0 0
        %7854 = vmatprep.subr.bf16.mxu0 0
        %7855 = vmatpush1.bf16.msra.mxu0 0
        %7856 = vmatprep.subr.bf16.mxu0 0
        %7857 = vmatpush1.bf16.msra.mxu0 0
        %7858 = vmatprep.mubr.bf16.mxu0 0
        %7859 = vmatmul.mubr.bf16.gmra.mrb[0].mxu0 %v7750
        %v7860 = vpop.f32.mrb[0].mxu0
        %v7861 = vadd.f32 %v7824, %v7860
        %v7862 = vpop.f32.mrb[0].mxu0
        %v7863 = vpop.f32.mrb[0].mxu0
        %v7864 = vadd.f32 %v7824, %v7863
        %v7865 = vpop.f32.mrb[0].mxu0
        %7866 = vmatprep.mubr.bf16.mxu0 0
        %7867 = vmatmul.mubr.bf16.gmra.mrb[0].mxu0 %v7751
        %v7868 = vpop.f32.mrb[0].mxu0
        %v7869 = vadd.f32 %v7824, %v7868
        %v7870 = vpop.f32.mrb[0].mxu0
        %v7871 = vpop.f32.mrb[0].mxu0
        %v7872 = vadd.f32 %v7824, %v7871
        %v7873 = vpop.f32.mrb[0].mxu0
        %7874 = vmatprep.mubr.bf16.mxu0 0
        %7875 = vmatmul.mubr.bf16.gmra.mrb[0].mxu0 %v7752
        %v7876 = vpop.f32.mrb[0].mxu0
        %v7877 = vadd.f32 %v7824, %v7876
        %v7878 = vpop.f32.mrb[0].mxu0
        %v7879 = vpop.f32.mrb[0].mxu0
        %v7880 = vadd.f32 %v7824, %v7879
        %v7881 = vpop.f32.mrb[0].mxu0
        %7882 = vmatprep.mubr.bf16.mxu0 0
        %7883 = vmatmul.mubr.bf16.gmra.mrb[0].mxu0 %v7753
        %v7884 = vpop.f32.mrb[0].mxu0
        %v7885 = vadd.f32 %v7824, %v7884
        %v7886 = vpop.f32.mrb[0].mxu0
        %v7887 = vpop.f32.mrb[0].mxu0
        %v7888 = vadd.f32 %v7824, %v7887
        %v7889 = vpop.f32.mrb[0].mxu0
        %7890 = vmatprep.mubr.bf16.mxu0 0
        %7891 = vmatmul.mubr.bf16.gmra.mrb[0].mxu0 %v7754
        %v7892 = vpop.f32.mrb[0].mxu0
        %v7893 = vadd.f32 %v7824, %v7892
        %v7894 = vpop.f32.mrb[0].mxu0
        %v7895 = vpop.f32.mrb[0].mxu0
        %v7896 = vadd.f32 %v7824, %v7895
        %v7897 = vpop.f32.mrb[0].mxu0
        %7898 = vmatprep.mubr.bf16.mxu0 0
        %7899 = vmatmul.mubr.bf16.gmra.mrb[0].mxu0 %v7755
        %v7900 = vpop.f32.mrb[0].mxu0
        %v7901 = vadd.f32 %v7824, %v7900
        %v7902 = vpop.f32.mrb[0].mxu0
        %v7903 = vpop.f32.mrb[0].mxu0
        %v7904 = vadd.f32 %v7824, %v7903
        %v7905 = vpop.f32.mrb[0].mxu0
        %7906 = vmatprep.mubr.bf16.mxu0 0
        %7907 = vmatmul.mubr.bf16.gmra.mrb[0].mxu0 %v7756
        %v7908 = vpop.f32.mrb[0].mxu0
        %v7909 = vadd.f32 %v7824, %v7908
        %v7910 = vpop.f32.mrb[0].mxu0
        %v7911 = vpop.f32.mrb[0].mxu0
        %v7912 = vadd.f32 %v7824, %v7911
        %v7913 = vpop.f32.mrb[0].mxu0
        %7914 = vmatprep.mubr.bf16.mxu0 0
        %7915 = vmatmul.mubr.bf16.gmra.mrb[0].mxu0 %v7757
        %v7916 = vpop.f32.mrb[0].mxu0
        %v7917 = vadd.f32 %v7824, %v7916
        %v7918 = vpop.f32.mrb[0].mxu0
        %v7919 = vpop.f32.mrb[0].mxu0
        %v7920 = vadd.f32 %v7824, %v7919
        %v7921 = vpop.f32.mrb[0].mxu0
        %7922 = vdwg.mxu0
        %v7923 = vadd.f32 %v7195, %v7861
        %v7924 = vadd.f32 %v7196, %v7864
        %v7925 = vadd.f32 %v7197, %v7869
        %v7926 = vadd.f32 %v7198, %v7872
        %v7927 = vadd.f32 %v7199, %v7877
        %v7928 = vadd.f32 %v7200, %v7880
        %v7929 = vadd.f32 %v7201, %v7885
        %v7930 = vadd.f32 %v7202, %v7888
        %v7931 = vadd.f32 %v7203, %v7893
        %v7932 = vadd.f32 %v7204, %v7896
        %v7933 = vadd.f32 %v7205, %v7901
        %v7934 = vadd.f32 %v7206, %v7904
        %v7935 = vadd.f32 %v7207, %v7909
        %v7936 = vadd.f32 %v7208, %v7912
        %v7937 = vadd.f32 %v7209, %v7917
        %v7938 = vadd.f32 %v7210, %v7920
        %v7939 = vsel %vm532, %v7923, -inf
        %v7940 = vrot.slane %v7939, 4
        %v7941 = vmax.f32 %v7939, %v7940
        %v7942 = vrot.slane %v7941, 2
        %v7943 = vmax.f32 %v7941, %v7942
        %v7944 = vrot.slane %v7943, 1
        %v7945 = vmax.f32 %v7943, %v7944
        %v7946 = vsel %vm532, %v7924, -inf
        %v7947 = vrot.slane %v7946, 4
        %v7948 = vmax.f32 %v7946, %v7947
        %v7949 = vrot.slane %v7948, 2
        %v7950 = vmax.f32 %v7948, %v7949
        %v7951 = vrot.slane %v7950, 1
        %v7952 = vmax.f32 %v7950, %v7951
        %v7953 = vsel %vm532, %v7925, -inf
        %v7954 = vrot.slane %v7953, 4
        %v7955 = vmax.f32 %v7953, %v7954
        %v7956 = vrot.slane %v7955, 2
        %v7957 = vmax.f32 %v7955, %v7956
        %v7958 = vrot.slane %v7957, 1
        %v7959 = vmax.f32 %v7957, %v7958
        %v7960 = vsel %vm532, %v7926, -inf
        %v7961 = vrot.slane %v7960, 4
        %v7962 = vmax.f32 %v7960, %v7961
        %v7963 = vrot.slane %v7962, 2
        %v7964 = vmax.f32 %v7962, %v7963
        %v7965 = vrot.slane %v7964, 1
        %v7966 = vmax.f32 %v7964, %v7965
        %v7967 = vsel %vm532, %v7927, -inf
        %v7968 = vrot.slane %v7967, 4
        %v7969 = vmax.f32 %v7967, %v7968
        %v7970 = vrot.slane %v7969, 2
        %v7971 = vmax.f32 %v7969, %v7970
        %v7972 = vrot.slane %v7971, 1
        %v7973 = vmax.f32 %v7971, %v7972
        %v7974 = vsel %vm532, %v7928, -inf
        %v7975 = vrot.slane %v7974, 4
        %v7976 = vmax.f32 %v7974, %v7975
        %v7977 = vrot.slane %v7976, 2
        %v7978 = vmax.f32 %v7976, %v7977
        %v7979 = vrot.slane %v7978, 1
        %v7980 = vmax.f32 %v7978, %v7979
        %v7981 = vsel %vm532, %v7929, -inf
        %v7982 = vrot.slane %v7981, 4
        %v7983 = vmax.f32 %v7981, %v7982
        %v7984 = vrot.slane %v7983, 2
        %v7985 = vmax.f32 %v7983, %v7984
        %v7986 = vrot.slane %v7985, 1
        %v7987 = vmax.f32 %v7985, %v7986
        %v7988 = vsel %vm532, %v7930, -inf
        %v7989 = vrot.slane %v7988, 4
        %v7990 = vmax.f32 %v7988, %v7989
        %v7991 = vrot.slane %v7990, 2
        %v7992 = vmax.f32 %v7990, %v7991
        %v7993 = vrot.slane %v7992, 1
        %v7994 = vmax.f32 %v7992, %v7993
        %v7995 = vsel %vm532, %v7931, -inf
        %v7996 = vrot.slane %v7995, 4
        %v7997 = vmax.f32 %v7995, %v7996
        %v7998 = vrot.slane %v7997, 2
        %v7999 = vmax.f32 %v7997, %v7998
        %v8000 = vrot.slane %v7999, 1
        %v8001 = vmax.f32 %v7999, %v8000
        %v8002 = vsel %vm532, %v7932, -inf
        %v8003 = vrot.slane %v8002, 4
        %v8004 = vmax.f32 %v8002, %v8003
        %v8005 = vrot.slane %v8004, 2
        %v8006 = vmax.f32 %v8004, %v8005
        %v8007 = vrot.slane %v8006, 1
        %v8008 = vmax.f32 %v8006, %v8007
        %v8009 = vsel %vm532, %v7933, -inf
        %v8010 = vrot.slane %v8009, 4
        %v8011 = vmax.f32 %v8009, %v8010
        %v8012 = vrot.slane %v8011, 2
        %v8013 = vmax.f32 %v8011, %v8012
        %v8014 = vrot.slane %v8013, 1
        %v8015 = vmax.f32 %v8013, %v8014
        %v8016 = vsel %vm532, %v7934, -inf
        %v8017 = vrot.slane %v8016, 4
        %v8018 = vmax.f32 %v8016, %v8017
        %v8019 = vrot.slane %v8018, 2
        %v8020 = vmax.f32 %v8018, %v8019
        %v8021 = vrot.slane %v8020, 1
        %v8022 = vmax.f32 %v8020, %v8021
        %v8023 = vsel %vm532, %v7935, -inf
        %v8024 = vrot.slane %v8023, 4
        %v8025 = vmax.f32 %v8023, %v8024
        %v8026 = vrot.slane %v8025, 2
        %v8027 = vmax.f32 %v8025, %v8026
        %v8028 = vrot.slane %v8027, 1
        %v8029 = vmax.f32 %v8027, %v8028
        %v8030 = vsel %vm532, %v7936, -inf
        %v8031 = vrot.slane %v8030, 4
        %v8032 = vmax.f32 %v8030, %v8031
        %v8033 = vrot.slane %v8032, 2
        %v8034 = vmax.f32 %v8032, %v8033
        %v8035 = vrot.slane %v8034, 1
        %v8036 = vmax.f32 %v8034, %v8035
        %v8037 = vsel %vm532, %v7937, -inf
        %v8038 = vrot.slane %v8037, 4
        %v8039 = vmax.f32 %v8037, %v8038
        %v8040 = vrot.slane %v8039, 2
        %v8041 = vmax.f32 %v8039, %v8040
        %v8042 = vrot.slane %v8041, 1
        %v8043 = vmax.f32 %v8041, %v8042
        %v8044 = vsel %vm532, %v7938, -inf
        %v8045 = vrot.slane %v8044, 4
        %v8046 = vmax.f32 %v8044, %v8045
        %v8047 = vrot.slane %v8046, 2
        %v8048 = vmax.f32 %v8046, %v8047
        %v8049 = vrot.slane %v8048, 1
        %v8050 = vmax.f32 %v8048, %v8049
        %vm8067 = vcmask 1041409
        %v8068 = vsel %vm8067, %v7952, %v7945
        %vm8069 = vcmask 1042434
        %v8070 = vsel %vm8069, %v7959, %v8068
        %vm8071 = vcmask 1043459
        %v8072 = vsel %vm8071, %v7966, %v8070
        %vm8073 = vcmask 1044484
        %v8074 = vsel %vm8073, %v7973, %v8072
        %vm8075 = vcmask 1045509
        %v8076 = vsel %vm8075, %v7980, %v8074
        %vm8077 = vcmask 1046534
        %v8078 = vsel %vm8077, %v7987, %v8076
        %vm8079 = vcmask 1047559
        %v8080 = vsel %vm8079, %v7994, %v8078
        %v8081 = vsel %vm8067, %v8008, %v8001
        %v8082 = vsel %vm8069, %v8015, %v8081
        %v8083 = vsel %vm8071, %v8022, %v8082
        %v8084 = vsel %vm8073, %v8029, %v8083
        %v8085 = vsel %vm8075, %v8036, %v8084
        %v8086 = vsel %vm8077, %v8043, %v8085
        %v8087 = vsel %vm8079, %v8050, %v8086
        %8090 = vst.msk [vmem:[%s493] sm:$0xff] %vm532, %v8080
        %8091 = vst.msk [vmem:[%s493 + $0x8] sm:$0xff] %vm532, %v8087
        %s8092 = sand.u32 %s345, 1
        %s8093 = scalar_lea.sflag [#allocation3], %s8092
        %s8094 = sand.u32 %s345, 1
        %s8095 = smul.addr %s8094, 16
        %s8096 = scalar_lea.vmem [#allocation2], %s8095
        // Predicated region
        $region77: #{tpu_custom_call.1} parent=75 // pred_check
          %p8097 = pneg %p355
        $region78: #{tpu_custom_call.1} parent=75 // pred_check_branch
          %8099 = sbr.rel (%p8097) target = $region80
        $region79: #{tpu_custom_call.1} parent=75 // pred_region
          %s8100 = smul.u32 2, %s28
          %s8102 = ssub.s32 256, 256
          %8103 = vsyncadd %s8093, %s8102
          %s8104 = smul.addr %s8100, 128
          %s8105 = scalar_lea.hbm %s14, %s8104
          %s8106 = sshll.u32 %s8096, 4
          %s8107 = int_to_ptr.vmem [resolvable:$true] %s8106
          %8112 = dma.vmem_to_hbm [thread:$0]  %s8107, 256, %s8105, %s8093, 128, 128, 8
        $region80: #{tpu_custom_call.1} parent=75 // pred_fallthru
          _
      $region76: #{tpu_custom_call.1} parent=5 // pred_fallthru
        _
      %p8113 = scmp.le.s32.totalorder 2, %s23
      // Predicated region
      $region81: #{tpu_custom_call.1} parent=5 // pred_check
        %p8114 = pneg %p8113
      $region82: #{tpu_custom_call.1} parent=5 // pred_check_branch
        %8116 = sbr.rel (%p8114) target = $region84
      $region83: #{tpu_custom_call.1} parent=5 // pred_region
        %s8117 = ssub.s32 %s23, 2
        // Predicated region
        $region85: #{tpu_custom_call.1} parent=83 // pred_check
          %p8118 = pneg %p361
        $region86: #{tpu_custom_call.1} parent=83 // pred_check_branch
          %8120 = sbr.rel (%p8118) target = $region88
        $region87: #{tpu_custom_call.1} parent=83 // pred_region
          %s8121 = sand.u32 %s346, 1
          %s8122 = scalar_lea.sflag [#allocation3], %s8121
          %s8123 = sand.u32 %s346, 1
          %s8124 = smul.addr %s8123, 16
          %s8125 = scalar_lea.vmem [#allocation2], %s8124
          %8126 = dma.done %s8122, 256
        $region88: #{tpu_custom_call.1} parent=83 // pred_fallthru
          _
      $region84: #{tpu_custom_call.1} parent=5 // pred_fallthru
        _
    $region6: #{tpu_custom_call.1} parent=1 // loop_footer
      %s27 = sadd.s32 1, %s23
    $region7: #{tpu_custom_call.1} parent=1 // loop_footer_branch
      %22 = sbr.rel target = $region3
    $region8: #{tpu_custom_call.1} parent=1 // loop_exit
      _
    %8127 = vsyncpa [#allocation3], 1
    %s8128 = scalar_lea.sflag [#allocation3], 1
    %8129 = vsyncpa %s8128, 1

</llo_original>
